<compile_context>
chip_gen: v7x
topology: tpu7x:2x2x1
jax: 0.10.0
libtpu: 0.0.40
codegen_flags: <defaults>
</compile_context>

<pallas_src>
import functools

import jax
import jax.numpy as jnp
from jax.experimental import pallas as pl
from jax.experimental.pallas import tpu as pltpu

HIDDEN = 64                      # Encoder hard-codes FC(input_dim=64, ...) -> hidden = 64
MAX_TILE = 512                   # adjacency tile; 512x512 bf16 = 512 KiB per buffer
VMEM_LIMIT = 48 * 1024 * 1024    # explicit scoped-VMEM cap (headroom even on v7x 64 MiB)


# ------------------------------------------------------------------ tiling helpers
def _round_up(x, m):
    return ((x + m - 1) // m) * m


def _tiling(n):
    """Padded node count + square tile size for the dense adjacency."""
    n_pad = _round_up(max(n, 1), 128)      # lane alignment for the [*, N] operands
    tile = min(MAX_TILE, n_pad)
    n_pad = _round_up(n_pad, tile)         # grid divides evenly -> no partial blocks
    return n_pad, tile


# ------------------------------------------------------------------ GNN layer kernels
def _gnn_layer_kernel(a_ref, h_ref, w_ref, b_ref, z_ref, acc_ref, *, relu):
    k = pl.program_id(2)

    @pl.when(k == 0)
    def _():
        acc_ref[...] = jnp.zeros_like(acc_ref)

    # message-passing partial sum: A_hat[i-block, k-block] @ h[k-block]
    # (bf16 MXU operands, f32 accumulation; residual "+h" is folded into A_hat = A + I)
    acc_ref[...] += jnp.dot(a_ref[0], h_ref[0], preferred_element_type=jnp.float32)

    @pl.when(k == pl.num_programs(2) - 1)
    def _():
        y = jnp.dot(acc_ref[...], w_ref[0], preferred_element_type=jnp.float32) + b_ref[0]
        if relu:
            y = jnp.maximum(y, 0.0)
        z_ref[0] = y.astype(z_ref.dtype)


def _gnn_pool_layer_kernel(a_ref, h_ref, w_ref, b_ref, pool_ref,
                           z_ref, gp_ref, acc_ref, *, relu):
    k = pl.program_id(2)

    @pl.when(k == 0)
    def _():
        acc_ref[...] = jnp.zeros_like(acc_ref)

    acc_ref[...] += jnp.dot(a_ref[0], h_ref[0], preferred_element_type=jnp.float32)

    @pl.when(k == pl.num_programs(2) - 1)
    def _():
        y = jnp.dot(acc_ref[...], w_ref[0], preferred_element_type=jnp.float32) + b_ref[0]
        if relu:
            y = jnp.maximum(y, 0.0)
        z_ref[0] = y.astype(z_ref.dtype)
        # fused global_add_pool partial on the z tile that is already in VMEM:
        #   gp[g, i] = pool[:, i-block] @ z[g, i-block]
        gp_ref[0, 0] = jnp.dot(pool_ref[...], y, preferred_element_type=jnp.float32)


def gnn_layer(A, h, w, b, *, relu, tile, out_dtype, pool=None):
    """One residual message-passing layer for G stacked adjacencies:
         z[g] = maybe_relu((A_hat[g] @ h[g]) @ w[g] + b[g])
       plus (optionally) fused global_add_pool partials summed outside."""
    g_cnt, n_pad, _ = A.shape
    d_in = h.shape[-1]
    d_out = w.shape[-1]
    n_blk = n_pad // tile

    A = A.astype(jnp.bfloat16)                    # bf16 MXU operands, f32 accumulation
    h = h.astype(jnp.bfloat16)
    w = w.astype(jnp.float32)
    b = b.reshape(g_cnt, 1, d_out).astype(jnp.float32)

    in_specs = [
        pl.BlockSpec((1, tile, tile), lambda g, i, k: (g, i, k)),    # A_hat tile
        pl.BlockSpec((1, tile, d_in), lambda g, i, k: (g, k, 0)),    # h k-block
        pl.BlockSpec((1, d_in, d_out), lambda g, i, k: (g, 0, 0)),   # W (resident, 16 KB)
        pl.BlockSpec((1, 1, d_out), lambda g, i, k: (g, 0, 0)),      # b
    ]
    args = [A, h, w, b]
    out_shape = [jax.ShapeDtypeStruct((g_cnt, n_pad, d_out), out_dtype)]
    out_specs = [pl.BlockSpec((1, tile, d_out), lambda g, i, k: (g, i, 0))]

    flops = 2 * g_cnt * n_pad * n_pad * d_in + 2 * g_cnt * n_pad * d_in * d_out
    bytes_accessed = (A.size * 2 + h.size * 2 + w.size * 4 + b.size * 4
                      + g_cnt * n_pad * d_out * jnp.dtype(out_dtype).itemsize)

    if pool is None:
        kernel = functools.partial(_gnn_layer_kernel, relu=relu)
    else:
        n_graphs = pool.shape[0]
        in_specs.append(pl.BlockSpec((n_graphs, tile), lambda g, i, k: (0, i)))
        args.append(pool.astype(jnp.float32))
        out_shape.append(jax.ShapeDtypeStruct((g_cnt, n_blk, n_graphs, d_out), jnp.float32))
        out_specs.append(pl.BlockSpec((1, 1, n_graphs, d_out), lambda g, i, k: (g, i, 0, 0)))
        flops += 2 * g_cnt * n_graphs * n_pad * d_out
        bytes_accessed += pool.size * 4 + g_cnt * n_blk * n_graphs * d_out * 4
        kernel = functools.partial(_gnn_pool_layer_kernel, relu=relu)

    # TODO(synk): sweep pl.Buffered(3) on the A BlockSpec if DMA is still exposed on
    # v6e/v7x; default double-buffering is used here.
    out = pl.pallas_call(
        kernel,
        grid_spec=pltpu.PrefetchScalarGridSpec(
            num_scalar_prefetch=0,
            grid=(g_cnt, n_blk, n_blk),            # reduction axis (k) innermost
            in_specs=in_specs,
            out_specs=out_specs,
            scratch_shapes=[pltpu.VMEM((tile, d_in), jnp.float32)],
        ),
        out_shape=out_shape,
        compiler_params=pltpu.CompilerParams(
            dimension_semantics=("parallel", "parallel", "arbitrary"),
            vmem_limit_bytes=VMEM_LIMIT,
        ),
        cost_estimate=pl.CostEstimate(flops=int(flops), transcendentals=0,
                                      bytes_accessed=int(bytes_accessed)),
    )(*args)

    if pool is None:
        return out[0]
    z, gp = out
    return z, jnp.sum(gp, axis=1)       # [G, B, d_out]; tiny partial-sum left to XLA


# ------------------------------------------------------------------ IB head (FC + softmax)
def _ib_softmax_kernel(z_ref, w1_ref, b1_ref, w2_ref, b2_ref, o_ref):
    # FC = Linear -> Dropout(p=0.2, identity at inference) -> ReLU -> Linear,
    # then softmax over dim=1, fused on the z row-tile (no HBM round trip of logits).
    hid = jnp.dot(z_ref[...], w1_ref[...], preferred_element_type=jnp.float32) + b1_ref[...]
    hid = jnp.maximum(hid, 0.0)
    logits = jnp.dot(hid, w2_ref[...], preferred_element_type=jnp.float32) + b2_ref[...]
    m = jnp.max(logits, axis=-1, keepdims=True)
    e = jnp.exp(logits - m)
    o_ref[...] = e / jnp.sum(e, axis=-1, keepdims=True)


def ib_head(fc_params, z, *, tile):
    (w1, b1), (w2, b2) = fc_params
    n_pad, d_in = z.shape
    d_hid = w1.shape[1]
    d_out = w2.shape[1]
    return pl.pallas_call(
        _ib_softmax_kernel,
        grid_spec=pltpu.PrefetchScalarGridSpec(
            num_scalar_prefetch=0,
            grid=(n_pad // tile,),
            in_specs=[
                pl.BlockSpec((tile, d_in), lambda i: (i, 0)),
                pl.BlockSpec((d_in, d_hid), lambda i: (0, 0)),
                pl.BlockSpec((1, d_hid), lambda i: (0, 0)),
                pl.BlockSpec((d_hid, d_out), lambda i: (0, 0)),
                pl.BlockSpec((1, d_out), lambda i: (0, 0)),
            ],
            out_specs=[pl.BlockSpec((tile, d_out), lambda i: (i, 0))],
        ),
        out_shape=[jax.ShapeDtypeStruct((n_pad, d_out), jnp.float32)],
        compiler_params=pltpu.CompilerParams(
            dimension_semantics=("parallel",),
            vmem_limit_bytes=VMEM_LIMIT,
        ),
    )(z.astype(jnp.float32), w1, b1, w2, b2)[0]


# ------------------------------------------------------------------ fused graph-level heads
def _heads_kernel(x_ref, w1_ref, b1_ref, w2_ref, b2_ref, o_ref):
    # 7 independent FC heads (Linear -> Dropout(identity) -> ReLU -> Linear) on tiny
    # [B, 64] graph embeddings fused into one launch; loop unrolls at trace time.
    for t in range(x_ref.shape[0]):
        hid = jnp.dot(x_ref[t], w1_ref[t], preferred_element_type=jnp.float32) + b1_ref[t]
        hid = jnp.maximum(hid, 0.0)
        o_ref[t] = jnp.dot(hid, w2_ref[t], preferred_element_type=jnp.float32) + b2_ref[t]


def fused_heads(head_params, head_in):
    n_heads, n_graphs, _ = head_in.shape
    d_max = max(p[1][0].shape[1] for p in head_params)    # pad narrow (2-wide) heads

    w1 = jnp.stack([p[0][0] for p in head_params])
    b1 = jnp.stack([p[0][1] for p in head_params])
    w2 = jnp.stack([jnp.pad(p[1][0], ((0, 0), (0, d_max - p[1][0].shape[1])))
                    for p in head_params])
    b2 = jnp.stack([jnp.pad(p[1][1], ((0, 0), (0, d_max - p[1][1].shape[1])))
                    for p in head_params])

    return pl.pallas_call(
        _heads_kernel,
        out_shape=jax.ShapeDtypeStruct((n_heads, n_graphs, d_max), jnp.float32),
        in_specs=[pl.BlockSpec(memory_space=pltpu.MemorySpace.VMEM) for _ in range(5)],
        out_specs=pl.BlockSpec(memory_space=pltpu.MemorySpace.VMEM),
    )(head_in.astype(jnp.float32), w1, b1, w2, b2)


# ------------------------------------------------------------------ parameter init
def _init_linear(key, din, dout, scale=0.1):
    kw, kb = jax.random.split(key)
    w = scale * jax.random.normal(kw, (din, dout), jnp.float32)
    b = scale * jax.random.normal(kb, (1, dout), jnp.float32)
    return w, b


def _init_fc(key, din, dhid, dout):
    k1, k2 = jax.random.split(key)
    return (_init_linear(k1, din, dhid), _init_linear(k2, dhid, dout))


def _init_gnn(key, fin, hidden):
    k1, k2 = jax.random.split(key)
    return (_init_linear(k1, fin, hidden), _init_linear(k2, hidden, hidden))


def init_encoder_params(key, fin):
    keys = jax.random.split(key, 12)
    return {
        "gcn1": _init_gnn(keys[0], fin, HIDDEN),
        "context": _init_gnn(keys[1], fin, HIDDEN),
        "objects": _init_gnn(keys[2], fin, HIDDEN),
        "mlp_IB": _init_fc(keys[3], HIDDEN, HIDDEN, 2),
        "mlp1": _init_fc(keys[4], HIDDEN, HIDDEN, 2),
        "mlp3": _init_fc(keys[5], HIDDEN, HIDDEN, HIDDEN),
        "mlp4": _init_fc(keys[6], HIDDEN, HIDDEN, 2),
        "mlp_co": _init_fc(keys[7], HIDDEN, HIDDEN, 2),
        "mlp_o": _init_fc(keys[8], HIDDEN, HIDDEN, 2),
        "mlp_co_s": _init_fc(keys[9], HIDDEN, HIDDEN, 2),
        # TODO(synk): bno/bnc (BatchNorm1d) are members of the original Encoder but are
        # never used in forward(); Adam optimizers are training-only; both omitted.
    }


# ------------------------------------------------------------------ model forward
def encoder_forward(params, x, edge_index, batch, y, num_graphs, perm):
    n, f_in = x.shape
    src, dst = edge_index[0], edge_index[1]
    n_pad, tile = _tiling(n)
    diag = jnp.arange(n)

    # dense adjacency (JAX scatter glue); residual "+h" folded in as +I on the diagonal
    A1 = (jnp.zeros((n_pad, n_pad), jnp.float32)
          .at[dst, src].add(1.0)
          .at[diag, diag].add(1.0))
    # pooling matrix [B, N_pad]; padded columns are zero so padded rows never pollute it
    pool = jnp.pad(jax.nn.one_hot(batch, num_graphs, dtype=jnp.float32).T,
                   ((0, 0), (0, n_pad - n)))
    xp = jnp.pad(x, ((0, n_pad - n), (0, 0)))

    # ---------------- gcn1 (global_add_pool fused into layer 2) ----------------
    (w1, b1), (w2, b2) = params["gcn1"]
    h1n = gnn_layer(A1[None], xp[None], w1[None], b1[None],
                    relu=True, tile=tile, out_dtype=jnp.bfloat16)
    z1p, g1p = gnn_layer(A1[None], h1n, w2[None], b2[None],
                         relu=False, tile=tile, out_dtype=jnp.float32, pool=pool)
    z1 = z1p[0]
    g1 = g1p[0]

    # ---------------- mlp_IB + softmax, fused ----------------
    assignment_p = ib_head(params["mlp_IB"], z1, tile=tile)     # [N_pad, 2]
    assignment = assignment_p[:n]

    # lift_node_att_to_edge_att + scatter into attention-weighted adjacencies (JAX glue)
    att_c = assignment_p[:, 0]
    att_o = assignment_p[:, 1]
    ew_c = att_c[src] * att_c[dst]
    ew_o = att_o[src] * att_o[dst]
    A_o = (jnp.zeros((n_pad, n_pad), jnp.float32)
           .at[dst, src].add(ew_o).at[diag, diag].add(1.0))
    A_c = (jnp.zeros((n_pad, n_pad), jnp.float32)
           .at[dst, src].add(ew_c).at[diag, diag].add(1.0))
    # TODO(synk): for large sparse protein graphs, replace the dense [N,N] adjacencies
    # with a row-block sparse gather (PrefetchScalarGridSpec + neighbour offsets in SMEM).

    # -------- context & objects, batched over a leading "parallel" grid axis --------
    ctx, obj = params["context"], params["objects"]
    A2 = jnp.stack([A_o, A_c])                 # branch 0 = context(A_o), 1 = objects(A_c)
    x2 = jnp.stack([xp, xp])
    h2 = gnn_layer(A2, x2,
                   jnp.stack([ctx[0][0], obj[0][0]]), jnp.stack([ctx[0][1], obj[0][1]]),
                   relu=True, tile=tile, out_dtype=jnp.bfloat16)
    _, g2 = gnn_layer(A2, h2,
                      jnp.stack([ctx[1][0], obj[1][0]]), jnp.stack([ctx[1][1], obj[1][1]]),
                      relu=False, tile=tile, out_dtype=jnp.bfloat16, pool=pool)
    g_M, g_res = g2[0], g2[1]                  # fused global_add_pool (no recompute)

    # -------- graph-level epilogue: 7 FC heads fused into one kernel --------
    g_co = g_res[perm] + g_M                   # tiny [B, 64] adds left to XLA
    g_co_s = g_res + g_M[perm]
    head_in = jnp.stack([g_co, g_M, g1, g_res, g_co_s, g_M, g1])
    head_params = [params["mlp_co"], params["mlp_o"], params["mlp1"], params["mlp4"],
                   params["mlp_co_s"], params["mlp3"], params["mlp3"]]
    heads = fused_heads(head_params, head_in)  # [7, B, 64] (narrow heads zero-padded)

    h_co = heads[0, :, :2]
    h_M = heads[1, :, :2]
    h1_out = heads[2, :, :2]
    h_res = heads[3, :, :2]
    h_shuf = heads[4, :, :2]
    proj_M = heads[5]
    proj1 = heads[6]
    y_shuf = y[perm]

    return (h1_out, g1, h_M, g_M, proj1, proj_M, assignment, h_co, h_res, h_shuf, y_shuf)


# ------------------------------------------------------------------ pure-JAX reference
def _ref_fc(p, x):
    (w1, b1), (w2, b2) = p
    return jnp.maximum(x @ w1 + b1, 0.0) @ w2 + b2


def _ref_gnn(p, A, x, pool):
    (w1, b1), (w2, b2) = p
    h = jnp.maximum((A @ x + x) @ w1 + b1, 0.0)
    z = (A @ h + h) @ w2 + b2
    return z, pool @ z


def reference_forward(params, x, edge_index, batch, y, num_graphs, perm):
    n = x.shape[0]
    src, dst = edge_index[0], edge_index[1]
    A = jnp.zeros((n, n), jnp.float32).at[dst, src].add(1.0)
    pool = jax.nn.one_hot(batch, num_graphs, dtype=jnp.float32).T
    z1, g1 = _ref_gnn(params["gcn1"], A, x, pool)
    assignment = jax.nn.softmax(_ref_fc(params["mlp_IB"], z1), axis=1)
    att_c, att_o = assignment[:, 0], assignment[:, 1]
    A_o = jnp.zeros((n, n), jnp.float32).at[dst, src].add(att_o[src] * att_o[dst])
    A_c = jnp.zeros((n, n), jnp.float32).at[dst, src].add(att_c[src] * att_c[dst])
    _, g_M = _ref_gnn(params["context"], A_o, x, pool)
    _, g_res = _ref_gnn(params["objects"], A_c, x, pool)
    g_co = g_res[perm] + g_M
    g_co_s = g_res + g_M[perm]
    return (_ref_fc(params["mlp1"], g1), g1, _ref_fc(params["mlp_o"], g_M), g_M,
            _ref_fc(params["mlp3"], g1), _ref_fc(params["mlp3"], g_M), assignment,
            _ref_fc(params["mlp_co"], g_co), _ref_fc(params["mlp4"], g_res),
            _ref_fc(params["mlp_co_s"], g_co_s), y[perm])


# ------------------------------------------------------------------ driver
if __name__ == "__main__":
    key = jax.random.PRNGKey(0)
    k_x, k_params, k_perm = jax.random.split(key, 3)

    # small graph batch: 4 graphs, 4 nodes each, ring topology (both directions)
    num_graphs = 4
    nodes_per_graph = 4
    n_nodes = num_graphs * nodes_per_graph
    f_in = 8

    x = jax.random.normal(k_x, (n_nodes, f_in), jnp.float32)
    batch = jnp.repeat(jnp.arange(num_graphs, dtype=jnp.int32), nodes_per_graph)

    srcs, dsts = [], []
    for g in range(num_graphs):
        base = g * nodes_per_graph
        for i in range(nodes_per_graph):
            a = base + i
            b = base + (i + 1) % nodes_per_graph
            srcs += [a, b]
            dsts += [b, a]
    edge_index = jnp.array([srcs, dsts], dtype=jnp.int32)    # [2, 32]

    y = jnp.array([0, 1, 0, 1], dtype=jnp.int32)
    perm = jax.random.permutation(k_perm, num_graphs)        # stands in for random.shuffle

    params = init_encoder_params(k_params, f_in)

    fwd = jax.jit(encoder_forward, static_argnums=(5,))
    outs = jax.block_until_ready(fwd(params, x, edge_index, batch, y, num_graphs, perm))

    expected_shapes = [(4, 2), (4, 64), (4, 2), (4, 64), (4, 64), (4, 64),
                       (16, 2), (4, 2), (4, 2), (4, 2), (4,)]
    assert [tuple(o.shape) for o in outs] == expected_shapes, \
        [tuple(o.shape) for o in outs]

    # correctness vs pure-JAX f32 reference (bf16 MXU operands -> loose tolerance)
    refs = reference_forward(params, x, edge_index, batch, y, num_graphs, perm)
    for got, want in zip(outs, refs):
        if jnp.issubdtype(got.dtype, jnp.integer):
            assert jnp.array_equal(got, want)
        else:
            assert jnp.allclose(got, want, rtol=5e-2, atol=5e-2), \
                float(jnp.max(jnp.abs(got - want)))

    print("KERNEL_OK")
</pallas_src>

<mosaic_0001>
module attributes {stable_mosaic.version = 11 : i64} {
  func.func private @main(%arg0: i32) attributes {dimension_semantics = [#tpu.dimension_semantics<core_parallel>], iteration_bounds = array<i64: 2>, tpu.core_type = #tpu.core_type<sc_scalar_subcore>, window_params = []} {
    return
  }
}

module attributes {stable_mosaic.version = 11 : i64} {
  func.func private @main(%arg0: i32) attributes {dimension_semantics = [#tpu.dimension_semantics<core_parallel>], iteration_bounds = array<i64: 2>, tpu.core_type = #tpu.core_type<sc_scalar_subcore>, window_params = []} {
    return
  }
}

module attributes {stable_mosaic.version = 11 : i64} {
  func.func @_ib_softmax_kernel(%arg0: i32, %arg1: memref<128x64xf32, #tpu.memory_space<vmem>>, %arg2: memref<64x64xf32, #tpu.memory_space<vmem>>, %arg3: memref<1x64xf32, #tpu.memory_space<vmem>>, %arg4: memref<64x2xf32, #tpu.memory_space<vmem>>, %arg5: memref<1x2xf32, #tpu.memory_space<vmem>>, %arg6: memref<128x2xf32, #tpu.memory_space<vmem>>) attributes {dimension_semantics = [#tpu.dimension_semantics<parallel>], iteration_bounds = array<i64: 1>, scalar_prefetch = 0 : i64, scratch_operands = 0 : i64, tpu.core_type = #tpu.core_type<tc>, window_params = [{transform_indices = @transform_0, window_bounds = array<i64: 128, 64>}, {pipeline_mode = #tpu.pipeline_mode<synchronous>, transform_indices = @transform_1, window_bounds = array<i64: 64, 64>}, {pipeline_mode = #tpu.pipeline_mode<synchronous>, transform_indices = @transform_2, window_bounds = array<i64: 1, 64>}, {pipeline_mode = #tpu.pipeline_mode<synchronous>, transform_indices = @transform_3, window_bounds = array<i64: 64, 2>}, {pipeline_mode = #tpu.pipeline_mode<synchronous>, transform_indices = @transform_4, window_bounds = array<i64: 1, 2>}, {transform_indices = @transform_5, window_bounds = array<i64: 128, 2>}]} {
    %c0 = arith.constant 0 : index
    %c0_0 = arith.constant 0 : index
    %0 = vector.load %arg1[%c0, %c0_0] : memref<128x64xf32, #tpu.memory_space<vmem>>, vector<128x64xf32>
    %c0_1 = arith.constant 0 : index
    %c0_2 = arith.constant 0 : index
    %1 = vector.load %arg2[%c0_1, %c0_2] : memref<64x64xf32, #tpu.memory_space<vmem>>, vector<64x64xf32>
    %cst = arith.constant dense<0.000000e+00> : vector<128x64xf32>
    %2 = tpu.matmul %0, %1, %cst {dimension_numbers = #tpu.dot_dimension_numbers<[1], [0], [0], [1], [0, 0, 1, 1], [], []>} : vector<128x64xf32>, vector<64x64xf32>, vector<128x64xf32> -> vector<128x64xf32>
    %c0_3 = arith.constant 0 : index
    %c0_4 = arith.constant 0 : index
    %3 = vector.load %arg3[%c0_3, %c0_4] : memref<1x64xf32, #tpu.memory_space<vmem>>, vector<1x64xf32>
    %4 = vector.broadcast %3 : vector<1x64xf32> to vector<128x64xf32>
    %5 = arith.addf %2, %4 : vector<128x64xf32>
    %cst_5 = arith.constant 0.000000e+00 : f32
    %6 = vector.broadcast %cst_5 : f32 to vector<128x64xf32>
    %7 = arith.maximumf %5, %6 : vector<128x64xf32>
    %c0_6 = arith.constant 0 : index
    %c0_7 = arith.constant 0 : index
    %8 = vector.load %arg4[%c0_6, %c0_7] : memref<64x2xf32, #tpu.memory_space<vmem>>, vector<64x2xf32>
    %cst_8 = arith.constant dense<0.000000e+00> : vector<128x2xf32>
    %9 = tpu.matmul %7, %8, %cst_8 {dimension_numbers = #tpu.dot_dimension_numbers<[1], [0], [0], [1], [0, 0, 1, 1], [], []>} : vector<128x64xf32>, vector<64x2xf32>, vector<128x2xf32> -> vector<128x2xf32>
    %c0_9 = arith.constant 0 : index
    %c0_10 = arith.constant 0 : index
    %10 = vector.load %arg5[%c0_9, %c0_10] : memref<1x2xf32, #tpu.memory_space<vmem>>, vector<1x2xf32>
    %11 = vector.broadcast %10 : vector<1x2xf32> to vector<128x2xf32>
    %12 = arith.addf %9, %11 : vector<128x2xf32>
    %cst_11 = arith.constant dense<0xFF800000> : vector<128xf32>
    %13 = vector.multi_reduction <maximumf>, %12, %cst_11 [1] : vector<128x2xf32> to vector<128xf32>
    %14 = vector.shape_cast %13 : vector<128xf32> to vector<128x1xf32>
    %15 = vector.broadcast %14 : vector<128x1xf32> to vector<128x2xf32>
    %16 = arith.subf %12, %15 : vector<128x2xf32>
    %17 = math.exp %16 : vector<128x2xf32>
    %cst_12 = arith.constant dense<0.000000e+00> : vector<128xf32>
    %18 = vector.multi_reduction <add>, %17, %cst_12 [1] : vector<128x2xf32> to vector<128xf32>
    %19 = vector.shape_cast %18 : vector<128xf32> to vector<128x1xf32>
    %20 = vector.broadcast %19 : vector<128x1xf32> to vector<128x2xf32>
    %21 = arith.divf %17, %20 : vector<128x2xf32>
    %c0_13 = arith.constant 0 : index
    %c0_14 = arith.constant 0 : index
    %22 = vector.load %arg6[%c0_13, %c0_14] : memref<128x2xf32, #tpu.memory_space<vmem>>, vector<128x2xf32>
    tpu.vector_store %arg6[%c0_13, %c0_14], %21 {strides = array<i32>} : memref<128x2xf32, #tpu.memory_space<vmem>>, vector<128x2xf32>,
    return
  }
  func.func @transform_0(%arg0: i32) -> (i32, i32) {
    %c0_i32 = arith.constant 0 : i32
    %c0_i32_0 = arith.constant 0 : i32
    return %arg0, %c0_i32 : i32, i32
  }
  func.func @transform_1(%arg0: i32) -> (i32, i32) {
    %c0_i32 = arith.constant 0 : i32
    %c0_i32_0 = arith.constant 0 : i32
    %c0_i32_1 = arith.constant 0 : i32
    return %c0_i32, %c0_i32_0 : i32, i32
  }
  func.func @transform_2(%arg0: i32) -> (i32, i32) {
    %c0_i32 = arith.constant 0 : i32
    %c0_i32_0 = arith.constant 0 : i32
    %c0_i32_1 = arith.constant 0 : i32
    return %c0_i32, %c0_i32_0 : i32, i32
  }
  func.func @transform_3(%arg0: i32) -> (i32, i32) {
    %c0_i32 = arith.constant 0 : i32
    %c0_i32_0 = arith.constant 0 : i32
    %c0_i32_1 = arith.constant 0 : i32
    return %c0_i32, %c0_i32_0 : i32, i32
  }
  func.func @transform_4(%arg0: i32) -> (i32, i32) {
    %c0_i32 = arith.constant 0 : i32
    %c0_i32_0 = arith.constant 0 : i32
    %c0_i32_1 = arith.constant 0 : i32
    return %c0_i32, %c0_i32_0 : i32, i32
  }
  func.func @transform_5(%arg0: i32) -> (i32, i32) {
    %c0_i32 = arith.constant 0 : i32
    %c0_i32_0 = arith.constant 0 : i32
    return %arg0, %c0_i32 : i32, i32
  }
}

module attributes {stable_mosaic.version = 11 : i64} {
  func.func @_gnn_pool_layer_kernel(%arg0: i32, %arg1: i32, %arg2: i32, %arg3: memref<1x128x128xbf16, #tpu.memory_space<vmem>>, %arg4: memref<1x128x64xbf16, #tpu.memory_space<vmem>>, %arg5: memref<1x64x64xf32, #tpu.memory_space<vmem>>, %arg6: memref<1x1x64xf32, #tpu.memory_space<vmem>>, %arg7: memref<4x128xf32, #tpu.memory_space<vmem>>, %arg8: memref<1x128x64xf32, #tpu.memory_space<vmem>>, %arg9: memref<1x1x4x64xf32, #tpu.memory_space<vmem>>, %arg10: memref<128x64xf32, #tpu.memory_space<vmem>>) attributes {dimension_semantics = [#tpu.dimension_semantics<parallel>, #tpu.dimension_semantics<parallel>, #tpu.dimension_semantics<arbitrary>], iteration_bounds = array<i64: 1, 1, 1>, scalar_prefetch = 0 : i64, scratch_operands = 1 : i64, tpu.core_type = #tpu.core_type<tc>, window_params = [{transform_indices = @transform_0, window_bounds = array<i64: 1, 128, 128>}, {transform_indices = @transform_1, window_bounds = array<i64: 1, 128, 64>}, {transform_indices = @transform_2, window_bounds = array<i64: 1, 64, 64>}, {transform_indices = @transform_3, window_bounds = array<i64: 1, 1, 64>}, {transform_indices = @transform_4, window_bounds = array<i64: 4, 128>}, {transform_indices = @transform_5, window_bounds = array<i64: 1, 128, 64>}, {transform_indices = @transform_6, window_bounds = array<i64: 1, 1, 4, 64>}]} {
    %c0_i32 = arith.constant 0 : i32
    %0 = arith.cmpi eq, %arg2, %c0_i32 : i32
    %1 = arith.extui %0 : i1 to i32
    %c0_i32_0 = arith.constant 0 : i32
    %2 = arith.cmpi ne, %1, %c0_i32_0 : i32
    scf.if %2 {
      %cst_12 = arith.constant 0.000000e+00 : f32
      %14 = vector.broadcast %cst_12 : f32 to vector<128x64xf32>
      %c0_13 = arith.constant 0 : index
      %c0_14 = arith.constant 0 : index
      %15 = vector.load %arg10[%c0_13, %c0_14] : memref<128x64xf32, #tpu.memory_space<vmem>>, vector<128x64xf32>
      tpu.vector_store %arg10[%c0_13, %c0_14], %14 {strides = array<i32>} : memref<128x64xf32, #tpu.memory_space<vmem>>, vector<128x64xf32>,
    } else {
    }
    %c0 = arith.constant 0 : index
    %c0_1 = arith.constant 0 : index
    %3 = vector.load %arg10[%c0, %c0_1] : memref<128x64xf32, #tpu.memory_space<vmem>>, vector<128x64xf32>
    %c0_2 = arith.constant 0 : index
    %c0_3 = arith.constant 0 : index
    %c0_4 = arith.constant 0 : index
    %4 = vector.load %arg3[%c0_2, %c0_3, %c0_4] : memref<1x128x128xbf16, #tpu.memory_space<vmem>>, vector<1x128x128xbf16>
    %5 = vector.shape_cast %4 : vector<1x128x128xbf16> to vector<128x128xbf16>
    %c0_5 = arith.constant 0 : index
    %c0_6 = arith.constant 0 : index
    %c0_7 = arith.constant 0 : index
    %6 = vector.load %arg4[%c0_5, %c0_6, %c0_7] : memref<1x128x64xbf16, #tpu.memory_space<vmem>>, vector<1x128x64xbf16>
    %7 = vector.shape_cast %6 : vector<1x128x64xbf16> to vector<128x64xbf16>
    %cst = arith.constant dense<0.000000e+00> : vector<128x64xf32>
    %8 = tpu.matmul %5, %7, %cst {dimension_numbers = #tpu.dot_dimension_numbers<[1], [0], [0], [1], [0, 0, 1, 1], [], []>} : vector<128x128xbf16>, vector<128x64xbf16>, vector<128x64xf32> -> vector<128x64xf32>
    %9 = arith.addf %3, %8 : vector<128x64xf32>
    %c0_8 = arith.constant 0 : index
    %c0_9 = arith.constant 0 : index
    %10 = vector.load %arg10[%c0_8, %c0_9] : memref<128x64xf32, #tpu.memory_space<vmem>>, vector<128x64xf32>
    tpu.vector_store %arg10[%c0_8, %c0_9], %9 {strides = array<i32>} : memref<128x64xf32, #tpu.memory_space<vmem>>, vector<128x64xf32>,
    %c0_i32_10 = arith.constant 0 : i32
    %11 = arith.cmpi eq, %arg2, %c0_i32_10 : i32
    %12 = arith.extui %11 : i1 to i32
    %c0_i32_11 = arith.constant 0 : i32
    %13 = arith.cmpi ne, %12, %c0_i32_11 : i32
    scf.if %13 {
      %c0_12 = arith.constant 0 : index
      %c0_13 = arith.constant 0 : index
      %14 = vector.load %arg10[%c0_12, %c0_13] : memref<128x64xf32, #tpu.memory_space<vmem>>, vector<128x64xf32>
      %c0_14 = arith.constant 0 : index
      %c0_15 = arith.constant 0 : index
      %c0_16 = arith.constant 0 : index
      %15 = vector.load %arg5[%c0_14, %c0_15, %c0_16] : memref<1x64x64xf32, #tpu.memory_space<vmem>>, vector<1x64x64xf32>
      %16 = vector.shape_cast %15 : vector<1x64x64xf32> to vector<64x64xf32>
      %cst_17 = arith.constant dense<0.000000e+00> : vector<128x64xf32>
      %17 = tpu.matmul %14, %16, %cst_17 {dimension_numbers = #tpu.dot_dimension_numbers<[1], [0], [0], [1], [0, 0, 1, 1], [], []>} : vector<128x64xf32>, vector<64x64xf32>, vector<128x64xf32> -> vector<128x64xf32>
      %c0_18 = arith.constant 0 : index
      %c0_19 = arith.constant 0 : index
      %c0_20 = arith.constant 0 : index
      %18 = vector.load %arg6[%c0_18, %c0_19, %c0_20] : memref<1x1x64xf32, #tpu.memory_space<vmem>>, vector<1x1x64xf32>
      %19 = vector.shape_cast %18 : vector<1x1x64xf32> to vector<1x64xf32>
      %20 = vector.broadcast %19 : vector<1x64xf32> to vector<128x64xf32>
      %21 = arith.addf %17, %20 : vector<128x64xf32>
      %c0_21 = arith.constant 0 : index
      %c0_22 = arith.constant 0 : index
      %c0_23 = arith.constant 0 : index
      %22 = vector.load %arg8[%c0_21, %c0_22, %c0_23] : memref<1x128x64xf32, #tpu.memory_space<vmem>>, vector<1x128x64xf32>
      %23 = vector.shape_cast %22 : vector<1x128x64xf32> to vector<128x64xf32>
      %24 = vector.shape_cast %21 : vector<128x64xf32> to vector<1x128x64xf32>
      tpu.vector_store %arg8[%c0_21, %c0_22, %c0_23], %24 {strides = array<i32>} : memref<1x128x64xf32, #tpu.memory_space<vmem>>, vector<1x128x64xf32>,
      %c0_24 = arith.constant 0 : index
      %c0_25 = arith.constant 0 : index
      %25 = vector.load %arg7[%c0_24, %c0_25] : memref<4x128xf32, #tpu.memory_space<vmem>>, vector<4x128xf32>
      %cst_26 = arith.constant dense<0.000000e+00> : vector<4x64xf32>
      %26 = tpu.matmul %25, %21, %cst_26 {dimension_numbers = #tpu.dot_dimension_numbers<[1], [0], [0], [1], [0, 0, 1, 1], [], []>} : vector<4x128xf32>, vector<128x64xf32>, vector<4x64xf32> -> vector<4x64xf32>
      %c0_27 = arith.constant 0 : index
      %c0_28 = arith.constant 0 : index
      %c0_29 = arith.constant 0 : index
      %c0_30 = arith.constant 0 : index
      %27 = vector.load %arg9[%c0_27, %c0_28, %c0_29, %c0_30] : memref<1x1x4x64xf32, #tpu.memory_space<vmem>>, vector<1x1x4x64xf32>
      %28 = vector.shape_cast %27 : vector<1x1x4x64xf32> to vector<4x64xf32>
      %29 = vector.shape_cast %26 : vector<4x64xf32> to vector<1x1x4x64xf32>
      tpu.vector_store %arg9[%c0_27, %c0_28, %c0_29, %c0_30], %29 {strides = array<i32>} : memref<1x1x4x64xf32, #tpu.memory_space<vmem>>, vector<1x1x4x64xf32>,
    } else {
    }
    return
  }
  func.func @transform_0(%arg0: i32, %arg1: i32, %arg2: i32) -> (i32, i32, i32) {
    %c0_i32 = arith.constant 0 : i32
    return %arg0, %arg1, %arg2 : i32, i32, i32
  }
  func.func @transform_1(%arg0: i32, %arg1: i32, %arg2: i32) -> (i32, i32, i32) {
    %c0_i32 = arith.constant 0 : i32
    %c0_i32_0 = arith.constant 0 : i32
    return %arg0, %arg2, %c0_i32 : i32, i32, i32
  }
  func.func @transform_2(%arg0: i32, %arg1: i32, %arg2: i32) -> (i32, i32, i32) {
    %c0_i32 = arith.constant 0 : i32
    %c0_i32_0 = arith.constant 0 : i32
    %c0_i32_1 = arith.constant 0 : i32
    return %arg0, %c0_i32, %c0_i32_0 : i32, i32, i32
  }
  func.func @transform_3(%arg0: i32, %arg1: i32, %arg2: i32) -> (i32, i32, i32) {
    %c0_i32 = arith.constant 0 : i32
    %c0_i32_0 = arith.constant 0 : i32
    %c0_i32_1 = arith.constant 0 : i32
    return %arg0, %c0_i32, %c0_i32_0 : i32, i32, i32
  }
  func.func @transform_4(%arg0: i32, %arg1: i32, %arg2: i32) -> (i32, i32) {
    %c0_i32 = arith.constant 0 : i32
    %c0_i32_0 = arith.constant 0 : i32
    return %c0_i32, %arg1 : i32, i32
  }
  func.func @transform_5(%arg0: i32, %arg1: i32, %arg2: i32) -> (i32, i32, i32) {
    %c0_i32 = arith.constant 0 : i32
    %c0_i32_0 = arith.constant 0 : i32
    return %arg0, %arg1, %c0_i32 : i32, i32, i32
  }
  func.func @transform_6(%arg0: i32, %arg1: i32, %arg2: i32) -> (i32, i32, i32, i32) {
    %c0_i32 = arith.constant 0 : i32
    %c0_i32_0 = arith.constant 0 : i32
    %c0_i32_1 = arith.constant 0 : i32
    return %arg0, %arg1, %c0_i32, %c0_i32_0 : i32, i32, i32, i32
  }
}

module attributes {stable_mosaic.version = 11 : i64} {
  func.func @_gnn_layer_kernel(%arg0: i32, %arg1: i32, %arg2: i32, %arg3: memref<1x128x128xbf16, #tpu.memory_space<vmem>>, %arg4: memref<1x128x8xbf16, #tpu.memory_space<vmem>>, %arg5: memref<1x8x64xf32, #tpu.memory_space<vmem>>, %arg6: memref<1x1x64xf32, #tpu.memory_space<vmem>>, %arg7: memref<1x128x64xbf16, #tpu.memory_space<vmem>>, %arg8: memref<128x8xf32, #tpu.memory_space<vmem>>) attributes {dimension_semantics = [#tpu.dimension_semantics<parallel>, #tpu.dimension_semantics<parallel>, #tpu.dimension_semantics<arbitrary>], iteration_bounds = array<i64: 1, 1, 1>, scalar_prefetch = 0 : i64, scratch_operands = 1 : i64, tpu.core_type = #tpu.core_type<tc>, window_params = [{transform_indices = @transform_0, window_bounds = array<i64: 1, 128, 128>}, {transform_indices = @transform_1, window_bounds = array<i64: 1, 128, 8>}, {transform_indices = @transform_2, window_bounds = array<i64: 1, 8, 64>}, {transform_indices = @transform_3, window_bounds = array<i64: 1, 1, 64>}, {transform_indices = @transform_4, window_bounds = array<i64: 1, 128, 64>}]} {
    %c0_i32 = arith.constant 0 : i32
    %0 = arith.cmpi eq, %arg2, %c0_i32 : i32
    %1 = arith.extui %0 : i1 to i32
    %c0_i32_0 = arith.constant 0 : i32
    %2 = arith.cmpi ne, %1, %c0_i32_0 : i32
    scf.if %2 {
      %cst_12 = arith.constant 0.000000e+00 : f32
      %14 = vector.broadcast %cst_12 : f32 to vector<128x8xf32>
      %c0_13 = arith.constant 0 : index
      %c0_14 = arith.constant 0 : index
      %15 = vector.load %arg8[%c0_13, %c0_14] : memref<128x8xf32, #tpu.memory_space<vmem>>, vector<128x8xf32>
      tpu.vector_store %arg8[%c0_13, %c0_14], %14 {strides = array<i32>} : memref<128x8xf32, #tpu.memory_space<vmem>>, vector<128x8xf32>,
    } else {
    }
    %c0 = arith.constant 0 : index
    %c0_1 = arith.constant 0 : index
    %3 = vector.load %arg8[%c0, %c0_1] : memref<128x8xf32, #tpu.memory_space<vmem>>, vector<128x8xf32>
    %c0_2 = arith.constant 0 : index
    %c0_3 = arith.constant 0 : index
    %c0_4 = arith.constant 0 : index
    %4 = vector.load %arg3[%c0_2, %c0_3, %c0_4] : memref<1x128x128xbf16, #tpu.memory_space<vmem>>, vector<1x128x128xbf16>
    %5 = vector.shape_cast %4 : vector<1x128x128xbf16> to vector<128x128xbf16>
    %c0_5 = arith.constant 0 : index
    %c0_6 = arith.constant 0 : index
    %c0_7 = arith.constant 0 : index
    %6 = vector.load %arg4[%c0_5, %c0_6, %c0_7] : memref<1x128x8xbf16, #tpu.memory_space<vmem>>, vector<1x128x8xbf16>
    %7 = vector.shape_cast %6 : vector<1x128x8xbf16> to vector<128x8xbf16>
    %cst = arith.constant dense<0.000000e+00> : vector<128x8xf32>
    %8 = tpu.matmul %5, %7, %cst {dimension_numbers = #tpu.dot_dimension_numbers<[1], [0], [0], [1], [0, 0, 1, 1], [], []>} : vector<128x128xbf16>, vector<128x8xbf16>, vector<128x8xf32> -> vector<128x8xf32>
    %9 = arith.addf %3, %8 : vector<128x8xf32>
    %c0_8 = arith.constant 0 : index
    %c0_9 = arith.constant 0 : index
    %10 = vector.load %arg8[%c0_8, %c0_9] : memref<128x8xf32, #tpu.memory_space<vmem>>, vector<128x8xf32>
    tpu.vector_store %arg8[%c0_8, %c0_9], %9 {strides = array<i32>} : memref<128x8xf32, #tpu.memory_space<vmem>>, vector<128x8xf32>,
    %c0_i32_10 = arith.constant 0 : i32
    %11 = arith.cmpi eq, %arg2, %c0_i32_10 : i32
    %12 = arith.extui %11 : i1 to i32
    %c0_i32_11 = arith.constant 0 : i32
    %13 = arith.cmpi ne, %12, %c0_i32_11 : i32
    scf.if %13 {
      %c0_12 = arith.constant 0 : index
      %c0_13 = arith.constant 0 : index
      %14 = vector.load %arg8[%c0_12, %c0_13] : memref<128x8xf32, #tpu.memory_space<vmem>>, vector<128x8xf32>
      %c0_14 = arith.constant 0 : index
      %c0_15 = arith.constant 0 : index
      %c0_16 = arith.constant 0 : index
      %15 = vector.load %arg5[%c0_14, %c0_15, %c0_16] : memref<1x8x64xf32, #tpu.memory_space<vmem>>, vector<1x8x64xf32>
      %16 = vector.shape_cast %15 : vector<1x8x64xf32> to vector<8x64xf32>
      %cst_17 = arith.constant dense<0.000000e+00> : vector<128x64xf32>
      %17 = tpu.matmul %14, %16, %cst_17 {dimension_numbers = #tpu.dot_dimension_numbers<[1], [0], [0], [1], [0, 0, 1, 1], [], []>} : vector<128x8xf32>, vector<8x64xf32>, vector<128x64xf32> -> vector<128x64xf32>
      %c0_18 = arith.constant 0 : index
      %c0_19 = arith.constant 0 : index
      %c0_20 = arith.constant 0 : index
      %18 = vector.load %arg6[%c0_18, %c0_19, %c0_20] : memref<1x1x64xf32, #tpu.memory_space<vmem>>, vector<1x1x64xf32>
      %19 = vector.shape_cast %18 : vector<1x1x64xf32> to vector<1x64xf32>
      %20 = vector.broadcast %19 : vector<1x64xf32> to vector<128x64xf32>
      %21 = arith.addf %17, %20 : vector<128x64xf32>
      %cst_21 = arith.constant 0.000000e+00 : f32
      %22 = vector.broadcast %cst_21 : f32 to vector<128x64xf32>
      %23 = arith.maximumf %21, %22 : vector<128x64xf32>
      %24 = arith.truncf %23 : vector<128x64xf32> to vector<128x64xbf16>
      %c0_22 = arith.constant 0 : index
      %c0_23 = arith.constant 0 : index
      %c0_24 = arith.constant 0 : index
      %25 = vector.load %arg7[%c0_22, %c0_23, %c0_24] : memref<1x128x64xbf16, #tpu.memory_space<vmem>>, vector<1x128x64xbf16>
      %26 = vector.shape_cast %25 : vector<1x128x64xbf16> to vector<128x64xbf16>
      %27 = vector.shape_cast %24 : vector<128x64xbf16> to vector<1x128x64xbf16>
      tpu.vector_store %arg7[%c0_22, %c0_23, %c0_24], %27 {strides = array<i32>} : memref<1x128x64xbf16, #tpu.memory_space<vmem>>, vector<1x128x64xbf16>,
    } else {
    }
    return
  }
  func.func @transform_0(%arg0: i32, %arg1: i32, %arg2: i32) -> (i32, i32, i32) {
    %c0_i32 = arith.constant 0 : i32
    return %arg0, %arg1, %arg2 : i32, i32, i32
  }
  func.func @transform_1(%arg0: i32, %arg1: i32, %arg2: i32) -> (i32, i32, i32) {
    %c0_i32 = arith.constant 0 : i32
    %c0_i32_0 = arith.constant 0 : i32
    return %arg0, %arg2, %c0_i32 : i32, i32, i32
  }
  func.func @transform_2(%arg0: i32, %arg1: i32, %arg2: i32) -> (i32, i32, i32) {
    %c0_i32 = arith.constant 0 : i32
    %c0_i32_0 = arith.constant 0 : i32
    %c0_i32_1 = arith.constant 0 : i32
    return %arg0, %c0_i32, %c0_i32_0 : i32, i32, i32
  }
  func.func @transform_3(%arg0: i32, %arg1: i32, %arg2: i32) -> (i32, i32, i32) {
    %c0_i32 = arith.constant 0 : i32
    %c0_i32_0 = arith.constant 0 : i32
    %c0_i32_1 = arith.constant 0 : i32
    return %arg0, %c0_i32, %c0_i32_0 : i32, i32, i32
  }
  func.func @transform_4(%arg0: i32, %arg1: i32, %arg2: i32) -> (i32, i32, i32) {
    %c0_i32 = arith.constant 0 : i32
    %c0_i32_0 = arith.constant 0 : i32
    return %arg0, %arg1, %c0_i32 : i32, i32, i32
  }
}

module attributes {stable_mosaic.version = 11 : i64} {
  func.func @_gnn_layer_kernel(%arg0: i32, %arg1: i32, %arg2: i32, %arg3: memref<1x128x128xbf16, #tpu.memory_space<vmem>>, %arg4: memref<1x128x8xbf16, #tpu.memory_space<vmem>>, %arg5: memref<1x8x64xf32, #tpu.memory_space<vmem>>, %arg6: memref<1x1x64xf32, #tpu.memory_space<vmem>>, %arg7: memref<1x128x64xbf16, #tpu.memory_space<vmem>>, %arg8: memref<128x8xf32, #tpu.memory_space<vmem>>) attributes {dimension_semantics = [#tpu.dimension_semantics<parallel>, #tpu.dimension_semantics<parallel>, #tpu.dimension_semantics<arbitrary>], iteration_bounds = array<i64: 2, 1, 1>, scalar_prefetch = 0 : i64, scratch_operands = 1 : i64, tpu.core_type = #tpu.core_type<tc>, window_params = [{transform_indices = @transform_0, window_bounds = array<i64: 1, 128, 128>}, {transform_indices = @transform_1, window_bounds = array<i64: 1, 128, 8>}, {transform_indices = @transform_2, window_bounds = array<i64: 1, 8, 64>}, {transform_indices = @transform_3, window_bounds = array<i64: 1, 1, 64>}, {transform_indices = @transform_4, window_bounds = array<i64: 1, 128, 64>}]} {
    %c0_i32 = arith.constant 0 : i32
    %0 = arith.cmpi eq, %arg2, %c0_i32 : i32
    %1 = arith.extui %0 : i1 to i32
    %c0_i32_0 = arith.constant 0 : i32
    %2 = arith.cmpi ne, %1, %c0_i32_0 : i32
    scf.if %2 {
      %cst_12 = arith.constant 0.000000e+00 : f32
      %14 = vector.broadcast %cst_12 : f32 to vector<128x8xf32>
      %c0_13 = arith.constant 0 : index
      %c0_14 = arith.constant 0 : index
      %15 = vector.load %arg8[%c0_13, %c0_14] : memref<128x8xf32, #tpu.memory_space<vmem>>, vector<128x8xf32>
      tpu.vector_store %arg8[%c0_13, %c0_14], %14 {strides = array<i32>} : memref<128x8xf32, #tpu.memory_space<vmem>>, vector<128x8xf32>,
    } else {
    }
    %c0 = arith.constant 0 : index
    %c0_1 = arith.constant 0 : index
    %3 = vector.load %arg8[%c0, %c0_1] : memref<128x8xf32, #tpu.memory_space<vmem>>, vector<128x8xf32>
    %c0_2 = arith.constant 0 : index
    %c0_3 = arith.constant 0 : index
    %c0_4 = arith.constant 0 : index
    %4 = vector.load %arg3[%c0_2, %c0_3, %c0_4] : memref<1x128x128xbf16, #tpu.memory_space<vmem>>, vector<1x128x128xbf16>
    %5 = vector.shape_cast %4 : vector<1x128x128xbf16> to vector<128x128xbf16>
    %c0_5 = arith.constant 0 : index
    %c0_6 = arith.constant 0 : index
    %c0_7 = arith.constant 0 : index
    %6 = vector.load %arg4[%c0_5, %c0_6, %c0_7] : memref<1x128x8xbf16, #tpu.memory_space<vmem>>, vector<1x128x8xbf16>
    %7 = vector.shape_cast %6 : vector<1x128x8xbf16> to vector<128x8xbf16>
    %cst = arith.constant dense<0.000000e+00> : vector<128x8xf32>
    %8 = tpu.matmul %5, %7, %cst {dimension_numbers = #tpu.dot_dimension_numbers<[1], [0], [0], [1], [0, 0, 1, 1], [], []>} : vector<128x128xbf16>, vector<128x8xbf16>, vector<128x8xf32> -> vector<128x8xf32>
    %9 = arith.addf %3, %8 : vector<128x8xf32>
    %c0_8 = arith.constant 0 : index
    %c0_9 = arith.constant 0 : index
    %10 = vector.load %arg8[%c0_8, %c0_9] : memref<128x8xf32, #tpu.memory_space<vmem>>, vector<128x8xf32>
    tpu.vector_store %arg8[%c0_8, %c0_9], %9 {strides = array<i32>} : memref<128x8xf32, #tpu.memory_space<vmem>>, vector<128x8xf32>,
    %c0_i32_10 = arith.constant 0 : i32
    %11 = arith.cmpi eq, %arg2, %c0_i32_10 : i32
    %12 = arith.extui %11 : i1 to i32
    %c0_i32_11 = arith.constant 0 : i32
    %13 = arith.cmpi ne, %12, %c0_i32_11 : i32
    scf.if %13 {
      %c0_12 = arith.constant 0 : index
      %c0_13 = arith.constant 0 : index
      %14 = vector.load %arg8[%c0_12, %c0_13] : memref<128x8xf32, #tpu.memory_space<vmem>>, vector<128x8xf32>
      %c0_14 = arith.constant 0 : index
      %c0_15 = arith.constant 0 : index
      %c0_16 = arith.constant 0 : index
      %15 = vector.load %arg5[%c0_14, %c0_15, %c0_16] : memref<1x8x64xf32, #tpu.memory_space<vmem>>, vector<1x8x64xf32>
      %16 = vector.shape_cast %15 : vector<1x8x64xf32> to vector<8x64xf32>
      %cst_17 = arith.constant dense<0.000000e+00> : vector<128x64xf32>
      %17 = tpu.matmul %14, %16, %cst_17 {dimension_numbers = #tpu.dot_dimension_numbers<[1], [0], [0], [1], [0, 0, 1, 1], [], []>} : vector<128x8xf32>, vector<8x64xf32>, vector<128x64xf32> -> vector<128x64xf32>
      %c0_18 = arith.constant 0 : index
      %c0_19 = arith.constant 0 : index
      %c0_20 = arith.constant 0 : index
      %18 = vector.load %arg6[%c0_18, %c0_19, %c0_20] : memref<1x1x64xf32, #tpu.memory_space<vmem>>, vector<1x1x64xf32>
      %19 = vector.shape_cast %18 : vector<1x1x64xf32> to vector<1x64xf32>
      %20 = vector.broadcast %19 : vector<1x64xf32> to vector<128x64xf32>
      %21 = arith.addf %17, %20 : vector<128x64xf32>
      %cst_21 = arith.constant 0.000000e+00 : f32
      %22 = vector.broadcast %cst_21 : f32 to vector<128x64xf32>
      %23 = arith.maximumf %21, %22 : vector<128x64xf32>
      %24 = arith.truncf %23 : vector<128x64xf32> to vector<128x64xbf16>
      %c0_22 = arith.constant 0 : index
      %c0_23 = arith.constant 0 : index
      %c0_24 = arith.constant 0 : index
      %25 = vector.load %arg7[%c0_22, %c0_23, %c0_24] : memref<1x128x64xbf16, #tpu.memory_space<vmem>>, vector<1x128x64xbf16>
      %26 = vector.shape_cast %25 : vector<1x128x64xbf16> to vector<128x64xbf16>
      %27 = vector.shape_cast %24 : vector<128x64xbf16> to vector<1x128x64xbf16>
      tpu.vector_store %arg7[%c0_22, %c0_23, %c0_24], %27 {strides = array<i32>} : memref<1x128x64xbf16, #tpu.memory_space<vmem>>, vector<1x128x64xbf16>,
    } else {
    }
    return
  }
  func.func @transform_0(%arg0: i32, %arg1: i32, %arg2: i32) -> (i32, i32, i32) {
    %c0_i32 = arith.constant 0 : i32
    return %arg0, %arg1, %arg2 : i32, i32, i32
  }
  func.func @transform_1(%arg0: i32, %arg1: i32, %arg2: i32) -> (i32, i32, i32) {
    %c0_i32 = arith.constant 0 : i32
    %c0_i32_0 = arith.constant 0 : i32
    return %arg0, %arg2, %c0_i32 : i32, i32, i32
  }
  func.func @transform_2(%arg0: i32, %arg1: i32, %arg2: i32) -> (i32, i32, i32) {
    %c0_i32 = arith.constant 0 : i32
    %c0_i32_0 = arith.constant 0 : i32
    %c0_i32_1 = arith.constant 0 : i32
    return %arg0, %c0_i32, %c0_i32_0 : i32, i32, i32
  }
  func.func @transform_3(%arg0: i32, %arg1: i32, %arg2: i32) -> (i32, i32, i32) {
    %c0_i32 = arith.constant 0 : i32
    %c0_i32_0 = arith.constant 0 : i32
    %c0_i32_1 = arith.constant 0 : i32
    return %arg0, %c0_i32, %c0_i32_0 : i32, i32, i32
  }
  func.func @transform_4(%arg0: i32, %arg1: i32, %arg2: i32) -> (i32, i32, i32) {
    %c0_i32 = arith.constant 0 : i32
    %c0_i32_0 = arith.constant 0 : i32
    return %arg0, %arg1, %c0_i32 : i32, i32, i32
  }
}

module attributes {stable_mosaic.version = 11 : i64} {
  func.func @_gnn_pool_layer_kernel(%arg0: i32, %arg1: i32, %arg2: i32, %arg3: memref<1x128x128xbf16, #tpu.memory_space<vmem>>, %arg4: memref<1x128x64xbf16, #tpu.memory_space<vmem>>, %arg5: memref<1x64x64xf32, #tpu.memory_space<vmem>>, %arg6: memref<1x1x64xf32, #tpu.memory_space<vmem>>, %arg7: memref<4x128xf32, #tpu.memory_space<vmem>>, %arg8: memref<1x128x64xbf16, #tpu.memory_space<vmem>>, %arg9: memref<1x1x4x64xf32, #tpu.memory_space<vmem>>, %arg10: memref<128x64xf32, #tpu.memory_space<vmem>>) attributes {dimension_semantics = [#tpu.dimension_semantics<parallel>, #tpu.dimension_semantics<parallel>, #tpu.dimension_semantics<arbitrary>], iteration_bounds = array<i64: 2, 1, 1>, scalar_prefetch = 0 : i64, scratch_operands = 1 : i64, tpu.core_type = #tpu.core_type<tc>, window_params = [{transform_indices = @transform_0, window_bounds = array<i64: 1, 128, 128>}, {transform_indices = @transform_1, window_bounds = array<i64: 1, 128, 64>}, {transform_indices = @transform_2, window_bounds = array<i64: 1, 64, 64>}, {transform_indices = @transform_3, window_bounds = array<i64: 1, 1, 64>}, {transform_indices = @transform_4, window_bounds = array<i64: 4, 128>}, {transform_indices = @transform_5, window_bounds = array<i64: 1, 128, 64>}, {transform_indices = @transform_6, window_bounds = array<i64: 1, 1, 4, 64>}]} {
    %c0_i32 = arith.constant 0 : i32
    %0 = arith.cmpi eq, %arg2, %c0_i32 : i32
    %1 = arith.extui %0 : i1 to i32
    %c0_i32_0 = arith.constant 0 : i32
    %2 = arith.cmpi ne, %1, %c0_i32_0 : i32
    scf.if %2 {
      %cst_12 = arith.constant 0.000000e+00 : f32
      %14 = vector.broadcast %cst_12 : f32 to vector<128x64xf32>
      %c0_13 = arith.constant 0 : index
      %c0_14 = arith.constant 0 : index
      %15 = vector.load %arg10[%c0_13, %c0_14] : memref<128x64xf32, #tpu.memory_space<vmem>>, vector<128x64xf32>
      tpu.vector_store %arg10[%c0_13, %c0_14], %14 {strides = array<i32>} : memref<128x64xf32, #tpu.memory_space<vmem>>, vector<128x64xf32>,
    } else {
    }
    %c0 = arith.constant 0 : index
    %c0_1 = arith.constant 0 : index
    %3 = vector.load %arg10[%c0, %c0_1] : memref<128x64xf32, #tpu.memory_space<vmem>>, vector<128x64xf32>
    %c0_2 = arith.constant 0 : index
    %c0_3 = arith.constant 0 : index
    %c0_4 = arith.constant 0 : index
    %4 = vector.load %arg3[%c0_2, %c0_3, %c0_4] : memref<1x128x128xbf16, #tpu.memory_space<vmem>>, vector<1x128x128xbf16>
    %5 = vector.shape_cast %4 : vector<1x128x128xbf16> to vector<128x128xbf16>
    %c0_5 = arith.constant 0 : index
    %c0_6 = arith.constant 0 : index
    %c0_7 = arith.constant 0 : index
    %6 = vector.load %arg4[%c0_5, %c0_6, %c0_7] : memref<1x128x64xbf16, #tpu.memory_space<vmem>>, vector<1x128x64xbf16>
    %7 = vector.shape_cast %6 : vector<1x128x64xbf16> to vector<128x64xbf16>
    %cst = arith.constant dense<0.000000e+00> : vector<128x64xf32>
    %8 = tpu.matmul %5, %7, %cst {dimension_numbers = #tpu.dot_dimension_numbers<[1], [0], [0], [1], [0, 0, 1, 1], [], []>} : vector<128x128xbf16>, vector<128x64xbf16>, vector<128x64xf32> -> vector<128x64xf32>
    %9 = arith.addf %3, %8 : vector<128x64xf32>
    %c0_8 = arith.constant 0 : index
    %c0_9 = arith.constant 0 : index
    %10 = vector.load %arg10[%c0_8, %c0_9] : memref<128x64xf32, #tpu.memory_space<vmem>>, vector<128x64xf32>
    tpu.vector_store %arg10[%c0_8, %c0_9], %9 {strides = array<i32>} : memref<128x64xf32, #tpu.memory_space<vmem>>, vector<128x64xf32>,
    %c0_i32_10 = arith.constant 0 : i32
    %11 = arith.cmpi eq, %arg2, %c0_i32_10 : i32
    %12 = arith.extui %11 : i1 to i32
    %c0_i32_11 = arith.constant 0 : i32
    %13 = arith.cmpi ne, %12, %c0_i32_11 : i32
    scf.if %13 {
      %c0_12 = arith.constant 0 : index
      %c0_13 = arith.constant 0 : index
      %14 = vector.load %arg10[%c0_12, %c0_13] : memref<128x64xf32, #tpu.memory_space<vmem>>, vector<128x64xf32>
      %c0_14 = arith.constant 0 : index
      %c0_15 = arith.constant 0 : index
      %c0_16 = arith.constant 0 : index
      %15 = vector.load %arg5[%c0_14, %c0_15, %c0_16] : memref<1x64x64xf32, #tpu.memory_space<vmem>>, vector<1x64x64xf32>
      %16 = vector.shape_cast %15 : vector<1x64x64xf32> to vector<64x64xf32>
      %cst_17 = arith.constant dense<0.000000e+00> : vector<128x64xf32>
      %17 = tpu.matmul %14, %16, %cst_17 {dimension_numbers = #tpu.dot_dimension_numbers<[1], [0], [0], [1], [0, 0, 1, 1], [], []>} : vector<128x64xf32>, vector<64x64xf32>, vector<128x64xf32> -> vector<128x64xf32>
      %c0_18 = arith.constant 0 : index
      %c0_19 = arith.constant 0 : index
      %c0_20 = arith.constant 0 : index
      %18 = vector.load %arg6[%c0_18, %c0_19, %c0_20] : memref<1x1x64xf32, #tpu.memory_space<vmem>>, vector<1x1x64xf32>
      %19 = vector.shape_cast %18 : vector<1x1x64xf32> to vector<1x64xf32>
      %20 = vector.broadcast %19 : vector<1x64xf32> to vector<128x64xf32>
      %21 = arith.addf %17, %20 : vector<128x64xf32>
      %22 = arith.truncf %21 : vector<128x64xf32> to vector<128x64xbf16>
      %c0_21 = arith.constant 0 : index
      %c0_22 = arith.constant 0 : index
      %c0_23 = arith.constant 0 : index
      %23 = vector.load %arg8[%c0_21, %c0_22, %c0_23] : memref<1x128x64xbf16, #tpu.memory_space<vmem>>, vector<1x128x64xbf16>
      %24 = vector.shape_cast %23 : vector<1x128x64xbf16> to vector<128x64xbf16>
      %25 = vector.shape_cast %22 : vector<128x64xbf16> to vector<1x128x64xbf16>
      tpu.vector_store %arg8[%c0_21, %c0_22, %c0_23], %25 {strides = array<i32>} : memref<1x128x64xbf16, #tpu.memory_space<vmem>>, vector<1x128x64xbf16>,
      %c0_24 = arith.constant 0 : index
      %c0_25 = arith.constant 0 : index
      %26 = vector.load %arg7[%c0_24, %c0_25] : memref<4x128xf32, #tpu.memory_space<vmem>>, vector<4x128xf32>
      %cst_26 = arith.constant dense<0.000000e+00> : vector<4x64xf32>
      %27 = tpu.matmul %26, %21, %cst_26 {dimension_numbers = #tpu.dot_dimension_numbers<[1], [0], [0], [1], [0, 0, 1, 1], [], []>} : vector<4x128xf32>, vector<128x64xf32>, vector<4x64xf32> -> vector<4x64xf32>
      %c0_27 = arith.constant 0 : index
      %c0_28 = arith.constant 0 : index
      %c0_29 = arith.constant 0 : index
      %c0_30 = arith.constant 0 : index
      %28 = vector.load %arg9[%c0_27, %c0_28, %c0_29, %c0_30] : memref<1x1x4x64xf32, #tpu.memory_space<vmem>>, vector<1x1x4x64xf32>
      %29 = vector.shape_cast %28 : vector<1x1x4x64xf32> to vector<4x64xf32>
      %30 = vector.shape_cast %27 : vector<4x64xf32> to vector<1x1x4x64xf32>
      tpu.vector_store %arg9[%c0_27, %c0_28, %c0_29, %c0_30], %30 {strides = array<i32>} : memref<1x1x4x64xf32, #tpu.memory_space<vmem>>, vector<1x1x4x64xf32>,
    } else {
    }
    return
  }
  func.func @transform_0(%arg0: i32, %arg1: i32, %arg2: i32) -> (i32, i32, i32) {
    %c0_i32 = arith.constant 0 : i32
    return %arg0, %arg1, %arg2 : i32, i32, i32
  }
  func.func @transform_1(%arg0: i32, %arg1: i32, %arg2: i32) -> (i32, i32, i32) {
    %c0_i32 = arith.constant 0 : i32
    %c0_i32_0 = arith.constant 0 : i32
    return %arg0, %arg2, %c0_i32 : i32, i32, i32
  }
  func.func @transform_2(%arg0: i32, %arg1: i32, %arg2: i32) -> (i32, i32, i32) {
    %c0_i32 = arith.constant 0 : i32
    %c0_i32_0 = arith.constant 0 : i32
    %c0_i32_1 = arith.constant 0 : i32
    return %arg0, %c0_i32, %c0_i32_0 : i32, i32, i32
  }
  func.func @transform_3(%arg0: i32, %arg1: i32, %arg2: i32) -> (i32, i32, i32) {
    %c0_i32 = arith.constant 0 : i32
    %c0_i32_0 = arith.constant 0 : i32
    %c0_i32_1 = arith.constant 0 : i32
    return %arg0, %c0_i32, %c0_i32_0 : i32, i32, i32
  }
  func.func @transform_4(%arg0: i32, %arg1: i32, %arg2: i32) -> (i32, i32) {
    %c0_i32 = arith.constant 0 : i32
    %c0_i32_0 = arith.constant 0 : i32
    return %c0_i32, %arg1 : i32, i32
  }
  func.func @transform_5(%arg0: i32, %arg1: i32, %arg2: i32) -> (i32, i32, i32) {
    %c0_i32 = arith.constant 0 : i32
    %c0_i32_0 = arith.constant 0 : i32
    return %arg0, %arg1, %c0_i32 : i32, i32, i32
  }
  func.func @transform_6(%arg0: i32, %arg1: i32, %arg2: i32) -> (i32, i32, i32, i32) {
    %c0_i32 = arith.constant 0 : i32
    %c0_i32_0 = arith.constant 0 : i32
    %c0_i32_1 = arith.constant 0 : i32
    return %arg0, %arg1, %c0_i32, %c0_i32_0 : i32, i32, i32, i32
  }
}

module attributes {stable_mosaic.version = 11 : i64} {
  func.func @_heads_kernel(%arg0: memref<7x4x64xf32, #tpu.memory_space<vmem>>, %arg1: memref<7x64x64xf32, #tpu.memory_space<vmem>>, %arg2: memref<7x1x64xf32, #tpu.memory_space<vmem>>, %arg3: memref<7x64x64xf32, #tpu.memory_space<vmem>>, %arg4: memref<7x1x64xf32, #tpu.memory_space<vmem>>, %arg5: memref<7x4x64xf32, #tpu.memory_space<vmem>>) attributes {dimension_semantics = [], scalar_prefetch = 0 : i64, scratch_operands = 0 : i64, tpu.core_type = #tpu.core_type<tc>} {
    %c0 = arith.constant 0 : index
    %c0_0 = arith.constant 0 : index
    %c0_1 = arith.constant 0 : index
    %0 = vector.load %arg0[%c0, %c0_0, %c0_1] : memref<7x4x64xf32, #tpu.memory_space<vmem>>, vector<1x4x64xf32>
    %1 = vector.shape_cast %0 : vector<1x4x64xf32> to vector<4x64xf32>
    %c0_2 = arith.constant 0 : index
    %c0_3 = arith.constant 0 : index
    %c0_4 = arith.constant 0 : index
    %2 = vector.load %arg1[%c0_2, %c0_3, %c0_4] : memref<7x64x64xf32, #tpu.memory_space<vmem>>, vector<1x64x64xf32>
    %3 = vector.shape_cast %2 : vector<1x64x64xf32> to vector<64x64xf32>
    %cst = arith.constant dense<0.000000e+00> : vector<4x64xf32>
    %4 = tpu.matmul %1, %3, %cst {dimension_numbers = #tpu.dot_dimension_numbers<[1], [0], [0], [1], [0, 0, 1, 1], [], []>} : vector<4x64xf32>, vector<64x64xf32>, vector<4x64xf32> -> vector<4x64xf32>
    %c0_5 = arith.constant 0 : index
    %c0_6 = arith.constant 0 : index
    %c0_7 = arith.constant 0 : index
    %5 = vector.load %arg2[%c0_5, %c0_6, %c0_7] : memref<7x1x64xf32, #tpu.memory_space<vmem>>, vector<1x1x64xf32>
    %6 = vector.shape_cast %5 : vector<1x1x64xf32> to vector<1x64xf32>
    %7 = vector.broadcast %6 : vector<1x64xf32> to vector<4x64xf32>
    %8 = arith.addf %4, %7 : vector<4x64xf32>
    %cst_8 = arith.constant 0.000000e+00 : f32
    %9 = vector.broadcast %cst_8 : f32 to vector<4x64xf32>
    %10 = arith.maximumf %8, %9 : vector<4x64xf32>
    %c0_9 = arith.constant 0 : index
    %c0_10 = arith.constant 0 : index
    %c0_11 = arith.constant 0 : index
    %11 = vector.load %arg3[%c0_9, %c0_10, %c0_11] : memref<7x64x64xf32, #tpu.memory_space<vmem>>, vector<1x64x64xf32>
    %12 = vector.shape_cast %11 : vector<1x64x64xf32> to vector<64x64xf32>
    %cst_12 = arith.constant dense<0.000000e+00> : vector<4x64xf32>
    %13 = tpu.matmul %10, %12, %cst_12 {dimension_numbers = #tpu.dot_dimension_numbers<[1], [0], [0], [1], [0, 0, 1, 1], [], []>} : vector<4x64xf32>, vector<64x64xf32>, vector<4x64xf32> -> vector<4x64xf32>
    %c0_13 = arith.constant 0 : index
    %c0_14 = arith.constant 0 : index
    %c0_15 = arith.constant 0 : index
    %14 = vector.load %arg4[%c0_13, %c0_14, %c0_15] : memref<7x1x64xf32, #tpu.memory_space<vmem>>, vector<1x1x64xf32>
    %15 = vector.shape_cast %14 : vector<1x1x64xf32> to vector<1x64xf32>
    %16 = vector.broadcast %15 : vector<1x64xf32> to vector<4x64xf32>
    %17 = arith.addf %13, %16 : vector<4x64xf32>
    %c0_16 = arith.constant 0 : index
    %c0_17 = arith.constant 0 : index
    %c0_18 = arith.constant 0 : index
    %18 = vector.load %arg5[%c0_16, %c0_17, %c0_18] : memref<7x4x64xf32, #tpu.memory_space<vmem>>, vector<1x4x64xf32>
    %19 = vector.shape_cast %18 : vector<1x4x64xf32> to vector<4x64xf32>
    %20 = vector.shape_cast %17 : vector<4x64xf32> to vector<1x4x64xf32>
    tpu.vector_store %arg5[%c0_16, %c0_17, %c0_18], %20 {strides = array<i32>} : memref<7x4x64xf32, #tpu.memory_space<vmem>>, vector<1x4x64xf32>,
    %c1 = arith.constant 1 : index
    %c0_19 = arith.constant 0 : index
    %c0_20 = arith.constant 0 : index
    %21 = vector.load %arg0[%c1, %c0_19, %c0_20] : memref<7x4x64xf32, #tpu.memory_space<vmem>>, vector<1x4x64xf32>
    %22 = vector.shape_cast %21 : vector<1x4x64xf32> to vector<4x64xf32>
    %c1_21 = arith.constant 1 : index
    %c0_22 = arith.constant 0 : index
    %c0_23 = arith.constant 0 : index
    %23 = vector.load %arg1[%c1_21, %c0_22, %c0_23] : memref<7x64x64xf32, #tpu.memory_space<vmem>>, vector<1x64x64xf32>
    %24 = vector.shape_cast %23 : vector<1x64x64xf32> to vector<64x64xf32>
    %cst_24 = arith.constant dense<0.000000e+00> : vector<4x64xf32>
    %25 = tpu.matmul %22, %24, %cst_24 {dimension_numbers = #tpu.dot_dimension_numbers<[1], [0], [0], [1], [0, 0, 1, 1], [], []>} : vector<4x64xf32>, vector<64x64xf32>, vector<4x64xf32> -> vector<4x64xf32>
    %c1_25 = arith.constant 1 : index
    %c0_26 = arith.constant 0 : index
    %c0_27 = arith.constant 0 : index
    %26 = vector.load %arg2[%c1_25, %c0_26, %c0_27] : memref<7x1x64xf32, #tpu.memory_space<vmem>>, vector<1x1x64xf32>
    %27 = vector.shape_cast %26 : vector<1x1x64xf32> to vector<1x64xf32>
    %28 = vector.broadcast %27 : vector<1x64xf32> to vector<4x64xf32>
    %29 = arith.addf %25, %28 : vector<4x64xf32>
    %cst_28 = arith.constant 0.000000e+00 : f32
    %30 = vector.broadcast %cst_28 : f32 to vector<4x64xf32>
    %31 = arith.maximumf %29, %30 : vector<4x64xf32>
    %c1_29 = arith.constant 1 : index
    %c0_30 = arith.constant 0 : index
    %c0_31 = arith.constant 0 : index
    %32 = vector.load %arg3[%c1_29, %c0_30, %c0_31] : memref<7x64x64xf32, #tpu.memory_space<vmem>>, vector<1x64x64xf32>
    %33 = vector.shape_cast %32 : vector<1x64x64xf32> to vector<64x64xf32>
    %cst_32 = arith.constant dense<0.000000e+00> : vector<4x64xf32>
    %34 = tpu.matmul %31, %33, %cst_32 {dimension_numbers = #tpu.dot_dimension_numbers<[1], [0], [0], [1], [0, 0, 1, 1], [], []>} : vector<4x64xf32>, vector<64x64xf32>, vector<4x64xf32> -> vector<4x64xf32>
    %c1_33 = arith.constant 1 : index
    %c0_34 = arith.constant 0 : index
    %c0_35 = arith.constant 0 : index
    %35 = vector.load %arg4[%c1_33, %c0_34, %c0_35] : memref<7x1x64xf32, #tpu.memory_space<vmem>>, vector<1x1x64xf32>
    %36 = vector.shape_cast %35 : vector<1x1x64xf32> to vector<1x64xf32>
    %37 = vector.broadcast %36 : vector<1x64xf32> to vector<4x64xf32>
    %38 = arith.addf %34, %37 : vector<4x64xf32>
    %c1_36 = arith.constant 1 : index
    %c0_37 = arith.constant 0 : index
    %c0_38 = arith.constant 0 : index
    %39 = vector.load %arg5[%c1_36, %c0_37, %c0_38] : memref<7x4x64xf32, #tpu.memory_space<vmem>>, vector<1x4x64xf32>
    %40 = vector.shape_cast %39 : vector<1x4x64xf32> to vector<4x64xf32>
    %41 = vector.shape_cast %38 : vector<4x64xf32> to vector<1x4x64xf32>
    tpu.vector_store %arg5[%c1_36, %c0_37, %c0_38], %41 {strides = array<i32>} : memref<7x4x64xf32, #tpu.memory_space<vmem>>, vector<1x4x64xf32>,
    %c2 = arith.constant 2 : index
    %c0_39 = arith.constant 0 : index
    %c0_40 = arith.constant 0 : index
    %42 = vector.load %arg0[%c2, %c0_39, %c0_40] : memref<7x4x64xf32, #tpu.memory_space<vmem>>, vector<1x4x64xf32>
    %43 = vector.shape_cast %42 : vector<1x4x64xf32> to vector<4x64xf32>
    %c2_41 = arith.constant 2 : index
    %c0_42 = arith.constant 0 : index
    %c0_43 = arith.constant 0 : index
    %44 = vector.load %arg1[%c2_41, %c0_42, %c0_43] : memref<7x64x64xf32, #tpu.memory_space<vmem>>, vector<1x64x64xf32>
    %45 = vector.shape_cast %44 : vector<1x64x64xf32> to vector<64x64xf32>
    %cst_44 = arith.constant dense<0.000000e+00> : vector<4x64xf32>
    %46 = tpu.matmul %43, %45, %cst_44 {dimension_numbers = #tpu.dot_dimension_numbers<[1], [0], [0], [1], [0, 0, 1, 1], [], []>} : vector<4x64xf32>, vector<64x64xf32>, vector<4x64xf32> -> vector<4x64xf32>
    %c2_45 = arith.constant 2 : index
    %c0_46 = arith.constant 0 : index
    %c0_47 = arith.constant 0 : index
    %47 = vector.load %arg2[%c2_45, %c0_46, %c0_47] : memref<7x1x64xf32, #tpu.memory_space<vmem>>, vector<1x1x64xf32>
    %48 = vector.shape_cast %47 : vector<1x1x64xf32> to vector<1x64xf32>
    %49 = vector.broadcast %48 : vector<1x64xf32> to vector<4x64xf32>
    %50 = arith.addf %46, %49 : vector<4x64xf32>
    %cst_48 = arith.constant 0.000000e+00 : f32
    %51 = vector.broadcast %cst_48 : f32 to vector<4x64xf32>
    %52 = arith.maximumf %50, %51 : vector<4x64xf32>
    %c2_49 = arith.constant 2 : index
    %c0_50 = arith.constant 0 : index
    %c0_51 = arith.constant 0 : index
    %53 = vector.load %arg3[%c2_49, %c0_50, %c0_51] : memref<7x64x64xf32, #tpu.memory_space<vmem>>, vector<1x64x64xf32>
    %54 = vector.shape_cast %53 : vector<1x64x64xf32> to vector<64x64xf32>
    %cst_52 = arith.constant dense<0.000000e+00> : vector<4x64xf32>
    %55 = tpu.matmul %52, %54, %cst_52 {dimension_numbers = #tpu.dot_dimension_numbers<[1], [0], [0], [1], [0, 0, 1, 1], [], []>} : vector<4x64xf32>, vector<64x64xf32>, vector<4x64xf32> -> vector<4x64xf32>
    %c2_53 = arith.constant 2 : index
    %c0_54 = arith.constant 0 : index
    %c0_55 = arith.constant 0 : index
    %56 = vector.load %arg4[%c2_53, %c0_54, %c0_55] : memref<7x1x64xf32, #tpu.memory_space<vmem>>, vector<1x1x64xf32>
    %57 = vector.shape_cast %56 : vector<1x1x64xf32> to vector<1x64xf32>
    %58 = vector.broadcast %57 : vector<1x64xf32> to vector<4x64xf32>
    %59 = arith.addf %55, %58 : vector<4x64xf32>
    %c2_56 = arith.constant 2 : index
    %c0_57 = arith.constant 0 : index
    %c0_58 = arith.constant 0 : index
    %60 = vector.load %arg5[%c2_56, %c0_57, %c0_58] : memref<7x4x64xf32, #tpu.memory_space<vmem>>, vector<1x4x64xf32>
    %61 = vector.shape_cast %60 : vector<1x4x64xf32> to vector<4x64xf32>
    %62 = vector.shape_cast %59 : vector<4x64xf32> to vector<1x4x64xf32>
    tpu.vector_store %arg5[%c2_56, %c0_57, %c0_58], %62 {strides = array<i32>} : memref<7x4x64xf32, #tpu.memory_space<vmem>>, vector<1x4x64xf32>,
    %c3 = arith.constant 3 : index
    %c0_59 = arith.constant 0 : index
    %c0_60 = arith.constant 0 : index
    %63 = vector.load %arg0[%c3, %c0_59, %c0_60] : memref<7x4x64xf32, #tpu.memory_space<vmem>>, vector<1x4x64xf32>
    %64 = vector.shape_cast %63 : vector<1x4x64xf32> to vector<4x64xf32>
    %c3_61 = arith.constant 3 : index
    %c0_62 = arith.constant 0 : index
    %c0_63 = arith.constant 0 : index
    %65 = vector.load %arg1[%c3_61, %c0_62, %c0_63] : memref<7x64x64xf32, #tpu.memory_space<vmem>>, vector<1x64x64xf32>
    %66 = vector.shape_cast %65 : vector<1x64x64xf32> to vector<64x64xf32>
    %cst_64 = arith.constant dense<0.000000e+00> : vector<4x64xf32>
    %67 = tpu.matmul %64, %66, %cst_64 {dimension_numbers = #tpu.dot_dimension_numbers<[1], [0], [0], [1], [0, 0, 1, 1], [], []>} : vector<4x64xf32>, vector<64x64xf32>, vector<4x64xf32> -> vector<4x64xf32>
    %c3_65 = arith.constant 3 : index
    %c0_66 = arith.constant 0 : index
    %c0_67 = arith.constant 0 : index
    %68 = vector.load %arg2[%c3_65, %c0_66, %c0_67] : memref<7x1x64xf32, #tpu.memory_space<vmem>>, vector<1x1x64xf32>
    %69 = vector.shape_cast %68 : vector<1x1x64xf32> to vector<1x64xf32>
    %70 = vector.broadcast %69 : vector<1x64xf32> to vector<4x64xf32>
    %71 = arith.addf %67, %70 : vector<4x64xf32>
    %cst_68 = arith.constant 0.000000e+00 : f32
    %72 = vector.broadcast %cst_68 : f32 to vector<4x64xf32>
    %73 = arith.maximumf %71, %72 : vector<4x64xf32>
    %c3_69 = arith.constant 3 : index
    %c0_70 = arith.constant 0 : index
    %c0_71 = arith.constant 0 : index
    %74 = vector.load %arg3[%c3_69, %c0_70, %c0_71] : memref<7x64x64xf32, #tpu.memory_space<vmem>>, vector<1x64x64xf32>
    %75 = vector.shape_cast %74 : vector<1x64x64xf32> to vector<64x64xf32>
    %cst_72 = arith.constant dense<0.000000e+00> : vector<4x64xf32>
    %76 = tpu.matmul %73, %75, %cst_72 {dimension_numbers = #tpu.dot_dimension_numbers<[1], [0], [0], [1], [0, 0, 1, 1], [], []>} : vector<4x64xf32>, vector<64x64xf32>, vector<4x64xf32> -> vector<4x64xf32>
    %c3_73 = arith.constant 3 : index
    %c0_74 = arith.constant 0 : index
    %c0_75 = arith.constant 0 : index
    %77 = vector.load %arg4[%c3_73, %c0_74, %c0_75] : memref<7x1x64xf32, #tpu.memory_space<vmem>>, vector<1x1x64xf32>
    %78 = vector.shape_cast %77 : vector<1x1x64xf32> to vector<1x64xf32>
    %79 = vector.broadcast %78 : vector<1x64xf32> to vector<4x64xf32>
    %80 = arith.addf %76, %79 : vector<4x64xf32>
    %c3_76 = arith.constant 3 : index
    %c0_77 = arith.constant 0 : index
    %c0_78 = arith.constant 0 : index
    %81 = vector.load %arg5[%c3_76, %c0_77, %c0_78] : memref<7x4x64xf32, #tpu.memory_space<vmem>>, vector<1x4x64xf32>
    %82 = vector.shape_cast %81 : vector<1x4x64xf32> to vector<4x64xf32>
    %83 = vector.shape_cast %80 : vector<4x64xf32> to vector<1x4x64xf32>
    tpu.vector_store %arg5[%c3_76, %c0_77, %c0_78], %83 {strides = array<i32>} : memref<7x4x64xf32, #tpu.memory_space<vmem>>, vector<1x4x64xf32>,
    %c4 = arith.constant 4 : index
    %c0_79 = arith.constant 0 : index
    %c0_80 = arith.constant 0 : index
    %84 = vector.load %arg0[%c4, %c0_79, %c0_80] : memref<7x4x64xf32, #tpu.memory_space<vmem>>, vector<1x4x64xf32>
    %85 = vector.shape_cast %84 : vector<1x4x64xf32> to vector<4x64xf32>
    %c4_81 = arith.constant 4 : index
    %c0_82 = arith.constant 0 : index
    %c0_83 = arith.constant 0 : index
    %86 = vector.load %arg1[%c4_81, %c0_82, %c0_83] : memref<7x64x64xf32, #tpu.memory_space<vmem>>, vector<1x64x64xf32>
    %87 = vector.shape_cast %86 : vector<1x64x64xf32> to vector<64x64xf32>
    %cst_84 = arith.constant dense<0.000000e+00> : vector<4x64xf32>
    %88 = tpu.matmul %85, %87, %cst_84 {dimension_numbers = #tpu.dot_dimension_numbers<[1], [0], [0], [1], [0, 0, 1, 1], [], []>} : vector<4x64xf32>, vector<64x64xf32>, vector<4x64xf32> -> vector<4x64xf32>
    %c4_85 = arith.constant 4 : index
    %c0_86 = arith.constant 0 : index
    %c0_87 = arith.constant 0 : index
    %89 = vector.load %arg2[%c4_85, %c0_86, %c0_87] : memref<7x1x64xf32, #tpu.memory_space<vmem>>, vector<1x1x64xf32>
    %90 = vector.shape_cast %89 : vector<1x1x64xf32> to vector<1x64xf32>
    %91 = vector.broadcast %90 : vector<1x64xf32> to vector<4x64xf32>
    %92 = arith.addf %88, %91 : vector<4x64xf32>
    %cst_88 = arith.constant 0.000000e+00 : f32
    %93 = vector.broadcast %cst_88 : f32 to vector<4x64xf32>
    %94 = arith.maximumf %92, %93 : vector<4x64xf32>
    %c4_89 = arith.constant 4 : index
    %c0_90 = arith.constant 0 : index
    %c0_91 = arith.constant 0 : index
    %95 = vector.load %arg3[%c4_89, %c0_90, %c0_91] : memref<7x64x64xf32, #tpu.memory_space<vmem>>, vector<1x64x64xf32>
    %96 = vector.shape_cast %95 : vector<1x64x64xf32> to vector<64x64xf32>
    %cst_92 = arith.constant dense<0.000000e+00> : vector<4x64xf32>
    %97 = tpu.matmul %94, %96, %cst_92 {dimension_numbers = #tpu.dot_dimension_numbers<[1], [0], [0], [1], [0, 0, 1, 1], [], []>} : vector<4x64xf32>, vector<64x64xf32>, vector<4x64xf32> -> vector<4x64xf32>
    %c4_93 = arith.constant 4 : index
    %c0_94 = arith.constant 0 : index
    %c0_95 = arith.constant 0 : index
    %98 = vector.load %arg4[%c4_93, %c0_94, %c0_95] : memref<7x1x64xf32, #tpu.memory_space<vmem>>, vector<1x1x64xf32>
    %99 = vector.shape_cast %98 : vector<1x1x64xf32> to vector<1x64xf32>
    %100 = vector.broadcast %99 : vector<1x64xf32> to vector<4x64xf32>
    %101 = arith.addf %97, %100 : vector<4x64xf32>
    %c4_96 = arith.constant 4 : index
    %c0_97 = arith.constant 0 : index
    %c0_98 = arith.constant 0 : index
    %102 = vector.load %arg5[%c4_96, %c0_97, %c0_98] : memref<7x4x64xf32, #tpu.memory_space<vmem>>, vector<1x4x64xf32>
    %103 = vector.shape_cast %102 : vector<1x4x64xf32> to vector<4x64xf32>
    %104 = vector.shape_cast %101 : vector<4x64xf32> to vector<1x4x64xf32>
    tpu.vector_store %arg5[%c4_96, %c0_97, %c0_98], %104 {strides = array<i32>} : memref<7x4x64xf32, #tpu.memory_space<vmem>>, vector<1x4x64xf32>,
    %c5 = arith.constant 5 : index
    %c0_99 = arith.constant 0 : index
    %c0_100 = arith.constant 0 : index
    %105 = vector.load %arg0[%c5, %c0_99, %c0_100] : memref<7x4x64xf32, #tpu.memory_space<vmem>>, vector<1x4x64xf32>
    %106 = vector.shape_cast %105 : vector<1x4x64xf32> to vector<4x64xf32>
    %c5_101 = arith.constant 5 : index
    %c0_102 = arith.constant 0 : index
    %c0_103 = arith.constant 0 : index
    %107 = vector.load %arg1[%c5_101, %c0_102, %c0_103] : memref<7x64x64xf32, #tpu.memory_space<vmem>>, vector<1x64x64xf32>
    %108 = vector.shape_cast %107 : vector<1x64x64xf32> to vector<64x64xf32>
    %cst_104 = arith.constant dense<0.000000e+00> : vector<4x64xf32>
    %109 = tpu.matmul %106, %108, %cst_104 {dimension_numbers = #tpu.dot_dimension_numbers<[1], [0], [0], [1], [0, 0, 1, 1], [], []>} : vector<4x64xf32>, vector<64x64xf32>, vector<4x64xf32> -> vector<4x64xf32>
    %c5_105 = arith.constant 5 : index
    %c0_106 = arith.constant 0 : index
    %c0_107 = arith.constant 0 : index
    %110 = vector.load %arg2[%c5_105, %c0_106, %c0_107] : memref<7x1x64xf32, #tpu.memory_space<vmem>>, vector<1x1x64xf32>
    %111 = vector.shape_cast %110 : vector<1x1x64xf32> to vector<1x64xf32>
    %112 = vector.broadcast %111 : vector<1x64xf32> to vector<4x64xf32>
    %113 = arith.addf %109, %112 : vector<4x64xf32>
    %cst_108 = arith.constant 0.000000e+00 : f32
    %114 = vector.broadcast %cst_108 : f32 to vector<4x64xf32>
    %115 = arith.maximumf %113, %114 : vector<4x64xf32>
    %c5_109 = arith.constant 5 : index
    %c0_110 = arith.constant 0 : index
    %c0_111 = arith.constant 0 : index
    %116 = vector.load %arg3[%c5_109, %c0_110, %c0_111] : memref<7x64x64xf32, #tpu.memory_space<vmem>>, vector<1x64x64xf32>
    %117 = vector.shape_cast %116 : vector<1x64x64xf32> to vector<64x64xf32>
    %cst_112 = arith.constant dense<0.000000e+00> : vector<4x64xf32>
    %118 = tpu.matmul %115, %117, %cst_112 {dimension_numbers = #tpu.dot_dimension_numbers<[1], [0], [0], [1], [0, 0, 1, 1], [], []>} : vector<4x64xf32>, vector<64x64xf32>, vector<4x64xf32> -> vector<4x64xf32>
    %c5_113 = arith.constant 5 : index
    %c0_114 = arith.constant 0 : index
    %c0_115 = arith.constant 0 : index
    %119 = vector.load %arg4[%c5_113, %c0_114, %c0_115] : memref<7x1x64xf32, #tpu.memory_space<vmem>>, vector<1x1x64xf32>
    %120 = vector.shape_cast %119 : vector<1x1x64xf32> to vector<1x64xf32>
    %121 = vector.broadcast %120 : vector<1x64xf32> to vector<4x64xf32>
    %122 = arith.addf %118, %121 : vector<4x64xf32>
    %c5_116 = arith.constant 5 : index
    %c0_117 = arith.constant 0 : index
    %c0_118 = arith.constant 0 : index
    %123 = vector.load %arg5[%c5_116, %c0_117, %c0_118] : memref<7x4x64xf32, #tpu.memory_space<vmem>>, vector<1x4x64xf32>
    %124 = vector.shape_cast %123 : vector<1x4x64xf32> to vector<4x64xf32>
    %125 = vector.shape_cast %122 : vector<4x64xf32> to vector<1x4x64xf32>
    tpu.vector_store %arg5[%c5_116, %c0_117, %c0_118], %125 {strides = array<i32>} : memref<7x4x64xf32, #tpu.memory_space<vmem>>, vector<1x4x64xf32>,
    %c6 = arith.constant 6 : index
    %c0_119 = arith.constant 0 : index
    %c0_120 = arith.constant 0 : index
    %126 = vector.load %arg0[%c6, %c0_119, %c0_120] : memref<7x4x64xf32, #tpu.memory_space<vmem>>, vector<1x4x64xf32>
    %127 = vector.shape_cast %126 : vector<1x4x64xf32> to vector<4x64xf32>
    %c6_121 = arith.constant 6 : index
    %c0_122 = arith.constant 0 : index
    %c0_123 = arith.constant 0 : index
    %128 = vector.load %arg1[%c6_121, %c0_122, %c0_123] : memref<7x64x64xf32, #tpu.memory_space<vmem>>, vector<1x64x64xf32>
    %129 = vector.shape_cast %128 : vector<1x64x64xf32> to vector<64x64xf32>
    %cst_124 = arith.constant dense<0.000000e+00> : vector<4x64xf32>
    %130 = tpu.matmul %127, %129, %cst_124 {dimension_numbers = #tpu.dot_dimension_numbers<[1], [0], [0], [1], [0, 0, 1, 1], [], []>} : vector<4x64xf32>, vector<64x64xf32>, vector<4x64xf32> -> vector<4x64xf32>
    %c6_125 = arith.constant 6 : index
    %c0_126 = arith.constant 0 : index
    %c0_127 = arith.constant 0 : index
    %131 = vector.load %arg2[%c6_125, %c0_126, %c0_127] : memref<7x1x64xf32, #tpu.memory_space<vmem>>, vector<1x1x64xf32>
    %132 = vector.shape_cast %131 : vector<1x1x64xf32> to vector<1x64xf32>
    %133 = vector.broadcast %132 : vector<1x64xf32> to vector<4x64xf32>
    %134 = arith.addf %130, %133 : vector<4x64xf32>
    %cst_128 = arith.constant 0.000000e+00 : f32
    %135 = vector.broadcast %cst_128 : f32 to vector<4x64xf32>
    %136 = arith.maximumf %134, %135 : vector<4x64xf32>
    %c6_129 = arith.constant 6 : index
    %c0_130 = arith.constant 0 : index
    %c0_131 = arith.constant 0 : index
    %137 = vector.load %arg3[%c6_129, %c0_130, %c0_131] : memref<7x64x64xf32, #tpu.memory_space<vmem>>, vector<1x64x64xf32>
    %138 = vector.shape_cast %137 : vector<1x64x64xf32> to vector<64x64xf32>
    %cst_132 = arith.constant dense<0.000000e+00> : vector<4x64xf32>
    %139 = tpu.matmul %136, %138, %cst_132 {dimension_numbers = #tpu.dot_dimension_numbers<[1], [0], [0], [1], [0, 0, 1, 1], [], []>} : vector<4x64xf32>, vector<64x64xf32>, vector<4x64xf32> -> vector<4x64xf32>
    %c6_133 = arith.constant 6 : index
    %c0_134 = arith.constant 0 : index
    %c0_135 = arith.constant 0 : index
    %140 = vector.load %arg4[%c6_133, %c0_134, %c0_135] : memref<7x1x64xf32, #tpu.memory_space<vmem>>, vector<1x1x64xf32>
    %141 = vector.shape_cast %140 : vector<1x1x64xf32> to vector<1x64xf32>
    %142 = vector.broadcast %141 : vector<1x64xf32> to vector<4x64xf32>
    %143 = arith.addf %139, %142 : vector<4x64xf32>
    %c6_136 = arith.constant 6 : index
    %c0_137 = arith.constant 0 : index
    %c0_138 = arith.constant 0 : index
    %144 = vector.load %arg5[%c6_136, %c0_137, %c0_138] : memref<7x4x64xf32, #tpu.memory_space<vmem>>, vector<1x4x64xf32>
    %145 = vector.shape_cast %144 : vector<1x4x64xf32> to vector<4x64xf32>
    %146 = vector.shape_cast %143 : vector<4x64xf32> to vector<1x4x64xf32>
    tpu.vector_store %arg5[%c6_136, %c0_137, %c0_138], %146 {strides = array<i32>} : memref<7x4x64xf32, #tpu.memory_space<vmem>>, vector<1x4x64xf32>,
    return
  }
}

</mosaic_0001>

<llo_original>
// kernel: encoder_forward.8
$region0: #{encoder_forward.8}
  #allocation0 [shape = 'u32[]', space=smem, size = 0x4, offset = 0x4, fixed_abs, tag = 'smem constant byte address 0x4 - core index']
  #allocation1 [shape = 'u32[144,128]{1,0:T(1,128)}', space=vmem, size = 0x12000, scoped, tag = 'internal scratch']
  %s0 = inlined_call_operand.vmem [shape: f32[128,64], index: 0, kind: input, shape index: {}]
  %s1 = inlined_call_operand.vmem [shape: f32[64,64], index: 1, kind: input, shape index: {}]
  %s2 = inlined_call_operand.vmem [shape: f32[1,64], index: 2, kind: input, shape index: {}]
  %s3 = inlined_call_operand.vmem [shape: f32[64,2], index: 3, kind: input, shape index: {}]
  %s4 = inlined_call_operand.vmem [shape: f32[1,2], index: 4, kind: input, shape index: {}]
  %s5 = inlined_call_operand.vmem [shape: f32[128,2], index: 5, kind: output, shape index: {}]
  %s6 = sld [smem:[#allocation0]]
  $region30: #{encoder_forward.8} parent=0
    _
  %s8 = ssub.s32 1, %s6
  %s9 = scalar_select 0, %s8, %s6
  // Predicated region
  $region2: #{encoder_forward.8} parent=0 // pred_check
    _
  $region3: #{encoder_forward.8} parent=0 // pred_check_branch
    %11 = sbr.rel (0) target = $region5
  $region4: #{encoder_forward.8} parent=0 // pred_region
    _
  $region5: #{encoder_forward.8} parent=0 // pred_fallthru
    _
  // Predicated region
  $region6: #{encoder_forward.8} parent=0 // pred_check
    _
  $region7: #{encoder_forward.8} parent=0 // pred_check_branch
    %13 = sbr.rel (0) target = $region9
  $region8: #{encoder_forward.8} parent=0 // pred_region
    _
  $region9: #{encoder_forward.8} parent=0 // pred_fallthru
    _
  // Predicated region
  $region10: #{encoder_forward.8} parent=0 // pred_check
    _
  $region11: #{encoder_forward.8} parent=0 // pred_check_branch
    %15 = sbr.rel (0) target = $region13
  $region12: #{encoder_forward.8} parent=0 // pred_region
    _
  $region13: #{encoder_forward.8} parent=0 // pred_fallthru
    _
  // Predicated region
  $region14: #{encoder_forward.8} parent=0 // pred_check
    _
  $region15: #{encoder_forward.8} parent=0 // pred_check_branch
    %17 = sbr.rel (0) target = $region17
  $region16: #{encoder_forward.8} parent=0 // pred_region
    _
  $region17: #{encoder_forward.8} parent=0 // pred_fallthru
    _
  // Predicated region
  $region18: #{encoder_forward.8} parent=0 // pred_check
    _
  $region19: #{encoder_forward.8} parent=0 // pred_check_branch
    %19 = sbr.rel (0) target = $region21
  $region20: #{encoder_forward.8} parent=0 // pred_region
    _
  $region21: #{encoder_forward.8} parent=0 // pred_fallthru
    _
  %v20 = vld [vmem:[%s0] sm:$0xff]
  %v21 = vld [vmem:[%s0 + $0x8] sm:$0xff]
  %v22 = vld [vmem:[%s0 + $0x10] sm:$0xff]
  %v23 = vld [vmem:[%s0 + $0x18] sm:$0xff]
  %v24 = vld [vmem:[%s0 + $0x20] sm:$0xff]
  %v25 = vld [vmem:[%s0 + $0x28] sm:$0xff]
  %v26 = vld [vmem:[%s0 + $0x30] sm:$0xff]
  %v27 = vld [vmem:[%s0 + $0x38] sm:$0xff]
  %v28 = vld [vmem:[%s0 + $0x40] sm:$0xff]
  %v29 = vld [vmem:[%s0 + $0x48] sm:$0xff]
  %v30 = vld [vmem:[%s0 + $0x50] sm:$0xff]
  %v31 = vld [vmem:[%s0 + $0x58] sm:$0xff]
  %v32 = vld [vmem:[%s0 + $0x60] sm:$0xff]
  %v33 = vld [vmem:[%s0 + $0x68] sm:$0xff]
  %v34 = vld [vmem:[%s0 + $0x70] sm:$0xff]
  %v35 = vld [vmem:[%s0 + $0x78] sm:$0xff]
  %v36 = vld [vmem:[%s1] sm:$0xff]
  %v37 = vld [vmem:[%s1 + $0x8] sm:$0xff]
  %v38 = vld [vmem:[%s1 + $0x10] sm:$0xff]
  %v39 = vld [vmem:[%s1 + $0x18] sm:$0xff]
  %v40 = vld [vmem:[%s1 + $0x20] sm:$0xff]
  %v41 = vld [vmem:[%s1 + $0x28] sm:$0xff]
  %v42 = vld [vmem:[%s1 + $0x30] sm:$0xff]
  %v43 = vld [vmem:[%s1 + $0x38] sm:$0xff]
  %v44 = vld [vmem:[%s2] sm:$0x1]
  %v46 = vlaneseq
  %v47 = vshrl.u32 %v46, 7
  %v48 = vsub.s32 0, %v47
  %v49 = vrot.slane %v44, %v48
  %vm51 = vcmask 523264
  %v53 = vsel %vm51, %v20, 0
  %v56 = vsel %vm51, %v21, 0
  %v59 = vsel %vm51, %v22, 0
  %v62 = vsel %vm51, %v23, 0
  %v65 = vsel %vm51, %v24, 0
  %v68 = vsel %vm51, %v25, 0
  %v71 = vsel %vm51, %v26, 0
  %v74 = vsel %vm51, %v27, 0
  %v77 = vsel %vm51, %v28, 0
  %v80 = vsel %vm51, %v29, 0
  %v83 = vsel %vm51, %v30, 0
  %v86 = vsel %vm51, %v31, 0
  %v89 = vsel %vm51, %v32, 0
  %v92 = vsel %vm51, %v33, 0
  %v95 = vsel %vm51, %v34, 0
  %v98 = vsel %vm51, %v35, 0
  %100 = vmatprep.subr.mxu0 0.0
  %101 = vmatpush1.msra.mxu0 %v36
  %102 = vmatprep.subr.mxu0 0.0
  %103 = vmatpush1.msra.mxu0 %v37
  %104 = vmatprep.subr.mxu0 0.0
  %105 = vmatpush1.msra.mxu0 %v38
  %106 = vmatprep.subr.mxu0 0.0
  %107 = vmatpush1.msra.mxu0 %v39
  %108 = vmatprep.subr.mxu0 0.0
  %109 = vmatpush1.msra.mxu0 %v40
  %110 = vmatprep.subr.mxu0 0.0
  %111 = vmatpush1.msra.mxu0 %v41
  %112 = vmatprep.subr.mxu0 0.0
  %113 = vmatpush1.msra.mxu0 %v42
  %114 = vmatprep.subr.mxu0 0.0
  %115 = vmatpush1.msra.mxu0 %v43
  %116 = vmatprep.subr.mxu0 0.0
  %117 = vmatpush1.msra.mxu0 0.0
  %118 = vmatprep.subr.mxu0 0.0
  %119 = vmatpush1.msra.mxu0 0.0
  %120 = vmatprep.subr.mxu0 0.0
  %121 = vmatpush1.msra.mxu0 0.0
  %122 = vmatprep.subr.mxu0 0.0
  %123 = vmatpush1.msra.mxu0 0.0
  %124 = vmatprep.subr.mxu0 0.0
  %125 = vmatpush1.msra.mxu0 0.0
  %126 = vmatprep.subr.mxu0 0.0
  %127 = vmatpush1.msra.mxu0 0.0
  %128 = vmatprep.subr.mxu0 0.0
  %129 = vmatpush1.msra.mxu0 0.0
  %130 = vmatprep.subr.mxu0 0.0
  %131 = vmatpush1.msra.mxu0 0.0
  %132 = vmatprep.subr.mxu0 0.0
  %133 = vmatpush1.msra.mxu0 0.0
  %134 = vmatprep.subr.mxu0 0.0
  %135 = vmatpush1.msra.mxu0 0.0
  %136 = vmatprep.subr.mxu0 0.0
  %137 = vmatpush1.msra.mxu0 0.0
  %138 = vmatprep.subr.mxu0 0.0
  %139 = vmatpush1.msra.mxu0 0.0
  %140 = vmatprep.subr.mxu0 0.0
  %141 = vmatpush1.msra.mxu0 0.0
  %142 = vmatprep.subr.mxu0 0.0
  %143 = vmatpush1.msra.mxu0 0.0
  %144 = vmatprep.subr.mxu0 0.0
  %145 = vmatpush1.msra.mxu0 0.0
  %146 = vmatprep.subr.mxu0 0.0
  %147 = vmatpush1.msra.mxu0 0.0
  %148 = vmatprep.subr.mxu0 0.0
  %149 = vmatpush1.msra.mxu0 0.0
  %150 = vmatprep.subr.mxu0 0.0
  %151 = vmatpush1.msra.mxu0 0.0
  %152 = vmatprep.subr.mxu0 0.0
  %153 = vmatpush1.msra.mxu0 0.0
  %154 = vmatprep.subr.mxu0 0.0
  %155 = vmatpush1.msra.mxu0 0.0
  %156 = vmatprep.subr.mxu0 0.0
  %157 = vmatpush1.msra.mxu0 0.0
  %158 = vmatprep.subr.mxu0 0.0
  %159 = vmatpush1.msra.mxu0 0.0
  %160 = vmatprep.subr.mxu0 0.0
  %161 = vmatpush1.msra.mxu0 0.0
  %162 = vmatprep.subr.mxu0 0.0
  %163 = vmatpush1.msra.mxu0 0.0
  %164 = vmatprep.mubr.f32.mxu0 0.0
  %165 = vmatmul.mubr.f32.gmra.mrb[0].mxu0 %v53
  %v166 = vpop.f32.mrb[0].mxu0
  %v167 = vadd.f32 %v49, %v166
  %v168 = vpop.f32.mrb[0].mxu0
  %169 = vmatprep.mubr.f32.mxu0 0.0
  %170 = vmatmul.mubr.f32.gmra.mrb[0].mxu0 %v56
  %v171 = vpop.f32.mrb[0].mxu0
  %v172 = vadd.f32 %v49, %v171
  %v173 = vpop.f32.mrb[0].mxu0
  %174 = vmatprep.mubr.f32.mxu0 0.0
  %175 = vmatmul.mubr.f32.gmra.mrb[0].mxu0 %v59
  %v176 = vpop.f32.mrb[0].mxu0
  %v177 = vadd.f32 %v49, %v176
  %v178 = vpop.f32.mrb[0].mxu0
  %179 = vmatprep.mubr.f32.mxu0 0.0
  %180 = vmatmul.mubr.f32.gmra.mrb[0].mxu0 %v62
  %v181 = vpop.f32.mrb[0].mxu0
  %v182 = vadd.f32 %v49, %v181
  %v183 = vpop.f32.mrb[0].mxu0
  %184 = vmatprep.mubr.f32.mxu0 0.0
  %185 = vmatmul.mubr.f32.gmra.mrb[0].mxu0 %v65
  %v186 = vpop.f32.mrb[0].mxu0
  %v187 = vadd.f32 %v49, %v186
  %v188 = vpop.f32.mrb[0].mxu0
  %189 = vmatprep.mubr.f32.mxu0 0.0
  %190 = vmatmul.mubr.f32.gmra.mrb[0].mxu0 %v68
  %v191 = vpop.f32.mrb[0].mxu0
  %v192 = vadd.f32 %v49, %v191
  %v193 = vpop.f32.mrb[0].mxu0
  %194 = vmatprep.mubr.f32.mxu0 0.0
  %195 = vmatmul.mubr.f32.gmra.mrb[0].mxu0 %v71
  %v196 = vpop.f32.mrb[0].mxu0
  %v197 = vadd.f32 %v49, %v196
  %v198 = vpop.f32.mrb[0].mxu0
  %199 = vmatprep.mubr.f32.mxu0 0.0
  %200 = vmatmul.mubr.f32.gmra.mrb[0].mxu0 %v74
  %v201 = vpop.f32.mrb[0].mxu0
  %v202 = vadd.f32 %v49, %v201
  %v203 = vpop.f32.mrb[0].mxu0
  %204 = vmatprep.mubr.f32.mxu0 0.0
  %205 = vmatmul.mubr.f32.gmra.mrb[0].mxu0 %v77
  %v206 = vpop.f32.mrb[0].mxu0
  %v207 = vadd.f32 %v49, %v206
  %v208 = vpop.f32.mrb[0].mxu0
  %209 = vmatprep.mubr.f32.mxu0 0.0
  %210 = vmatmul.mubr.f32.gmra.mrb[0].mxu0 %v80
  %v211 = vpop.f32.mrb[0].mxu0
  %v212 = vadd.f32 %v49, %v211
  %v213 = vpop.f32.mrb[0].mxu0
  %214 = vmatprep.mubr.f32.mxu0 0.0
  %215 = vmatmul.mubr.f32.gmra.mrb[0].mxu0 %v83
  %v216 = vpop.f32.mrb[0].mxu0
  %v217 = vadd.f32 %v49, %v216
  %v218 = vpop.f32.mrb[0].mxu0
  %219 = vmatprep.mubr.f32.mxu0 0.0
  %220 = vmatmul.mubr.f32.gmra.mrb[0].mxu0 %v86
  %v221 = vpop.f32.mrb[0].mxu0
  %v222 = vadd.f32 %v49, %v221
  %v223 = vpop.f32.mrb[0].mxu0
  %224 = vmatprep.mubr.f32.mxu0 0.0
  %225 = vmatmul.mubr.f32.gmra.mrb[0].mxu0 %v89
  %v226 = vpop.f32.mrb[0].mxu0
  %v227 = vadd.f32 %v49, %v226
  %v228 = vpop.f32.mrb[0].mxu0
  %229 = vmatprep.mubr.f32.mxu0 0.0
  %230 = vmatmul.mubr.f32.gmra.mrb[0].mxu0 %v92
  %v231 = vpop.f32.mrb[0].mxu0
  %v232 = vadd.f32 %v49, %v231
  %v233 = vpop.f32.mrb[0].mxu0
  %234 = vmatprep.mubr.f32.mxu0 0.0
  %235 = vmatmul.mubr.f32.gmra.mrb[0].mxu0 %v95
  %v236 = vpop.f32.mrb[0].mxu0
  %v237 = vadd.f32 %v49, %v236
  %v238 = vpop.f32.mrb[0].mxu0
  %239 = vmatprep.mubr.f32.mxu0 0.0
  %240 = vmatmul.mubr.f32.gmra.mrb[0].mxu0 %v98
  %v241 = vpop.f32.mrb[0].mxu0
  %v242 = vadd.f32 %v49, %v241
  %v243 = vpop.f32.mrb[0].mxu0
  %244 = vdwg.mxu0
  %v245 = vmax.f32 %v167, 0.0
  %v246 = vmax.f32 %v172, 0.0
  %v247 = vmax.f32 %v177, 0.0
  %v248 = vmax.f32 %v182, 0.0
  %v249 = vmax.f32 %v187, 0.0
  %v250 = vmax.f32 %v192, 0.0
  %v251 = vmax.f32 %v197, 0.0
  %v252 = vmax.f32 %v202, 0.0
  %v253 = vmax.f32 %v207, 0.0
  %v254 = vmax.f32 %v212, 0.0
  %v255 = vmax.f32 %v217, 0.0
  %v256 = vmax.f32 %v222, 0.0
  %v257 = vmax.f32 %v227, 0.0
  %v258 = vmax.f32 %v232, 0.0
  %v259 = vmax.f32 %v237, 0.0
  %v260 = vmax.f32 %v242, 0.0
  %v261 = vld [vmem:[%s3] sm:$0xff]
  %v262 = vld [vmem:[%s3 + $0x8] sm:$0xff]
  %v263 = vld [vmem:[%s3 + $0x10] sm:$0xff]
  %v264 = vld [vmem:[%s3 + $0x18] sm:$0xff]
  %v265 = vld [vmem:[%s3 + $0x20] sm:$0xff]
  %v266 = vld [vmem:[%s3 + $0x28] sm:$0xff]
  %v267 = vld [vmem:[%s3 + $0x30] sm:$0xff]
  %v268 = vld [vmem:[%s3 + $0x38] sm:$0xff]
  %v269 = vld [vmem:[%s4] sm:$0x1]
  %v271 = vlaneseq
  %v272 = vshrl.u32 %v271, 7
  %v273 = vsub.s32 0, %v272
  %v274 = vrot.slane %v269, %v273
  %v277 = vsel %vm51, %v245, 0
  %v280 = vsel %vm51, %v246, 0
  %v283 = vsel %vm51, %v247, 0
  %v286 = vsel %vm51, %v248, 0
  %v289 = vsel %vm51, %v249, 0
  %v292 = vsel %vm51, %v250, 0
  %v295 = vsel %vm51, %v251, 0
  %v298 = vsel %vm51, %v252, 0
  %v301 = vsel %vm51, %v253, 0
  %v304 = vsel %vm51, %v254, 0
  %v307 = vsel %vm51, %v255, 0
  %v310 = vsel %vm51, %v256, 0
  %v313 = vsel %vm51, %v257, 0
  %v316 = vsel %vm51, %v258, 0
  %v319 = vsel %vm51, %v259, 0
  %v322 = vsel %vm51, %v260, 0
  %324 = vmatprep.subr.mxu0 0.0
  %325 = vmatpush1.msra.mxu0 %v261
  %326 = vmatprep.subr.mxu0 0.0
  %327 = vmatpush1.msra.mxu0 %v262
  %328 = vmatprep.subr.mxu0 0.0
  %329 = vmatpush1.msra.mxu0 %v263
  %330 = vmatprep.subr.mxu0 0.0
  %331 = vmatpush1.msra.mxu0 %v264
  %332 = vmatprep.subr.mxu0 0.0
  %333 = vmatpush1.msra.mxu0 %v265
  %334 = vmatprep.subr.mxu0 0.0
  %335 = vmatpush1.msra.mxu0 %v266
  %336 = vmatprep.subr.mxu0 0.0
  %337 = vmatpush1.msra.mxu0 %v267
  %338 = vmatprep.subr.mxu0 0.0
  %339 = vmatpush1.msra.mxu0 %v268
  %340 = vmatprep.subr.mxu0 0.0
  %341 = vmatpush1.msra.mxu0 0.0
  %342 = vmatprep.subr.mxu0 0.0
  %343 = vmatpush1.msra.mxu0 0.0
  %344 = vmatprep.subr.mxu0 0.0
  %345 = vmatpush1.msra.mxu0 0.0
  %346 = vmatprep.subr.mxu0 0.0
  %347 = vmatpush1.msra.mxu0 0.0
  %348 = vmatprep.subr.mxu0 0.0
  %349 = vmatpush1.msra.mxu0 0.0
  %350 = vmatprep.subr.mxu0 0.0
  %351 = vmatpush1.msra.mxu0 0.0
  %352 = vmatprep.subr.mxu0 0.0
  %353 = vmatpush1.msra.mxu0 0.0
  %354 = vmatprep.subr.mxu0 0.0
  %355 = vmatpush1.msra.mxu0 0.0
  %356 = vmatprep.subr.mxu0 0.0
  %357 = vmatpush1.msra.mxu0 0.0
  %358 = vmatprep.subr.mxu0 0.0
  %359 = vmatpush1.msra.mxu0 0.0
  %360 = vmatprep.subr.mxu0 0.0
  %361 = vmatpush1.msra.mxu0 0.0
  %362 = vmatprep.subr.mxu0 0.0
  %363 = vmatpush1.msra.mxu0 0.0
  %364 = vmatprep.subr.mxu0 0.0
  %365 = vmatpush1.msra.mxu0 0.0
  %366 = vmatprep.subr.mxu0 0.0
  %367 = vmatpush1.msra.mxu0 0.0
  %368 = vmatprep.subr.mxu0 0.0
  %369 = vmatpush1.msra.mxu0 0.0
  %370 = vmatprep.subr.mxu0 0.0
  %371 = vmatpush1.msra.mxu0 0.0
  %372 = vmatprep.subr.mxu0 0.0
  %373 = vmatpush1.msra.mxu0 0.0
  %374 = vmatprep.subr.mxu0 0.0
  %375 = vmatpush1.msra.mxu0 0.0
  %376 = vmatprep.subr.mxu0 0.0
  %377 = vmatpush1.msra.mxu0 0.0
  %378 = vmatprep.subr.mxu0 0.0
  %379 = vmatpush1.msra.mxu0 0.0
  %380 = vmatprep.subr.mxu0 0.0
  %381 = vmatpush1.msra.mxu0 0.0
  %382 = vmatprep.subr.mxu0 0.0
  %383 = vmatpush1.msra.mxu0 0.0
  %384 = vmatprep.subr.mxu0 0.0
  %385 = vmatpush1.msra.mxu0 0.0
  %386 = vmatprep.subr.mxu0 0.0
  %387 = vmatpush1.msra.mxu0 0.0
  %388 = vmatprep.mubr.f32.mxu0 0.0
  %389 = vmatmul.mubr.f32.gmra.mrb[0].mxu0 %v277
  %v390 = vpop.f32.mrb[0].mxu0
  %v391 = vadd.f32 %v274, %v390
  %v392 = vpop.f32.mrb[0].mxu0
  %393 = vmatprep.mubr.f32.mxu0 0.0
  %394 = vmatmul.mubr.f32.gmra.mrb[0].mxu0 %v280
  %v395 = vpop.f32.mrb[0].mxu0
  %v396 = vadd.f32 %v274, %v395
  %v397 = vpop.f32.mrb[0].mxu0
  %398 = vmatprep.mubr.f32.mxu0 0.0
  %399 = vmatmul.mubr.f32.gmra.mrb[0].mxu0 %v283
  %v400 = vpop.f32.mrb[0].mxu0
  %v401 = vadd.f32 %v274, %v400
  %v402 = vpop.f32.mrb[0].mxu0
  %403 = vmatprep.mubr.f32.mxu0 0.0
  %404 = vmatmul.mubr.f32.gmra.mrb[0].mxu0 %v286
  %v405 = vpop.f32.mrb[0].mxu0
  %v406 = vadd.f32 %v274, %v405
  %v407 = vpop.f32.mrb[0].mxu0
  %408 = vmatprep.mubr.f32.mxu0 0.0
  %409 = vmatmul.mubr.f32.gmra.mrb[0].mxu0 %v289
  %v410 = vpop.f32.mrb[0].mxu0
  %v411 = vadd.f32 %v274, %v410
  %v412 = vpop.f32.mrb[0].mxu0
  %413 = vmatprep.mubr.f32.mxu0 0.0
  %414 = vmatmul.mubr.f32.gmra.mrb[0].mxu0 %v292
  %v415 = vpop.f32.mrb[0].mxu0
  %v416 = vadd.f32 %v274, %v415
  %v417 = vpop.f32.mrb[0].mxu0
  %418 = vmatprep.mubr.f32.mxu0 0.0
  %419 = vmatmul.mubr.f32.gmra.mrb[0].mxu0 %v295
  %v420 = vpop.f32.mrb[0].mxu0
  %v421 = vadd.f32 %v274, %v420
  %v422 = vpop.f32.mrb[0].mxu0
  %423 = vmatprep.mubr.f32.mxu0 0.0
  %424 = vmatmul.mubr.f32.gmra.mrb[0].mxu0 %v298
  %v425 = vpop.f32.mrb[0].mxu0
  %v426 = vadd.f32 %v274, %v425
  %v427 = vpop.f32.mrb[0].mxu0
  %428 = vmatprep.mubr.f32.mxu0 0.0
  %429 = vmatmul.mubr.f32.gmra.mrb[0].mxu0 %v301
  %v430 = vpop.f32.mrb[0].mxu0
  %v431 = vadd.f32 %v274, %v430
  %v432 = vpop.f32.mrb[0].mxu0
  %433 = vmatprep.mubr.f32.mxu0 0.0
  %434 = vmatmul.mubr.f32.gmra.mrb[0].mxu0 %v304
  %v435 = vpop.f32.mrb[0].mxu0
  %v436 = vadd.f32 %v274, %v435
  %v437 = vpop.f32.mrb[0].mxu0
  %438 = vmatprep.mubr.f32.mxu0 0.0
  %439 = vmatmul.mubr.f32.gmra.mrb[0].mxu0 %v307
  %v440 = vpop.f32.mrb[0].mxu0
  %v441 = vadd.f32 %v274, %v440
  %v442 = vpop.f32.mrb[0].mxu0
  %443 = vmatprep.mubr.f32.mxu0 0.0
  %444 = vmatmul.mubr.f32.gmra.mrb[0].mxu0 %v310
  %v445 = vpop.f32.mrb[0].mxu0
  %v446 = vadd.f32 %v274, %v445
  %v447 = vpop.f32.mrb[0].mxu0
  %448 = vmatprep.mubr.f32.mxu0 0.0
  %449 = vmatmul.mubr.f32.gmra.mrb[0].mxu0 %v313
  %v450 = vpop.f32.mrb[0].mxu0
  %v451 = vadd.f32 %v274, %v450
  %v452 = vpop.f32.mrb[0].mxu0
  %453 = vmatprep.mubr.f32.mxu0 0.0
  %454 = vmatmul.mubr.f32.gmra.mrb[0].mxu0 %v316
  %v455 = vpop.f32.mrb[0].mxu0
  %v456 = vadd.f32 %v274, %v455
  %v457 = vpop.f32.mrb[0].mxu0
  %458 = vmatprep.mubr.f32.mxu0 0.0
  %459 = vmatmul.mubr.f32.gmra.mrb[0].mxu0 %v319
  %v460 = vpop.f32.mrb[0].mxu0
  %v461 = vadd.f32 %v274, %v460
  %v462 = vpop.f32.mrb[0].mxu0
  %463 = vmatprep.mubr.f32.mxu0 0.0
  %464 = vmatmul.mubr.f32.gmra.mrb[0].mxu0 %v322
  %v465 = vpop.f32.mrb[0].mxu0
  %v466 = vadd.f32 %v274, %v465
  %v467 = vpop.f32.mrb[0].mxu0
  %468 = vdwg.mxu0
  %vm469 = vcmask 15360
  %v470 = vsel %vm469, %v391, -inf
  %471 = vmax.xlane.f32.xlu0 %v470
  %v472 = vpop.xlane.xlu0 %471
  %v473 = vsel %vm469, %v396, -inf
  %474 = vmax.xlane.f32.xlu0 %v473
  %v475 = vpop.xlane.xlu0 %474
  %v476 = vsel %vm469, %v401, -inf
  %477 = vmax.xlane.f32.xlu0 %v476
  %v478 = vpop.xlane.xlu0 %477
  %v479 = vsel %vm469, %v406, -inf
  %480 = vmax.xlane.f32.xlu0 %v479
  %v481 = vpop.xlane.xlu0 %480
  %v482 = vsel %vm469, %v411, -inf
  %483 = vmax.xlane.f32.xlu0 %v482
  %v484 = vpop.xlane.xlu0 %483
  %v485 = vsel %vm469, %v416, -inf
  %486 = vmax.xlane.f32.xlu0 %v485
  %v487 = vpop.xlane.xlu0 %486
  %v488 = vsel %vm469, %v421, -inf
  %489 = vmax.xlane.f32.xlu0 %v488
  %v490 = vpop.xlane.xlu0 %489
  %v491 = vsel %vm469, %v426, -inf
  %492 = vmax.xlane.f32.xlu0 %v491
  %v493 = vpop.xlane.xlu0 %492
  %v494 = vsel %vm469, %v431, -inf
  %495 = vmax.xlane.f32.xlu0 %v494
  %v496 = vpop.xlane.xlu0 %495
  %v497 = vsel %vm469, %v436, -inf
  %498 = vmax.xlane.f32.xlu0 %v497
  %v499 = vpop.xlane.xlu0 %498
  %v500 = vsel %vm469, %v441, -inf
  %501 = vmax.xlane.f32.xlu0 %v500
  %v502 = vpop.xlane.xlu0 %501
  %v503 = vsel %vm469, %v446, -inf
  %504 = vmax.xlane.f32.xlu0 %v503
  %v505 = vpop.xlane.xlu0 %504
  %v506 = vsel %vm469, %v451, -inf
  %507 = vmax.xlane.f32.xlu0 %v506
  %v508 = vpop.xlane.xlu0 %507
  %v509 = vsel %vm469, %v456, -inf
  %510 = vmax.xlane.f32.xlu0 %v509
  %v511 = vpop.xlane.xlu0 %510
  %v512 = vsel %vm469, %v461, -inf
  %513 = vmax.xlane.f32.xlu0 %v512
  %v514 = vpop.xlane.xlu0 %513
  %v515 = vsel %vm469, %v466, -inf
  %516 = vmax.xlane.f32.xlu0 %v515
  %v517 = vpop.xlane.xlu0 %516
  %v518 = vsub.f32 %v391, %v472
  %v519 = vsub.f32 %v396, %v475
  %v520 = vsub.f32 %v401, %v478
  %v521 = vsub.f32 %v406, %v481
  %v522 = vsub.f32 %v411, %v484
  %v523 = vsub.f32 %v416, %v487
  %v524 = vsub.f32 %v421, %v490
  %v525 = vsub.f32 %v426, %v493
  %v526 = vsub.f32 %v431, %v496
  %v527 = vsub.f32 %v436, %v499
  %v528 = vsub.f32 %v441, %v502
  %v529 = vsub.f32 %v446, %v505
  %v530 = vsub.f32 %v451, %v508
  %v531 = vsub.f32 %v456, %v511
  %v532 = vsub.f32 %v461, %v514
  %v533 = vsub.f32 %v466, %v517
  %v534 = vmul.f32 %v518, 1.442695
  %v535 = vpow.pop %v534
  %v536 = vmul.f32 %v519, 1.442695
  %v537 = vpow.pop %v536
  %v538 = vmul.f32 %v520, 1.442695
  %v539 = vpow.pop %v538
  %v540 = vmul.f32 %v521, 1.442695
  %v541 = vpow.pop %v540
  %v542 = vmul.f32 %v522, 1.442695
  %v543 = vpow.pop %v542
  %v544 = vmul.f32 %v523, 1.442695
  %v545 = vpow.pop %v544
  %v546 = vmul.f32 %v524, 1.442695
  %v547 = vpow.pop %v546
  %v548 = vmul.f32 %v525, 1.442695
  %v549 = vpow.pop %v548
  %v550 = vmul.f32 %v526, 1.442695
  %v551 = vpow.pop %v550
  %v552 = vmul.f32 %v527, 1.442695
  %v553 = vpow.pop %v552
  %v554 = vmul.f32 %v528, 1.442695
  %v555 = vpow.pop %v554
  %v556 = vmul.f32 %v529, 1.442695
  %v557 = vpow.pop %v556
  %v558 = vmul.f32 %v530, 1.442695
  %v559 = vpow.pop %v558
  %v560 = vmul.f32 %v531, 1.442695
  %v561 = vpow.pop %v560
  %v562 = vmul.f32 %v532, 1.442695
  %v563 = vpow.pop %v562
  %v564 = vmul.f32 %v533, 1.442695
  %v565 = vpow.pop %v564
  %v566 = vsel %vm469, %v535, 0.0
  %567 = vadd.xlane.f32.xlu0 %v566
  %v568 = vpop.xlane.xlu0 %567
  %v569 = vsel %vm469, %v537, 0.0
  %570 = vadd.xlane.f32.xlu0 %v569
  %v571 = vpop.xlane.xlu0 %570
  %v572 = vsel %vm469, %v539, 0.0
  %573 = vadd.xlane.f32.xlu0 %v572
  %v574 = vpop.xlane.xlu0 %573
  %v575 = vsel %vm469, %v541, 0.0
  %576 = vadd.xlane.f32.xlu0 %v575
  %v577 = vpop.xlane.xlu0 %576
  %v578 = vsel %vm469, %v543, 0.0
  %579 = vadd.xlane.f32.xlu0 %v578
  %v580 = vpop.xlane.xlu0 %579
  %v581 = vsel %vm469, %v545, 0.0
  %582 = vadd.xlane.f32.xlu0 %v581
  %v583 = vpop.xlane.xlu0 %582
  %v584 = vsel %vm469, %v547, 0.0
  %585 = vadd.xlane.f32.xlu0 %v584
  %v586 = vpop.xlane.xlu0 %585
  %v587 = vsel %vm469, %v549, 0.0
  %588 = vadd.xlane.f32.xlu0 %v587
  %v589 = vpop.xlane.xlu0 %588
  %v590 = vsel %vm469, %v551, 0.0
  %591 = vadd.xlane.f32.xlu0 %v590
  %v592 = vpop.xlane.xlu0 %591
  %v593 = vsel %vm469, %v553, 0.0
  %594 = vadd.xlane.f32.xlu0 %v593
  %v595 = vpop.xlane.xlu0 %594
  %v596 = vsel %vm469, %v555, 0.0
  %597 = vadd.xlane.f32.xlu0 %v596
  %v598 = vpop.xlane.xlu0 %597
  %v599 = vsel %vm469, %v557, 0.0
  %600 = vadd.xlane.f32.xlu0 %v599
  %v601 = vpop.xlane.xlu0 %600
  %v602 = vsel %vm469, %v559, 0.0
  %603 = vadd.xlane.f32.xlu0 %v602
  %v604 = vpop.xlane.xlu0 %603
  %v605 = vsel %vm469, %v561, 0.0
  %606 = vadd.xlane.f32.xlu0 %v605
  %v607 = vpop.xlane.xlu0 %606
  %v608 = vsel %vm469, %v563, 0.0
  %609 = vadd.xlane.f32.xlu0 %v608
  %v610 = vpop.xlane.xlu0 %609
  %v611 = vsel %vm469, %v565, 0.0
  %612 = vadd.xlane.f32.xlu0 %v611
  %v613 = vpop.xlane.xlu0 %612
  %v614 = vrcp.pop %v568
  %v615 = vmul.f32 %v535, %v614
  %v616 = vrcp.pop %v571
  %v617 = vmul.f32 %v537, %v616
  %v618 = vrcp.pop %v574
  %v619 = vmul.f32 %v539, %v618
  %v620 = vrcp.pop %v577
  %v621 = vmul.f32 %v541, %v620
  %v622 = vrcp.pop %v580
  %v623 = vmul.f32 %v543, %v622
  %v624 = vrcp.pop %v583
  %v625 = vmul.f32 %v545, %v624
  %v626 = vrcp.pop %v586
  %v627 = vmul.f32 %v547, %v626
  %v628 = vrcp.pop %v589
  %v629 = vmul.f32 %v549, %v628
  %v630 = vrcp.pop %v592
  %v631 = vmul.f32 %v551, %v630
  %v632 = vrcp.pop %v595
  %v633 = vmul.f32 %v553, %v632
  %v634 = vrcp.pop %v598
  %v635 = vmul.f32 %v555, %v634
  %v636 = vrcp.pop %v601
  %v637 = vmul.f32 %v557, %v636
  %v638 = vrcp.pop %v604
  %v639 = vmul.f32 %v559, %v638
  %v640 = vrcp.pop %v607
  %v641 = vmul.f32 %v561, %v640
  %v642 = vrcp.pop %v610
  %v643 = vmul.f32 %v563, %v642
  %v644 = vrcp.pop %v613
  %v645 = vmul.f32 %v565, %v644
  %646 = vst.msk [vmem:[%s5] sm:$0xff] %vm469, %v615
  %647 = vst.msk [vmem:[%s5 + $0x8] sm:$0xff] %vm469, %v617
  %648 = vst.msk [vmem:[%s5 + $0x10] sm:$0xff] %vm469, %v619
  %649 = vst.msk [vmem:[%s5 + $0x18] sm:$0xff] %vm469, %v621
  %650 = vst.msk [vmem:[%s5 + $0x20] sm:$0xff] %vm469, %v623
  %651 = vst.msk [vmem:[%s5 + $0x28] sm:$0xff] %vm469, %v625
  %652 = vst.msk [vmem:[%s5 + $0x30] sm:$0xff] %vm469, %v627
  %653 = vst.msk [vmem:[%s5 + $0x38] sm:$0xff] %vm469, %v629
  %654 = vst.msk [vmem:[%s5 + $0x40] sm:$0xff] %vm469, %v631
  %655 = vst.msk [vmem:[%s5 + $0x48] sm:$0xff] %vm469, %v633
  %656 = vst.msk [vmem:[%s5 + $0x50] sm:$0xff] %vm469, %v635
  %657 = vst.msk [vmem:[%s5 + $0x58] sm:$0xff] %vm469, %v637
  %658 = vst.msk [vmem:[%s5 + $0x60] sm:$0xff] %vm469, %v639
  %659 = vst.msk [vmem:[%s5 + $0x68] sm:$0xff] %vm469, %v641
  %660 = vst.msk [vmem:[%s5 + $0x70] sm:$0xff] %vm469, %v643
  %661 = vst.msk [vmem:[%s5 + $0x78] sm:$0xff] %vm469, %v645
  // Predicated region
  $region22: #{encoder_forward.8} parent=0 // pred_check
    _
  $region23: #{encoder_forward.8} parent=0 // pred_check_branch
    %663 = sbr.rel (0) target = $region25
  $region24: #{encoder_forward.8} parent=0 // pred_region
    _
  $region25: #{encoder_forward.8} parent=0 // pred_fallthru
    _
  // Predicated region
  $region26: #{encoder_forward.8} parent=0 // pred_check
    _
  $region27: #{encoder_forward.8} parent=0 // pred_check_branch
    %665 = sbr.rel (0) target = $region29
  $region28: #{encoder_forward.8} parent=0 // pred_region
    _
  $region29: #{encoder_forward.8} parent=0 // pred_fallthru
    _

// kernel: mul.2
$region0: #{mul.2}
  #allocation0 [shape = 's32[1]{0}', space=sflag, size = 0x4, scoped, tag = 'scoped memory for mul.2']
  %s0 = inlined_call_operand.vmem [shape: f32[32], index: 0, kind: input, shape index: {}]
  %s1 = inlined_call_operand.vmem [shape: f32[32], index: 1, kind: input, shape index: {}]
  %s2 = inlined_call_operand.vmem [shape: f32[32], index: 2, kind: output, shape index: {}]
  %v3 = vld [vmem:[%s0] sm:$0x1]
  %v4 = vld [vmem:[%s1] sm:$0x1]
  %5 = xla_tuple %v3, %v4
  %6 = xla_tuple %5
  %v7 = vmul.f32 %v3, %v4
  %8 = xla_tuple %v7
  %9 = vst [vmem:[%s2] sm:$0x1] %v7

// kernel: encoder_forward.7
$region0: #{encoder_forward.7}
  #allocation0 [shape = 'u32[]', space=smem, size = 0x4, offset = 0x4, fixed_abs, tag = 'smem constant byte address 0x4 - core index']
  #allocation1 [shape = 'u32[144,128]{1,0:T(1,128)}', space=vmem, size = 0x12000, scoped, tag = 'internal scratch']
  #allocation2 [shape = 'f32[128,64]{1,0:T(8,128)}', space=vmem, size = 0x10000, scoped, tag = 'scratch operand']
  %s0 = inlined_call_operand.vmem [shape: bf16[1,128,128], index: 0, kind: input, shape index: {}]
  %s1 = inlined_call_operand.vmem [shape: bf16[1,128,64], index: 1, kind: input, shape index: {}]
  %s2 = inlined_call_operand.vmem [shape: f32[1,64,64], index: 2, kind: input, shape index: {}]
  %s3 = inlined_call_operand.vmem [shape: f32[1,1,64], index: 3, kind: input, shape index: {}]
  %s4 = inlined_call_operand.vmem [shape: f32[4,128], index: 4, kind: input, shape index: {}]
  %s5 = inlined_call_operand.vmem [shape: f32[1,128,64], index: 5, kind: output, shape index: {0}]
  %s6 = inlined_call_operand.vmem [shape: f32[1,1,4,64], index: 6, kind: output, shape index: {1}]
  %7 = xla_tuple %s5, %s6
  %s8 = sld [smem:[#allocation0]]
  $region46: #{encoder_forward.7} parent=0
    _
  %s10 = ssub.s32 1, %s8
  %s11 = scalar_select 0, %s10, %s8
  // Predicated region
  $region2: #{encoder_forward.7} parent=0 // pred_check
    _
  $region3: #{encoder_forward.7} parent=0 // pred_check_branch
    %13 = sbr.rel (0) target = $region5
  $region4: #{encoder_forward.7} parent=0 // pred_region
    _
  $region5: #{encoder_forward.7} parent=0 // pred_fallthru
    _
  // Predicated region
  $region6: #{encoder_forward.7} parent=0 // pred_check
    _
  $region7: #{encoder_forward.7} parent=0 // pred_check_branch
    %15 = sbr.rel (0) target = $region9
  $region8: #{encoder_forward.7} parent=0 // pred_region
    _
  $region9: #{encoder_forward.7} parent=0 // pred_fallthru
    _
  // Predicated region
  $region10: #{encoder_forward.7} parent=0 // pred_check
    _
  $region11: #{encoder_forward.7} parent=0 // pred_check_branch
    %17 = sbr.rel (0) target = $region13
  $region12: #{encoder_forward.7} parent=0 // pred_region
    _
  $region13: #{encoder_forward.7} parent=0 // pred_fallthru
    _
  // Predicated region
  $region14: #{encoder_forward.7} parent=0 // pred_check
    _
  $region15: #{encoder_forward.7} parent=0 // pred_check_branch
    %19 = sbr.rel (0) target = $region17
  $region16: #{encoder_forward.7} parent=0 // pred_region
    _
  $region17: #{encoder_forward.7} parent=0 // pred_fallthru
    _
  // Predicated region
  $region18: #{encoder_forward.7} parent=0 // pred_check
    _
  $region19: #{encoder_forward.7} parent=0 // pred_check_branch
    %21 = sbr.rel (0) target = $region21
  $region20: #{encoder_forward.7} parent=0 // pred_region
    _
  $region21: #{encoder_forward.7} parent=0 // pred_fallthru
    _
  %p23 = scmp.eq.s32.totalorder 0, 0
  // Predicated region
  $region22: #{encoder_forward.7} parent=0 // pred_check
    %p24 = pneg %p23
  $region23: #{encoder_forward.7} parent=0 // pred_check_branch
    %26 = sbr.rel (%p24) target = $region25
  $region24: #{encoder_forward.7} parent=0 // pred_region
    %vm27 = vcmask 523264
    %28 = vst.msk [vmem:[#allocation2] sm:$0xff] %vm27, 0.0
    %29 = vst.msk [vmem:[#allocation2 + $0x8] sm:$0xff] %vm27, 0.0
    %30 = vst.msk [vmem:[#allocation2 + $0x10] sm:$0xff] %vm27, 0.0
    %31 = vst.msk [vmem:[#allocation2 + $0x18] sm:$0xff] %vm27, 0.0
    %32 = vst.msk [vmem:[#allocation2 + $0x20] sm:$0xff] %vm27, 0.0
    %33 = vst.msk [vmem:[#allocation2 + $0x28] sm:$0xff] %vm27, 0.0
    %34 = vst.msk [vmem:[#allocation2 + $0x30] sm:$0xff] %vm27, 0.0
    %35 = vst.msk [vmem:[#allocation2 + $0x38] sm:$0xff] %vm27, 0.0
    %36 = vst.msk [vmem:[#allocation2 + $0x40] sm:$0xff] %vm27, 0.0
    %37 = vst.msk [vmem:[#allocation2 + $0x48] sm:$0xff] %vm27, 0.0
    %38 = vst.msk [vmem:[#allocation2 + $0x50] sm:$0xff] %vm27, 0.0
    %39 = vst.msk [vmem:[#allocation2 + $0x58] sm:$0xff] %vm27, 0.0
    %40 = vst.msk [vmem:[#allocation2 + $0x60] sm:$0xff] %vm27, 0.0
    %41 = vst.msk [vmem:[#allocation2 + $0x68] sm:$0xff] %vm27, 0.0
    %42 = vst.msk [vmem:[#allocation2 + $0x70] sm:$0xff] %vm27, 0.0
    %43 = vst.msk [vmem:[#allocation2 + $0x78] sm:$0xff] %vm27, 0.0
  $region25: #{encoder_forward.7} parent=0 // pred_fallthru
    _
  %v44 = vld [vmem:[#allocation2] sm:$0xff]
  %v45 = vld [vmem:[#allocation2 + $0x8] sm:$0xff]
  %v46 = vld [vmem:[#allocation2 + $0x10] sm:$0xff]
  %v47 = vld [vmem:[#allocation2 + $0x18] sm:$0xff]
  %v48 = vld [vmem:[#allocation2 + $0x20] sm:$0xff]
  %v49 = vld [vmem:[#allocation2 + $0x28] sm:$0xff]
  %v50 = vld [vmem:[#allocation2 + $0x30] sm:$0xff]
  %v51 = vld [vmem:[#allocation2 + $0x38] sm:$0xff]
  %v52 = vld [vmem:[#allocation2 + $0x40] sm:$0xff]
  %v53 = vld [vmem:[#allocation2 + $0x48] sm:$0xff]
  %v54 = vld [vmem:[#allocation2 + $0x50] sm:$0xff]
  %v55 = vld [vmem:[#allocation2 + $0x58] sm:$0xff]
  %v56 = vld [vmem:[#allocation2 + $0x60] sm:$0xff]
  %v57 = vld [vmem:[#allocation2 + $0x68] sm:$0xff]
  %v58 = vld [vmem:[#allocation2 + $0x70] sm:$0xff]
  %v59 = vld [vmem:[#allocation2 + $0x78] sm:$0xff]
  %v60 = vld [vmem:[%s0] sm:$0xf]
  %v61 = vld [vmem:[%s0 + $0x4] sm:$0xf]
  %v62 = vld [vmem:[%s0 + $0x8] sm:$0xf]
  %v63 = vld [vmem:[%s0 + $0xc] sm:$0xf]
  %v64 = vld [vmem:[%s0 + $0x10] sm:$0xf]
  %v65 = vld [vmem:[%s0 + $0x14] sm:$0xf]
  %v66 = vld [vmem:[%s0 + $0x18] sm:$0xf]
  %v67 = vld [vmem:[%s0 + $0x1c] sm:$0xf]
  %v68 = vld [vmem:[%s0 + $0x20] sm:$0xf]
  %v69 = vld [vmem:[%s0 + $0x24] sm:$0xf]
  %v70 = vld [vmem:[%s0 + $0x28] sm:$0xf]
  %v71 = vld [vmem:[%s0 + $0x2c] sm:$0xf]
  %v72 = vld [vmem:[%s0 + $0x30] sm:$0xf]
  %v73 = vld [vmem:[%s0 + $0x34] sm:$0xf]
  %v74 = vld [vmem:[%s0 + $0x38] sm:$0xf]
  %v75 = vld [vmem:[%s0 + $0x3c] sm:$0xf]
  %v76 = vld [vmem:[%s1] sm:$0xf]
  %v77 = vld [vmem:[%s1 + $0x4] sm:$0xf]
  %v78 = vld [vmem:[%s1 + $0x8] sm:$0xf]
  %v79 = vld [vmem:[%s1 + $0xc] sm:$0xf]
  %v80 = vld [vmem:[%s1 + $0x10] sm:$0xf]
  %v81 = vld [vmem:[%s1 + $0x14] sm:$0xf]
  %v82 = vld [vmem:[%s1 + $0x18] sm:$0xf]
  %v83 = vld [vmem:[%s1 + $0x1c] sm:$0xf]
  %v84 = vld [vmem:[%s1 + $0x20] sm:$0xf]
  %v85 = vld [vmem:[%s1 + $0x24] sm:$0xf]
  %v86 = vld [vmem:[%s1 + $0x28] sm:$0xf]
  %v87 = vld [vmem:[%s1 + $0x2c] sm:$0xf]
  %v88 = vld [vmem:[%s1 + $0x30] sm:$0xf]
  %v89 = vld [vmem:[%s1 + $0x34] sm:$0xf]
  %v90 = vld [vmem:[%s1 + $0x38] sm:$0xf]
  %v91 = vld [vmem:[%s1 + $0x3c] sm:$0xf]
  %v108 = vunpack.c.l.b16 %v60
  %v109 = vunpack.c.l.b16 %v61
  %v110 = vunpack.c.l.b16 %v62
  %v111 = vunpack.c.l.b16 %v63
  %v112 = vunpack.c.l.b16 %v64
  %v113 = vunpack.c.l.b16 %v65
  %v114 = vunpack.c.l.b16 %v66
  %v115 = vunpack.c.l.b16 %v67
  %v116 = vunpack.c.l.b16 %v68
  %v117 = vunpack.c.l.b16 %v69
  %v118 = vunpack.c.l.b16 %v70
  %v119 = vunpack.c.l.b16 %v71
  %v120 = vunpack.c.l.b16 %v72
  %v121 = vunpack.c.l.b16 %v73
  %v122 = vunpack.c.l.b16 %v74
  %v123 = vunpack.c.l.b16 %v75
  %v124 = vpack.c.b16 %v109, %v108
  %v125 = vpack.c.b16 %v111, %v110
  %v126 = vpack.c.b16 %v113, %v112
  %v127 = vpack.c.b16 %v115, %v114
  %v128 = vpack.c.b16 %v117, %v116
  %v129 = vpack.c.b16 %v119, %v118
  %v130 = vpack.c.b16 %v121, %v120
  %v131 = vpack.c.b16 %v123, %v122
  %v156 = vunpack.c.l.b16 %v76
  %v157 = vunpack.c.l.b16 %v77
  %v158 = vunpack.c.l.b16 %v78
  %v159 = vunpack.c.l.b16 %v79
  %v160 = vunpack.c.l.b16 %v80
  %v161 = vunpack.c.l.b16 %v81
  %v162 = vunpack.c.l.b16 %v82
  %v163 = vunpack.c.l.b16 %v83
  %v164 = vunpack.c.l.b16 %v84
  %v165 = vunpack.c.l.b16 %v85
  %v166 = vunpack.c.l.b16 %v86
  %v167 = vunpack.c.l.b16 %v87
  %v168 = vunpack.c.l.b16 %v88
  %v169 = vunpack.c.l.b16 %v89
  %v170 = vunpack.c.l.b16 %v90
  %v171 = vunpack.c.l.b16 %v91
  %v172 = vpack.c.b16 %v157, %v156
  %v173 = vpack.c.b16 %v159, %v158
  %v174 = vpack.c.b16 %v161, %v160
  %v175 = vpack.c.b16 %v163, %v162
  %v176 = vpack.c.b16 %v165, %v164
  %v177 = vpack.c.b16 %v167, %v166
  %v178 = vpack.c.b16 %v169, %v168
  %v179 = vpack.c.b16 %v171, %v170
  %188 = vmatprep.subr.bf16.mxu0 0
  %189 = vmatpush1.bf16.msra.mxu0 %v172
  %190 = vmatprep.subr.bf16.mxu0 0
  %191 = vmatpush1.bf16.msra.mxu0 %v173
  %192 = vmatprep.subr.bf16.mxu0 0
  %193 = vmatpush1.bf16.msra.mxu0 %v174
  %194 = vmatprep.subr.bf16.mxu0 0
  %195 = vmatpush1.bf16.msra.mxu0 %v175
  %196 = vmatprep.subr.bf16.mxu0 0
  %197 = vmatpush1.bf16.msra.mxu0 %v176
  %198 = vmatprep.subr.bf16.mxu0 0
  %199 = vmatpush1.bf16.msra.mxu0 %v177
  %200 = vmatprep.subr.bf16.mxu0 0
  %201 = vmatpush1.bf16.msra.mxu0 %v178
  %202 = vmatprep.subr.bf16.mxu0 0
  %203 = vmatpush1.bf16.msra.mxu0 %v179
  %204 = vmatprep.subr.bf16.mxu0 0
  %205 = vmatpush1.bf16.msra.mxu0 0
  %206 = vmatprep.subr.bf16.mxu0 0
  %207 = vmatpush1.bf16.msra.mxu0 0
  %208 = vmatprep.subr.bf16.mxu0 0
  %209 = vmatpush1.bf16.msra.mxu0 0
  %210 = vmatprep.subr.bf16.mxu0 0
  %211 = vmatpush1.bf16.msra.mxu0 0
  %212 = vmatprep.subr.bf16.mxu0 0
  %213 = vmatpush1.bf16.msra.mxu0 0
  %214 = vmatprep.subr.bf16.mxu0 0
  %215 = vmatpush1.bf16.msra.mxu0 0
  %216 = vmatprep.subr.bf16.mxu0 0
  %217 = vmatpush1.bf16.msra.mxu0 0
  %218 = vmatprep.subr.bf16.mxu0 0
  %219 = vmatpush1.bf16.msra.mxu0 0
  %220 = vmatprep.mubr.bf16.mxu0 0
  %221 = vmatmul.mubr.bf16.gmra.mrb[0].mxu0 %v124
  %v222 = vpop.f32.mrb[0].mxu0
  %v223 = vadd.f32 0.0, %v222
  %v224 = vpop.f32.mrb[0].mxu0
  %v225 = vpop.f32.mrb[0].mxu0
  %v226 = vadd.f32 0.0, %v225
  %v227 = vpop.f32.mrb[0].mxu0
  %228 = vmatprep.mubr.bf16.mxu0 0
  %229 = vmatmul.mubr.bf16.gmra.mrb[0].mxu0 %v125
  %v230 = vpop.f32.mrb[0].mxu0
  %v231 = vadd.f32 0.0, %v230
  %v232 = vpop.f32.mrb[0].mxu0
  %v233 = vpop.f32.mrb[0].mxu0
  %v234 = vadd.f32 0.0, %v233
  %v235 = vpop.f32.mrb[0].mxu0
  %236 = vmatprep.mubr.bf16.mxu0 0
  %237 = vmatmul.mubr.bf16.gmra.mrb[0].mxu0 %v126
  %v238 = vpop.f32.mrb[0].mxu0
  %v239 = vadd.f32 0.0, %v238
  %v240 = vpop.f32.mrb[0].mxu0
  %v241 = vpop.f32.mrb[0].mxu0
  %v242 = vadd.f32 0.0, %v241
  %v243 = vpop.f32.mrb[0].mxu0
  %244 = vmatprep.mubr.bf16.mxu0 0
  %245 = vmatmul.mubr.bf16.gmra.mrb[0].mxu0 %v127
  %v246 = vpop.f32.mrb[0].mxu0
  %v247 = vadd.f32 0.0, %v246
  %v248 = vpop.f32.mrb[0].mxu0
  %v249 = vpop.f32.mrb[0].mxu0
  %v250 = vadd.f32 0.0, %v249
  %v251 = vpop.f32.mrb[0].mxu0
  %252 = vmatprep.mubr.bf16.mxu0 0
  %253 = vmatmul.mubr.bf16.gmra.mrb[0].mxu0 %v128
  %v254 = vpop.f32.mrb[0].mxu0
  %v255 = vadd.f32 0.0, %v254
  %v256 = vpop.f32.mrb[0].mxu0
  %v257 = vpop.f32.mrb[0].mxu0
  %v258 = vadd.f32 0.0, %v257
  %v259 = vpop.f32.mrb[0].mxu0
  %260 = vmatprep.mubr.bf16.mxu0 0
  %261 = vmatmul.mubr.bf16.gmra.mrb[0].mxu0 %v129
  %v262 = vpop.f32.mrb[0].mxu0
  %v263 = vadd.f32 0.0, %v262
  %v264 = vpop.f32.mrb[0].mxu0
  %v265 = vpop.f32.mrb[0].mxu0
  %v266 = vadd.f32 0.0, %v265
  %v267 = vpop.f32.mrb[0].mxu0
  %268 = vmatprep.mubr.bf16.mxu0 0
  %269 = vmatmul.mubr.bf16.gmra.mrb[0].mxu0 %v130
  %v270 = vpop.f32.mrb[0].mxu0
  %v271 = vadd.f32 0.0, %v270
  %v272 = vpop.f32.mrb[0].mxu0
  %v273 = vpop.f32.mrb[0].mxu0
  %v274 = vadd.f32 0.0, %v273
  %v275 = vpop.f32.mrb[0].mxu0
  %276 = vmatprep.mubr.bf16.mxu0 0
  %277 = vmatmul.mubr.bf16.gmra.mrb[0].mxu0 %v131
  %v278 = vpop.f32.mrb[0].mxu0
  %v279 = vadd.f32 0.0, %v278
  %v280 = vpop.f32.mrb[0].mxu0
  %v281 = vpop.f32.mrb[0].mxu0
  %v282 = vadd.f32 0.0, %v281
  %v283 = vpop.f32.mrb[0].mxu0
  %284 = vdwg.mxu0
  %v285 = vadd.f32 %v44, %v223
  %v286 = vadd.f32 %v45, %v226
  %v287 = vadd.f32 %v46, %v231
  %v288 = vadd.f32 %v47, %v234
  %v289 = vadd.f32 %v48, %v239
  %v290 = vadd.f32 %v49, %v242
  %v291 = vadd.f32 %v50, %v247
  %v292 = vadd.f32 %v51, %v250
  %v293 = vadd.f32 %v52, %v255
  %v294 = vadd.f32 %v53, %v258
  %v295 = vadd.f32 %v54, %v263
  %v296 = vadd.f32 %v55, %v266
  %v297 = vadd.f32 %v56, %v271
  %v298 = vadd.f32 %v57, %v274
  %v299 = vadd.f32 %v58, %v279
  %v300 = vadd.f32 %v59, %v282
  %vm301 = vcmask 523264
  %302 = vst.msk [vmem:[#allocation2] sm:$0xff] %vm301, %v285
  %303 = vst.msk [vmem:[#allocation2 + $0x8] sm:$0xff] %vm301, %v286
  %304 = vst.msk [vmem:[#allocation2 + $0x10] sm:$0xff] %vm301, %v287
  %305 = vst.msk [vmem:[#allocation2 + $0x18] sm:$0xff] %vm301, %v288
  %306 = vst.msk [vmem:[#allocation2 + $0x20] sm:$0xff] %vm301, %v289
  %307 = vst.msk [vmem:[#allocation2 + $0x28] sm:$0xff] %vm301, %v290
  %308 = vst.msk [vmem:[#allocation2 + $0x30] sm:$0xff] %vm301, %v291
  %309 = vst.msk [vmem:[#allocation2 + $0x38] sm:$0xff] %vm301, %v292
  %310 = vst.msk [vmem:[#allocation2 + $0x40] sm:$0xff] %vm301, %v293
  %311 = vst.msk [vmem:[#allocation2 + $0x48] sm:$0xff] %vm301, %v294
  %312 = vst.msk [vmem:[#allocation2 + $0x50] sm:$0xff] %vm301, %v295
  %313 = vst.msk [vmem:[#allocation2 + $0x58] sm:$0xff] %vm301, %v296
  %314 = vst.msk [vmem:[#allocation2 + $0x60] sm:$0xff] %vm301, %v297
  %315 = vst.msk [vmem:[#allocation2 + $0x68] sm:$0xff] %vm301, %v298
  %316 = vst.msk [vmem:[#allocation2 + $0x70] sm:$0xff] %vm301, %v299
  %317 = vst.msk [vmem:[#allocation2 + $0x78] sm:$0xff] %vm301, %v300
  // Predicated region
  $region26: #{encoder_forward.7} parent=0 // pred_check
    %p318 = pneg %p23
  $region27: #{encoder_forward.7} parent=0 // pred_check_branch
    %320 = sbr.rel (%p318) target = $region29
  $region28: #{encoder_forward.7} parent=0 // pred_region
    %v321 = vld [vmem:[#allocation2] sm:$0xff]
    %v322 = vld [vmem:[#allocation2 + $0x8] sm:$0xff]
    %v323 = vld [vmem:[#allocation2 + $0x10] sm:$0xff]
    %v324 = vld [vmem:[#allocation2 + $0x18] sm:$0xff]
    %v325 = vld [vmem:[#allocation2 + $0x20] sm:$0xff]
    %v326 = vld [vmem:[#allocation2 + $0x28] sm:$0xff]
    %v327 = vld [vmem:[#allocation2 + $0x30] sm:$0xff]
    %v328 = vld [vmem:[#allocation2 + $0x38] sm:$0xff]
    %v329 = vld [vmem:[#allocation2 + $0x40] sm:$0xff]
    %v330 = vld [vmem:[#allocation2 + $0x48] sm:$0xff]
    %v331 = vld [vmem:[#allocation2 + $0x50] sm:$0xff]
    %v332 = vld [vmem:[#allocation2 + $0x58] sm:$0xff]
    %v333 = vld [vmem:[#allocation2 + $0x60] sm:$0xff]
    %v334 = vld [vmem:[#allocation2 + $0x68] sm:$0xff]
    %v335 = vld [vmem:[#allocation2 + $0x70] sm:$0xff]
    %v336 = vld [vmem:[#allocation2 + $0x78] sm:$0xff]
    %v337 = vld [vmem:[%s2] sm:$0xff]
    %v338 = vld [vmem:[%s2 + $0x8] sm:$0xff]
    %v339 = vld [vmem:[%s2 + $0x10] sm:$0xff]
    %v340 = vld [vmem:[%s2 + $0x18] sm:$0xff]
    %v341 = vld [vmem:[%s2 + $0x20] sm:$0xff]
    %v342 = vld [vmem:[%s2 + $0x28] sm:$0xff]
    %v343 = vld [vmem:[%s2 + $0x30] sm:$0xff]
    %v344 = vld [vmem:[%s2 + $0x38] sm:$0xff]
    %v345 = vld [vmem:[%s3] sm:$0x1]
    %v347 = vlaneseq
    %v348 = vshrl.u32 %v347, 7
    %v349 = vsub.s32 0, %v348
    %v350 = vrot.slane %v345, %v349
    %v353 = vsel %vm301, %v321, 0
    %v356 = vsel %vm301, %v322, 0
    %v359 = vsel %vm301, %v323, 0
    %v362 = vsel %vm301, %v324, 0
    %v365 = vsel %vm301, %v325, 0
    %v368 = vsel %vm301, %v326, 0
    %v371 = vsel %vm301, %v327, 0
    %v374 = vsel %vm301, %v328, 0
    %v377 = vsel %vm301, %v329, 0
    %v380 = vsel %vm301, %v330, 0
    %v383 = vsel %vm301, %v331, 0
    %v386 = vsel %vm301, %v332, 0
    %v389 = vsel %vm301, %v333, 0
    %v392 = vsel %vm301, %v334, 0
    %v395 = vsel %vm301, %v335, 0
    %v398 = vsel %vm301, %v336, 0
    %400 = vmatprep.subr.mxu0 0.0
    %401 = vmatpush1.msra.mxu0 %v337
    %402 = vmatprep.subr.mxu0 0.0
    %403 = vmatpush1.msra.mxu0 %v338
    %404 = vmatprep.subr.mxu0 0.0
    %405 = vmatpush1.msra.mxu0 %v339
    %406 = vmatprep.subr.mxu0 0.0
    %407 = vmatpush1.msra.mxu0 %v340
    %408 = vmatprep.subr.mxu0 0.0
    %409 = vmatpush1.msra.mxu0 %v341
    %410 = vmatprep.subr.mxu0 0.0
    %411 = vmatpush1.msra.mxu0 %v342
    %412 = vmatprep.subr.mxu0 0.0
    %413 = vmatpush1.msra.mxu0 %v343
    %414 = vmatprep.subr.mxu0 0.0
    %415 = vmatpush1.msra.mxu0 %v344
    %416 = vmatprep.subr.mxu0 0.0
    %417 = vmatpush1.msra.mxu0 0.0
    %418 = vmatprep.subr.mxu0 0.0
    %419 = vmatpush1.msra.mxu0 0.0
    %420 = vmatprep.subr.mxu0 0.0
    %421 = vmatpush1.msra.mxu0 0.0
    %422 = vmatprep.subr.mxu0 0.0
    %423 = vmatpush1.msra.mxu0 0.0
    %424 = vmatprep.subr.mxu0 0.0
    %425 = vmatpush1.msra.mxu0 0.0
    %426 = vmatprep.subr.mxu0 0.0
    %427 = vmatpush1.msra.mxu0 0.0
    %428 = vmatprep.subr.mxu0 0.0
    %429 = vmatpush1.msra.mxu0 0.0
    %430 = vmatprep.subr.mxu0 0.0
    %431 = vmatpush1.msra.mxu0 0.0
    %432 = vmatprep.subr.mxu0 0.0
    %433 = vmatpush1.msra.mxu0 0.0
    %434 = vmatprep.subr.mxu0 0.0
    %435 = vmatpush1.msra.mxu0 0.0
    %436 = vmatprep.subr.mxu0 0.0
    %437 = vmatpush1.msra.mxu0 0.0
    %438 = vmatprep.subr.mxu0 0.0
    %439 = vmatpush1.msra.mxu0 0.0
    %440 = vmatprep.subr.mxu0 0.0
    %441 = vmatpush1.msra.mxu0 0.0
    %442 = vmatprep.subr.mxu0 0.0
    %443 = vmatpush1.msra.mxu0 0.0
    %444 = vmatprep.subr.mxu0 0.0
    %445 = vmatpush1.msra.mxu0 0.0
    %446 = vmatprep.subr.mxu0 0.0
    %447 = vmatpush1.msra.mxu0 0.0
    %448 = vmatprep.subr.mxu0 0.0
    %449 = vmatpush1.msra.mxu0 0.0
    %450 = vmatprep.subr.mxu0 0.0
    %451 = vmatpush1.msra.mxu0 0.0
    %452 = vmatprep.subr.mxu0 0.0
    %453 = vmatpush1.msra.mxu0 0.0
    %454 = vmatprep.subr.mxu0 0.0
    %455 = vmatpush1.msra.mxu0 0.0
    %456 = vmatprep.subr.mxu0 0.0
    %457 = vmatpush1.msra.mxu0 0.0
    %458 = vmatprep.subr.mxu0 0.0
    %459 = vmatpush1.msra.mxu0 0.0
    %460 = vmatprep.subr.mxu0 0.0
    %461 = vmatpush1.msra.mxu0 0.0
    %462 = vmatprep.subr.mxu0 0.0
    %463 = vmatpush1.msra.mxu0 0.0
    %464 = vmatprep.mubr.f32.mxu0 0.0
    %465 = vmatmul.mubr.f32.gmra.mrb[0].mxu0 %v353
    %v466 = vpop.f32.mrb[0].mxu0
    %v467 = vadd.f32 %v350, %v466
    %v468 = vpop.f32.mrb[0].mxu0
    %469 = vmatprep.mubr.f32.mxu0 0.0
    %470 = vmatmul.mubr.f32.gmra.mrb[0].mxu0 %v356
    %v471 = vpop.f32.mrb[0].mxu0
    %v472 = vadd.f32 %v350, %v471
    %v473 = vpop.f32.mrb[0].mxu0
    %474 = vmatprep.mubr.f32.mxu0 0.0
    %475 = vmatmul.mubr.f32.gmra.mrb[0].mxu0 %v359
    %v476 = vpop.f32.mrb[0].mxu0
    %v477 = vadd.f32 %v350, %v476
    %v478 = vpop.f32.mrb[0].mxu0
    %479 = vmatprep.mubr.f32.mxu0 0.0
    %480 = vmatmul.mubr.f32.gmra.mrb[0].mxu0 %v362
    %v481 = vpop.f32.mrb[0].mxu0
    %v482 = vadd.f32 %v350, %v481
    %v483 = vpop.f32.mrb[0].mxu0
    %484 = vmatprep.mubr.f32.mxu0 0.0
    %485 = vmatmul.mubr.f32.gmra.mrb[0].mxu0 %v365
    %v486 = vpop.f32.mrb[0].mxu0
    %v487 = vadd.f32 %v350, %v486
    %v488 = vpop.f32.mrb[0].mxu0
    %489 = vmatprep.mubr.f32.mxu0 0.0
    %490 = vmatmul.mubr.f32.gmra.mrb[0].mxu0 %v368
    %v491 = vpop.f32.mrb[0].mxu0
    %v492 = vadd.f32 %v350, %v491
    %v493 = vpop.f32.mrb[0].mxu0
    %494 = vmatprep.mubr.f32.mxu0 0.0
    %495 = vmatmul.mubr.f32.gmra.mrb[0].mxu0 %v371
    %v496 = vpop.f32.mrb[0].mxu0
    %v497 = vadd.f32 %v350, %v496
    %v498 = vpop.f32.mrb[0].mxu0
    %499 = vmatprep.mubr.f32.mxu0 0.0
    %500 = vmatmul.mubr.f32.gmra.mrb[0].mxu0 %v374
    %v501 = vpop.f32.mrb[0].mxu0
    %v502 = vadd.f32 %v350, %v501
    %v503 = vpop.f32.mrb[0].mxu0
    %504 = vmatprep.mubr.f32.mxu0 0.0
    %505 = vmatmul.mubr.f32.gmra.mrb[0].mxu0 %v377
    %v506 = vpop.f32.mrb[0].mxu0
    %v507 = vadd.f32 %v350, %v506
    %v508 = vpop.f32.mrb[0].mxu0
    %509 = vmatprep.mubr.f32.mxu0 0.0
    %510 = vmatmul.mubr.f32.gmra.mrb[0].mxu0 %v380
    %v511 = vpop.f32.mrb[0].mxu0
    %v512 = vadd.f32 %v350, %v511
    %v513 = vpop.f32.mrb[0].mxu0
    %514 = vmatprep.mubr.f32.mxu0 0.0
    %515 = vmatmul.mubr.f32.gmra.mrb[0].mxu0 %v383
    %v516 = vpop.f32.mrb[0].mxu0
    %v517 = vadd.f32 %v350, %v516
    %v518 = vpop.f32.mrb[0].mxu0
    %519 = vmatprep.mubr.f32.mxu0 0.0
    %520 = vmatmul.mubr.f32.gmra.mrb[0].mxu0 %v386
    %v521 = vpop.f32.mrb[0].mxu0
    %v522 = vadd.f32 %v350, %v521
    %v523 = vpop.f32.mrb[0].mxu0
    %524 = vmatprep.mubr.f32.mxu0 0.0
    %525 = vmatmul.mubr.f32.gmra.mrb[0].mxu0 %v389
    %v526 = vpop.f32.mrb[0].mxu0
    %v527 = vadd.f32 %v350, %v526
    %v528 = vpop.f32.mrb[0].mxu0
    %529 = vmatprep.mubr.f32.mxu0 0.0
    %530 = vmatmul.mubr.f32.gmra.mrb[0].mxu0 %v392
    %v531 = vpop.f32.mrb[0].mxu0
    %v532 = vadd.f32 %v350, %v531
    %v533 = vpop.f32.mrb[0].mxu0
    %534 = vmatprep.mubr.f32.mxu0 0.0
    %535 = vmatmul.mubr.f32.gmra.mrb[0].mxu0 %v395
    %v536 = vpop.f32.mrb[0].mxu0
    %v537 = vadd.f32 %v350, %v536
    %v538 = vpop.f32.mrb[0].mxu0
    %539 = vmatprep.mubr.f32.mxu0 0.0
    %540 = vmatmul.mubr.f32.gmra.mrb[0].mxu0 %v398
    %v541 = vpop.f32.mrb[0].mxu0
    %v542 = vadd.f32 %v350, %v541
    %v543 = vpop.f32.mrb[0].mxu0
    %544 = vdwg.mxu0
    %545 = vst.msk [vmem:[%s5] sm:$0xff] %vm301, %v467
    %546 = vst.msk [vmem:[%s5 + $0x8] sm:$0xff] %vm301, %v472
    %547 = vst.msk [vmem:[%s5 + $0x10] sm:$0xff] %vm301, %v477
    %548 = vst.msk [vmem:[%s5 + $0x18] sm:$0xff] %vm301, %v482
    %549 = vst.msk [vmem:[%s5 + $0x20] sm:$0xff] %vm301, %v487
    %550 = vst.msk [vmem:[%s5 + $0x28] sm:$0xff] %vm301, %v492
    %551 = vst.msk [vmem:[%s5 + $0x30] sm:$0xff] %vm301, %v497
    %552 = vst.msk [vmem:[%s5 + $0x38] sm:$0xff] %vm301, %v502
    %553 = vst.msk [vmem:[%s5 + $0x40] sm:$0xff] %vm301, %v507
    %554 = vst.msk [vmem:[%s5 + $0x48] sm:$0xff] %vm301, %v512
    %555 = vst.msk [vmem:[%s5 + $0x50] sm:$0xff] %vm301, %v517
    %556 = vst.msk [vmem:[%s5 + $0x58] sm:$0xff] %vm301, %v522
    %557 = vst.msk [vmem:[%s5 + $0x60] sm:$0xff] %vm301, %v527
    %558 = vst.msk [vmem:[%s5 + $0x68] sm:$0xff] %vm301, %v532
    %559 = vst.msk [vmem:[%s5 + $0x70] sm:$0xff] %vm301, %v537
    %560 = vst.msk [vmem:[%s5 + $0x78] sm:$0xff] %vm301, %v542
    %v561 = vld [vmem:[%s4] sm:$0xf]
    %562 = vmatprep.subr.mxu0 0.0
    %563 = vmatpush1.msra.mxu0 %v467
    %564 = vmatprep.subr.mxu0 0.0
    %565 = vmatpush1.msra.mxu0 %v472
    %566 = vmatprep.subr.mxu0 0.0
    %567 = vmatpush1.msra.mxu0 %v477
    %568 = vmatprep.subr.mxu0 0.0
    %569 = vmatpush1.msra.mxu0 %v482
    %570 = vmatprep.subr.mxu0 0.0
    %571 = vmatpush1.msra.mxu0 %v487
    %572 = vmatprep.subr.mxu0 0.0
    %573 = vmatpush1.msra.mxu0 %v492
    %574 = vmatprep.subr.mxu0 0.0
    %575 = vmatpush1.msra.mxu0 %v497
    %576 = vmatprep.subr.mxu0 0.0
    %577 = vmatpush1.msra.mxu0 %v502
    %578 = vmatprep.subr.mxu0 0.0
    %579 = vmatpush1.msra.mxu0 %v507
    %580 = vmatprep.subr.mxu0 0.0
    %581 = vmatpush1.msra.mxu0 %v512
    %582 = vmatprep.subr.mxu0 0.0
    %583 = vmatpush1.msra.mxu0 %v517
    %584 = vmatprep.subr.mxu0 0.0
    %585 = vmatpush1.msra.mxu0 %v522
    %586 = vmatprep.subr.mxu0 0.0
    %587 = vmatpush1.msra.mxu0 %v527
    %588 = vmatprep.subr.mxu0 0.0
    %589 = vmatpush1.msra.mxu0 %v532
    %590 = vmatprep.subr.mxu0 0.0
    %591 = vmatpush1.msra.mxu0 %v537
    %592 = vmatprep.subr.mxu0 0.0
    %593 = vmatpush1.msra.mxu0 %v542
    %594 = vmatprep.subr.mxu0 0.0
    %595 = vmatpush1.msra.mxu0 0.0
    %596 = vmatprep.subr.mxu0 0.0
    %597 = vmatpush1.msra.mxu0 0.0
    %598 = vmatprep.subr.mxu0 0.0
    %599 = vmatpush1.msra.mxu0 0.0
    %600 = vmatprep.subr.mxu0 0.0
    %601 = vmatpush1.msra.mxu0 0.0
    %602 = vmatprep.subr.mxu0 0.0
    %603 = vmatpush1.msra.mxu0 0.0
    %604 = vmatprep.subr.mxu0 0.0
    %605 = vmatpush1.msra.mxu0 0.0
    %606 = vmatprep.subr.mxu0 0.0
    %607 = vmatpush1.msra.mxu0 0.0
    %608 = vmatprep.subr.mxu0 0.0
    %609 = vmatpush1.msra.mxu0 0.0
    %610 = vmatprep.subr.mxu0 0.0
    %611 = vmatpush1.msra.mxu0 0.0
    %612 = vmatprep.subr.mxu0 0.0
    %613 = vmatpush1.msra.mxu0 0.0
    %614 = vmatprep.subr.mxu0 0.0
    %615 = vmatpush1.msra.mxu0 0.0
    %616 = vmatprep.subr.mxu0 0.0
    %617 = vmatpush1.msra.mxu0 0.0
    %618 = vmatprep.subr.mxu0 0.0
    %619 = vmatpush1.msra.mxu0 0.0
    %620 = vmatprep.subr.mxu0 0.0
    %621 = vmatpush1.msra.mxu0 0.0
    %622 = vmatprep.subr.mxu0 0.0
    %623 = vmatpush1.msra.mxu0 0.0
    %624 = vmatprep.subr.mxu0 0.0
    %625 = vmatpush1.msra.mxu0 0.0
    %626 = vmatprep.mubr.f32.mxu0 0.0
    %627 = vmatmul.mubr.f32.gmra.mrb[0].mxu0 %v561
    %v628 = vpop.f32.mrb[0].mxu0
    %v629 = vadd.f32 0.0, %v628
    %v630 = vpop.f32.mrb[0].mxu0
    %631 = vdwg.mxu0
    %vm632 = vcmask 519168
    %633 = vst.msk [vmem:[%s6] sm:$0xf] %vm632, %v629
  $region29: #{encoder_forward.7} parent=0 // pred_fallthru
    _
  // Predicated region
  $region30: #{encoder_forward.7} parent=0 // pred_check
    _
  $region31: #{encoder_forward.7} parent=0 // pred_check_branch
    %635 = sbr.rel (0) target = $region33
  $region32: #{encoder_forward.7} parent=0 // pred_region
    _
  $region33: #{encoder_forward.7} parent=0 // pred_fallthru
    _
  // Predicated region
  $region34: #{encoder_forward.7} parent=0 // pred_check
    _
  $region35: #{encoder_forward.7} parent=0 // pred_check_branch
    %637 = sbr.rel (0) target = $region37
  $region36: #{encoder_forward.7} parent=0 // pred_region
    _
  $region37: #{encoder_forward.7} parent=0 // pred_fallthru
    _
  // Predicated region
  $region38: #{encoder_forward.7} parent=0 // pred_check
    _
  $region39: #{encoder_forward.7} parent=0 // pred_check_branch
    %639 = sbr.rel (0) target = $region41
  $region40: #{encoder_forward.7} parent=0 // pred_region
    _
  $region41: #{encoder_forward.7} parent=0 // pred_fallthru
    _
  // Predicated region
  $region42: #{encoder_forward.7} parent=0 // pred_check
    _
  $region43: #{encoder_forward.7} parent=0 // pred_check_branch
    %641 = sbr.rel (0) target = $region45
  $region44: #{encoder_forward.7} parent=0 // pred_region
    _
  $region45: #{encoder_forward.7} parent=0 // pred_fallthru
    _

// kernel: encoder_forward.6
$region0: #{encoder_forward.6}
  #allocation0 [shape = 'u32[]', space=smem, size = 0x4, offset = 0x4, fixed_abs, tag = 'smem constant byte address 0x4 - core index']
  #allocation1 [shape = 'u32[144,128]{1,0:T(1,128)}', space=vmem, size = 0x12000, scoped, tag = 'internal scratch']
  #allocation2 [shape = 'f32[128,8]{1,0:T(8,128)}', space=vmem, size = 0x10000, scoped, tag = 'scratch operand']
  %s0 = inlined_call_operand.vmem [shape: bf16[1,128,128], index: 0, kind: input, shape index: {}]
  %s1 = inlined_call_operand.vmem [shape: bf16[1,128,8], index: 1, kind: input, shape index: {}]
  %s2 = inlined_call_operand.vmem [shape: f32[1,8,64], index: 2, kind: input, shape index: {}]
  %s3 = inlined_call_operand.vmem [shape: f32[1,1,64], index: 3, kind: input, shape index: {}]
  %s4 = inlined_call_operand.vmem [shape: bf16[1,128,64], index: 4, kind: output, shape index: {}]
  %s5 = sld [smem:[#allocation0]]
  $region34: #{encoder_forward.6} parent=0
    _
  %s7 = ssub.s32 1, %s5
  %s8 = scalar_select 0, %s7, %s5
  // Predicated region
  $region2: #{encoder_forward.6} parent=0 // pred_check
    _
  $region3: #{encoder_forward.6} parent=0 // pred_check_branch
    %10 = sbr.rel (0) target = $region5
  $region4: #{encoder_forward.6} parent=0 // pred_region
    _
  $region5: #{encoder_forward.6} parent=0 // pred_fallthru
    _
  // Predicated region
  $region6: #{encoder_forward.6} parent=0 // pred_check
    _
  $region7: #{encoder_forward.6} parent=0 // pred_check_branch
    %12 = sbr.rel (0) target = $region9
  $region8: #{encoder_forward.6} parent=0 // pred_region
    _
  $region9: #{encoder_forward.6} parent=0 // pred_fallthru
    _
  // Predicated region
  $region10: #{encoder_forward.6} parent=0 // pred_check
    _
  $region11: #{encoder_forward.6} parent=0 // pred_check_branch
    %14 = sbr.rel (0) target = $region13
  $region12: #{encoder_forward.6} parent=0 // pred_region
    _
  $region13: #{encoder_forward.6} parent=0 // pred_fallthru
    _
  // Predicated region
  $region14: #{encoder_forward.6} parent=0 // pred_check
    _
  $region15: #{encoder_forward.6} parent=0 // pred_check_branch
    %16 = sbr.rel (0) target = $region17
  $region16: #{encoder_forward.6} parent=0 // pred_region
    _
  $region17: #{encoder_forward.6} parent=0 // pred_fallthru
    _
  %p18 = scmp.eq.s32.totalorder 0, 0
  // Predicated region
  $region18: #{encoder_forward.6} parent=0 // pred_check
    %p19 = pneg %p18
  $region19: #{encoder_forward.6} parent=0 // pred_check_branch
    %21 = sbr.rel (%p19) target = $region21
  $region20: #{encoder_forward.6} parent=0 // pred_region
    %vm22 = vcmask 64512
    %23 = vst.msk [vmem:[#allocation2] sm:$0xff] %vm22, 0.0
    %24 = vst.msk [vmem:[#allocation2 + $0x8] sm:$0xff] %vm22, 0.0
    %25 = vst.msk [vmem:[#allocation2 + $0x10] sm:$0xff] %vm22, 0.0
    %26 = vst.msk [vmem:[#allocation2 + $0x18] sm:$0xff] %vm22, 0.0
    %27 = vst.msk [vmem:[#allocation2 + $0x20] sm:$0xff] %vm22, 0.0
    %28 = vst.msk [vmem:[#allocation2 + $0x28] sm:$0xff] %vm22, 0.0
    %29 = vst.msk [vmem:[#allocation2 + $0x30] sm:$0xff] %vm22, 0.0
    %30 = vst.msk [vmem:[#allocation2 + $0x38] sm:$0xff] %vm22, 0.0
    %31 = vst.msk [vmem:[#allocation2 + $0x40] sm:$0xff] %vm22, 0.0
    %32 = vst.msk [vmem:[#allocation2 + $0x48] sm:$0xff] %vm22, 0.0
    %33 = vst.msk [vmem:[#allocation2 + $0x50] sm:$0xff] %vm22, 0.0
    %34 = vst.msk [vmem:[#allocation2 + $0x58] sm:$0xff] %vm22, 0.0
    %35 = vst.msk [vmem:[#allocation2 + $0x60] sm:$0xff] %vm22, 0.0
    %36 = vst.msk [vmem:[#allocation2 + $0x68] sm:$0xff] %vm22, 0.0
    %37 = vst.msk [vmem:[#allocation2 + $0x70] sm:$0xff] %vm22, 0.0
    %38 = vst.msk [vmem:[#allocation2 + $0x78] sm:$0xff] %vm22, 0.0
  $region21: #{encoder_forward.6} parent=0 // pred_fallthru
    _
  %v39 = vld [vmem:[#allocation2] sm:$0xff]
  %v40 = vld [vmem:[#allocation2 + $0x8] sm:$0xff]
  %v41 = vld [vmem:[#allocation2 + $0x10] sm:$0xff]
  %v42 = vld [vmem:[#allocation2 + $0x18] sm:$0xff]
  %v43 = vld [vmem:[#allocation2 + $0x20] sm:$0xff]
  %v44 = vld [vmem:[#allocation2 + $0x28] sm:$0xff]
  %v45 = vld [vmem:[#allocation2 + $0x30] sm:$0xff]
  %v46 = vld [vmem:[#allocation2 + $0x38] sm:$0xff]
  %v47 = vld [vmem:[#allocation2 + $0x40] sm:$0xff]
  %v48 = vld [vmem:[#allocation2 + $0x48] sm:$0xff]
  %v49 = vld [vmem:[#allocation2 + $0x50] sm:$0xff]
  %v50 = vld [vmem:[#allocation2 + $0x58] sm:$0xff]
  %v51 = vld [vmem:[#allocation2 + $0x60] sm:$0xff]
  %v52 = vld [vmem:[#allocation2 + $0x68] sm:$0xff]
  %v53 = vld [vmem:[#allocation2 + $0x70] sm:$0xff]
  %v54 = vld [vmem:[#allocation2 + $0x78] sm:$0xff]
  %v55 = vld [vmem:[%s0] sm:$0xf]
  %v56 = vld [vmem:[%s0 + $0x4] sm:$0xf]
  %v57 = vld [vmem:[%s0 + $0x8] sm:$0xf]
  %v58 = vld [vmem:[%s0 + $0xc] sm:$0xf]
  %v59 = vld [vmem:[%s0 + $0x10] sm:$0xf]
  %v60 = vld [vmem:[%s0 + $0x14] sm:$0xf]
  %v61 = vld [vmem:[%s0 + $0x18] sm:$0xf]
  %v62 = vld [vmem:[%s0 + $0x1c] sm:$0xf]
  %v63 = vld [vmem:[%s0 + $0x20] sm:$0xf]
  %v64 = vld [vmem:[%s0 + $0x24] sm:$0xf]
  %v65 = vld [vmem:[%s0 + $0x28] sm:$0xf]
  %v66 = vld [vmem:[%s0 + $0x2c] sm:$0xf]
  %v67 = vld [vmem:[%s0 + $0x30] sm:$0xf]
  %v68 = vld [vmem:[%s0 + $0x34] sm:$0xf]
  %v69 = vld [vmem:[%s0 + $0x38] sm:$0xf]
  %v70 = vld [vmem:[%s0 + $0x3c] sm:$0xf]
  %v71 = vld [vmem:[%s1] sm:$0xf]
  %v72 = vld [vmem:[%s1 + $0x4] sm:$0xf]
  %v73 = vld [vmem:[%s1 + $0x8] sm:$0xf]
  %v74 = vld [vmem:[%s1 + $0xc] sm:$0xf]
  %v75 = vld [vmem:[%s1 + $0x10] sm:$0xf]
  %v76 = vld [vmem:[%s1 + $0x14] sm:$0xf]
  %v77 = vld [vmem:[%s1 + $0x18] sm:$0xf]
  %v78 = vld [vmem:[%s1 + $0x1c] sm:$0xf]
  %v79 = vld [vmem:[%s1 + $0x20] sm:$0xf]
  %v80 = vld [vmem:[%s1 + $0x24] sm:$0xf]
  %v81 = vld [vmem:[%s1 + $0x28] sm:$0xf]
  %v82 = vld [vmem:[%s1 + $0x2c] sm:$0xf]
  %v83 = vld [vmem:[%s1 + $0x30] sm:$0xf]
  %v84 = vld [vmem:[%s1 + $0x34] sm:$0xf]
  %v85 = vld [vmem:[%s1 + $0x38] sm:$0xf]
  %v86 = vld [vmem:[%s1 + $0x3c] sm:$0xf]
  %v103 = vunpack.c.l.b16 %v55
  %v104 = vunpack.c.l.b16 %v56
  %v105 = vunpack.c.l.b16 %v57
  %v106 = vunpack.c.l.b16 %v58
  %v107 = vunpack.c.l.b16 %v59
  %v108 = vunpack.c.l.b16 %v60
  %v109 = vunpack.c.l.b16 %v61
  %v110 = vunpack.c.l.b16 %v62
  %v111 = vunpack.c.l.b16 %v63
  %v112 = vunpack.c.l.b16 %v64
  %v113 = vunpack.c.l.b16 %v65
  %v114 = vunpack.c.l.b16 %v66
  %v115 = vunpack.c.l.b16 %v67
  %v116 = vunpack.c.l.b16 %v68
  %v117 = vunpack.c.l.b16 %v69
  %v118 = vunpack.c.l.b16 %v70
  %v119 = vpack.c.b16 %v104, %v103
  %v120 = vpack.c.b16 %v106, %v105
  %v121 = vpack.c.b16 %v108, %v107
  %v122 = vpack.c.b16 %v110, %v109
  %v123 = vpack.c.b16 %v112, %v111
  %v124 = vpack.c.b16 %v114, %v113
  %v125 = vpack.c.b16 %v116, %v115
  %v126 = vpack.c.b16 %v118, %v117
  %v151 = vunpack.c.l.b16 %v71
  %v152 = vunpack.c.l.b16 %v72
  %v153 = vunpack.c.l.b16 %v73
  %v154 = vunpack.c.l.b16 %v74
  %v155 = vunpack.c.l.b16 %v75
  %v156 = vunpack.c.l.b16 %v76
  %v157 = vunpack.c.l.b16 %v77
  %v158 = vunpack.c.l.b16 %v78
  %v159 = vunpack.c.l.b16 %v79
  %v160 = vunpack.c.l.b16 %v80
  %v161 = vunpack.c.l.b16 %v81
  %v162 = vunpack.c.l.b16 %v82
  %v163 = vunpack.c.l.b16 %v83
  %v164 = vunpack.c.l.b16 %v84
  %v165 = vunpack.c.l.b16 %v85
  %v166 = vunpack.c.l.b16 %v86
  %v167 = vpack.c.b16 %v152, %v151
  %v168 = vpack.c.b16 %v154, %v153
  %v169 = vpack.c.b16 %v156, %v155
  %v170 = vpack.c.b16 %v158, %v157
  %v171 = vpack.c.b16 %v160, %v159
  %v172 = vpack.c.b16 %v162, %v161
  %v173 = vpack.c.b16 %v164, %v163
  %v174 = vpack.c.b16 %v166, %v165
  %183 = vmatprep.subr.bf16.mxu0 0
  %184 = vmatpush1.bf16.msra.mxu0 %v167
  %185 = vmatprep.subr.bf16.mxu0 0
  %186 = vmatpush1.bf16.msra.mxu0 %v168
  %187 = vmatprep.subr.bf16.mxu0 0
  %188 = vmatpush1.bf16.msra.mxu0 %v169
  %189 = vmatprep.subr.bf16.mxu0 0
  %190 = vmatpush1.bf16.msra.mxu0 %v170
  %191 = vmatprep.subr.bf16.mxu0 0
  %192 = vmatpush1.bf16.msra.mxu0 %v171
  %193 = vmatprep.subr.bf16.mxu0 0
  %194 = vmatpush1.bf16.msra.mxu0 %v172
  %195 = vmatprep.subr.bf16.mxu0 0
  %196 = vmatpush1.bf16.msra.mxu0 %v173
  %197 = vmatprep.subr.bf16.mxu0 0
  %198 = vmatpush1.bf16.msra.mxu0 %v174
  %199 = vmatprep.subr.bf16.mxu0 0
  %200 = vmatpush1.bf16.msra.mxu0 0
  %201 = vmatprep.subr.bf16.mxu0 0
  %202 = vmatpush1.bf16.msra.mxu0 0
  %203 = vmatprep.subr.bf16.mxu0 0
  %204 = vmatpush1.bf16.msra.mxu0 0
  %205 = vmatprep.subr.bf16.mxu0 0
  %206 = vmatpush1.bf16.msra.mxu0 0
  %207 = vmatprep.subr.bf16.mxu0 0
  %208 = vmatpush1.bf16.msra.mxu0 0
  %209 = vmatprep.subr.bf16.mxu0 0
  %210 = vmatpush1.bf16.msra.mxu0 0
  %211 = vmatprep.subr.bf16.mxu0 0
  %212 = vmatpush1.bf16.msra.mxu0 0
  %213 = vmatprep.subr.bf16.mxu0 0
  %214 = vmatpush1.bf16.msra.mxu0 0
  %215 = vmatprep.mubr.bf16.mxu0 0
  %216 = vmatmul.mubr.bf16.gmra.mrb[0].mxu0 %v119
  %v217 = vpop.f32.mrb[0].mxu0
  %v218 = vadd.f32 0.0, %v217
  %v219 = vpop.f32.mrb[0].mxu0
  %v220 = vpop.f32.mrb[0].mxu0
  %v221 = vadd.f32 0.0, %v220
  %v222 = vpop.f32.mrb[0].mxu0
  %223 = vmatprep.mubr.bf16.mxu0 0
  %224 = vmatmul.mubr.bf16.gmra.mrb[0].mxu0 %v120
  %v225 = vpop.f32.mrb[0].mxu0
  %v226 = vadd.f32 0.0, %v225
  %v227 = vpop.f32.mrb[0].mxu0
  %v228 = vpop.f32.mrb[0].mxu0
  %v229 = vadd.f32 0.0, %v228
  %v230 = vpop.f32.mrb[0].mxu0
  %231 = vmatprep.mubr.bf16.mxu0 0
  %232 = vmatmul.mubr.bf16.gmra.mrb[0].mxu0 %v121
  %v233 = vpop.f32.mrb[0].mxu0
  %v234 = vadd.f32 0.0, %v233
  %v235 = vpop.f32.mrb[0].mxu0
  %v236 = vpop.f32.mrb[0].mxu0
  %v237 = vadd.f32 0.0, %v236
  %v238 = vpop.f32.mrb[0].mxu0
  %239 = vmatprep.mubr.bf16.mxu0 0
  %240 = vmatmul.mubr.bf16.gmra.mrb[0].mxu0 %v122
  %v241 = vpop.f32.mrb[0].mxu0
  %v242 = vadd.f32 0.0, %v241
  %v243 = vpop.f32.mrb[0].mxu0
  %v244 = vpop.f32.mrb[0].mxu0
  %v245 = vadd.f32 0.0, %v244
  %v246 = vpop.f32.mrb[0].mxu0
  %247 = vmatprep.mubr.bf16.mxu0 0
  %248 = vmatmul.mubr.bf16.gmra.mrb[0].mxu0 %v123
  %v249 = vpop.f32.mrb[0].mxu0
  %v250 = vadd.f32 0.0, %v249
  %v251 = vpop.f32.mrb[0].mxu0
  %v252 = vpop.f32.mrb[0].mxu0
  %v253 = vadd.f32 0.0, %v252
  %v254 = vpop.f32.mrb[0].mxu0
  %255 = vmatprep.mubr.bf16.mxu0 0
  %256 = vmatmul.mubr.bf16.gmra.mrb[0].mxu0 %v124
  %v257 = vpop.f32.mrb[0].mxu0
  %v258 = vadd.f32 0.0, %v257
  %v259 = vpop.f32.mrb[0].mxu0
  %v260 = vpop.f32.mrb[0].mxu0
  %v261 = vadd.f32 0.0, %v260
  %v262 = vpop.f32.mrb[0].mxu0
  %263 = vmatprep.mubr.bf16.mxu0 0
  %264 = vmatmul.mubr.bf16.gmra.mrb[0].mxu0 %v125
  %v265 = vpop.f32.mrb[0].mxu0
  %v266 = vadd.f32 0.0, %v265
  %v267 = vpop.f32.mrb[0].mxu0
  %v268 = vpop.f32.mrb[0].mxu0
  %v269 = vadd.f32 0.0, %v268
  %v270 = vpop.f32.mrb[0].mxu0
  %271 = vmatprep.mubr.bf16.mxu0 0
  %272 = vmatmul.mubr.bf16.gmra.mrb[0].mxu0 %v126
  %v273 = vpop.f32.mrb[0].mxu0
  %v274 = vadd.f32 0.0, %v273
  %v275 = vpop.f32.mrb[0].mxu0
  %v276 = vpop.f32.mrb[0].mxu0
  %v277 = vadd.f32 0.0, %v276
  %v278 = vpop.f32.mrb[0].mxu0
  %279 = vdwg.mxu0
  %v280 = vadd.f32 %v39, %v218
  %v281 = vadd.f32 %v40, %v221
  %v282 = vadd.f32 %v41, %v226
  %v283 = vadd.f32 %v42, %v229
  %v284 = vadd.f32 %v43, %v234
  %v285 = vadd.f32 %v44, %v237
  %v286 = vadd.f32 %v45, %v242
  %v287 = vadd.f32 %v46, %v245
  %v288 = vadd.f32 %v47, %v250
  %v289 = vadd.f32 %v48, %v253
  %v290 = vadd.f32 %v49, %v258
  %v291 = vadd.f32 %v50, %v261
  %v292 = vadd.f32 %v51, %v266
  %v293 = vadd.f32 %v52, %v269
  %v294 = vadd.f32 %v53, %v274
  %v295 = vadd.f32 %v54, %v277
  %vm296 = vcmask 64512
  %297 = vst.msk [vmem:[#allocation2] sm:$0xff] %vm296, %v280
  %298 = vst.msk [vmem:[#allocation2 + $0x8] sm:$0xff] %vm296, %v281
  %299 = vst.msk [vmem:[#allocation2 + $0x10] sm:$0xff] %vm296, %v282
  %300 = vst.msk [vmem:[#allocation2 + $0x18] sm:$0xff] %vm296, %v283
  %301 = vst.msk [vmem:[#allocation2 + $0x20] sm:$0xff] %vm296, %v284
  %302 = vst.msk [vmem:[#allocation2 + $0x28] sm:$0xff] %vm296, %v285
  %303 = vst.msk [vmem:[#allocation2 + $0x30] sm:$0xff] %vm296, %v286
  %304 = vst.msk [vmem:[#allocation2 + $0x38] sm:$0xff] %vm296, %v287
  %305 = vst.msk [vmem:[#allocation2 + $0x40] sm:$0xff] %vm296, %v288
  %306 = vst.msk [vmem:[#allocation2 + $0x48] sm:$0xff] %vm296, %v289
  %307 = vst.msk [vmem:[#allocation2 + $0x50] sm:$0xff] %vm296, %v290
  %308 = vst.msk [vmem:[#allocation2 + $0x58] sm:$0xff] %vm296, %v291
  %309 = vst.msk [vmem:[#allocation2 + $0x60] sm:$0xff] %vm296, %v292
  %310 = vst.msk [vmem:[#allocation2 + $0x68] sm:$0xff] %vm296, %v293
  %311 = vst.msk [vmem:[#allocation2 + $0x70] sm:$0xff] %vm296, %v294
  %312 = vst.msk [vmem:[#allocation2 + $0x78] sm:$0xff] %vm296, %v295
  // Predicated region
  $region22: #{encoder_forward.6} parent=0 // pred_check
    %p313 = pneg %p18
  $region23: #{encoder_forward.6} parent=0 // pred_check_branch
    %315 = sbr.rel (%p313) target = $region25
  $region24: #{encoder_forward.6} parent=0 // pred_region
    %v316 = vld [vmem:[#allocation2] sm:$0xff]
    %v317 = vld [vmem:[#allocation2 + $0x8] sm:$0xff]
    %v318 = vld [vmem:[#allocation2 + $0x10] sm:$0xff]
    %v319 = vld [vmem:[#allocation2 + $0x18] sm:$0xff]
    %v320 = vld [vmem:[#allocation2 + $0x20] sm:$0xff]
    %v321 = vld [vmem:[#allocation2 + $0x28] sm:$0xff]
    %v322 = vld [vmem:[#allocation2 + $0x30] sm:$0xff]
    %v323 = vld [vmem:[#allocation2 + $0x38] sm:$0xff]
    %v324 = vld [vmem:[#allocation2 + $0x40] sm:$0xff]
    %v325 = vld [vmem:[#allocation2 + $0x48] sm:$0xff]
    %v326 = vld [vmem:[#allocation2 + $0x50] sm:$0xff]
    %v327 = vld [vmem:[#allocation2 + $0x58] sm:$0xff]
    %v328 = vld [vmem:[#allocation2 + $0x60] sm:$0xff]
    %v329 = vld [vmem:[#allocation2 + $0x68] sm:$0xff]
    %v330 = vld [vmem:[#allocation2 + $0x70] sm:$0xff]
    %v331 = vld [vmem:[#allocation2 + $0x78] sm:$0xff]
    %v332 = vld [vmem:[%s2] sm:$0xff]
    %v333 = vld [vmem:[%s3] sm:$0x1]
    %v335 = vlaneseq
    %v336 = vshrl.u32 %v335, 7
    %v337 = vsub.s32 0, %v336
    %v338 = vrot.slane %v333, %v337
    %v341 = vsel %vm296, %v316, 0
    %v344 = vsel %vm296, %v317, 0
    %v347 = vsel %vm296, %v318, 0
    %v350 = vsel %vm296, %v319, 0
    %v353 = vsel %vm296, %v320, 0
    %v356 = vsel %vm296, %v321, 0
    %v359 = vsel %vm296, %v322, 0
    %v362 = vsel %vm296, %v323, 0
    %v365 = vsel %vm296, %v324, 0
    %v368 = vsel %vm296, %v325, 0
    %v371 = vsel %vm296, %v326, 0
    %v374 = vsel %vm296, %v327, 0
    %v377 = vsel %vm296, %v328, 0
    %v380 = vsel %vm296, %v329, 0
    %v383 = vsel %vm296, %v330, 0
    %v386 = vsel %vm296, %v331, 0
    %388 = vmatprep.subr.mxu0 0.0
    %389 = vmatpush1.msra.mxu0 %v332
    %390 = vmatprep.subr.mxu0 0.0
    %391 = vmatpush1.msra.mxu0 0.0
    %392 = vmatprep.subr.mxu0 0.0
    %393 = vmatpush1.msra.mxu0 0.0
    %394 = vmatprep.subr.mxu0 0.0
    %395 = vmatpush1.msra.mxu0 0.0
    %396 = vmatprep.subr.mxu0 0.0
    %397 = vmatpush1.msra.mxu0 0.0
    %398 = vmatprep.subr.mxu0 0.0
    %399 = vmatpush1.msra.mxu0 0.0
    %400 = vmatprep.subr.mxu0 0.0
    %401 = vmatpush1.msra.mxu0 0.0
    %402 = vmatprep.subr.mxu0 0.0
    %403 = vmatpush1.msra.mxu0 0.0
    %404 = vmatprep.subr.mxu0 0.0
    %405 = vmatpush1.msra.mxu0 0.0
    %406 = vmatprep.subr.mxu0 0.0
    %407 = vmatpush1.msra.mxu0 0.0
    %408 = vmatprep.subr.mxu0 0.0
    %409 = vmatpush1.msra.mxu0 0.0
    %410 = vmatprep.subr.mxu0 0.0
    %411 = vmatpush1.msra.mxu0 0.0
    %412 = vmatprep.subr.mxu0 0.0
    %413 = vmatpush1.msra.mxu0 0.0
    %414 = vmatprep.subr.mxu0 0.0
    %415 = vmatpush1.msra.mxu0 0.0
    %416 = vmatprep.subr.mxu0 0.0
    %417 = vmatpush1.msra.mxu0 0.0
    %418 = vmatprep.subr.mxu0 0.0
    %419 = vmatpush1.msra.mxu0 0.0
    %420 = vmatprep.subr.mxu0 0.0
    %421 = vmatpush1.msra.mxu0 0.0
    %422 = vmatprep.subr.mxu0 0.0
    %423 = vmatpush1.msra.mxu0 0.0
    %424 = vmatprep.subr.mxu0 0.0
    %425 = vmatpush1.msra.mxu0 0.0
    %426 = vmatprep.subr.mxu0 0.0
    %427 = vmatpush1.msra.mxu0 0.0
    %428 = vmatprep.subr.mxu0 0.0
    %429 = vmatpush1.msra.mxu0 0.0
    %430 = vmatprep.subr.mxu0 0.0
    %431 = vmatpush1.msra.mxu0 0.0
    %432 = vmatprep.subr.mxu0 0.0
    %433 = vmatpush1.msra.mxu0 0.0
    %434 = vmatprep.subr.mxu0 0.0
    %435 = vmatpush1.msra.mxu0 0.0
    %436 = vmatprep.subr.mxu0 0.0
    %437 = vmatpush1.msra.mxu0 0.0
    %438 = vmatprep.subr.mxu0 0.0
    %439 = vmatpush1.msra.mxu0 0.0
    %440 = vmatprep.subr.mxu0 0.0
    %441 = vmatpush1.msra.mxu0 0.0
    %442 = vmatprep.subr.mxu0 0.0
    %443 = vmatpush1.msra.mxu0 0.0
    %444 = vmatprep.subr.mxu0 0.0
    %445 = vmatpush1.msra.mxu0 0.0
    %446 = vmatprep.subr.mxu0 0.0
    %447 = vmatpush1.msra.mxu0 0.0
    %448 = vmatprep.subr.mxu0 0.0
    %449 = vmatpush1.msra.mxu0 0.0
    %450 = vmatprep.subr.mxu0 0.0
    %451 = vmatpush1.msra.mxu0 0.0
    %452 = vmatprep.mubr.f32.mxu0 0.0
    %453 = vmatmul.mubr.f32.gmra.mrb[0].mxu0 %v341
    %v454 = vpop.f32.mrb[0].mxu0
    %v455 = vadd.f32 %v338, %v454
    %v456 = vpop.f32.mrb[0].mxu0
    %457 = vmatprep.mubr.f32.mxu0 0.0
    %458 = vmatmul.mubr.f32.gmra.mrb[0].mxu0 %v344
    %v459 = vpop.f32.mrb[0].mxu0
    %v460 = vadd.f32 %v338, %v459
    %v461 = vpop.f32.mrb[0].mxu0
    %462 = vmatprep.mubr.f32.mxu0 0.0
    %463 = vmatmul.mubr.f32.gmra.mrb[0].mxu0 %v347
    %v464 = vpop.f32.mrb[0].mxu0
    %v465 = vadd.f32 %v338, %v464
    %v466 = vpop.f32.mrb[0].mxu0
    %467 = vmatprep.mubr.f32.mxu0 0.0
    %468 = vmatmul.mubr.f32.gmra.mrb[0].mxu0 %v350
    %v469 = vpop.f32.mrb[0].mxu0
    %v470 = vadd.f32 %v338, %v469
    %v471 = vpop.f32.mrb[0].mxu0
    %472 = vmatprep.mubr.f32.mxu0 0.0
    %473 = vmatmul.mubr.f32.gmra.mrb[0].mxu0 %v353
    %v474 = vpop.f32.mrb[0].mxu0
    %v475 = vadd.f32 %v338, %v474
    %v476 = vpop.f32.mrb[0].mxu0
    %477 = vmatprep.mubr.f32.mxu0 0.0
    %478 = vmatmul.mubr.f32.gmra.mrb[0].mxu0 %v356
    %v479 = vpop.f32.mrb[0].mxu0
    %v480 = vadd.f32 %v338, %v479
    %v481 = vpop.f32.mrb[0].mxu0
    %482 = vmatprep.mubr.f32.mxu0 0.0
    %483 = vmatmul.mubr.f32.gmra.mrb[0].mxu0 %v359
    %v484 = vpop.f32.mrb[0].mxu0
    %v485 = vadd.f32 %v338, %v484
    %v486 = vpop.f32.mrb[0].mxu0
    %487 = vmatprep.mubr.f32.mxu0 0.0
    %488 = vmatmul.mubr.f32.gmra.mrb[0].mxu0 %v362
    %v489 = vpop.f32.mrb[0].mxu0
    %v490 = vadd.f32 %v338, %v489
    %v491 = vpop.f32.mrb[0].mxu0
    %492 = vmatprep.mubr.f32.mxu0 0.0
    %493 = vmatmul.mubr.f32.gmra.mrb[0].mxu0 %v365
    %v494 = vpop.f32.mrb[0].mxu0
    %v495 = vadd.f32 %v338, %v494
    %v496 = vpop.f32.mrb[0].mxu0
    %497 = vmatprep.mubr.f32.mxu0 0.0
    %498 = vmatmul.mubr.f32.gmra.mrb[0].mxu0 %v368
    %v499 = vpop.f32.mrb[0].mxu0
    %v500 = vadd.f32 %v338, %v499
    %v501 = vpop.f32.mrb[0].mxu0
    %502 = vmatprep.mubr.f32.mxu0 0.0
    %503 = vmatmul.mubr.f32.gmra.mrb[0].mxu0 %v371
    %v504 = vpop.f32.mrb[0].mxu0
    %v505 = vadd.f32 %v338, %v504
    %v506 = vpop.f32.mrb[0].mxu0
    %507 = vmatprep.mubr.f32.mxu0 0.0
    %508 = vmatmul.mubr.f32.gmra.mrb[0].mxu0 %v374
    %v509 = vpop.f32.mrb[0].mxu0
    %v510 = vadd.f32 %v338, %v509
    %v511 = vpop.f32.mrb[0].mxu0
    %512 = vmatprep.mubr.f32.mxu0 0.0
    %513 = vmatmul.mubr.f32.gmra.mrb[0].mxu0 %v377
    %v514 = vpop.f32.mrb[0].mxu0
    %v515 = vadd.f32 %v338, %v514
    %v516 = vpop.f32.mrb[0].mxu0
    %517 = vmatprep.mubr.f32.mxu0 0.0
    %518 = vmatmul.mubr.f32.gmra.mrb[0].mxu0 %v380
    %v519 = vpop.f32.mrb[0].mxu0
    %v520 = vadd.f32 %v338, %v519
    %v521 = vpop.f32.mrb[0].mxu0
    %522 = vmatprep.mubr.f32.mxu0 0.0
    %523 = vmatmul.mubr.f32.gmra.mrb[0].mxu0 %v383
    %v524 = vpop.f32.mrb[0].mxu0
    %v525 = vadd.f32 %v338, %v524
    %v526 = vpop.f32.mrb[0].mxu0
    %527 = vmatprep.mubr.f32.mxu0 0.0
    %528 = vmatmul.mubr.f32.gmra.mrb[0].mxu0 %v386
    %v529 = vpop.f32.mrb[0].mxu0
    %v530 = vadd.f32 %v338, %v529
    %v531 = vpop.f32.mrb[0].mxu0
    %532 = vdwg.mxu0
    %v533 = vmax.f32 %v455, 0.0
    %v534 = vmax.f32 %v460, 0.0
    %v535 = vmax.f32 %v465, 0.0
    %v536 = vmax.f32 %v470, 0.0
    %v537 = vmax.f32 %v475, 0.0
    %v538 = vmax.f32 %v480, 0.0
    %v539 = vmax.f32 %v485, 0.0
    %v540 = vmax.f32 %v490, 0.0
    %v541 = vmax.f32 %v495, 0.0
    %v542 = vmax.f32 %v500, 0.0
    %v543 = vmax.f32 %v505, 0.0
    %v544 = vmax.f32 %v510, 0.0
    %v545 = vmax.f32 %v515, 0.0
    %v546 = vmax.f32 %v520, 0.0
    %v547 = vmax.f32 %v525, 0.0
    %v548 = vmax.f32 %v530, 0.0
    %v549 = vpack.c.bf16 %v534, %v533
    %v550 = vpack.c.bf16 %v536, %v535
    %v551 = vpack.c.bf16 %v538, %v537
    %v552 = vpack.c.bf16 %v540, %v539
    %v553 = vpack.c.bf16 %v542, %v541
    %v554 = vpack.c.bf16 %v544, %v543
    %v555 = vpack.c.bf16 %v546, %v545
    %v556 = vpack.c.bf16 %v548, %v547
    %v565 = vunpack.c.l.b16 %v549
    %v566 = vunpack.c.h.b16 %v549
    %v567 = vunpack.c.l.b16 %v550
    %v568 = vunpack.c.h.b16 %v550
    %v569 = vunpack.c.l.b16 %v551
    %v570 = vunpack.c.h.b16 %v551
    %v571 = vunpack.c.l.b16 %v552
    %v572 = vunpack.c.h.b16 %v552
    %v573 = vunpack.c.l.b16 %v553
    %v574 = vunpack.c.h.b16 %v553
    %v575 = vunpack.c.l.b16 %v554
    %v576 = vunpack.c.h.b16 %v554
    %v577 = vunpack.c.l.b16 %v555
    %v578 = vunpack.c.h.b16 %v555
    %v579 = vunpack.c.l.b16 %v556
    %v580 = vunpack.c.h.b16 %v556
    %v581 = vpack.c.b16 %v565, %v565
    %v582 = vpack.c.b16 %v566, %v566
    %v583 = vpack.c.b16 %v567, %v567
    %v584 = vpack.c.b16 %v568, %v568
    %v585 = vpack.c.b16 %v569, %v569
    %v586 = vpack.c.b16 %v570, %v570
    %v587 = vpack.c.b16 %v571, %v571
    %v588 = vpack.c.b16 %v572, %v572
    %v589 = vpack.c.b16 %v573, %v573
    %v590 = vpack.c.b16 %v574, %v574
    %v591 = vpack.c.b16 %v575, %v575
    %v592 = vpack.c.b16 %v576, %v576
    %v593 = vpack.c.b16 %v577, %v577
    %v594 = vpack.c.b16 %v578, %v578
    %v595 = vpack.c.b16 %v579, %v579
    %v596 = vpack.c.b16 %v580, %v580
    %vm613 = vcmask 519168
    %614 = vst.msk [vmem:[%s4] sm:$0xf] %vm613, %v581
    %615 = vst.msk [vmem:[%s4 + $0x4] sm:$0xf] %vm613, %v582
    %616 = vst.msk [vmem:[%s4 + $0x8] sm:$0xf] %vm613, %v583
    %617 = vst.msk [vmem:[%s4 + $0xc] sm:$0xf] %vm613, %v584
    %618 = vst.msk [vmem:[%s4 + $0x10] sm:$0xf] %vm613, %v585
    %619 = vst.msk [vmem:[%s4 + $0x14] sm:$0xf] %vm613, %v586
    %620 = vst.msk [vmem:[%s4 + $0x18] sm:$0xf] %vm613, %v587
    %621 = vst.msk [vmem:[%s4 + $0x1c] sm:$0xf] %vm613, %v588
    %622 = vst.msk [vmem:[%s4 + $0x20] sm:$0xf] %vm613, %v589
    %623 = vst.msk [vmem:[%s4 + $0x24] sm:$0xf] %vm613, %v590
    %624 = vst.msk [vmem:[%s4 + $0x28] sm:$0xf] %vm613, %v591
    %625 = vst.msk [vmem:[%s4 + $0x2c] sm:$0xf] %vm613, %v592
    %626 = vst.msk [vmem:[%s4 + $0x30] sm:$0xf] %vm613, %v593
    %627 = vst.msk [vmem:[%s4 + $0x34] sm:$0xf] %vm613, %v594
    %628 = vst.msk [vmem:[%s4 + $0x38] sm:$0xf] %vm613, %v595
    %629 = vst.msk [vmem:[%s4 + $0x3c] sm:$0xf] %vm613, %v596
  $region25: #{encoder_forward.6} parent=0 // pred_fallthru
    _
  // Predicated region
  $region26: #{encoder_forward.6} parent=0 // pred_check
    _
  $region27: #{encoder_forward.6} parent=0 // pred_check_branch
    %631 = sbr.rel (0) target = $region29
  $region28: #{encoder_forward.6} parent=0 // pred_region
    _
  $region29: #{encoder_forward.6} parent=0 // pred_fallthru
    _
  // Predicated region
  $region30: #{encoder_forward.6} parent=0 // pred_check
    _
  $region31: #{encoder_forward.6} parent=0 // pred_check_branch
    %633 = sbr.rel (0) target = $region33
  $region32: #{encoder_forward.6} parent=0 // pred_region
    _
  $region33: #{encoder_forward.6} parent=0 // pred_fallthru
    _

// kernel: encoder_forward.9
$region0: #{encoder_forward.9}
  #allocation0 [shape = 'u32[]', space=smem, size = 0x4, offset = 0x4, fixed_abs, tag = 'smem constant byte address 0x4 - core index']
  #allocation1 [shape = 'u32[144,128]{1,0:T(1,128)}', space=vmem, size = 0x12000, scoped, tag = 'internal scratch']
  #allocation2 [shape = 'f32[128,8]{1,0:T(8,128)}', space=vmem, size = 0x10000, scoped, tag = 'scratch operand']
  %s0 = inlined_call_operand.vmem [shape: bf16[2,128,128], index: 0, kind: input, shape index: {}]
  %s1 = inlined_call_operand.vmem [shape: bf16[2,128,8], index: 1, kind: input, shape index: {}]
  %s2 = inlined_call_operand.vmem [shape: f32[2,8,64], index: 2, kind: input, shape index: {}]
  %s3 = inlined_call_operand.vmem [shape: f32[2,1,64], index: 3, kind: input, shape index: {}]
  %s4 = inlined_call_operand.vmem [shape: bf16[2,128,64], index: 4, kind: output, shape index: {}]
  %s5 = sld [smem:[#allocation0]]
  $region57: #{encoder_forward.9} parent=0
    _
  %s7 = ssub.s32 1, %s5
  %s8 = scalar_select 0, %s7, %s5
  loop: start=0, step=1, limit=4
  $region2: #{encoder_forward.9} parent=0 // loop_pre_header
    _
  $region3: #{encoder_forward.9} parent=0 // loop_header
    %s10 = sphi 0, %s14
    %p11 = scmp.ge.s32.totalorder %s10, 4
    %s17 = sphi 0, %s36
    %s18 = sphi 0, %s32
    %s19 = sphi 0, %s28
    %s20 = sphi 0, %s17
    %s21 = sphi 0, %s18
    %s22 = sphi 0, %s19
    %s23 = sphi 0, %s20
    %s24 = sphi 0, %s21
    %s25 = sphi 0, %s22
    %s43 = sphi 0, %s45
    %s46 = sphi 0, %s43
    %s47 = sphi 0, %s46
    %s63 = sphi 0, %s47
    %s71 = sphi 0, %s73
    %s74 = sphi 0, %s71
    %s75 = sphi 0, %s74
    %s91 = sphi 0, %s75
    %s97 = sphi 0, %s99
    %s100 = sphi 0, %s97
    %s101 = sphi 0, %s100
    %s117 = sphi 0, %s101
    %s123 = sphi 0, %s125
    %s126 = sphi 0, %s123
    %s127 = sphi 0, %s126
    %s143 = sphi 0, %s127
    %s151 = sphi 0, %s153
    %s154 = sphi 0, %s151
    %s155 = sphi 0, %s154
    %s171 = sphi 0, %s155
  $region4: #{encoder_forward.9} parent=0 // loop_header_branch
    %13 = sbr.rel (%p11) target = $region8
  $region5: #{encoder_forward.9} parent=0 // loop_body
    %s15 = ssub.s32 %s10, 1
    %s16 = ssub.s32 %s10, 2
    %s26 = sadd.s32 1, %s19
    %p27 = scmp.ge.s32.totalorder %s26, 1
    %s28 = scalar_select %p27, 0, %s26
    %s29 = sadd.s32 1, %s18
    %s30 = scalar_select %p27, %s29, %s18
    %p31 = scmp.ge.s32.totalorder %s30, 1
    %s32 = scalar_select %p31, 0, %s30
    %s33 = sadd.s32 1, %s17
    %s34 = scalar_select %p31, %s33, %s17
    %p35 = scmp.ge.s32.totalorder %s34, 2
    %s36 = scalar_select %p35, 0, %s34
    %s37 = ssub.s32 %s17, %s36
    %s38 = ssub.s32 %s18, %s32
    %s39 = sor.u32 %s37, %s38
    %s40 = ssub.s32 %s19, %s28
    %s41 = sor.u32 %s39, %s40
    %p42 = scmp.eq.s32.totalorder %s41, 0
    %s44 = sadd.s32 %s43, 1
    %s45 = scalar_select %p42, %s43, %s44
    %p48 = pneg %p42
    %p49 = scmp.eq.s32.totalorder %s10, 1
    %p50 = por %p48, %p49
    %p51 = scmp.ne.s32.totalorder %s43, %s46
    %p52 = scmp.eq.s32.totalorder %s10, 0
    %p53 = por %p51, %p52
    %p54 = scmp.ne.s32.totalorder %s43, %s46
    %p55 = scmp.eq.s32.totalorder %s15, 1
    %p56 = por %p54, %p55
    %p57 = scmp.ne.s32.totalorder %s46, %s47
    %p58 = scmp.eq.s32.totalorder %s15, 0
    %p59 = por %p57, %p58
    %p60 = scmp.ne.s32.totalorder %s46, %s47
    %p61 = scmp.eq.s32.totalorder %s16, 1
    %p62 = por %p60, %p61
    %p64 = scmp.ne.s32.totalorder %s47, %s63
    %p65 = scmp.eq.s32.totalorder %s16, 0
    %p66 = por %p64, %p65
    %s67 = ssub.s32 %s17, %s36
    %s68 = ssub.s32 %s19, %s28
    %s69 = sor.u32 %s67, %s68
    %p70 = scmp.eq.s32.totalorder %s69, 0
    %s72 = sadd.s32 %s71, 1
    %s73 = scalar_select %p70, %s71, %s72
    %p76 = pneg %p70
    %p77 = scmp.eq.s32.totalorder %s10, 1
    %p78 = por %p76, %p77
    %p79 = scmp.ne.s32.totalorder %s71, %s74
    %p80 = scmp.eq.s32.totalorder %s10, 0
    %p81 = por %p79, %p80
    %p82 = scmp.ne.s32.totalorder %s71, %s74
    %p83 = scmp.eq.s32.totalorder %s15, 1
    %p84 = por %p82, %p83
    %p85 = scmp.ne.s32.totalorder %s74, %s75
    %p86 = scmp.eq.s32.totalorder %s15, 0
    %p87 = por %p85, %p86
    %p88 = scmp.ne.s32.totalorder %s74, %s75
    %p89 = scmp.eq.s32.totalorder %s16, 1
    %p90 = por %p88, %p89
    %p92 = scmp.ne.s32.totalorder %s75, %s91
    %p93 = scmp.eq.s32.totalorder %s16, 0
    %p94 = por %p92, %p93
    %s95 = ssub.s32 %s17, %s36
    %p96 = scmp.eq.s32.totalorder %s95, 0
    %s98 = sadd.s32 %s97, 1
    %s99 = scalar_select %p96, %s97, %s98
    %p102 = pneg %p96
    %p103 = scmp.eq.s32.totalorder %s10, 1
    %p104 = por %p102, %p103
    %p105 = scmp.ne.s32.totalorder %s97, %s100
    %p106 = scmp.eq.s32.totalorder %s10, 0
    %p107 = por %p105, %p106
    %p108 = scmp.ne.s32.totalorder %s97, %s100
    %p109 = scmp.eq.s32.totalorder %s15, 1
    %p110 = por %p108, %p109
    %p111 = scmp.ne.s32.totalorder %s100, %s101
    %p112 = scmp.eq.s32.totalorder %s15, 0
    %p113 = por %p111, %p112
    %p114 = scmp.ne.s32.totalorder %s100, %s101
    %p115 = scmp.eq.s32.totalorder %s16, 1
    %p116 = por %p114, %p115
    %p118 = scmp.ne.s32.totalorder %s101, %s117
    %p119 = scmp.eq.s32.totalorder %s16, 0
    %p120 = por %p118, %p119
    %s121 = ssub.s32 %s17, %s36
    %p122 = scmp.eq.s32.totalorder %s121, 0
    %s124 = sadd.s32 %s123, 1
    %s125 = scalar_select %p122, %s123, %s124
    %p128 = pneg %p122
    %p129 = scmp.eq.s32.totalorder %s10, 1
    %p130 = por %p128, %p129
    %p131 = scmp.ne.s32.totalorder %s123, %s126
    %p132 = scmp.eq.s32.totalorder %s10, 0
    %p133 = por %p131, %p132
    %p134 = scmp.ne.s32.totalorder %s123, %s126
    %p135 = scmp.eq.s32.totalorder %s15, 1
    %p136 = por %p134, %p135
    %p137 = scmp.ne.s32.totalorder %s126, %s127
    %p138 = scmp.eq.s32.totalorder %s15, 0
    %p139 = por %p137, %p138
    %p140 = scmp.ne.s32.totalorder %s126, %s127
    %p141 = scmp.eq.s32.totalorder %s16, 1
    %p142 = por %p140, %p141
    %p144 = scmp.ne.s32.totalorder %s127, %s143
    %p145 = scmp.eq.s32.totalorder %s16, 0
    %p146 = por %p144, %p145
    %s147 = ssub.s32 %s17, %s36
    %s148 = ssub.s32 %s18, %s32
    %s149 = sor.u32 %s147, %s148
    %p150 = scmp.eq.s32.totalorder %s149, 0
    %s152 = sadd.s32 %s151, 1
    %s153 = scalar_select %p150, %s151, %s152
    %p156 = pneg %p150
    %p157 = scmp.eq.s32.totalorder %s10, 1
    %p158 = por %p156, %p157
    %p159 = scmp.ne.s32.totalorder %s151, %s154
    %p160 = scmp.eq.s32.totalorder %s10, 0
    %p161 = por %p159, %p160
    %p162 = scmp.ne.s32.totalorder %s151, %s154
    %p163 = scmp.eq.s32.totalorder %s15, 1
    %p164 = por %p162, %p163
    %p165 = scmp.ne.s32.totalorder %s154, %s155
    %p166 = scmp.eq.s32.totalorder %s15, 0
    %p167 = por %p165, %p166
    %p168 = scmp.ne.s32.totalorder %s154, %s155
    %p169 = scmp.eq.s32.totalorder %s16, 1
    %p170 = por %p168, %p169
    %p172 = scmp.ne.s32.totalorder %s155, %s171
    %p173 = scmp.eq.s32.totalorder %s16, 0
    %p174 = por %p172, %p173
    %p175 = scmp.le.s32.totalorder 1, %s10
    %p176 = scmp.lt.s32.totalorder %s10, 3
    %p177 = pnand %p175, %p176
    %p178 = pneg %p177
    // Predicated region
    $region9: #{encoder_forward.9} parent=5 // pred_check
      _
    $region10: #{encoder_forward.9} parent=5 // pred_check_branch
      %180 = sbr.rel (%p177) target = $region12
    $region11: #{encoder_forward.9} parent=5 // pred_region
      %s181 = ssub.s32 %s10, 1
    $region12: #{encoder_forward.9} parent=5 // pred_fallthru
      _
    %p182 = scmp.lt.s32.totalorder %s10, 2
    // Predicated region
    $region13: #{encoder_forward.9} parent=5 // pred_check
      %p183 = pneg %p182
    $region14: #{encoder_forward.9} parent=5 // pred_check_branch
      %185 = sbr.rel (%p183) target = $region16
    $region15: #{encoder_forward.9} parent=5 // pred_region
      // Predicated region
      $region17: #{encoder_forward.9} parent=15 // pred_check
        %p186 = pneg %p53
      $region18: #{encoder_forward.9} parent=15 // pred_check_branch
        %188 = sbr.rel (%p186) target = $region20
      $region19: #{encoder_forward.9} parent=15 // pred_region
        %s189 = smul.u32 16, %s18
        %p190 = scmp.lt.s32.totalorder %s17, 1
        %s191 = scalar_select %p190, %s17, 1
        %p192 = scmp.lt.s32.totalorder %s189, 15
        %s193 = scalar_select %p192, %s189, 15
        %p194 = scmp.lt.s32.totalorder %s19, 0
        %s195 = scalar_select %p194, %s19, 0
        %s196 = sadd.s32 %s195, %s193
        %s197 = smul.addr %s191, 16
        %s198 = sadd.s32 %s196, %s197
        %s199 = smul.addr %s198, 4
        %s200 = scalar_lea.vmem %s0, %s199
        %s201 = smul.u32 16, %s18
      $region20: #{encoder_forward.9} parent=15 // pred_fallthru
        _
      // Predicated region
      $region21: #{encoder_forward.9} parent=15 // pred_check
        %p202 = pneg %p81
      $region22: #{encoder_forward.9} parent=15 // pred_check_branch
        %204 = sbr.rel (%p202) target = $region24
      $region23: #{encoder_forward.9} parent=15 // pred_region
        %s205 = smul.u32 16, %s19
        %p206 = scmp.lt.s32.totalorder %s17, 1
        %s207 = scalar_select %p206, %s17, 1
        %p208 = scmp.lt.s32.totalorder %s205, 15
        %s209 = scalar_select %p208, %s205, 15
        %s210 = smul.addr %s207, 16
        %s211 = sadd.s32 %s209, %s210
        %s212 = smul.addr %s211, 4
        %s213 = scalar_lea.vmem %s1, %s212
        %s214 = smul.u32 16, %s19
      $region24: #{encoder_forward.9} parent=15 // pred_fallthru
        _
      // Predicated region
      $region25: #{encoder_forward.9} parent=15 // pred_check
        %p215 = pneg %p107
      $region26: #{encoder_forward.9} parent=15 // pred_check_branch
        %217 = sbr.rel (%p215) target = $region28
      $region27: #{encoder_forward.9} parent=15 // pred_region
        %p218 = scmp.lt.s32.totalorder %s17, 1
        %s219 = scalar_select %p218, %s17, 1
        %s220 = smul.addr %s219, 8
        %s221 = scalar_lea.vmem %s2, %s220
      $region28: #{encoder_forward.9} parent=15 // pred_fallthru
        _
      // Predicated region
      $region29: #{encoder_forward.9} parent=15 // pred_check
        %p222 = pneg %p133
      $region30: #{encoder_forward.9} parent=15 // pred_check_branch
        %224 = sbr.rel (%p222) target = $region32
      $region31: #{encoder_forward.9} parent=15 // pred_region
        %p225 = scmp.lt.s32.totalorder %s17, 1
        %s226 = scalar_select %p225, %s17, 1
        %s227 = scalar_lea.vmem %s3, %s226
      $region32: #{encoder_forward.9} parent=15 // pred_fallthru
        _
    $region16: #{encoder_forward.9} parent=5 // pred_fallthru
      _
    %p228 = scmp.le.s32.totalorder 1, %s10
    %p229 = scmp.lt.s32.totalorder %s10, 3
    %p230 = pnand %p228, %p229
    %p231 = pneg %p230
    // Predicated region
    $region33: #{encoder_forward.9} parent=5 // pred_check
      _
    $region34: #{encoder_forward.9} parent=5 // pred_check_branch
      %233 = sbr.rel (%p230) target = $region36
    $region35: #{encoder_forward.9} parent=5 // pred_region
      %s234 = ssub.s32 %s10, 1
      %s235 = smul.u32 16, %s21
      %p236 = scmp.lt.s32.totalorder %s20, 1
      %s237 = scalar_select %p236, %s20, 1
      %p238 = scmp.lt.s32.totalorder %s235, 15
      %s239 = scalar_select %p238, %s235, 15
      %p240 = scmp.lt.s32.totalorder %s22, 0
      %s241 = scalar_select %p240, %s22, 0
      %s242 = sadd.s32 %s241, %s239
      %s243 = smul.addr %s237, 16
      %s244 = sadd.s32 %s242, %s243
      %s245 = smul.addr %s244, 4
      %s246 = scalar_lea.vmem %s0, %s245
      %p247 = pneg %p59
      %p248 = pneg %p56
      %s249 = smul.u32 16, %s22
      %p250 = scmp.lt.s32.totalorder %s20, 1
      %s251 = scalar_select %p250, %s20, 1
      %p252 = scmp.lt.s32.totalorder %s249, 15
      %s253 = scalar_select %p252, %s249, 15
      %s254 = smul.addr %s251, 16
      %s255 = sadd.s32 %s253, %s254
      %s256 = smul.addr %s255, 4
      %s257 = scalar_lea.vmem %s1, %s256
      %p258 = pneg %p87
      %p259 = pneg %p84
      %p260 = scmp.lt.s32.totalorder %s20, 1
      %s261 = scalar_select %p260, %s20, 1
      %s262 = smul.addr %s261, 8
      %s263 = scalar_lea.vmem %s2, %s262
      %p264 = pneg %p113
      %p265 = pneg %p110
      %p266 = scmp.lt.s32.totalorder %s20, 1
      %s267 = scalar_select %p266, %s20, 1
      %s268 = scalar_lea.vmem %s3, %s267
      %p269 = pneg %p139
      %p270 = pneg %p136
      %p271 = pneg %p167
      %p272 = pneg %p164
      %s273 = smul.u32 16, %s21
      %p274 = scmp.lt.s32.totalorder %s20, 1
      %s275 = scalar_select %p274, %s20, 1
      %p276 = scmp.lt.s32.totalorder %s273, 15
      %s277 = scalar_select %p276, %s273, 15
      %s278 = smul.addr %s275, 16
      %s279 = sadd.s32 %s277, %s278
      %s280 = smul.addr %s279, 4
      %s281 = scalar_lea.vmem %s4, %s280
      %s282 = smul.u32 16, %s21
      %p283 = scmp.lt.s32.totalorder %s20, 1
      %s284 = scalar_select %p283, %s20, 1
      %p285 = scmp.lt.s32.totalorder %s282, 15
      %s286 = scalar_select %p285, %s282, 15
      %p287 = scmp.lt.s32.totalorder %s22, 0
      %s288 = scalar_select %p287, %s22, 0
      %s289 = sadd.s32 %s288, %s286
      %s290 = smul.addr %s284, 16
      %s291 = sadd.s32 %s289, %s290
      %s292 = smul.addr %s291, 4
      %s293 = scalar_lea.vmem %s0, %s292
      %s294 = smul.u32 16, %s21
      %s295 = smul.u32 16, %s22
      %p296 = scmp.lt.s32.totalorder %s20, 1
      %s297 = scalar_select %p296, %s20, 1
      %p298 = scmp.lt.s32.totalorder %s295, 15
      %s299 = scalar_select %p298, %s295, 15
      %s300 = smul.addr %s297, 16
      %s301 = sadd.s32 %s299, %s300
      %s302 = smul.addr %s301, 4
      %s303 = scalar_lea.vmem %s1, %s302
      %s304 = smul.u32 16, %s22
      %p305 = scmp.lt.s32.totalorder %s20, 1
      %s306 = scalar_select %p305, %s20, 1
      %s307 = smul.addr %s306, 8
      %s308 = scalar_lea.vmem %s2, %s307
      %p309 = scmp.lt.s32.totalorder %s20, 1
      %s310 = scalar_select %p309, %s20, 1
      %s311 = scalar_lea.vmem %s3, %s310
      %s312 = smul.u32 16, %s21
      %p313 = scmp.lt.s32.totalorder %s20, 1
      %s314 = scalar_select %p313, %s20, 1
      %p315 = scmp.lt.s32.totalorder %s312, 15
      %s316 = scalar_select %p315, %s312, 15
      %s317 = smul.addr %s314, 16
      %s318 = sadd.s32 %s316, %s317
      %s319 = smul.addr %s318, 4
      %s320 = scalar_lea.vmem %s4, %s319
      %s321 = smul.u32 16, %s21
      %p323 = scmp.eq.s32.totalorder %s22, 0
      // Predicated region
      $region37: #{encoder_forward.9} parent=35 // pred_check
        %p324 = pneg %p323
      $region38: #{encoder_forward.9} parent=35 // pred_check_branch
        %326 = sbr.rel (%p324) target = $region40
      $region39: #{encoder_forward.9} parent=35 // pred_region
        %vm327 = vcmask 64512
        %328 = vst.msk [vmem:[#allocation2] sm:$0xff] %vm327, 0.0
        %329 = vst.msk [vmem:[#allocation2 + $0x8] sm:$0xff] %vm327, 0.0
        %330 = vst.msk [vmem:[#allocation2 + $0x10] sm:$0xff] %vm327, 0.0
        %331 = vst.msk [vmem:[#allocation2 + $0x18] sm:$0xff] %vm327, 0.0
        %332 = vst.msk [vmem:[#allocation2 + $0x20] sm:$0xff] %vm327, 0.0
        %333 = vst.msk [vmem:[#allocation2 + $0x28] sm:$0xff] %vm327, 0.0
        %334 = vst.msk [vmem:[#allocation2 + $0x30] sm:$0xff] %vm327, 0.0
        %335 = vst.msk [vmem:[#allocation2 + $0x38] sm:$0xff] %vm327, 0.0
        %336 = vst.msk [vmem:[#allocation2 + $0x40] sm:$0xff] %vm327, 0.0
        %337 = vst.msk [vmem:[#allocation2 + $0x48] sm:$0xff] %vm327, 0.0
        %338 = vst.msk [vmem:[#allocation2 + $0x50] sm:$0xff] %vm327, 0.0
        %339 = vst.msk [vmem:[#allocation2 + $0x58] sm:$0xff] %vm327, 0.0
        %340 = vst.msk [vmem:[#allocation2 + $0x60] sm:$0xff] %vm327, 0.0
        %341 = vst.msk [vmem:[#allocation2 + $0x68] sm:$0xff] %vm327, 0.0
        %342 = vst.msk [vmem:[#allocation2 + $0x70] sm:$0xff] %vm327, 0.0
        %343 = vst.msk [vmem:[#allocation2 + $0x78] sm:$0xff] %vm327, 0.0
      $region40: #{encoder_forward.9} parent=35 // pred_fallthru
        _
      %v344 = vld [vmem:[#allocation2] sm:$0xff]
      %v345 = vld [vmem:[#allocation2 + $0x8] sm:$0xff]
      %v346 = vld [vmem:[#allocation2 + $0x10] sm:$0xff]
      %v347 = vld [vmem:[#allocation2 + $0x18] sm:$0xff]
      %v348 = vld [vmem:[#allocation2 + $0x20] sm:$0xff]
      %v349 = vld [vmem:[#allocation2 + $0x28] sm:$0xff]
      %v350 = vld [vmem:[#allocation2 + $0x30] sm:$0xff]
      %v351 = vld [vmem:[#allocation2 + $0x38] sm:$0xff]
      %v352 = vld [vmem:[#allocation2 + $0x40] sm:$0xff]
      %v353 = vld [vmem:[#allocation2 + $0x48] sm:$0xff]
      %v354 = vld [vmem:[#allocation2 + $0x50] sm:$0xff]
      %v355 = vld [vmem:[#allocation2 + $0x58] sm:$0xff]
      %v356 = vld [vmem:[#allocation2 + $0x60] sm:$0xff]
      %v357 = vld [vmem:[#allocation2 + $0x68] sm:$0xff]
      %v358 = vld [vmem:[#allocation2 + $0x70] sm:$0xff]
      %v359 = vld [vmem:[#allocation2 + $0x78] sm:$0xff]
      %v360 = vld [vmem:[%s293] sm:$0xf]
      %v361 = vld [vmem:[%s293 + $0x4] sm:$0xf]
      %v362 = vld [vmem:[%s293 + $0x8] sm:$0xf]
      %v363 = vld [vmem:[%s293 + $0xc] sm:$0xf]
      %v364 = vld [vmem:[%s293 + $0x10] sm:$0xf]
      %v365 = vld [vmem:[%s293 + $0x14] sm:$0xf]
      %v366 = vld [vmem:[%s293 + $0x18] sm:$0xf]
      %v367 = vld [vmem:[%s293 + $0x1c] sm:$0xf]
      %v368 = vld [vmem:[%s293 + $0x20] sm:$0xf]
      %v369 = vld [vmem:[%s293 + $0x24] sm:$0xf]
      %v370 = vld [vmem:[%s293 + $0x28] sm:$0xf]
      %v371 = vld [vmem:[%s293 + $0x2c] sm:$0xf]
      %v372 = vld [vmem:[%s293 + $0x30] sm:$0xf]
      %v373 = vld [vmem:[%s293 + $0x34] sm:$0xf]
      %v374 = vld [vmem:[%s293 + $0x38] sm:$0xf]
      %v375 = vld [vmem:[%s293 + $0x3c] sm:$0xf]
      %v376 = vld [vmem:[%s303] sm:$0xf]
      %v377 = vld [vmem:[%s303 + $0x4] sm:$0xf]
      %v378 = vld [vmem:[%s303 + $0x8] sm:$0xf]
      %v379 = vld [vmem:[%s303 + $0xc] sm:$0xf]
      %v380 = vld [vmem:[%s303 + $0x10] sm:$0xf]
      %v381 = vld [vmem:[%s303 + $0x14] sm:$0xf]
      %v382 = vld [vmem:[%s303 + $0x18] sm:$0xf]
      %v383 = vld [vmem:[%s303 + $0x1c] sm:$0xf]
      %v384 = vld [vmem:[%s303 + $0x20] sm:$0xf]
      %v385 = vld [vmem:[%s303 + $0x24] sm:$0xf]
      %v386 = vld [vmem:[%s303 + $0x28] sm:$0xf]
      %v387 = vld [vmem:[%s303 + $0x2c] sm:$0xf]
      %v388 = vld [vmem:[%s303 + $0x30] sm:$0xf]
      %v389 = vld [vmem:[%s303 + $0x34] sm:$0xf]
      %v390 = vld [vmem:[%s303 + $0x38] sm:$0xf]
      %v391 = vld [vmem:[%s303 + $0x3c] sm:$0xf]
      %v408 = vunpack.c.l.b16 %v360
      %v409 = vunpack.c.l.b16 %v361
      %v410 = vunpack.c.l.b16 %v362
      %v411 = vunpack.c.l.b16 %v363
      %v412 = vunpack.c.l.b16 %v364
      %v413 = vunpack.c.l.b16 %v365
      %v414 = vunpack.c.l.b16 %v366
      %v415 = vunpack.c.l.b16 %v367
      %v416 = vunpack.c.l.b16 %v368
      %v417 = vunpack.c.l.b16 %v369
      %v418 = vunpack.c.l.b16 %v370
      %v419 = vunpack.c.l.b16 %v371
      %v420 = vunpack.c.l.b16 %v372
      %v421 = vunpack.c.l.b16 %v373
      %v422 = vunpack.c.l.b16 %v374
      %v423 = vunpack.c.l.b16 %v375
      %v424 = vpack.c.b16 %v409, %v408
      %v425 = vpack.c.b16 %v411, %v410
      %v426 = vpack.c.b16 %v413, %v412
      %v427 = vpack.c.b16 %v415, %v414
      %v428 = vpack.c.b16 %v417, %v416
      %v429 = vpack.c.b16 %v419, %v418
      %v430 = vpack.c.b16 %v421, %v420
      %v431 = vpack.c.b16 %v423, %v422
      %v456 = vunpack.c.l.b16 %v376
      %v457 = vunpack.c.l.b16 %v377
      %v458 = vunpack.c.l.b16 %v378
      %v459 = vunpack.c.l.b16 %v379
      %v460 = vunpack.c.l.b16 %v380
      %v461 = vunpack.c.l.b16 %v381
      %v462 = vunpack.c.l.b16 %v382
      %v463 = vunpack.c.l.b16 %v383
      %v464 = vunpack.c.l.b16 %v384
      %v465 = vunpack.c.l.b16 %v385
      %v466 = vunpack.c.l.b16 %v386
      %v467 = vunpack.c.l.b16 %v387
      %v468 = vunpack.c.l.b16 %v388
      %v469 = vunpack.c.l.b16 %v389
      %v470 = vunpack.c.l.b16 %v390
      %v471 = vunpack.c.l.b16 %v391
      %v472 = vpack.c.b16 %v457, %v456
      %v473 = vpack.c.b16 %v459, %v458
      %v474 = vpack.c.b16 %v461, %v460
      %v475 = vpack.c.b16 %v463, %v462
      %v476 = vpack.c.b16 %v465, %v464
      %v477 = vpack.c.b16 %v467, %v466
      %v478 = vpack.c.b16 %v469, %v468
      %v479 = vpack.c.b16 %v471, %v470
      %488 = vmatprep.subr.bf16.mxu0 0
      %489 = vmatpush1.bf16.msra.mxu0 %v472
      %490 = vmatprep.subr.bf16.mxu0 0
      %491 = vmatpush1.bf16.msra.mxu0 %v473
      %492 = vmatprep.subr.bf16.mxu0 0
      %493 = vmatpush1.bf16.msra.mxu0 %v474
      %494 = vmatprep.subr.bf16.mxu0 0
      %495 = vmatpush1.bf16.msra.mxu0 %v475
      %496 = vmatprep.subr.bf16.mxu0 0
      %497 = vmatpush1.bf16.msra.mxu0 %v476
      %498 = vmatprep.subr.bf16.mxu0 0
      %499 = vmatpush1.bf16.msra.mxu0 %v477
      %500 = vmatprep.subr.bf16.mxu0 0
      %501 = vmatpush1.bf16.msra.mxu0 %v478
      %502 = vmatprep.subr.bf16.mxu0 0
      %503 = vmatpush1.bf16.msra.mxu0 %v479
      %504 = vmatprep.subr.bf16.mxu0 0
      %505 = vmatpush1.bf16.msra.mxu0 0
      %506 = vmatprep.subr.bf16.mxu0 0
      %507 = vmatpush1.bf16.msra.mxu0 0
      %508 = vmatprep.subr.bf16.mxu0 0
      %509 = vmatpush1.bf16.msra.mxu0 0
      %510 = vmatprep.subr.bf16.mxu0 0
      %511 = vmatpush1.bf16.msra.mxu0 0
      %512 = vmatprep.subr.bf16.mxu0 0
      %513 = vmatpush1.bf16.msra.mxu0 0
      %514 = vmatprep.subr.bf16.mxu0 0
      %515 = vmatpush1.bf16.msra.mxu0 0
      %516 = vmatprep.subr.bf16.mxu0 0
      %517 = vmatpush1.bf16.msra.mxu0 0
      %518 = vmatprep.subr.bf16.mxu0 0
      %519 = vmatpush1.bf16.msra.mxu0 0
      %520 = vmatprep.mubr.bf16.mxu0 0
      %521 = vmatmul.mubr.bf16.gmra.mrb[0].mxu0 %v424
      %v522 = vpop.f32.mrb[0].mxu0
      %v523 = vadd.f32 0.0, %v522
      %v524 = vpop.f32.mrb[0].mxu0
      %v525 = vpop.f32.mrb[0].mxu0
      %v526 = vadd.f32 0.0, %v525
      %v527 = vpop.f32.mrb[0].mxu0
      %528 = vmatprep.mubr.bf16.mxu0 0
      %529 = vmatmul.mubr.bf16.gmra.mrb[0].mxu0 %v425
      %v530 = vpop.f32.mrb[0].mxu0
      %v531 = vadd.f32 0.0, %v530
      %v532 = vpop.f32.mrb[0].mxu0
      %v533 = vpop.f32.mrb[0].mxu0
      %v534 = vadd.f32 0.0, %v533
      %v535 = vpop.f32.mrb[0].mxu0
      %536 = vmatprep.mubr.bf16.mxu0 0
      %537 = vmatmul.mubr.bf16.gmra.mrb[0].mxu0 %v426
      %v538 = vpop.f32.mrb[0].mxu0
      %v539 = vadd.f32 0.0, %v538
      %v540 = vpop.f32.mrb[0].mxu0
      %v541 = vpop.f32.mrb[0].mxu0
      %v542 = vadd.f32 0.0, %v541
      %v543 = vpop.f32.mrb[0].mxu0
      %544 = vmatprep.mubr.bf16.mxu0 0
      %545 = vmatmul.mubr.bf16.gmra.mrb[0].mxu0 %v427
      %v546 = vpop.f32.mrb[0].mxu0
      %v547 = vadd.f32 0.0, %v546
      %v548 = vpop.f32.mrb[0].mxu0
      %v549 = vpop.f32.mrb[0].mxu0
      %v550 = vadd.f32 0.0, %v549
      %v551 = vpop.f32.mrb[0].mxu0
      %552 = vmatprep.mubr.bf16.mxu0 0
      %553 = vmatmul.mubr.bf16.gmra.mrb[0].mxu0 %v428
      %v554 = vpop.f32.mrb[0].mxu0
      %v555 = vadd.f32 0.0, %v554
      %v556 = vpop.f32.mrb[0].mxu0
      %v557 = vpop.f32.mrb[0].mxu0
      %v558 = vadd.f32 0.0, %v557
      %v559 = vpop.f32.mrb[0].mxu0
      %560 = vmatprep.mubr.bf16.mxu0 0
      %561 = vmatmul.mubr.bf16.gmra.mrb[0].mxu0 %v429
      %v562 = vpop.f32.mrb[0].mxu0
      %v563 = vadd.f32 0.0, %v562
      %v564 = vpop.f32.mrb[0].mxu0
      %v565 = vpop.f32.mrb[0].mxu0
      %v566 = vadd.f32 0.0, %v565
      %v567 = vpop.f32.mrb[0].mxu0
      %568 = vmatprep.mubr.bf16.mxu0 0
      %569 = vmatmul.mubr.bf16.gmra.mrb[0].mxu0 %v430
      %v570 = vpop.f32.mrb[0].mxu0
      %v571 = vadd.f32 0.0, %v570
      %v572 = vpop.f32.mrb[0].mxu0
      %v573 = vpop.f32.mrb[0].mxu0
      %v574 = vadd.f32 0.0, %v573
      %v575 = vpop.f32.mrb[0].mxu0
      %576 = vmatprep.mubr.bf16.mxu0 0
      %577 = vmatmul.mubr.bf16.gmra.mrb[0].mxu0 %v431
      %v578 = vpop.f32.mrb[0].mxu0
      %v579 = vadd.f32 0.0, %v578
      %v580 = vpop.f32.mrb[0].mxu0
      %v581 = vpop.f32.mrb[0].mxu0
      %v582 = vadd.f32 0.0, %v581
      %v583 = vpop.f32.mrb[0].mxu0
      %584 = vdwg.mxu0
      %v585 = vadd.f32 %v344, %v523
      %v586 = vadd.f32 %v345, %v526
      %v587 = vadd.f32 %v346, %v531
      %v588 = vadd.f32 %v347, %v534
      %v589 = vadd.f32 %v348, %v539
      %v590 = vadd.f32 %v349, %v542
      %v591 = vadd.f32 %v350, %v547
      %v592 = vadd.f32 %v351, %v550
      %v593 = vadd.f32 %v352, %v555
      %v594 = vadd.f32 %v353, %v558
      %v595 = vadd.f32 %v354, %v563
      %v596 = vadd.f32 %v355, %v566
      %v597 = vadd.f32 %v356, %v571
      %v598 = vadd.f32 %v357, %v574
      %v599 = vadd.f32 %v358, %v579
      %v600 = vadd.f32 %v359, %v582
      %vm601 = vcmask 64512
      %602 = vst.msk [vmem:[#allocation2] sm:$0xff] %vm601, %v585
      %603 = vst.msk [vmem:[#allocation2 + $0x8] sm:$0xff] %vm601, %v586
      %604 = vst.msk [vmem:[#allocation2 + $0x10] sm:$0xff] %vm601, %v587
      %605 = vst.msk [vmem:[#allocation2 + $0x18] sm:$0xff] %vm601, %v588
      %606 = vst.msk [vmem:[#allocation2 + $0x20] sm:$0xff] %vm601, %v589
      %607 = vst.msk [vmem:[#allocation2 + $0x28] sm:$0xff] %vm601, %v590
      %608 = vst.msk [vmem:[#allocation2 + $0x30] sm:$0xff] %vm601, %v591
      %609 = vst.msk [vmem:[#allocation2 + $0x38] sm:$0xff] %vm601, %v592
      %610 = vst.msk [vmem:[#allocation2 + $0x40] sm:$0xff] %vm601, %v593
      %611 = vst.msk [vmem:[#allocation2 + $0x48] sm:$0xff] %vm601, %v594
      %612 = vst.msk [vmem:[#allocation2 + $0x50] sm:$0xff] %vm601, %v595
      %613 = vst.msk [vmem:[#allocation2 + $0x58] sm:$0xff] %vm601, %v596
      %614 = vst.msk [vmem:[#allocation2 + $0x60] sm:$0xff] %vm601, %v597
      %615 = vst.msk [vmem:[#allocation2 + $0x68] sm:$0xff] %vm601, %v598
      %616 = vst.msk [vmem:[#allocation2 + $0x70] sm:$0xff] %vm601, %v599
      %617 = vst.msk [vmem:[#allocation2 + $0x78] sm:$0xff] %vm601, %v600
      // Predicated region
      $region41: #{encoder_forward.9} parent=35 // pred_check
        %p618 = pneg %p323
      $region42: #{encoder_forward.9} parent=35 // pred_check_branch
        %620 = sbr.rel (%p618) target = $region44
      $region43: #{encoder_forward.9} parent=35 // pred_region
        %v621 = vld [vmem:[#allocation2] sm:$0xff]
        %v622 = vld [vmem:[#allocation2 + $0x8] sm:$0xff]
        %v623 = vld [vmem:[#allocation2 + $0x10] sm:$0xff]
        %v624 = vld [vmem:[#allocation2 + $0x18] sm:$0xff]
        %v625 = vld [vmem:[#allocation2 + $0x20] sm:$0xff]
        %v626 = vld [vmem:[#allocation2 + $0x28] sm:$0xff]
        %v627 = vld [vmem:[#allocation2 + $0x30] sm:$0xff]
        %v628 = vld [vmem:[#allocation2 + $0x38] sm:$0xff]
        %v629 = vld [vmem:[#allocation2 + $0x40] sm:$0xff]
        %v630 = vld [vmem:[#allocation2 + $0x48] sm:$0xff]
        %v631 = vld [vmem:[#allocation2 + $0x50] sm:$0xff]
        %v632 = vld [vmem:[#allocation2 + $0x58] sm:$0xff]
        %v633 = vld [vmem:[#allocation2 + $0x60] sm:$0xff]
        %v634 = vld [vmem:[#allocation2 + $0x68] sm:$0xff]
        %v635 = vld [vmem:[#allocation2 + $0x70] sm:$0xff]
        %v636 = vld [vmem:[#allocation2 + $0x78] sm:$0xff]
        %v637 = vld [vmem:[%s308] sm:$0xff]
        %v638 = vld [vmem:[%s311] sm:$0x1]
        %v640 = vlaneseq
        %v641 = vshrl.u32 %v640, 7
        %v642 = vsub.s32 0, %v641
        %v643 = vrot.slane %v638, %v642
        %v646 = vsel %vm601, %v621, 0
        %v649 = vsel %vm601, %v622, 0
        %v652 = vsel %vm601, %v623, 0
        %v655 = vsel %vm601, %v624, 0
        %v658 = vsel %vm601, %v625, 0
        %v661 = vsel %vm601, %v626, 0
        %v664 = vsel %vm601, %v627, 0
        %v667 = vsel %vm601, %v628, 0
        %v670 = vsel %vm601, %v629, 0
        %v673 = vsel %vm601, %v630, 0
        %v676 = vsel %vm601, %v631, 0
        %v679 = vsel %vm601, %v632, 0
        %v682 = vsel %vm601, %v633, 0
        %v685 = vsel %vm601, %v634, 0
        %v688 = vsel %vm601, %v635, 0
        %v691 = vsel %vm601, %v636, 0
        %693 = vmatprep.subr.mxu0 0.0
        %694 = vmatpush1.msra.mxu0 %v637
        %695 = vmatprep.subr.mxu0 0.0
        %696 = vmatpush1.msra.mxu0 0.0
        %697 = vmatprep.subr.mxu0 0.0
        %698 = vmatpush1.msra.mxu0 0.0
        %699 = vmatprep.subr.mxu0 0.0
        %700 = vmatpush1.msra.mxu0 0.0
        %701 = vmatprep.subr.mxu0 0.0
        %702 = vmatpush1.msra.mxu0 0.0
        %703 = vmatprep.subr.mxu0 0.0
        %704 = vmatpush1.msra.mxu0 0.0
        %705 = vmatprep.subr.mxu0 0.0
        %706 = vmatpush1.msra.mxu0 0.0
        %707 = vmatprep.subr.mxu0 0.0
        %708 = vmatpush1.msra.mxu0 0.0
        %709 = vmatprep.subr.mxu0 0.0
        %710 = vmatpush1.msra.mxu0 0.0
        %711 = vmatprep.subr.mxu0 0.0
        %712 = vmatpush1.msra.mxu0 0.0
        %713 = vmatprep.subr.mxu0 0.0
        %714 = vmatpush1.msra.mxu0 0.0
        %715 = vmatprep.subr.mxu0 0.0
        %716 = vmatpush1.msra.mxu0 0.0
        %717 = vmatprep.subr.mxu0 0.0
        %718 = vmatpush1.msra.mxu0 0.0
        %719 = vmatprep.subr.mxu0 0.0
        %720 = vmatpush1.msra.mxu0 0.0
        %721 = vmatprep.subr.mxu0 0.0
        %722 = vmatpush1.msra.mxu0 0.0
        %723 = vmatprep.subr.mxu0 0.0
        %724 = vmatpush1.msra.mxu0 0.0
        %725 = vmatprep.subr.mxu0 0.0
        %726 = vmatpush1.msra.mxu0 0.0
        %727 = vmatprep.subr.mxu0 0.0
        %728 = vmatpush1.msra.mxu0 0.0
        %729 = vmatprep.subr.mxu0 0.0
        %730 = vmatpush1.msra.mxu0 0.0
        %731 = vmatprep.subr.mxu0 0.0
        %732 = vmatpush1.msra.mxu0 0.0
        %733 = vmatprep.subr.mxu0 0.0
        %734 = vmatpush1.msra.mxu0 0.0
        %735 = vmatprep.subr.mxu0 0.0
        %736 = vmatpush1.msra.mxu0 0.0
        %737 = vmatprep.subr.mxu0 0.0
        %738 = vmatpush1.msra.mxu0 0.0
        %739 = vmatprep.subr.mxu0 0.0
        %740 = vmatpush1.msra.mxu0 0.0
        %741 = vmatprep.subr.mxu0 0.0
        %742 = vmatpush1.msra.mxu0 0.0
        %743 = vmatprep.subr.mxu0 0.0
        %744 = vmatpush1.msra.mxu0 0.0
        %745 = vmatprep.subr.mxu0 0.0
        %746 = vmatpush1.msra.mxu0 0.0
        %747 = vmatprep.subr.mxu0 0.0
        %748 = vmatpush1.msra.mxu0 0.0
        %749 = vmatprep.subr.mxu0 0.0
        %750 = vmatpush1.msra.mxu0 0.0
        %751 = vmatprep.subr.mxu0 0.0
        %752 = vmatpush1.msra.mxu0 0.0
        %753 = vmatprep.subr.mxu0 0.0
        %754 = vmatpush1.msra.mxu0 0.0
        %755 = vmatprep.subr.mxu0 0.0
        %756 = vmatpush1.msra.mxu0 0.0
        %757 = vmatprep.mubr.f32.mxu0 0.0
        %758 = vmatmul.mubr.f32.gmra.mrb[0].mxu0 %v646
        %v759 = vpop.f32.mrb[0].mxu0
        %v760 = vadd.f32 %v643, %v759
        %v761 = vpop.f32.mrb[0].mxu0
        %762 = vmatprep.mubr.f32.mxu0 0.0
        %763 = vmatmul.mubr.f32.gmra.mrb[0].mxu0 %v649
        %v764 = vpop.f32.mrb[0].mxu0
        %v765 = vadd.f32 %v643, %v764
        %v766 = vpop.f32.mrb[0].mxu0
        %767 = vmatprep.mubr.f32.mxu0 0.0
        %768 = vmatmul.mubr.f32.gmra.mrb[0].mxu0 %v652
        %v769 = vpop.f32.mrb[0].mxu0
        %v770 = vadd.f32 %v643, %v769
        %v771 = vpop.f32.mrb[0].mxu0
        %772 = vmatprep.mubr.f32.mxu0 0.0
        %773 = vmatmul.mubr.f32.gmra.mrb[0].mxu0 %v655
        %v774 = vpop.f32.mrb[0].mxu0
        %v775 = vadd.f32 %v643, %v774
        %v776 = vpop.f32.mrb[0].mxu0
        %777 = vmatprep.mubr.f32.mxu0 0.0
        %778 = vmatmul.mubr.f32.gmra.mrb[0].mxu0 %v658
        %v779 = vpop.f32.mrb[0].mxu0
        %v780 = vadd.f32 %v643, %v779
        %v781 = vpop.f32.mrb[0].mxu0
        %782 = vmatprep.mubr.f32.mxu0 0.0
        %783 = vmatmul.mubr.f32.gmra.mrb[0].mxu0 %v661
        %v784 = vpop.f32.mrb[0].mxu0
        %v785 = vadd.f32 %v643, %v784
        %v786 = vpop.f32.mrb[0].mxu0
        %787 = vmatprep.mubr.f32.mxu0 0.0
        %788 = vmatmul.mubr.f32.gmra.mrb[0].mxu0 %v664
        %v789 = vpop.f32.mrb[0].mxu0
        %v790 = vadd.f32 %v643, %v789
        %v791 = vpop.f32.mrb[0].mxu0
        %792 = vmatprep.mubr.f32.mxu0 0.0
        %793 = vmatmul.mubr.f32.gmra.mrb[0].mxu0 %v667
        %v794 = vpop.f32.mrb[0].mxu0
        %v795 = vadd.f32 %v643, %v794
        %v796 = vpop.f32.mrb[0].mxu0
        %797 = vmatprep.mubr.f32.mxu0 0.0
        %798 = vmatmul.mubr.f32.gmra.mrb[0].mxu0 %v670
        %v799 = vpop.f32.mrb[0].mxu0
        %v800 = vadd.f32 %v643, %v799
        %v801 = vpop.f32.mrb[0].mxu0
        %802 = vmatprep.mubr.f32.mxu0 0.0
        %803 = vmatmul.mubr.f32.gmra.mrb[0].mxu0 %v673
        %v804 = vpop.f32.mrb[0].mxu0
        %v805 = vadd.f32 %v643, %v804
        %v806 = vpop.f32.mrb[0].mxu0
        %807 = vmatprep.mubr.f32.mxu0 0.0
        %808 = vmatmul.mubr.f32.gmra.mrb[0].mxu0 %v676
        %v809 = vpop.f32.mrb[0].mxu0
        %v810 = vadd.f32 %v643, %v809
        %v811 = vpop.f32.mrb[0].mxu0
        %812 = vmatprep.mubr.f32.mxu0 0.0
        %813 = vmatmul.mubr.f32.gmra.mrb[0].mxu0 %v679
        %v814 = vpop.f32.mrb[0].mxu0
        %v815 = vadd.f32 %v643, %v814
        %v816 = vpop.f32.mrb[0].mxu0
        %817 = vmatprep.mubr.f32.mxu0 0.0
        %818 = vmatmul.mubr.f32.gmra.mrb[0].mxu0 %v682
        %v819 = vpop.f32.mrb[0].mxu0
        %v820 = vadd.f32 %v643, %v819
        %v821 = vpop.f32.mrb[0].mxu0
        %822 = vmatprep.mubr.f32.mxu0 0.0
        %823 = vmatmul.mubr.f32.gmra.mrb[0].mxu0 %v685
        %v824 = vpop.f32.mrb[0].mxu0
        %v825 = vadd.f32 %v643, %v824
        %v826 = vpop.f32.mrb[0].mxu0
        %827 = vmatprep.mubr.f32.mxu0 0.0
        %828 = vmatmul.mubr.f32.gmra.mrb[0].mxu0 %v688
        %v829 = vpop.f32.mrb[0].mxu0
        %v830 = vadd.f32 %v643, %v829
        %v831 = vpop.f32.mrb[0].mxu0
        %832 = vmatprep.mubr.f32.mxu0 0.0
        %833 = vmatmul.mubr.f32.gmra.mrb[0].mxu0 %v691
        %v834 = vpop.f32.mrb[0].mxu0
        %v835 = vadd.f32 %v643, %v834
        %v836 = vpop.f32.mrb[0].mxu0
        %837 = vdwg.mxu0
        %v838 = vmax.f32 %v760, 0.0
        %v839 = vmax.f32 %v765, 0.0
        %v840 = vmax.f32 %v770, 0.0
        %v841 = vmax.f32 %v775, 0.0
        %v842 = vmax.f32 %v780, 0.0
        %v843 = vmax.f32 %v785, 0.0
        %v844 = vmax.f32 %v790, 0.0
        %v845 = vmax.f32 %v795, 0.0
        %v846 = vmax.f32 %v800, 0.0
        %v847 = vmax.f32 %v805, 0.0
        %v848 = vmax.f32 %v810, 0.0
        %v849 = vmax.f32 %v815, 0.0
        %v850 = vmax.f32 %v820, 0.0
        %v851 = vmax.f32 %v825, 0.0
        %v852 = vmax.f32 %v830, 0.0
        %v853 = vmax.f32 %v835, 0.0
        %v854 = vpack.c.bf16 %v839, %v838
        %v855 = vpack.c.bf16 %v841, %v840
        %v856 = vpack.c.bf16 %v843, %v842
        %v857 = vpack.c.bf16 %v845, %v844
        %v858 = vpack.c.bf16 %v847, %v846
        %v859 = vpack.c.bf16 %v849, %v848
        %v860 = vpack.c.bf16 %v851, %v850
        %v861 = vpack.c.bf16 %v853, %v852
        %v870 = vunpack.c.l.b16 %v854
        %v871 = vunpack.c.h.b16 %v854
        %v872 = vunpack.c.l.b16 %v855
        %v873 = vunpack.c.h.b16 %v855
        %v874 = vunpack.c.l.b16 %v856
        %v875 = vunpack.c.h.b16 %v856
        %v876 = vunpack.c.l.b16 %v857
        %v877 = vunpack.c.h.b16 %v857
        %v878 = vunpack.c.l.b16 %v858
        %v879 = vunpack.c.h.b16 %v858
        %v880 = vunpack.c.l.b16 %v859
        %v881 = vunpack.c.h.b16 %v859
        %v882 = vunpack.c.l.b16 %v860
        %v883 = vunpack.c.h.b16 %v860
        %v884 = vunpack.c.l.b16 %v861
        %v885 = vunpack.c.h.b16 %v861
        %v886 = vpack.c.b16 %v870, %v870
        %v887 = vpack.c.b16 %v871, %v871
        %v888 = vpack.c.b16 %v872, %v872
        %v889 = vpack.c.b16 %v873, %v873
        %v890 = vpack.c.b16 %v874, %v874
        %v891 = vpack.c.b16 %v875, %v875
        %v892 = vpack.c.b16 %v876, %v876
        %v893 = vpack.c.b16 %v877, %v877
        %v894 = vpack.c.b16 %v878, %v878
        %v895 = vpack.c.b16 %v879, %v879
        %v896 = vpack.c.b16 %v880, %v880
        %v897 = vpack.c.b16 %v881, %v881
        %v898 = vpack.c.b16 %v882, %v882
        %v899 = vpack.c.b16 %v883, %v883
        %v900 = vpack.c.b16 %v884, %v884
        %v901 = vpack.c.b16 %v885, %v885
        %vm918 = vcmask 519168
        %919 = vst.msk [vmem:[%s320] sm:$0xf] %vm918, %v886
        %920 = vst.msk [vmem:[%s320 + $0x4] sm:$0xf] %vm918, %v887
        %921 = vst.msk [vmem:[%s320 + $0x8] sm:$0xf] %vm918, %v888
        %922 = vst.msk [vmem:[%s320 + $0xc] sm:$0xf] %vm918, %v889
        %923 = vst.msk [vmem:[%s320 + $0x10] sm:$0xf] %vm918, %v890
        %924 = vst.msk [vmem:[%s320 + $0x14] sm:$0xf] %vm918, %v891
        %925 = vst.msk [vmem:[%s320 + $0x18] sm:$0xf] %vm918, %v892
        %926 = vst.msk [vmem:[%s320 + $0x1c] sm:$0xf] %vm918, %v893
        %927 = vst.msk [vmem:[%s320 + $0x20] sm:$0xf] %vm918, %v894
        %928 = vst.msk [vmem:[%s320 + $0x24] sm:$0xf] %vm918, %v895
        %929 = vst.msk [vmem:[%s320 + $0x28] sm:$0xf] %vm918, %v896
        %930 = vst.msk [vmem:[%s320 + $0x2c] sm:$0xf] %vm918, %v897
        %931 = vst.msk [vmem:[%s320 + $0x30] sm:$0xf] %vm918, %v898
        %932 = vst.msk [vmem:[%s320 + $0x34] sm:$0xf] %vm918, %v899
        %933 = vst.msk [vmem:[%s320 + $0x38] sm:$0xf] %vm918, %v900
        %934 = vst.msk [vmem:[%s320 + $0x3c] sm:$0xf] %vm918, %v901
      $region44: #{encoder_forward.9} parent=35 // pred_fallthru
        _
      %s935 = smul.u32 16, %s21
      %p936 = scmp.lt.s32.totalorder %s20, 1
      %s937 = scalar_select %p936, %s20, 1
      %p938 = scmp.lt.s32.totalorder %s935, 15
      %s939 = scalar_select %p938, %s935, 15
      %s940 = smul.addr %s937, 16
      %s941 = sadd.s32 %s939, %s940
      %s942 = smul.addr %s941, 4
      %s943 = scalar_lea.vmem %s4, %s942
      // Predicated region
      $region45: #{encoder_forward.9} parent=35 // pred_check
        %p944 = pneg %p164
      $region46: #{encoder_forward.9} parent=35 // pred_check_branch
        %946 = sbr.rel (%p944) target = $region48
      $region47: #{encoder_forward.9} parent=35 // pred_region
        %s947 = smul.u32 16, %s21
      $region48: #{encoder_forward.9} parent=35 // pred_fallthru
        _
    $region36: #{encoder_forward.9} parent=5 // pred_fallthru
      _
    %p948 = scmp.le.s32.totalorder 2, %s10
    // Predicated region
    $region49: #{encoder_forward.9} parent=5 // pred_check
      %p949 = pneg %p948
    $region50: #{encoder_forward.9} parent=5 // pred_check_branch
      %951 = sbr.rel (%p949) target = $region52
    $region51: #{encoder_forward.9} parent=5 // pred_region
      %s952 = ssub.s32 %s10, 2
      // Predicated region
      $region53: #{encoder_forward.9} parent=51 // pred_check
        %p953 = pneg %p170
      $region54: #{encoder_forward.9} parent=51 // pred_check_branch
        %955 = sbr.rel (%p953) target = $region56
      $region55: #{encoder_forward.9} parent=51 // pred_region
        %s956 = smul.u32 16, %s24
        %p957 = scmp.lt.s32.totalorder %s23, 1
        %s958 = scalar_select %p957, %s23, 1
        %p959 = scmp.lt.s32.totalorder %s956, 15
        %s960 = scalar_select %p959, %s956, 15
        %s961 = smul.addr %s958, 16
        %s962 = sadd.s32 %s960, %s961
        %s963 = smul.addr %s962, 4
        %s964 = scalar_lea.vmem %s4, %s963
      $region56: #{encoder_forward.9} parent=51 // pred_fallthru
        _
    $region52: #{encoder_forward.9} parent=5 // pred_fallthru
      _
  $region6: #{encoder_forward.9} parent=0 // loop_footer
    %s14 = sadd.s32 1, %s10
  $region7: #{encoder_forward.9} parent=0 // loop_footer_branch
    %9 = sbr.rel target = $region3
  $region8: #{encoder_forward.9} parent=0 // loop_exit
    _

// kernel: encoder_forward.10
$region0: #{encoder_forward.10}
  #allocation0 [shape = 'u32[]', space=smem, size = 0x4, offset = 0x4, fixed_abs, tag = 'smem constant byte address 0x4 - core index']
  #allocation1 [shape = 'u32[144,128]{1,0:T(1,128)}', space=vmem, size = 0x12000, scoped, tag = 'internal scratch']
  #allocation2 [shape = 'f32[128,64]{1,0:T(8,128)}', space=vmem, size = 0x10000, scoped, tag = 'scratch operand']
  %s0 = inlined_call_operand.vmem [shape: bf16[2,128,128], index: 0, kind: input, shape index: {}]
  %s1 = inlined_call_operand.vmem [shape: bf16[2,128,64], index: 1, kind: input, shape index: {}]
  %s2 = inlined_call_operand.vmem [shape: f32[2,64,64], index: 2, kind: input, shape index: {}]
  %s3 = inlined_call_operand.vmem [shape: f32[2,1,64], index: 3, kind: input, shape index: {}]
  %s4 = inlined_call_operand.vmem [shape: f32[4,128], index: 4, kind: input, shape index: {}]
  %s5 = inlined_call_operand.hbm [shape: bf16[2,128,64], index: 5, kind: output, shape index: {0}]
  %s6 = inlined_call_operand.vmem [shape: f32[2,1,4,64], index: 6, kind: output, shape index: {1}]
  %7 = xla_tuple %s5, %s6
  %s8 = sld [smem:[#allocation0]]
  $region69: #{encoder_forward.10} parent=0
    _
  %s10 = ssub.s32 1, %s8
  %s11 = scalar_select 0, %s10, %s8
  $region1: #{encoder_forward.10} parent=0
    #allocation3 [shape = 'u8[65536]{0}', space=vmem, size = 0x10000, scoped, tag = 'output window, operand 0']
    #allocation4 [shape = 's32[2]{0}', space=sflag, size = 0x8, scoped, tag = 'scoped memory for encoder_forward.10']
    %12 = vsyncpa [#allocation4], 0
    %s13 = scalar_lea.sflag [#allocation4], 1
    %14 = vsyncpa %s13, 0
    loop: start=0, step=1, limit=4
    $region2: #{encoder_forward.10} parent=1 // loop_pre_header
      _
    $region3: #{encoder_forward.10} parent=1 // loop_header
      %s16 = sphi 0, %s20
      %p17 = scmp.ge.s32.totalorder %s16, 4
      %s23 = sphi 0, %s42
      %s24 = sphi 0, %s38
      %s25 = sphi 0, %s34
      %s26 = sphi 0, %s23
      %s27 = sphi 0, %s24
      %s28 = sphi 0, %s25
      %s29 = sphi 0, %s26
      %s30 = sphi 0, %s27
      %s31 = sphi 0, %s28
      %s49 = sphi 0, %s51
      %s52 = sphi 0, %s49
      %s53 = sphi 0, %s52
      %s69 = sphi 0, %s53
      %s77 = sphi 0, %s79
      %s80 = sphi 0, %s77
      %s81 = sphi 0, %s80
      %s97 = sphi 0, %s81
      %s103 = sphi 0, %s105
      %s106 = sphi 0, %s103
      %s107 = sphi 0, %s106
      %s123 = sphi 0, %s107
      %s129 = sphi 0, %s131
      %s132 = sphi 0, %s129
      %s133 = sphi 0, %s132
      %s149 = sphi 0, %s133
      %s155 = sphi 0, %s157
      %s158 = sphi 0, %s155
      %s159 = sphi 0, %s158
      %s175 = sphi 0, %s159
      %s183 = sphi 0, %s185
      %s186 = sphi 0, %s183
      %s187 = sphi 0, %s186
      %s203 = sphi 0, %s187
      %s211 = sphi 0, %s213
      %s214 = sphi 0, %s211
      %s215 = sphi 0, %s214
      %s231 = sphi 0, %s215
    $region4: #{encoder_forward.10} parent=1 // loop_header_branch
      %19 = sbr.rel (%p17) target = $region8
    $region5: #{encoder_forward.10} parent=1 // loop_body
      %s21 = ssub.s32 %s16, 1
      %s22 = ssub.s32 %s16, 2
      %s32 = sadd.s32 1, %s25
      %p33 = scmp.ge.s32.totalorder %s32, 1
      %s34 = scalar_select %p33, 0, %s32
      %s35 = sadd.s32 1, %s24
      %s36 = scalar_select %p33, %s35, %s24
      %p37 = scmp.ge.s32.totalorder %s36, 1
      %s38 = scalar_select %p37, 0, %s36
      %s39 = sadd.s32 1, %s23
      %s40 = scalar_select %p37, %s39, %s23
      %p41 = scmp.ge.s32.totalorder %s40, 2
      %s42 = scalar_select %p41, 0, %s40
      %s43 = ssub.s32 %s23, %s42
      %s44 = ssub.s32 %s24, %s38
      %s45 = sor.u32 %s43, %s44
      %s46 = ssub.s32 %s25, %s34
      %s47 = sor.u32 %s45, %s46
      %p48 = scmp.eq.s32.totalorder %s47, 0
      %s50 = sadd.s32 %s49, 1
      %s51 = scalar_select %p48, %s49, %s50
      %p54 = pneg %p48
      %p55 = scmp.eq.s32.totalorder %s16, 1
      %p56 = por %p54, %p55
      %p57 = scmp.ne.s32.totalorder %s49, %s52
      %p58 = scmp.eq.s32.totalorder %s16, 0
      %p59 = por %p57, %p58
      %p60 = scmp.ne.s32.totalorder %s49, %s52
      %p61 = scmp.eq.s32.totalorder %s21, 1
      %p62 = por %p60, %p61
      %p63 = scmp.ne.s32.totalorder %s52, %s53
      %p64 = scmp.eq.s32.totalorder %s21, 0
      %p65 = por %p63, %p64
      %p66 = scmp.ne.s32.totalorder %s52, %s53
      %p67 = scmp.eq.s32.totalorder %s22, 1
      %p68 = por %p66, %p67
      %p70 = scmp.ne.s32.totalorder %s53, %s69
      %p71 = scmp.eq.s32.totalorder %s22, 0
      %p72 = por %p70, %p71
      %s73 = ssub.s32 %s23, %s42
      %s74 = ssub.s32 %s25, %s34
      %s75 = sor.u32 %s73, %s74
      %p76 = scmp.eq.s32.totalorder %s75, 0
      %s78 = sadd.s32 %s77, 1
      %s79 = scalar_select %p76, %s77, %s78
      %p82 = pneg %p76
      %p83 = scmp.eq.s32.totalorder %s16, 1
      %p84 = por %p82, %p83
      %p85 = scmp.ne.s32.totalorder %s77, %s80
      %p86 = scmp.eq.s32.totalorder %s16, 0
      %p87 = por %p85, %p86
      %p88 = scmp.ne.s32.totalorder %s77, %s80
      %p89 = scmp.eq.s32.totalorder %s21, 1
      %p90 = por %p88, %p89
      %p91 = scmp.ne.s32.totalorder %s80, %s81
      %p92 = scmp.eq.s32.totalorder %s21, 0
      %p93 = por %p91, %p92
      %p94 = scmp.ne.s32.totalorder %s80, %s81
      %p95 = scmp.eq.s32.totalorder %s22, 1
      %p96 = por %p94, %p95
      %p98 = scmp.ne.s32.totalorder %s81, %s97
      %p99 = scmp.eq.s32.totalorder %s22, 0
      %p100 = por %p98, %p99
      %s101 = ssub.s32 %s23, %s42
      %p102 = scmp.eq.s32.totalorder %s101, 0
      %s104 = sadd.s32 %s103, 1
      %s105 = scalar_select %p102, %s103, %s104
      %p108 = pneg %p102
      %p109 = scmp.eq.s32.totalorder %s16, 1
      %p110 = por %p108, %p109
      %p111 = scmp.ne.s32.totalorder %s103, %s106
      %p112 = scmp.eq.s32.totalorder %s16, 0
      %p113 = por %p111, %p112
      %p114 = scmp.ne.s32.totalorder %s103, %s106
      %p115 = scmp.eq.s32.totalorder %s21, 1
      %p116 = por %p114, %p115
      %p117 = scmp.ne.s32.totalorder %s106, %s107
      %p118 = scmp.eq.s32.totalorder %s21, 0
      %p119 = por %p117, %p118
      %p120 = scmp.ne.s32.totalorder %s106, %s107
      %p121 = scmp.eq.s32.totalorder %s22, 1
      %p122 = por %p120, %p121
      %p124 = scmp.ne.s32.totalorder %s107, %s123
      %p125 = scmp.eq.s32.totalorder %s22, 0
      %p126 = por %p124, %p125
      %s127 = ssub.s32 %s23, %s42
      %p128 = scmp.eq.s32.totalorder %s127, 0
      %s130 = sadd.s32 %s129, 1
      %s131 = scalar_select %p128, %s129, %s130
      %p134 = pneg %p128
      %p135 = scmp.eq.s32.totalorder %s16, 1
      %p136 = por %p134, %p135
      %p137 = scmp.ne.s32.totalorder %s129, %s132
      %p138 = scmp.eq.s32.totalorder %s16, 0
      %p139 = por %p137, %p138
      %p140 = scmp.ne.s32.totalorder %s129, %s132
      %p141 = scmp.eq.s32.totalorder %s21, 1
      %p142 = por %p140, %p141
      %p143 = scmp.ne.s32.totalorder %s132, %s133
      %p144 = scmp.eq.s32.totalorder %s21, 0
      %p145 = por %p143, %p144
      %p146 = scmp.ne.s32.totalorder %s132, %s133
      %p147 = scmp.eq.s32.totalorder %s22, 1
      %p148 = por %p146, %p147
      %p150 = scmp.ne.s32.totalorder %s133, %s149
      %p151 = scmp.eq.s32.totalorder %s22, 0
      %p152 = por %p150, %p151
      %s153 = ssub.s32 %s24, %s38
      %p154 = scmp.eq.s32.totalorder %s153, 0
      %s156 = sadd.s32 %s155, 1
      %s157 = scalar_select %p154, %s155, %s156
      %p160 = pneg %p154
      %p161 = scmp.eq.s32.totalorder %s16, 1
      %p162 = por %p160, %p161
      %p163 = scmp.ne.s32.totalorder %s155, %s158
      %p164 = scmp.eq.s32.totalorder %s16, 0
      %p165 = por %p163, %p164
      %p166 = scmp.ne.s32.totalorder %s155, %s158
      %p167 = scmp.eq.s32.totalorder %s21, 1
      %p168 = por %p166, %p167
      %p169 = scmp.ne.s32.totalorder %s158, %s159
      %p170 = scmp.eq.s32.totalorder %s21, 0
      %p171 = por %p169, %p170
      %p172 = scmp.ne.s32.totalorder %s158, %s159
      %p173 = scmp.eq.s32.totalorder %s22, 1
      %p174 = por %p172, %p173
      %p176 = scmp.ne.s32.totalorder %s159, %s175
      %p177 = scmp.eq.s32.totalorder %s22, 0
      %p178 = por %p176, %p177
      %s179 = ssub.s32 %s23, %s42
      %s180 = ssub.s32 %s24, %s38
      %s181 = sor.u32 %s179, %s180
      %p182 = scmp.eq.s32.totalorder %s181, 0
      %s184 = sadd.s32 %s183, 1
      %s185 = scalar_select %p182, %s183, %s184
      %p188 = pneg %p182
      %p189 = scmp.eq.s32.totalorder %s16, 1
      %p190 = por %p188, %p189
      %p191 = scmp.ne.s32.totalorder %s183, %s186
      %p192 = scmp.eq.s32.totalorder %s16, 0
      %p193 = por %p191, %p192
      %p194 = scmp.ne.s32.totalorder %s183, %s186
      %p195 = scmp.eq.s32.totalorder %s21, 1
      %p196 = por %p194, %p195
      %p197 = scmp.ne.s32.totalorder %s186, %s187
      %p198 = scmp.eq.s32.totalorder %s21, 0
      %p199 = por %p197, %p198
      %p200 = scmp.ne.s32.totalorder %s186, %s187
      %p201 = scmp.eq.s32.totalorder %s22, 1
      %p202 = por %p200, %p201
      %p204 = scmp.ne.s32.totalorder %s187, %s203
      %p205 = scmp.eq.s32.totalorder %s22, 0
      %p206 = por %p204, %p205
      %s207 = ssub.s32 %s23, %s42
      %s208 = ssub.s32 %s24, %s38
      %s209 = sor.u32 %s207, %s208
      %p210 = scmp.eq.s32.totalorder %s209, 0
      %s212 = sadd.s32 %s211, 1
      %s213 = scalar_select %p210, %s211, %s212
      %p216 = pneg %p210
      %p217 = scmp.eq.s32.totalorder %s16, 1
      %p218 = por %p216, %p217
      %p219 = scmp.ne.s32.totalorder %s211, %s214
      %p220 = scmp.eq.s32.totalorder %s16, 0
      %p221 = por %p219, %p220
      %p222 = scmp.ne.s32.totalorder %s211, %s214
      %p223 = scmp.eq.s32.totalorder %s21, 1
      %p224 = por %p222, %p223
      %p225 = scmp.ne.s32.totalorder %s214, %s215
      %p226 = scmp.eq.s32.totalorder %s21, 0
      %p227 = por %p225, %p226
      %p228 = scmp.ne.s32.totalorder %s214, %s215
      %p229 = scmp.eq.s32.totalorder %s22, 1
      %p230 = por %p228, %p229
      %p232 = scmp.ne.s32.totalorder %s215, %s231
      %p233 = scmp.eq.s32.totalorder %s22, 0
      %p234 = por %p232, %p233
      %p235 = scmp.le.s32.totalorder 1, %s16
      %p236 = scmp.lt.s32.totalorder %s16, 3
      %p237 = pnand %p235, %p236
      %p238 = pneg %p237
      // Predicated region
      $region9: #{encoder_forward.10} parent=5 // pred_check
        _
      $region10: #{encoder_forward.10} parent=5 // pred_check_branch
        %240 = sbr.rel (%p237) target = $region12
      $region11: #{encoder_forward.10} parent=5 // pred_region
        %s241 = ssub.s32 %s16, 1
        // Predicated region
        $region13: #{encoder_forward.10} parent=11 // pred_check
          %p242 = pneg %p171
        $region14: #{encoder_forward.10} parent=11 // pred_check_branch
          %244 = sbr.rel (%p242) target = $region16
        $region15: #{encoder_forward.10} parent=11 // pred_region
          %p245 = scmp.lt.s32.totalorder %s27, 0
          %s246 = scalar_select %p245, %s27, 0
          %s247 = smul.addr %s246, 4
          %s248 = scalar_lea.vmem %s4, %s247
        $region16: #{encoder_forward.10} parent=11 // pred_fallthru
          _
      $region12: #{encoder_forward.10} parent=5 // pred_fallthru
        _
      %p249 = scmp.lt.s32.totalorder %s16, 2
      // Predicated region
      $region17: #{encoder_forward.10} parent=5 // pred_check
        %p250 = pneg %p249
      $region18: #{encoder_forward.10} parent=5 // pred_check_branch
        %252 = sbr.rel (%p250) target = $region20
      $region19: #{encoder_forward.10} parent=5 // pred_region
        // Predicated region
        $region21: #{encoder_forward.10} parent=19 // pred_check
          %p253 = pneg %p59
        $region22: #{encoder_forward.10} parent=19 // pred_check_branch
          %255 = sbr.rel (%p253) target = $region24
        $region23: #{encoder_forward.10} parent=19 // pred_region
          %s256 = smul.u32 16, %s24
          %p257 = scmp.lt.s32.totalorder %s23, 1
          %s258 = scalar_select %p257, %s23, 1
          %p259 = scmp.lt.s32.totalorder %s256, 15
          %s260 = scalar_select %p259, %s256, 15
          %p261 = scmp.lt.s32.totalorder %s25, 0
          %s262 = scalar_select %p261, %s25, 0
          %s263 = sadd.s32 %s262, %s260
          %s264 = smul.addr %s258, 16
          %s265 = sadd.s32 %s263, %s264
          %s266 = smul.addr %s265, 4
          %s267 = scalar_lea.vmem %s0, %s266
          %s268 = smul.u32 16, %s24
        $region24: #{encoder_forward.10} parent=19 // pred_fallthru
          _
        // Predicated region
        $region25: #{encoder_forward.10} parent=19 // pred_check
          %p269 = pneg %p87
        $region26: #{encoder_forward.10} parent=19 // pred_check_branch
          %271 = sbr.rel (%p269) target = $region28
        $region27: #{encoder_forward.10} parent=19 // pred_region
          %s272 = smul.u32 16, %s25
          %p273 = scmp.lt.s32.totalorder %s23, 1
          %s274 = scalar_select %p273, %s23, 1
          %p275 = scmp.lt.s32.totalorder %s272, 15
          %s276 = scalar_select %p275, %s272, 15
          %s277 = smul.addr %s274, 16
          %s278 = sadd.s32 %s276, %s277
          %s279 = smul.addr %s278, 4
          %s280 = scalar_lea.vmem %s1, %s279
          %s281 = smul.u32 16, %s25
        $region28: #{encoder_forward.10} parent=19 // pred_fallthru
          _
        // Predicated region
        $region29: #{encoder_forward.10} parent=19 // pred_check
          %p282 = pneg %p113
        $region30: #{encoder_forward.10} parent=19 // pred_check_branch
          %284 = sbr.rel (%p282) target = $region32
        $region31: #{encoder_forward.10} parent=19 // pred_region
          %p285 = scmp.lt.s32.totalorder %s23, 1
          %s286 = scalar_select %p285, %s23, 1
          %s287 = smul.addr %s286, 8
          %s288 = smul.addr %s287, 8
          %s289 = scalar_lea.vmem %s2, %s288
        $region32: #{encoder_forward.10} parent=19 // pred_fallthru
          _
        // Predicated region
        $region33: #{encoder_forward.10} parent=19 // pred_check
          %p290 = pneg %p139
        $region34: #{encoder_forward.10} parent=19 // pred_check_branch
          %292 = sbr.rel (%p290) target = $region36
        $region35: #{encoder_forward.10} parent=19 // pred_region
          %p293 = scmp.lt.s32.totalorder %s23, 1
          %s294 = scalar_select %p293, %s23, 1
          %s295 = scalar_lea.vmem %s3, %s294
        $region36: #{encoder_forward.10} parent=19 // pred_fallthru
          _
      $region20: #{encoder_forward.10} parent=5 // pred_fallthru
        _
      %p296 = scmp.le.s32.totalorder 1, %s16
      %p297 = scmp.lt.s32.totalorder %s16, 3
      %p298 = pnand %p296, %p297
      %p299 = pneg %p298
      // Predicated region
      $region37: #{encoder_forward.10} parent=5 // pred_check
        _
      $region38: #{encoder_forward.10} parent=5 // pred_check_branch
        %301 = sbr.rel (%p298) target = $region40
      $region39: #{encoder_forward.10} parent=5 // pred_region
        %s302 = ssub.s32 %s16, 1
        %s303 = smul.u32 16, %s27
        %p304 = scmp.lt.s32.totalorder %s26, 1
        %s305 = scalar_select %p304, %s26, 1
        %p306 = scmp.lt.s32.totalorder %s303, 15
        %s307 = scalar_select %p306, %s303, 15
        %p308 = scmp.lt.s32.totalorder %s28, 0
        %s309 = scalar_select %p308, %s28, 0
        %s310 = sadd.s32 %s309, %s307
        %s311 = smul.addr %s305, 16
        %s312 = sadd.s32 %s310, %s311
        %s313 = smul.addr %s312, 4
        %s314 = scalar_lea.vmem %s0, %s313
        %p315 = pneg %p65
        %p316 = pneg %p62
        %s317 = smul.u32 16, %s28
        %p318 = scmp.lt.s32.totalorder %s26, 1
        %s319 = scalar_select %p318, %s26, 1
        %p320 = scmp.lt.s32.totalorder %s317, 15
        %s321 = scalar_select %p320, %s317, 15
        %s322 = smul.addr %s319, 16
        %s323 = sadd.s32 %s321, %s322
        %s324 = smul.addr %s323, 4
        %s325 = scalar_lea.vmem %s1, %s324
        %p326 = pneg %p93
        %p327 = pneg %p90
        %p328 = scmp.lt.s32.totalorder %s26, 1
        %s329 = scalar_select %p328, %s26, 1
        %s330 = smul.addr %s329, 8
        %s331 = smul.addr %s330, 8
        %s332 = scalar_lea.vmem %s2, %s331
        %p333 = pneg %p119
        %p334 = pneg %p116
        %p335 = scmp.lt.s32.totalorder %s26, 1
        %s336 = scalar_select %p335, %s26, 1
        %s337 = scalar_lea.vmem %s3, %s336
        %p338 = pneg %p145
        %p339 = pneg %p142
        %p340 = scmp.lt.s32.totalorder %s27, 0
        %s341 = scalar_select %p340, %s27, 0
        %s342 = smul.addr %s341, 4
        %s343 = scalar_lea.vmem %s4, %s342
        %p344 = pneg %p171
        %p345 = pneg %p168
        %p346 = pneg %p199
        %p347 = pneg %p196
        %s348 = sand.u32 %s186, 1
        %s349 = scalar_lea.sflag [#allocation4], %s348
        %s350 = sand.u32 %s186, 1
        %s351 = smul.addr %s350, 64
        %s352 = scalar_lea.vmem [#allocation3], %s351
        %p353 = pneg %p227
        %p354 = pneg %p224
        %p355 = scmp.lt.s32.totalorder %s26, 1
        %s356 = scalar_select %p355, %s26, 1
        %p357 = scmp.lt.s32.totalorder %s27, 0
        %s358 = scalar_select %p357, %s27, 0
        %s359 = sadd.s32 %s358, %s356
        %s360 = smul.addr %s359, 4
        %s361 = scalar_lea.vmem %s6, %s360
        %s362 = smul.u32 16, %s27
        %p363 = scmp.lt.s32.totalorder %s26, 1
        %s364 = scalar_select %p363, %s26, 1
        %p365 = scmp.lt.s32.totalorder %s362, 15
        %s366 = scalar_select %p365, %s362, 15
        %p367 = scmp.lt.s32.totalorder %s28, 0
        %s368 = scalar_select %p367, %s28, 0
        %s369 = sadd.s32 %s368, %s366
        %s370 = smul.addr %s364, 16
        %s371 = sadd.s32 %s369, %s370
        %s372 = smul.addr %s371, 4
        %s373 = scalar_lea.vmem %s0, %s372
        %s374 = smul.u32 16, %s27
        %s375 = smul.u32 16, %s28
        %p376 = scmp.lt.s32.totalorder %s26, 1
        %s377 = scalar_select %p376, %s26, 1
        %p378 = scmp.lt.s32.totalorder %s375, 15
        %s379 = scalar_select %p378, %s375, 15
        %s380 = smul.addr %s377, 16
        %s381 = sadd.s32 %s379, %s380
        %s382 = smul.addr %s381, 4
        %s383 = scalar_lea.vmem %s1, %s382
        %s384 = smul.u32 16, %s28
        %p385 = scmp.lt.s32.totalorder %s26, 1
        %s386 = scalar_select %p385, %s26, 1
        %s387 = smul.addr %s386, 8
        %s388 = smul.addr %s387, 8
        %s389 = scalar_lea.vmem %s2, %s388
        %p390 = scmp.lt.s32.totalorder %s26, 1
        %s391 = scalar_select %p390, %s26, 1
        %s392 = scalar_lea.vmem %s3, %s391
        %p393 = scmp.lt.s32.totalorder %s27, 0
        %s394 = scalar_select %p393, %s27, 0
        %s395 = smul.addr %s394, 4
        %s396 = scalar_lea.vmem %s4, %s395
        %s397 = smul.u32 16, %s27
        %p398 = scmp.lt.s32.totalorder %s26, 1
        %s399 = scalar_select %p398, %s26, 1
        %p400 = scmp.lt.s32.totalorder %s27, 0
        %s401 = scalar_select %p400, %s27, 0
        %s402 = sadd.s32 %s401, %s399
        %s403 = smul.addr %s402, 4
        %s404 = scalar_lea.vmem %s6, %s403
        %p406 = scmp.eq.s32.totalorder %s28, 0
        // Predicated region
        $region41: #{encoder_forward.10} parent=39 // pred_check
          %p407 = pneg %p406
        $region42: #{encoder_forward.10} parent=39 // pred_check_branch
          %409 = sbr.rel (%p407) target = $region44
        $region43: #{encoder_forward.10} parent=39 // pred_region
          %vm410 = vcmask 523264
          %411 = vst.msk [vmem:[#allocation2] sm:$0xff] %vm410, 0.0
          %412 = vst.msk [vmem:[#allocation2 + $0x8] sm:$0xff] %vm410, 0.0
          %413 = vst.msk [vmem:[#allocation2 + $0x10] sm:$0xff] %vm410, 0.0
          %414 = vst.msk [vmem:[#allocation2 + $0x18] sm:$0xff] %vm410, 0.0
          %415 = vst.msk [vmem:[#allocation2 + $0x20] sm:$0xff] %vm410, 0.0
          %416 = vst.msk [vmem:[#allocation2 + $0x28] sm:$0xff] %vm410, 0.0
          %417 = vst.msk [vmem:[#allocation2 + $0x30] sm:$0xff] %vm410, 0.0
          %418 = vst.msk [vmem:[#allocation2 + $0x38] sm:$0xff] %vm410, 0.0
          %419 = vst.msk [vmem:[#allocation2 + $0x40] sm:$0xff] %vm410, 0.0
          %420 = vst.msk [vmem:[#allocation2 + $0x48] sm:$0xff] %vm410, 0.0
          %421 = vst.msk [vmem:[#allocation2 + $0x50] sm:$0xff] %vm410, 0.0
          %422 = vst.msk [vmem:[#allocation2 + $0x58] sm:$0xff] %vm410, 0.0
          %423 = vst.msk [vmem:[#allocation2 + $0x60] sm:$0xff] %vm410, 0.0
          %424 = vst.msk [vmem:[#allocation2 + $0x68] sm:$0xff] %vm410, 0.0
          %425 = vst.msk [vmem:[#allocation2 + $0x70] sm:$0xff] %vm410, 0.0
          %426 = vst.msk [vmem:[#allocation2 + $0x78] sm:$0xff] %vm410, 0.0
        $region44: #{encoder_forward.10} parent=39 // pred_fallthru
          _
        %v427 = vld [vmem:[#allocation2] sm:$0xff]
        %v428 = vld [vmem:[#allocation2 + $0x8] sm:$0xff]
        %v429 = vld [vmem:[#allocation2 + $0x10] sm:$0xff]
        %v430 = vld [vmem:[#allocation2 + $0x18] sm:$0xff]
        %v431 = vld [vmem:[#allocation2 + $0x20] sm:$0xff]
        %v432 = vld [vmem:[#allocation2 + $0x28] sm:$0xff]
        %v433 = vld [vmem:[#allocation2 + $0x30] sm:$0xff]
        %v434 = vld [vmem:[#allocation2 + $0x38] sm:$0xff]
        %v435 = vld [vmem:[#allocation2 + $0x40] sm:$0xff]
        %v436 = vld [vmem:[#allocation2 + $0x48] sm:$0xff]
        %v437 = vld [vmem:[#allocation2 + $0x50] sm:$0xff]
        %v438 = vld [vmem:[#allocation2 + $0x58] sm:$0xff]
        %v439 = vld [vmem:[#allocation2 + $0x60] sm:$0xff]
        %v440 = vld [vmem:[#allocation2 + $0x68] sm:$0xff]
        %v441 = vld [vmem:[#allocation2 + $0x70] sm:$0xff]
        %v442 = vld [vmem:[#allocation2 + $0x78] sm:$0xff]
        %v443 = vld [vmem:[%s373] sm:$0xf]
        %v444 = vld [vmem:[%s373 + $0x4] sm:$0xf]
        %v445 = vld [vmem:[%s373 + $0x8] sm:$0xf]
        %v446 = vld [vmem:[%s373 + $0xc] sm:$0xf]
        %v447 = vld [vmem:[%s373 + $0x10] sm:$0xf]
        %v448 = vld [vmem:[%s373 + $0x14] sm:$0xf]
        %v449 = vld [vmem:[%s373 + $0x18] sm:$0xf]
        %v450 = vld [vmem:[%s373 + $0x1c] sm:$0xf]
        %v451 = vld [vmem:[%s373 + $0x20] sm:$0xf]
        %v452 = vld [vmem:[%s373 + $0x24] sm:$0xf]
        %v453 = vld [vmem:[%s373 + $0x28] sm:$0xf]
        %v454 = vld [vmem:[%s373 + $0x2c] sm:$0xf]
        %v455 = vld [vmem:[%s373 + $0x30] sm:$0xf]
        %v456 = vld [vmem:[%s373 + $0x34] sm:$0xf]
        %v457 = vld [vmem:[%s373 + $0x38] sm:$0xf]
        %v458 = vld [vmem:[%s373 + $0x3c] sm:$0xf]
        %v459 = vld [vmem:[%s383] sm:$0xf]
        %v460 = vld [vmem:[%s383 + $0x4] sm:$0xf]
        %v461 = vld [vmem:[%s383 + $0x8] sm:$0xf]
        %v462 = vld [vmem:[%s383 + $0xc] sm:$0xf]
        %v463 = vld [vmem:[%s383 + $0x10] sm:$0xf]
        %v464 = vld [vmem:[%s383 + $0x14] sm:$0xf]
        %v465 = vld [vmem:[%s383 + $0x18] sm:$0xf]
        %v466 = vld [vmem:[%s383 + $0x1c] sm:$0xf]
        %v467 = vld [vmem:[%s383 + $0x20] sm:$0xf]
        %v468 = vld [vmem:[%s383 + $0x24] sm:$0xf]
        %v469 = vld [vmem:[%s383 + $0x28] sm:$0xf]
        %v470 = vld [vmem:[%s383 + $0x2c] sm:$0xf]
        %v471 = vld [vmem:[%s383 + $0x30] sm:$0xf]
        %v472 = vld [vmem:[%s383 + $0x34] sm:$0xf]
        %v473 = vld [vmem:[%s383 + $0x38] sm:$0xf]
        %v474 = vld [vmem:[%s383 + $0x3c] sm:$0xf]
        %v491 = vunpack.c.l.b16 %v443
        %v492 = vunpack.c.l.b16 %v444
        %v493 = vunpack.c.l.b16 %v445
        %v494 = vunpack.c.l.b16 %v446
        %v495 = vunpack.c.l.b16 %v447
        %v496 = vunpack.c.l.b16 %v448
        %v497 = vunpack.c.l.b16 %v449
        %v498 = vunpack.c.l.b16 %v450
        %v499 = vunpack.c.l.b16 %v451
        %v500 = vunpack.c.l.b16 %v452
        %v501 = vunpack.c.l.b16 %v453
        %v502 = vunpack.c.l.b16 %v454
        %v503 = vunpack.c.l.b16 %v455
        %v504 = vunpack.c.l.b16 %v456
        %v505 = vunpack.c.l.b16 %v457
        %v506 = vunpack.c.l.b16 %v458
        %v507 = vpack.c.b16 %v492, %v491
        %v508 = vpack.c.b16 %v494, %v493
        %v509 = vpack.c.b16 %v496, %v495
        %v510 = vpack.c.b16 %v498, %v497
        %v511 = vpack.c.b16 %v500, %v499
        %v512 = vpack.c.b16 %v502, %v501
        %v513 = vpack.c.b16 %v504, %v503
        %v514 = vpack.c.b16 %v506, %v505
        %v539 = vunpack.c.l.b16 %v459
        %v540 = vunpack.c.l.b16 %v460
        %v541 = vunpack.c.l.b16 %v461
        %v542 = vunpack.c.l.b16 %v462
        %v543 = vunpack.c.l.b16 %v463
        %v544 = vunpack.c.l.b16 %v464
        %v545 = vunpack.c.l.b16 %v465
        %v546 = vunpack.c.l.b16 %v466
        %v547 = vunpack.c.l.b16 %v467
        %v548 = vunpack.c.l.b16 %v468
        %v549 = vunpack.c.l.b16 %v469
        %v550 = vunpack.c.l.b16 %v470
        %v551 = vunpack.c.l.b16 %v471
        %v552 = vunpack.c.l.b16 %v472
        %v553 = vunpack.c.l.b16 %v473
        %v554 = vunpack.c.l.b16 %v474
        %v555 = vpack.c.b16 %v540, %v539
        %v556 = vpack.c.b16 %v542, %v541
        %v557 = vpack.c.b16 %v544, %v543
        %v558 = vpack.c.b16 %v546, %v545
        %v559 = vpack.c.b16 %v548, %v547
        %v560 = vpack.c.b16 %v550, %v549
        %v561 = vpack.c.b16 %v552, %v551
        %v562 = vpack.c.b16 %v554, %v553
        %571 = vmatprep.subr.bf16.mxu0 0
        %572 = vmatpush1.bf16.msra.mxu0 %v555
        %573 = vmatprep.subr.bf16.mxu0 0
        %574 = vmatpush1.bf16.msra.mxu0 %v556
        %575 = vmatprep.subr.bf16.mxu0 0
        %576 = vmatpush1.bf16.msra.mxu0 %v557
        %577 = vmatprep.subr.bf16.mxu0 0
        %578 = vmatpush1.bf16.msra.mxu0 %v558
        %579 = vmatprep.subr.bf16.mxu0 0
        %580 = vmatpush1.bf16.msra.mxu0 %v559
        %581 = vmatprep.subr.bf16.mxu0 0
        %582 = vmatpush1.bf16.msra.mxu0 %v560
        %583 = vmatprep.subr.bf16.mxu0 0
        %584 = vmatpush1.bf16.msra.mxu0 %v561
        %585 = vmatprep.subr.bf16.mxu0 0
        %586 = vmatpush1.bf16.msra.mxu0 %v562
        %587 = vmatprep.subr.bf16.mxu0 0
        %588 = vmatpush1.bf16.msra.mxu0 0
        %589 = vmatprep.subr.bf16.mxu0 0
        %590 = vmatpush1.bf16.msra.mxu0 0
        %591 = vmatprep.subr.bf16.mxu0 0
        %592 = vmatpush1.bf16.msra.mxu0 0
        %593 = vmatprep.subr.bf16.mxu0 0
        %594 = vmatpush1.bf16.msra.mxu0 0
        %595 = vmatprep.subr.bf16.mxu0 0
        %596 = vmatpush1.bf16.msra.mxu0 0
        %597 = vmatprep.subr.bf16.mxu0 0
        %598 = vmatpush1.bf16.msra.mxu0 0
        %599 = vmatprep.subr.bf16.mxu0 0
        %600 = vmatpush1.bf16.msra.mxu0 0
        %601 = vmatprep.subr.bf16.mxu0 0
        %602 = vmatpush1.bf16.msra.mxu0 0
        %603 = vmatprep.mubr.bf16.mxu0 0
        %604 = vmatmul.mubr.bf16.gmra.mrb[0].mxu0 %v507
        %v605 = vpop.f32.mrb[0].mxu0
        %v606 = vadd.f32 0.0, %v605
        %v607 = vpop.f32.mrb[0].mxu0
        %v608 = vpop.f32.mrb[0].mxu0
        %v609 = vadd.f32 0.0, %v608
        %v610 = vpop.f32.mrb[0].mxu0
        %611 = vmatprep.mubr.bf16.mxu0 0
        %612 = vmatmul.mubr.bf16.gmra.mrb[0].mxu0 %v508
        %v613 = vpop.f32.mrb[0].mxu0
        %v614 = vadd.f32 0.0, %v613
        %v615 = vpop.f32.mrb[0].mxu0
        %v616 = vpop.f32.mrb[0].mxu0
        %v617 = vadd.f32 0.0, %v616
        %v618 = vpop.f32.mrb[0].mxu0
        %619 = vmatprep.mubr.bf16.mxu0 0
        %620 = vmatmul.mubr.bf16.gmra.mrb[0].mxu0 %v509
        %v621 = vpop.f32.mrb[0].mxu0
        %v622 = vadd.f32 0.0, %v621
        %v623 = vpop.f32.mrb[0].mxu0
        %v624 = vpop.f32.mrb[0].mxu0
        %v625 = vadd.f32 0.0, %v624
        %v626 = vpop.f32.mrb[0].mxu0
        %627 = vmatprep.mubr.bf16.mxu0 0
        %628 = vmatmul.mubr.bf16.gmra.mrb[0].mxu0 %v510
        %v629 = vpop.f32.mrb[0].mxu0
        %v630 = vadd.f32 0.0, %v629
        %v631 = vpop.f32.mrb[0].mxu0
        %v632 = vpop.f32.mrb[0].mxu0
        %v633 = vadd.f32 0.0, %v632
        %v634 = vpop.f32.mrb[0].mxu0
        %635 = vmatprep.mubr.bf16.mxu0 0
        %636 = vmatmul.mubr.bf16.gmra.mrb[0].mxu0 %v511
        %v637 = vpop.f32.mrb[0].mxu0
        %v638 = vadd.f32 0.0, %v637
        %v639 = vpop.f32.mrb[0].mxu0
        %v640 = vpop.f32.mrb[0].mxu0
        %v641 = vadd.f32 0.0, %v640
        %v642 = vpop.f32.mrb[0].mxu0
        %643 = vmatprep.mubr.bf16.mxu0 0
        %644 = vmatmul.mubr.bf16.gmra.mrb[0].mxu0 %v512
        %v645 = vpop.f32.mrb[0].mxu0
        %v646 = vadd.f32 0.0, %v645
        %v647 = vpop.f32.mrb[0].mxu0
        %v648 = vpop.f32.mrb[0].mxu0
        %v649 = vadd.f32 0.0, %v648
        %v650 = vpop.f32.mrb[0].mxu0
        %651 = vmatprep.mubr.bf16.mxu0 0
        %652 = vmatmul.mubr.bf16.gmra.mrb[0].mxu0 %v513
        %v653 = vpop.f32.mrb[0].mxu0
        %v654 = vadd.f32 0.0, %v653
        %v655 = vpop.f32.mrb[0].mxu0
        %v656 = vpop.f32.mrb[0].mxu0
        %v657 = vadd.f32 0.0, %v656
        %v658 = vpop.f32.mrb[0].mxu0
        %659 = vmatprep.mubr.bf16.mxu0 0
        %660 = vmatmul.mubr.bf16.gmra.mrb[0].mxu0 %v514
        %v661 = vpop.f32.mrb[0].mxu0
        %v662 = vadd.f32 0.0, %v661
        %v663 = vpop.f32.mrb[0].mxu0
        %v664 = vpop.f32.mrb[0].mxu0
        %v665 = vadd.f32 0.0, %v664
        %v666 = vpop.f32.mrb[0].mxu0
        %667 = vdwg.mxu0
        %v668 = vadd.f32 %v427, %v606
        %v669 = vadd.f32 %v428, %v609
        %v670 = vadd.f32 %v429, %v614
        %v671 = vadd.f32 %v430, %v617
        %v672 = vadd.f32 %v431, %v622
        %v673 = vadd.f32 %v432, %v625
        %v674 = vadd.f32 %v433, %v630
        %v675 = vadd.f32 %v434, %v633
        %v676 = vadd.f32 %v435, %v638
        %v677 = vadd.f32 %v436, %v641
        %v678 = vadd.f32 %v437, %v646
        %v679 = vadd.f32 %v438, %v649
        %v680 = vadd.f32 %v439, %v654
        %v681 = vadd.f32 %v440, %v657
        %v682 = vadd.f32 %v441, %v662
        %v683 = vadd.f32 %v442, %v665
        %vm684 = vcmask 523264
        %685 = vst.msk [vmem:[#allocation2] sm:$0xff] %vm684, %v668
        %686 = vst.msk [vmem:[#allocation2 + $0x8] sm:$0xff] %vm684, %v669
        %687 = vst.msk [vmem:[#allocation2 + $0x10] sm:$0xff] %vm684, %v670
        %688 = vst.msk [vmem:[#allocation2 + $0x18] sm:$0xff] %vm684, %v671
        %689 = vst.msk [vmem:[#allocation2 + $0x20] sm:$0xff] %vm684, %v672
        %690 = vst.msk [vmem:[#allocation2 + $0x28] sm:$0xff] %vm684, %v673
        %691 = vst.msk [vmem:[#allocation2 + $0x30] sm:$0xff] %vm684, %v674
        %692 = vst.msk [vmem:[#allocation2 + $0x38] sm:$0xff] %vm684, %v675
        %693 = vst.msk [vmem:[#allocation2 + $0x40] sm:$0xff] %vm684, %v676
        %694 = vst.msk [vmem:[#allocation2 + $0x48] sm:$0xff] %vm684, %v677
        %695 = vst.msk [vmem:[#allocation2 + $0x50] sm:$0xff] %vm684, %v678
        %696 = vst.msk [vmem:[#allocation2 + $0x58] sm:$0xff] %vm684, %v679
        %697 = vst.msk [vmem:[#allocation2 + $0x60] sm:$0xff] %vm684, %v680
        %698 = vst.msk [vmem:[#allocation2 + $0x68] sm:$0xff] %vm684, %v681
        %699 = vst.msk [vmem:[#allocation2 + $0x70] sm:$0xff] %vm684, %v682
        %700 = vst.msk [vmem:[#allocation2 + $0x78] sm:$0xff] %vm684, %v683
        // Predicated region
        $region45: #{encoder_forward.10} parent=39 // pred_check
          %p701 = pneg %p406
        $region46: #{encoder_forward.10} parent=39 // pred_check_branch
          %703 = sbr.rel (%p701) target = $region48
        $region47: #{encoder_forward.10} parent=39 // pred_region
          %v704 = vld [vmem:[#allocation2] sm:$0xff]
          %v705 = vld [vmem:[#allocation2 + $0x8] sm:$0xff]
          %v706 = vld [vmem:[#allocation2 + $0x10] sm:$0xff]
          %v707 = vld [vmem:[#allocation2 + $0x18] sm:$0xff]
          %v708 = vld [vmem:[#allocation2 + $0x20] sm:$0xff]
          %v709 = vld [vmem:[#allocation2 + $0x28] sm:$0xff]
          %v710 = vld [vmem:[#allocation2 + $0x30] sm:$0xff]
          %v711 = vld [vmem:[#allocation2 + $0x38] sm:$0xff]
          %v712 = vld [vmem:[#allocation2 + $0x40] sm:$0xff]
          %v713 = vld [vmem:[#allocation2 + $0x48] sm:$0xff]
          %v714 = vld [vmem:[#allocation2 + $0x50] sm:$0xff]
          %v715 = vld [vmem:[#allocation2 + $0x58] sm:$0xff]
          %v716 = vld [vmem:[#allocation2 + $0x60] sm:$0xff]
          %v717 = vld [vmem:[#allocation2 + $0x68] sm:$0xff]
          %v718 = vld [vmem:[#allocation2 + $0x70] sm:$0xff]
          %v719 = vld [vmem:[#allocation2 + $0x78] sm:$0xff]
          %v720 = vld [vmem:[%s389] sm:$0xff]
          %v721 = vld [vmem:[%s389 + $0x8] sm:$0xff]
          %v722 = vld [vmem:[%s389 + $0x10] sm:$0xff]
          %v723 = vld [vmem:[%s389 + $0x18] sm:$0xff]
          %v724 = vld [vmem:[%s389 + $0x20] sm:$0xff]
          %v725 = vld [vmem:[%s389 + $0x28] sm:$0xff]
          %v726 = vld [vmem:[%s389 + $0x30] sm:$0xff]
          %v727 = vld [vmem:[%s389 + $0x38] sm:$0xff]
          %v728 = vld [vmem:[%s392] sm:$0x1]
          %v730 = vlaneseq
          %v731 = vshrl.u32 %v730, 7
          %v732 = vsub.s32 0, %v731
          %v733 = vrot.slane %v728, %v732
          %v736 = vsel %vm684, %v704, 0
          %v739 = vsel %vm684, %v705, 0
          %v742 = vsel %vm684, %v706, 0
          %v745 = vsel %vm684, %v707, 0
          %v748 = vsel %vm684, %v708, 0
          %v751 = vsel %vm684, %v709, 0
          %v754 = vsel %vm684, %v710, 0
          %v757 = vsel %vm684, %v711, 0
          %v760 = vsel %vm684, %v712, 0
          %v763 = vsel %vm684, %v713, 0
          %v766 = vsel %vm684, %v714, 0
          %v769 = vsel %vm684, %v715, 0
          %v772 = vsel %vm684, %v716, 0
          %v775 = vsel %vm684, %v717, 0
          %v778 = vsel %vm684, %v718, 0
          %v781 = vsel %vm684, %v719, 0
          %783 = vmatprep.subr.mxu0 0.0
          %784 = vmatpush1.msra.mxu0 %v720
          %785 = vmatprep.subr.mxu0 0.0
          %786 = vmatpush1.msra.mxu0 %v721
          %787 = vmatprep.subr.mxu0 0.0
          %788 = vmatpush1.msra.mxu0 %v722
          %789 = vmatprep.subr.mxu0 0.0
          %790 = vmatpush1.msra.mxu0 %v723
          %791 = vmatprep.subr.mxu0 0.0
          %792 = vmatpush1.msra.mxu0 %v724
          %793 = vmatprep.subr.mxu0 0.0
          %794 = vmatpush1.msra.mxu0 %v725
          %795 = vmatprep.subr.mxu0 0.0
          %796 = vmatpush1.msra.mxu0 %v726
          %797 = vmatprep.subr.mxu0 0.0
          %798 = vmatpush1.msra.mxu0 %v727
          %799 = vmatprep.subr.mxu0 0.0
          %800 = vmatpush1.msra.mxu0 0.0
          %801 = vmatprep.subr.mxu0 0.0
          %802 = vmatpush1.msra.mxu0 0.0
          %803 = vmatprep.subr.mxu0 0.0
          %804 = vmatpush1.msra.mxu0 0.0
          %805 = vmatprep.subr.mxu0 0.0
          %806 = vmatpush1.msra.mxu0 0.0
          %807 = vmatprep.subr.mxu0 0.0
          %808 = vmatpush1.msra.mxu0 0.0
          %809 = vmatprep.subr.mxu0 0.0
          %810 = vmatpush1.msra.mxu0 0.0
          %811 = vmatprep.subr.mxu0 0.0
          %812 = vmatpush1.msra.mxu0 0.0
          %813 = vmatprep.subr.mxu0 0.0
          %814 = vmatpush1.msra.mxu0 0.0
          %815 = vmatprep.subr.mxu0 0.0
          %816 = vmatpush1.msra.mxu0 0.0
          %817 = vmatprep.subr.mxu0 0.0
          %818 = vmatpush1.msra.mxu0 0.0
          %819 = vmatprep.subr.mxu0 0.0
          %820 = vmatpush1.msra.mxu0 0.0
          %821 = vmatprep.subr.mxu0 0.0
          %822 = vmatpush1.msra.mxu0 0.0
          %823 = vmatprep.subr.mxu0 0.0
          %824 = vmatpush1.msra.mxu0 0.0
          %825 = vmatprep.subr.mxu0 0.0
          %826 = vmatpush1.msra.mxu0 0.0
          %827 = vmatprep.subr.mxu0 0.0
          %828 = vmatpush1.msra.mxu0 0.0
          %829 = vmatprep.subr.mxu0 0.0
          %830 = vmatpush1.msra.mxu0 0.0
          %831 = vmatprep.subr.mxu0 0.0
          %832 = vmatpush1.msra.mxu0 0.0
          %833 = vmatprep.subr.mxu0 0.0
          %834 = vmatpush1.msra.mxu0 0.0
          %835 = vmatprep.subr.mxu0 0.0
          %836 = vmatpush1.msra.mxu0 0.0
          %837 = vmatprep.subr.mxu0 0.0
          %838 = vmatpush1.msra.mxu0 0.0
          %839 = vmatprep.subr.mxu0 0.0
          %840 = vmatpush1.msra.mxu0 0.0
          %841 = vmatprep.subr.mxu0 0.0
          %842 = vmatpush1.msra.mxu0 0.0
          %843 = vmatprep.subr.mxu0 0.0
          %844 = vmatpush1.msra.mxu0 0.0
          %845 = vmatprep.subr.mxu0 0.0
          %846 = vmatpush1.msra.mxu0 0.0
          %847 = vmatprep.mubr.f32.mxu0 0.0
          %848 = vmatmul.mubr.f32.gmra.mrb[0].mxu0 %v736
          %v849 = vpop.f32.mrb[0].mxu0
          %v850 = vadd.f32 %v733, %v849
          %v851 = vpop.f32.mrb[0].mxu0
          %852 = vmatprep.mubr.f32.mxu0 0.0
          %853 = vmatmul.mubr.f32.gmra.mrb[0].mxu0 %v739
          %v854 = vpop.f32.mrb[0].mxu0
          %v855 = vadd.f32 %v733, %v854
          %v856 = vpop.f32.mrb[0].mxu0
          %857 = vmatprep.mubr.f32.mxu0 0.0
          %858 = vmatmul.mubr.f32.gmra.mrb[0].mxu0 %v742
          %v859 = vpop.f32.mrb[0].mxu0
          %v860 = vadd.f32 %v733, %v859
          %v861 = vpop.f32.mrb[0].mxu0
          %862 = vmatprep.mubr.f32.mxu0 0.0
          %863 = vmatmul.mubr.f32.gmra.mrb[0].mxu0 %v745
          %v864 = vpop.f32.mrb[0].mxu0
          %v865 = vadd.f32 %v733, %v864
          %v866 = vpop.f32.mrb[0].mxu0
          %867 = vmatprep.mubr.f32.mxu0 0.0
          %868 = vmatmul.mubr.f32.gmra.mrb[0].mxu0 %v748
          %v869 = vpop.f32.mrb[0].mxu0
          %v870 = vadd.f32 %v733, %v869
          %v871 = vpop.f32.mrb[0].mxu0
          %872 = vmatprep.mubr.f32.mxu0 0.0
          %873 = vmatmul.mubr.f32.gmra.mrb[0].mxu0 %v751
          %v874 = vpop.f32.mrb[0].mxu0
          %v875 = vadd.f32 %v733, %v874
          %v876 = vpop.f32.mrb[0].mxu0
          %877 = vmatprep.mubr.f32.mxu0 0.0
          %878 = vmatmul.mubr.f32.gmra.mrb[0].mxu0 %v754
          %v879 = vpop.f32.mrb[0].mxu0
          %v880 = vadd.f32 %v733, %v879
          %v881 = vpop.f32.mrb[0].mxu0
          %882 = vmatprep.mubr.f32.mxu0 0.0
          %883 = vmatmul.mubr.f32.gmra.mrb[0].mxu0 %v757
          %v884 = vpop.f32.mrb[0].mxu0
          %v885 = vadd.f32 %v733, %v884
          %v886 = vpop.f32.mrb[0].mxu0
          %887 = vmatprep.mubr.f32.mxu0 0.0
          %888 = vmatmul.mubr.f32.gmra.mrb[0].mxu0 %v760
          %v889 = vpop.f32.mrb[0].mxu0
          %v890 = vadd.f32 %v733, %v889
          %v891 = vpop.f32.mrb[0].mxu0
          %892 = vmatprep.mubr.f32.mxu0 0.0
          %893 = vmatmul.mubr.f32.gmra.mrb[0].mxu0 %v763
          %v894 = vpop.f32.mrb[0].mxu0
          %v895 = vadd.f32 %v733, %v894
          %v896 = vpop.f32.mrb[0].mxu0
          %897 = vmatprep.mubr.f32.mxu0 0.0
          %898 = vmatmul.mubr.f32.gmra.mrb[0].mxu0 %v766
          %v899 = vpop.f32.mrb[0].mxu0
          %v900 = vadd.f32 %v733, %v899
          %v901 = vpop.f32.mrb[0].mxu0
          %902 = vmatprep.mubr.f32.mxu0 0.0
          %903 = vmatmul.mubr.f32.gmra.mrb[0].mxu0 %v769
          %v904 = vpop.f32.mrb[0].mxu0
          %v905 = vadd.f32 %v733, %v904
          %v906 = vpop.f32.mrb[0].mxu0
          %907 = vmatprep.mubr.f32.mxu0 0.0
          %908 = vmatmul.mubr.f32.gmra.mrb[0].mxu0 %v772
          %v909 = vpop.f32.mrb[0].mxu0
          %v910 = vadd.f32 %v733, %v909
          %v911 = vpop.f32.mrb[0].mxu0
          %912 = vmatprep.mubr.f32.mxu0 0.0
          %913 = vmatmul.mubr.f32.gmra.mrb[0].mxu0 %v775
          %v914 = vpop.f32.mrb[0].mxu0
          %v915 = vadd.f32 %v733, %v914
          %v916 = vpop.f32.mrb[0].mxu0
          %917 = vmatprep.mubr.f32.mxu0 0.0
          %918 = vmatmul.mubr.f32.gmra.mrb[0].mxu0 %v778
          %v919 = vpop.f32.mrb[0].mxu0
          %v920 = vadd.f32 %v733, %v919
          %v921 = vpop.f32.mrb[0].mxu0
          %922 = vmatprep.mubr.f32.mxu0 0.0
          %923 = vmatmul.mubr.f32.gmra.mrb[0].mxu0 %v781
          %v924 = vpop.f32.mrb[0].mxu0
          %v925 = vadd.f32 %v733, %v924
          %v926 = vpop.f32.mrb[0].mxu0
          %927 = vdwg.mxu0
          %v928 = vpack.c.bf16 %v855, %v850
          %v929 = vpack.c.bf16 %v865, %v860
          %v930 = vpack.c.bf16 %v875, %v870
          %v931 = vpack.c.bf16 %v885, %v880
          %v932 = vpack.c.bf16 %v895, %v890
          %v933 = vpack.c.bf16 %v905, %v900
          %v934 = vpack.c.bf16 %v915, %v910
          %v935 = vpack.c.bf16 %v925, %v920
          %v944 = vunpack.c.l.b16 %v928
          %v945 = vunpack.c.h.b16 %v928
          %v946 = vunpack.c.l.b16 %v929
          %v947 = vunpack.c.h.b16 %v929
          %v948 = vunpack.c.l.b16 %v930
          %v949 = vunpack.c.h.b16 %v930
          %v950 = vunpack.c.l.b16 %v931
          %v951 = vunpack.c.h.b16 %v931
          %v952 = vunpack.c.l.b16 %v932
          %v953 = vunpack.c.h.b16 %v932
          %v954 = vunpack.c.l.b16 %v933
          %v955 = vunpack.c.h.b16 %v933
          %v956 = vunpack.c.l.b16 %v934
          %v957 = vunpack.c.h.b16 %v934
          %v958 = vunpack.c.l.b16 %v935
          %v959 = vunpack.c.h.b16 %v935
          %v960 = vpack.c.b16 %v944, %v944
          %v961 = vpack.c.b16 %v945, %v945
          %v962 = vpack.c.b16 %v946, %v946
          %v963 = vpack.c.b16 %v947, %v947
          %v964 = vpack.c.b16 %v948, %v948
          %v965 = vpack.c.b16 %v949, %v949
          %v966 = vpack.c.b16 %v950, %v950
          %v967 = vpack.c.b16 %v951, %v951
          %v968 = vpack.c.b16 %v952, %v952
          %v969 = vpack.c.b16 %v953, %v953
          %v970 = vpack.c.b16 %v954, %v954
          %v971 = vpack.c.b16 %v955, %v955
          %v972 = vpack.c.b16 %v956, %v956
          %v973 = vpack.c.b16 %v957, %v957
          %v974 = vpack.c.b16 %v958, %v958
          %v975 = vpack.c.b16 %v959, %v959
          %vm992 = vcmask 519168
          %993 = vst.msk [vmem:[%s352] sm:$0xf] %vm992, %v960
          %994 = vst.msk [vmem:[%s352 + $0x4] sm:$0xf] %vm992, %v961
          %995 = vst.msk [vmem:[%s352 + $0x8] sm:$0xf] %vm992, %v962
          %996 = vst.msk [vmem:[%s352 + $0xc] sm:$0xf] %vm992, %v963
          %997 = vst.msk [vmem:[%s352 + $0x10] sm:$0xf] %vm992, %v964
          %998 = vst.msk [vmem:[%s352 + $0x14] sm:$0xf] %vm992, %v965
          %999 = vst.msk [vmem:[%s352 + $0x18] sm:$0xf] %vm992, %v966
          %1000 = vst.msk [vmem:[%s352 + $0x1c] sm:$0xf] %vm992, %v967
          %1001 = vst.msk [vmem:[%s352 + $0x20] sm:$0xf] %vm992, %v968
          %1002 = vst.msk [vmem:[%s352 + $0x24] sm:$0xf] %vm992, %v969
          %1003 = vst.msk [vmem:[%s352 + $0x28] sm:$0xf] %vm992, %v970
          %1004 = vst.msk [vmem:[%s352 + $0x2c] sm:$0xf] %vm992, %v971
          %1005 = vst.msk [vmem:[%s352 + $0x30] sm:$0xf] %vm992, %v972
          %1006 = vst.msk [vmem:[%s352 + $0x34] sm:$0xf] %vm992, %v973
          %1007 = vst.msk [vmem:[%s352 + $0x38] sm:$0xf] %vm992, %v974
          %1008 = vst.msk [vmem:[%s352 + $0x3c] sm:$0xf] %vm992, %v975
          %v1009 = vld [vmem:[%s396] sm:$0xf]
          %1010 = vmatprep.subr.mxu0 0.0
          %1011 = vmatpush1.msra.mxu0 %v850
          %1012 = vmatprep.subr.mxu0 0.0
          %1013 = vmatpush1.msra.mxu0 %v855
          %1014 = vmatprep.subr.mxu0 0.0
          %1015 = vmatpush1.msra.mxu0 %v860
          %1016 = vmatprep.subr.mxu0 0.0
          %1017 = vmatpush1.msra.mxu0 %v865
          %1018 = vmatprep.subr.mxu0 0.0
          %1019 = vmatpush1.msra.mxu0 %v870
          %1020 = vmatprep.subr.mxu0 0.0
          %1021 = vmatpush1.msra.mxu0 %v875
          %1022 = vmatprep.subr.mxu0 0.0
          %1023 = vmatpush1.msra.mxu0 %v880
          %1024 = vmatprep.subr.mxu0 0.0
          %1025 = vmatpush1.msra.mxu0 %v885
          %1026 = vmatprep.subr.mxu0 0.0
          %1027 = vmatpush1.msra.mxu0 %v890
          %1028 = vmatprep.subr.mxu0 0.0
          %1029 = vmatpush1.msra.mxu0 %v895
          %1030 = vmatprep.subr.mxu0 0.0
          %1031 = vmatpush1.msra.mxu0 %v900
          %1032 = vmatprep.subr.mxu0 0.0
          %1033 = vmatpush1.msra.mxu0 %v905
          %1034 = vmatprep.subr.mxu0 0.0
          %1035 = vmatpush1.msra.mxu0 %v910
          %1036 = vmatprep.subr.mxu0 0.0
          %1037 = vmatpush1.msra.mxu0 %v915
          %1038 = vmatprep.subr.mxu0 0.0
          %1039 = vmatpush1.msra.mxu0 %v920
          %1040 = vmatprep.subr.mxu0 0.0
          %1041 = vmatpush1.msra.mxu0 %v925
          %1042 = vmatprep.subr.mxu0 0.0
          %1043 = vmatpush1.msra.mxu0 0.0
          %1044 = vmatprep.subr.mxu0 0.0
          %1045 = vmatpush1.msra.mxu0 0.0
          %1046 = vmatprep.subr.mxu0 0.0
          %1047 = vmatpush1.msra.mxu0 0.0
          %1048 = vmatprep.subr.mxu0 0.0
          %1049 = vmatpush1.msra.mxu0 0.0
          %1050 = vmatprep.subr.mxu0 0.0
          %1051 = vmatpush1.msra.mxu0 0.0
          %1052 = vmatprep.subr.mxu0 0.0
          %1053 = vmatpush1.msra.mxu0 0.0
          %1054 = vmatprep.subr.mxu0 0.0
          %1055 = vmatpush1.msra.mxu0 0.0
          %1056 = vmatprep.subr.mxu0 0.0
          %1057 = vmatpush1.msra.mxu0 0.0
          %1058 = vmatprep.subr.mxu0 0.0
          %1059 = vmatpush1.msra.mxu0 0.0
          %1060 = vmatprep.subr.mxu0 0.0
          %1061 = vmatpush1.msra.mxu0 0.0
          %1062 = vmatprep.subr.mxu0 0.0
          %1063 = vmatpush1.msra.mxu0 0.0
          %1064 = vmatprep.subr.mxu0 0.0
          %1065 = vmatpush1.msra.mxu0 0.0
          %1066 = vmatprep.subr.mxu0 0.0
          %1067 = vmatpush1.msra.mxu0 0.0
          %1068 = vmatprep.subr.mxu0 0.0
          %1069 = vmatpush1.msra.mxu0 0.0
          %1070 = vmatprep.subr.mxu0 0.0
          %1071 = vmatpush1.msra.mxu0 0.0
          %1072 = vmatprep.subr.mxu0 0.0
          %1073 = vmatpush1.msra.mxu0 0.0
          %1074 = vmatprep.mubr.f32.mxu0 0.0
          %1075 = vmatmul.mubr.f32.gmra.mrb[0].mxu0 %v1009
          %v1076 = vpop.f32.mrb[0].mxu0
          %v1077 = vadd.f32 0.0, %v1076
          %v1078 = vpop.f32.mrb[0].mxu0
          %1079 = vdwg.mxu0
          %1080 = vst.msk [vmem:[%s404] sm:$0xf] %vm992, %v1077
        $region48: #{encoder_forward.10} parent=39 // pred_fallthru
          _
        %s1081 = sand.u32 %s186, 1
        %s1082 = scalar_lea.sflag [#allocation4], %s1081
        %s1083 = sand.u32 %s186, 1
        %s1084 = smul.addr %s1083, 64
        %s1085 = scalar_lea.vmem [#allocation3], %s1084
        %p1086 = scmp.lt.s32.totalorder %s26, 1
        %s1087 = scalar_select %p1086, %s26, 1
        %p1088 = scmp.lt.s32.totalorder %s27, 0
        %s1089 = scalar_select %p1088, %s27, 0
        %s1090 = sadd.s32 %s1089, %s1087
        %s1091 = smul.addr %s1090, 4
        %s1092 = scalar_lea.vmem %s6, %s1091
        // Predicated region
        $region49: #{encoder_forward.10} parent=39 // pred_check
          %p1093 = pneg %p196
        $region50: #{encoder_forward.10} parent=39 // pred_check_branch
          %1095 = sbr.rel (%p1093) target = $region52
        $region51: #{encoder_forward.10} parent=39 // pred_region
          %s1096 = smul.u32 16, %s27
          %s1098 = ssub.s32 1024, 1024
          %1099 = vsyncadd %s1082, %s1098
          %s1100 = smul.addr %s26, 16
          %s1101 = sadd.s32 %s1096, %s1100
          %s1102 = smul.addr %s1101, 64
          %s1103 = scalar_lea.hbm %s5, %s1102
          %s1104 = sshll.u32 %s1085, 4
          %s1105 = int_to_ptr.vmem [resolvable:$true] %s1104
          %1110 = dma.vmem_to_hbm [thread:$0]  %s1105, 1024, %s1103, %s1082, 64, 64, 4
        $region52: #{encoder_forward.10} parent=39 // pred_fallthru
          _
        // Predicated region
        $region53: #{encoder_forward.10} parent=39 // pred_check
          %p1111 = pneg %p224
        $region54: #{encoder_forward.10} parent=39 // pred_check_branch
          %1113 = sbr.rel (%p1111) target = $region56
        $region55: #{encoder_forward.10} parent=39 // pred_region
          _
        $region56: #{encoder_forward.10} parent=39 // pred_fallthru
          _
      $region40: #{encoder_forward.10} parent=5 // pred_fallthru
        _
      %p1114 = scmp.le.s32.totalorder 2, %s16
      // Predicated region
      $region57: #{encoder_forward.10} parent=5 // pred_check
        %p1115 = pneg %p1114
      $region58: #{encoder_forward.10} parent=5 // pred_check_branch
        %1117 = sbr.rel (%p1115) target = $region60
      $region59: #{encoder_forward.10} parent=5 // pred_region
        %s1118 = ssub.s32 %s16, 2
        // Predicated region
        $region61: #{encoder_forward.10} parent=59 // pred_check
          %p1119 = pneg %p202
        $region62: #{encoder_forward.10} parent=59 // pred_check_branch
          %1121 = sbr.rel (%p1119) target = $region64
        $region63: #{encoder_forward.10} parent=59 // pred_region
          %s1122 = sand.u32 %s187, 1
          %s1123 = scalar_lea.sflag [#allocation4], %s1122
          %s1124 = sand.u32 %s187, 1
          %s1125 = smul.addr %s1124, 64
          %s1126 = scalar_lea.vmem [#allocation3], %s1125
          %1127 = dma.done %s1123, 1024
        $region64: #{encoder_forward.10} parent=59 // pred_fallthru
          _
        // Predicated region
        $region65: #{encoder_forward.10} parent=59 // pred_check
          %p1128 = pneg %p230
        $region66: #{encoder_forward.10} parent=59 // pred_check_branch
          %1130 = sbr.rel (%p1128) target = $region68
        $region67: #{encoder_forward.10} parent=59 // pred_region
          %p1131 = scmp.lt.s32.totalorder %s29, 1
          %s1132 = scalar_select %p1131, %s29, 1
          %p1133 = scmp.lt.s32.totalorder %s30, 0
          %s1134 = scalar_select %p1133, %s30, 0
          %s1135 = sadd.s32 %s1134, %s1132
          %s1136 = smul.addr %s1135, 4
          %s1137 = scalar_lea.vmem %s6, %s1136
        $region68: #{encoder_forward.10} parent=59 // pred_fallthru
          _
      $region60: #{encoder_forward.10} parent=5 // pred_fallthru
        _
    $region6: #{encoder_forward.10} parent=1 // loop_footer
      %s20 = sadd.s32 1, %s16
    $region7: #{encoder_forward.10} parent=1 // loop_footer_branch
      %15 = sbr.rel target = $region3
    $region8: #{encoder_forward.10} parent=1 // loop_exit
      _
    %1138 = vsyncpa [#allocation4], 1
    %s1139 = scalar_lea.sflag [#allocation4], 1
    %1140 = vsyncpa %s1139, 1

// kernel: encoder_forward.11
$region0: #{encoder_forward.11}
  #allocation0 [shape = 'u32[]', space=smem, size = 0x4, offset = 0x4, fixed_abs, tag = 'smem constant byte address 0x4 - core index']
  #allocation1 [shape = 'u32[144,128]{1,0:T(1,128)}', space=vmem, size = 0x12000, scoped, tag = 'internal scratch']
  %s0 = inlined_call_operand.vmem [shape: f32[7,4,64], index: 0, kind: input, shape index: {}]
  %s1 = inlined_call_operand.vmem [shape: f32[7,64,64], index: 1, kind: input, shape index: {}]
  %s2 = inlined_call_operand.vmem [shape: f32[7,1,64], index: 2, kind: input, shape index: {}]
  %s3 = inlined_call_operand.vmem [shape: f32[7,64,64], index: 3, kind: input, shape index: {}]
  %s4 = inlined_call_operand.vmem [shape: f32[7,1,64], index: 4, kind: input, shape index: {}]
  %s5 = inlined_call_operand.vmem [shape: f32[7,4,64], index: 5, kind: output, shape index: {}]
  %s6 = sld [smem:[#allocation0]]
  $region30: #{encoder_forward.11} parent=0
    _
  %s8 = ssub.s32 1, %s6
  %s9 = scalar_select 0, %s8, %s6
  // Predicated region
  $region2: #{encoder_forward.11} parent=0 // pred_check
    _
  $region3: #{encoder_forward.11} parent=0 // pred_check_branch
    %11 = sbr.rel (0) target = $region5
  $region4: #{encoder_forward.11} parent=0 // pred_region
    _
  $region5: #{encoder_forward.11} parent=0 // pred_fallthru
    _
  // Predicated region
  $region6: #{encoder_forward.11} parent=0 // pred_check
    _
  $region7: #{encoder_forward.11} parent=0 // pred_check_branch
    %13 = sbr.rel (0) target = $region9
  $region8: #{encoder_forward.11} parent=0 // pred_region
    _
  $region9: #{encoder_forward.11} parent=0 // pred_fallthru
    _
  // Predicated region
  $region10: #{encoder_forward.11} parent=0 // pred_check
    _
  $region11: #{encoder_forward.11} parent=0 // pred_check_branch
    %15 = sbr.rel (0) target = $region13
  $region12: #{encoder_forward.11} parent=0 // pred_region
    _
  $region13: #{encoder_forward.11} parent=0 // pred_fallthru
    _
  // Predicated region
  $region14: #{encoder_forward.11} parent=0 // pred_check
    _
  $region15: #{encoder_forward.11} parent=0 // pred_check_branch
    %17 = sbr.rel (0) target = $region17
  $region16: #{encoder_forward.11} parent=0 // pred_region
    _
  $region17: #{encoder_forward.11} parent=0 // pred_fallthru
    _
  // Predicated region
  $region18: #{encoder_forward.11} parent=0 // pred_check
    _
  $region19: #{encoder_forward.11} parent=0 // pred_check_branch
    %19 = sbr.rel (0) target = $region21
  $region20: #{encoder_forward.11} parent=0 // pred_region
    _
  $region21: #{encoder_forward.11} parent=0 // pred_fallthru
    _
  %v20 = vld [vmem:[%s0] sm:$0xf]
  %v21 = vld [vmem:[%s1] sm:$0xff]
  %v22 = vld [vmem:[%s1 + $0x8] sm:$0xff]
  %v23 = vld [vmem:[%s1 + $0x10] sm:$0xff]
  %v24 = vld [vmem:[%s1 + $0x18] sm:$0xff]
  %v25 = vld [vmem:[%s1 + $0x20] sm:$0xff]
  %v26 = vld [vmem:[%s1 + $0x28] sm:$0xff]
  %v27 = vld [vmem:[%s1 + $0x30] sm:$0xff]
  %v28 = vld [vmem:[%s1 + $0x38] sm:$0xff]
  %v29 = vld [vmem:[%s2] sm:$0x1]
  %v31 = vlaneseq
  %v32 = vshrl.u32 %v31, 7
  %v33 = vsub.s32 0, %v32
  %v34 = vrot.slane %v29, %v33
  %vm36 = vcmask 523264
  %v38 = vsel %vm36, %v20, 0
  %40 = vmatprep.subr.mxu0 0.0
  %41 = vmatpush1.msra.mxu0 %v21
  %42 = vmatprep.subr.mxu0 0.0
  %43 = vmatpush1.msra.mxu0 %v22
  %44 = vmatprep.subr.mxu0 0.0
  %45 = vmatpush1.msra.mxu0 %v23
  %46 = vmatprep.subr.mxu0 0.0
  %47 = vmatpush1.msra.mxu0 %v24
  %48 = vmatprep.subr.mxu0 0.0
  %49 = vmatpush1.msra.mxu0 %v25
  %50 = vmatprep.subr.mxu0 0.0
  %51 = vmatpush1.msra.mxu0 %v26
  %52 = vmatprep.subr.mxu0 0.0
  %53 = vmatpush1.msra.mxu0 %v27
  %54 = vmatprep.subr.mxu0 0.0
  %55 = vmatpush1.msra.mxu0 %v28
  %56 = vmatprep.subr.mxu0 0.0
  %57 = vmatpush1.msra.mxu0 0.0
  %58 = vmatprep.subr.mxu0 0.0
  %59 = vmatpush1.msra.mxu0 0.0
  %60 = vmatprep.subr.mxu0 0.0
  %61 = vmatpush1.msra.mxu0 0.0
  %62 = vmatprep.subr.mxu0 0.0
  %63 = vmatpush1.msra.mxu0 0.0
  %64 = vmatprep.subr.mxu0 0.0
  %65 = vmatpush1.msra.mxu0 0.0
  %66 = vmatprep.subr.mxu0 0.0
  %67 = vmatpush1.msra.mxu0 0.0
  %68 = vmatprep.subr.mxu0 0.0
  %69 = vmatpush1.msra.mxu0 0.0
  %70 = vmatprep.subr.mxu0 0.0
  %71 = vmatpush1.msra.mxu0 0.0
  %72 = vmatprep.subr.mxu0 0.0
  %73 = vmatpush1.msra.mxu0 0.0
  %74 = vmatprep.subr.mxu0 0.0
  %75 = vmatpush1.msra.mxu0 0.0
  %76 = vmatprep.subr.mxu0 0.0
  %77 = vmatpush1.msra.mxu0 0.0
  %78 = vmatprep.subr.mxu0 0.0
  %79 = vmatpush1.msra.mxu0 0.0
  %80 = vmatprep.subr.mxu0 0.0
  %81 = vmatpush1.msra.mxu0 0.0
  %82 = vmatprep.subr.mxu0 0.0
  %83 = vmatpush1.msra.mxu0 0.0
  %84 = vmatprep.subr.mxu0 0.0
  %85 = vmatpush1.msra.mxu0 0.0
  %86 = vmatprep.subr.mxu0 0.0
  %87 = vmatpush1.msra.mxu0 0.0
  %88 = vmatprep.subr.mxu0 0.0
  %89 = vmatpush1.msra.mxu0 0.0
  %90 = vmatprep.subr.mxu0 0.0
  %91 = vmatpush1.msra.mxu0 0.0
  %92 = vmatprep.subr.mxu0 0.0
  %93 = vmatpush1.msra.mxu0 0.0
  %94 = vmatprep.subr.mxu0 0.0
  %95 = vmatpush1.msra.mxu0 0.0
  %96 = vmatprep.subr.mxu0 0.0
  %97 = vmatpush1.msra.mxu0 0.0
  %98 = vmatprep.subr.mxu0 0.0
  %99 = vmatpush1.msra.mxu0 0.0
  %100 = vmatprep.subr.mxu0 0.0
  %101 = vmatpush1.msra.mxu0 0.0
  %102 = vmatprep.subr.mxu0 0.0
  %103 = vmatpush1.msra.mxu0 0.0
  %104 = vmatprep.mubr.f32.mxu0 0.0
  %105 = vmatmul.mubr.f32.gmra.mrb[0].mxu0 %v38
  %v106 = vpop.f32.mrb[0].mxu0
  %v107 = vadd.f32 %v34, %v106
  %v108 = vpop.f32.mrb[0].mxu0
  %109 = vdwg.mxu0
  %v110 = vmax.f32 %v107, 0.0
  %v111 = vld [vmem:[%s3] sm:$0xff]
  %v112 = vld [vmem:[%s3 + $0x8] sm:$0xff]
  %v113 = vld [vmem:[%s3 + $0x10] sm:$0xff]
  %v114 = vld [vmem:[%s3 + $0x18] sm:$0xff]
  %v115 = vld [vmem:[%s3 + $0x20] sm:$0xff]
  %v116 = vld [vmem:[%s3 + $0x28] sm:$0xff]
  %v117 = vld [vmem:[%s3 + $0x30] sm:$0xff]
  %v118 = vld [vmem:[%s3 + $0x38] sm:$0xff]
  %v119 = vld [vmem:[%s4] sm:$0x1]
  %v121 = vlaneseq
  %v122 = vshrl.u32 %v121, 7
  %v123 = vsub.s32 0, %v122
  %v124 = vrot.slane %v119, %v123
  %v127 = vsel %vm36, %v110, 0
  %129 = vmatprep.subr.mxu0 0.0
  %130 = vmatpush1.msra.mxu0 %v111
  %131 = vmatprep.subr.mxu0 0.0
  %132 = vmatpush1.msra.mxu0 %v112
  %133 = vmatprep.subr.mxu0 0.0
  %134 = vmatpush1.msra.mxu0 %v113
  %135 = vmatprep.subr.mxu0 0.0
  %136 = vmatpush1.msra.mxu0 %v114
  %137 = vmatprep.subr.mxu0 0.0
  %138 = vmatpush1.msra.mxu0 %v115
  %139 = vmatprep.subr.mxu0 0.0
  %140 = vmatpush1.msra.mxu0 %v116
  %141 = vmatprep.subr.mxu0 0.0
  %142 = vmatpush1.msra.mxu0 %v117
  %143 = vmatprep.subr.mxu0 0.0
  %144 = vmatpush1.msra.mxu0 %v118
  %145 = vmatprep.subr.mxu0 0.0
  %146 = vmatpush1.msra.mxu0 0.0
  %147 = vmatprep.subr.mxu0 0.0
  %148 = vmatpush1.msra.mxu0 0.0
  %149 = vmatprep.subr.mxu0 0.0
  %150 = vmatpush1.msra.mxu0 0.0
  %151 = vmatprep.subr.mxu0 0.0
  %152 = vmatpush1.msra.mxu0 0.0
  %153 = vmatprep.subr.mxu0 0.0
  %154 = vmatpush1.msra.mxu0 0.0
  %155 = vmatprep.subr.mxu0 0.0
  %156 = vmatpush1.msra.mxu0 0.0
  %157 = vmatprep.subr.mxu0 0.0
  %158 = vmatpush1.msra.mxu0 0.0
  %159 = vmatprep.subr.mxu0 0.0
  %160 = vmatpush1.msra.mxu0 0.0
  %161 = vmatprep.subr.mxu0 0.0
  %162 = vmatpush1.msra.mxu0 0.0
  %163 = vmatprep.subr.mxu0 0.0
  %164 = vmatpush1.msra.mxu0 0.0
  %165 = vmatprep.subr.mxu0 0.0
  %166 = vmatpush1.msra.mxu0 0.0
  %167 = vmatprep.subr.mxu0 0.0
  %168 = vmatpush1.msra.mxu0 0.0
  %169 = vmatprep.subr.mxu0 0.0
  %170 = vmatpush1.msra.mxu0 0.0
  %171 = vmatprep.subr.mxu0 0.0
  %172 = vmatpush1.msra.mxu0 0.0
  %173 = vmatprep.subr.mxu0 0.0
  %174 = vmatpush1.msra.mxu0 0.0
  %175 = vmatprep.subr.mxu0 0.0
  %176 = vmatpush1.msra.mxu0 0.0
  %177 = vmatprep.subr.mxu0 0.0
  %178 = vmatpush1.msra.mxu0 0.0
  %179 = vmatprep.subr.mxu0 0.0
  %180 = vmatpush1.msra.mxu0 0.0
  %181 = vmatprep.subr.mxu0 0.0
  %182 = vmatpush1.msra.mxu0 0.0
  %183 = vmatprep.subr.mxu0 0.0
  %184 = vmatpush1.msra.mxu0 0.0
  %185 = vmatprep.subr.mxu0 0.0
  %186 = vmatpush1.msra.mxu0 0.0
  %187 = vmatprep.subr.mxu0 0.0
  %188 = vmatpush1.msra.mxu0 0.0
  %189 = vmatprep.subr.mxu0 0.0
  %190 = vmatpush1.msra.mxu0 0.0
  %191 = vmatprep.subr.mxu0 0.0
  %192 = vmatpush1.msra.mxu0 0.0
  %193 = vmatprep.mubr.f32.mxu0 0.0
  %194 = vmatmul.mubr.f32.gmra.mrb[0].mxu0 %v127
  %v195 = vpop.f32.mrb[0].mxu0
  %v196 = vadd.f32 %v124, %v195
  %v197 = vpop.f32.mrb[0].mxu0
  %198 = vdwg.mxu0
  %vm199 = vcmask 519168
  %200 = vst.msk [vmem:[%s5] sm:$0xf] %vm199, %v196
  %s201 = scalar_lea.vmem %s0, 4
  %v202 = vld [vmem:[%s201] sm:$0xf]
  %s203 = scalar_lea.vmem %s1, 64
  %v204 = vld [vmem:[%s203] sm:$0xff]
  %v205 = vld [vmem:[%s203 + $0x8] sm:$0xff]
  %v206 = vld [vmem:[%s203 + $0x10] sm:$0xff]
  %v207 = vld [vmem:[%s203 + $0x18] sm:$0xff]
  %v208 = vld [vmem:[%s203 + $0x20] sm:$0xff]
  %v209 = vld [vmem:[%s203 + $0x28] sm:$0xff]
  %v210 = vld [vmem:[%s203 + $0x30] sm:$0xff]
  %v211 = vld [vmem:[%s203 + $0x38] sm:$0xff]
  %s212 = scalar_lea.vmem %s2, 1
  %v213 = vld [vmem:[%s212] sm:$0x1]
  %v215 = vlaneseq
  %v216 = vshrl.u32 %v215, 7
  %v217 = vsub.s32 0, %v216
  %v218 = vrot.slane %v213, %v217
  %v221 = vsel %vm36, %v202, 0
  %223 = vmatprep.subr.mxu0 0.0
  %224 = vmatpush1.msra.mxu0 %v204
  %225 = vmatprep.subr.mxu0 0.0
  %226 = vmatpush1.msra.mxu0 %v205
  %227 = vmatprep.subr.mxu0 0.0
  %228 = vmatpush1.msra.mxu0 %v206
  %229 = vmatprep.subr.mxu0 0.0
  %230 = vmatpush1.msra.mxu0 %v207
  %231 = vmatprep.subr.mxu0 0.0
  %232 = vmatpush1.msra.mxu0 %v208
  %233 = vmatprep.subr.mxu0 0.0
  %234 = vmatpush1.msra.mxu0 %v209
  %235 = vmatprep.subr.mxu0 0.0
  %236 = vmatpush1.msra.mxu0 %v210
  %237 = vmatprep.subr.mxu0 0.0
  %238 = vmatpush1.msra.mxu0 %v211
  %239 = vmatprep.subr.mxu0 0.0
  %240 = vmatpush1.msra.mxu0 0.0
  %241 = vmatprep.subr.mxu0 0.0
  %242 = vmatpush1.msra.mxu0 0.0
  %243 = vmatprep.subr.mxu0 0.0
  %244 = vmatpush1.msra.mxu0 0.0
  %245 = vmatprep.subr.mxu0 0.0
  %246 = vmatpush1.msra.mxu0 0.0
  %247 = vmatprep.subr.mxu0 0.0
  %248 = vmatpush1.msra.mxu0 0.0
  %249 = vmatprep.subr.mxu0 0.0
  %250 = vmatpush1.msra.mxu0 0.0
  %251 = vmatprep.subr.mxu0 0.0
  %252 = vmatpush1.msra.mxu0 0.0
  %253 = vmatprep.subr.mxu0 0.0
  %254 = vmatpush1.msra.mxu0 0.0
  %255 = vmatprep.subr.mxu0 0.0
  %256 = vmatpush1.msra.mxu0 0.0
  %257 = vmatprep.subr.mxu0 0.0
  %258 = vmatpush1.msra.mxu0 0.0
  %259 = vmatprep.subr.mxu0 0.0
  %260 = vmatpush1.msra.mxu0 0.0
  %261 = vmatprep.subr.mxu0 0.0
  %262 = vmatpush1.msra.mxu0 0.0
  %263 = vmatprep.subr.mxu0 0.0
  %264 = vmatpush1.msra.mxu0 0.0
  %265 = vmatprep.subr.mxu0 0.0
  %266 = vmatpush1.msra.mxu0 0.0
  %267 = vmatprep.subr.mxu0 0.0
  %268 = vmatpush1.msra.mxu0 0.0
  %269 = vmatprep.subr.mxu0 0.0
  %270 = vmatpush1.msra.mxu0 0.0
  %271 = vmatprep.subr.mxu0 0.0
  %272 = vmatpush1.msra.mxu0 0.0
  %273 = vmatprep.subr.mxu0 0.0
  %274 = vmatpush1.msra.mxu0 0.0
  %275 = vmatprep.subr.mxu0 0.0
  %276 = vmatpush1.msra.mxu0 0.0
  %277 = vmatprep.subr.mxu0 0.0
  %278 = vmatpush1.msra.mxu0 0.0
  %279 = vmatprep.subr.mxu0 0.0
  %280 = vmatpush1.msra.mxu0 0.0
  %281 = vmatprep.subr.mxu0 0.0
  %282 = vmatpush1.msra.mxu0 0.0
  %283 = vmatprep.subr.mxu0 0.0
  %284 = vmatpush1.msra.mxu0 0.0
  %285 = vmatprep.subr.mxu0 0.0
  %286 = vmatpush1.msra.mxu0 0.0
  %287 = vmatprep.mubr.f32.mxu0 0.0
  %288 = vmatmul.mubr.f32.gmra.mrb[0].mxu0 %v221
  %v289 = vpop.f32.mrb[0].mxu0
  %v290 = vadd.f32 %v218, %v289
  %v291 = vpop.f32.mrb[0].mxu0
  %292 = vdwg.mxu0
  %v293 = vmax.f32 %v290, 0.0
  %s294 = scalar_lea.vmem %s3, 64
  %v295 = vld [vmem:[%s294] sm:$0xff]
  %v296 = vld [vmem:[%s294 + $0x8] sm:$0xff]
  %v297 = vld [vmem:[%s294 + $0x10] sm:$0xff]
  %v298 = vld [vmem:[%s294 + $0x18] sm:$0xff]
  %v299 = vld [vmem:[%s294 + $0x20] sm:$0xff]
  %v300 = vld [vmem:[%s294 + $0x28] sm:$0xff]
  %v301 = vld [vmem:[%s294 + $0x30] sm:$0xff]
  %v302 = vld [vmem:[%s294 + $0x38] sm:$0xff]
  %s303 = scalar_lea.vmem %s4, 1
  %v304 = vld [vmem:[%s303] sm:$0x1]
  %v306 = vlaneseq
  %v307 = vshrl.u32 %v306, 7
  %v308 = vsub.s32 0, %v307
  %v309 = vrot.slane %v304, %v308
  %v312 = vsel %vm36, %v293, 0
  %314 = vmatprep.subr.mxu0 0.0
  %315 = vmatpush1.msra.mxu0 %v295
  %316 = vmatprep.subr.mxu0 0.0
  %317 = vmatpush1.msra.mxu0 %v296
  %318 = vmatprep.subr.mxu0 0.0
  %319 = vmatpush1.msra.mxu0 %v297
  %320 = vmatprep.subr.mxu0 0.0
  %321 = vmatpush1.msra.mxu0 %v298
  %322 = vmatprep.subr.mxu0 0.0
  %323 = vmatpush1.msra.mxu0 %v299
  %324 = vmatprep.subr.mxu0 0.0
  %325 = vmatpush1.msra.mxu0 %v300
  %326 = vmatprep.subr.mxu0 0.0
  %327 = vmatpush1.msra.mxu0 %v301
  %328 = vmatprep.subr.mxu0 0.0
  %329 = vmatpush1.msra.mxu0 %v302
  %330 = vmatprep.subr.mxu0 0.0
  %331 = vmatpush1.msra.mxu0 0.0
  %332 = vmatprep.subr.mxu0 0.0
  %333 = vmatpush1.msra.mxu0 0.0
  %334 = vmatprep.subr.mxu0 0.0
  %335 = vmatpush1.msra.mxu0 0.0
  %336 = vmatprep.subr.mxu0 0.0
  %337 = vmatpush1.msra.mxu0 0.0
  %338 = vmatprep.subr.mxu0 0.0
  %339 = vmatpush1.msra.mxu0 0.0
  %340 = vmatprep.subr.mxu0 0.0
  %341 = vmatpush1.msra.mxu0 0.0
  %342 = vmatprep.subr.mxu0 0.0
  %343 = vmatpush1.msra.mxu0 0.0
  %344 = vmatprep.subr.mxu0 0.0
  %345 = vmatpush1.msra.mxu0 0.0
  %346 = vmatprep.subr.mxu0 0.0
  %347 = vmatpush1.msra.mxu0 0.0
  %348 = vmatprep.subr.mxu0 0.0
  %349 = vmatpush1.msra.mxu0 0.0
  %350 = vmatprep.subr.mxu0 0.0
  %351 = vmatpush1.msra.mxu0 0.0
  %352 = vmatprep.subr.mxu0 0.0
  %353 = vmatpush1.msra.mxu0 0.0
  %354 = vmatprep.subr.mxu0 0.0
  %355 = vmatpush1.msra.mxu0 0.0
  %356 = vmatprep.subr.mxu0 0.0
  %357 = vmatpush1.msra.mxu0 0.0
  %358 = vmatprep.subr.mxu0 0.0
  %359 = vmatpush1.msra.mxu0 0.0
  %360 = vmatprep.subr.mxu0 0.0
  %361 = vmatpush1.msra.mxu0 0.0
  %362 = vmatprep.subr.mxu0 0.0
  %363 = vmatpush1.msra.mxu0 0.0
  %364 = vmatprep.subr.mxu0 0.0
  %365 = vmatpush1.msra.mxu0 0.0
  %366 = vmatprep.subr.mxu0 0.0
  %367 = vmatpush1.msra.mxu0 0.0
  %368 = vmatprep.subr.mxu0 0.0
  %369 = vmatpush1.msra.mxu0 0.0
  %370 = vmatprep.subr.mxu0 0.0
  %371 = vmatpush1.msra.mxu0 0.0
  %372 = vmatprep.subr.mxu0 0.0
  %373 = vmatpush1.msra.mxu0 0.0
  %374 = vmatprep.subr.mxu0 0.0
  %375 = vmatpush1.msra.mxu0 0.0
  %376 = vmatprep.subr.mxu0 0.0
  %377 = vmatpush1.msra.mxu0 0.0
  %378 = vmatprep.mubr.f32.mxu0 0.0
  %379 = vmatmul.mubr.f32.gmra.mrb[0].mxu0 %v312
  %v380 = vpop.f32.mrb[0].mxu0
  %v381 = vadd.f32 %v309, %v380
  %v382 = vpop.f32.mrb[0].mxu0
  %383 = vdwg.mxu0
  %s384 = scalar_lea.vmem %s5, 4
  %385 = vst.msk [vmem:[%s384] sm:$0xf] %vm199, %v381
  %s386 = scalar_lea.vmem %s0, 8
  %v387 = vld [vmem:[%s386] sm:$0xf]
  %s388 = scalar_lea.vmem %s1, 128
  %v389 = vld [vmem:[%s388] sm:$0xff]
  %v390 = vld [vmem:[%s388 + $0x8] sm:$0xff]
  %v391 = vld [vmem:[%s388 + $0x10] sm:$0xff]
  %v392 = vld [vmem:[%s388 + $0x18] sm:$0xff]
  %v393 = vld [vmem:[%s388 + $0x20] sm:$0xff]
  %v394 = vld [vmem:[%s388 + $0x28] sm:$0xff]
  %v395 = vld [vmem:[%s388 + $0x30] sm:$0xff]
  %v396 = vld [vmem:[%s388 + $0x38] sm:$0xff]
  %s397 = scalar_lea.vmem %s2, 2
  %v398 = vld [vmem:[%s397] sm:$0x1]
  %v400 = vlaneseq
  %v401 = vshrl.u32 %v400, 7
  %v402 = vsub.s32 0, %v401
  %v403 = vrot.slane %v398, %v402
  %v406 = vsel %vm36, %v387, 0
  %408 = vmatprep.subr.mxu0 0.0
  %409 = vmatpush1.msra.mxu0 %v389
  %410 = vmatprep.subr.mxu0 0.0
  %411 = vmatpush1.msra.mxu0 %v390
  %412 = vmatprep.subr.mxu0 0.0
  %413 = vmatpush1.msra.mxu0 %v391
  %414 = vmatprep.subr.mxu0 0.0
  %415 = vmatpush1.msra.mxu0 %v392
  %416 = vmatprep.subr.mxu0 0.0
  %417 = vmatpush1.msra.mxu0 %v393
  %418 = vmatprep.subr.mxu0 0.0
  %419 = vmatpush1.msra.mxu0 %v394
  %420 = vmatprep.subr.mxu0 0.0
  %421 = vmatpush1.msra.mxu0 %v395
  %422 = vmatprep.subr.mxu0 0.0
  %423 = vmatpush1.msra.mxu0 %v396
  %424 = vmatprep.subr.mxu0 0.0
  %425 = vmatpush1.msra.mxu0 0.0
  %426 = vmatprep.subr.mxu0 0.0
  %427 = vmatpush1.msra.mxu0 0.0
  %428 = vmatprep.subr.mxu0 0.0
  %429 = vmatpush1.msra.mxu0 0.0
  %430 = vmatprep.subr.mxu0 0.0
  %431 = vmatpush1.msra.mxu0 0.0
  %432 = vmatprep.subr.mxu0 0.0
  %433 = vmatpush1.msra.mxu0 0.0
  %434 = vmatprep.subr.mxu0 0.0
  %435 = vmatpush1.msra.mxu0 0.0
  %436 = vmatprep.subr.mxu0 0.0
  %437 = vmatpush1.msra.mxu0 0.0
  %438 = vmatprep.subr.mxu0 0.0
  %439 = vmatpush1.msra.mxu0 0.0
  %440 = vmatprep.subr.mxu0 0.0
  %441 = vmatpush1.msra.mxu0 0.0
  %442 = vmatprep.subr.mxu0 0.0
  %443 = vmatpush1.msra.mxu0 0.0
  %444 = vmatprep.subr.mxu0 0.0
  %445 = vmatpush1.msra.mxu0 0.0
  %446 = vmatprep.subr.mxu0 0.0
  %447 = vmatpush1.msra.mxu0 0.0
  %448 = vmatprep.subr.mxu0 0.0
  %449 = vmatpush1.msra.mxu0 0.0
  %450 = vmatprep.subr.mxu0 0.0
  %451 = vmatpush1.msra.mxu0 0.0
  %452 = vmatprep.subr.mxu0 0.0
  %453 = vmatpush1.msra.mxu0 0.0
  %454 = vmatprep.subr.mxu0 0.0
  %455 = vmatpush1.msra.mxu0 0.0
  %456 = vmatprep.subr.mxu0 0.0
  %457 = vmatpush1.msra.mxu0 0.0
  %458 = vmatprep.subr.mxu0 0.0
  %459 = vmatpush1.msra.mxu0 0.0
  %460 = vmatprep.subr.mxu0 0.0
  %461 = vmatpush1.msra.mxu0 0.0
  %462 = vmatprep.subr.mxu0 0.0
  %463 = vmatpush1.msra.mxu0 0.0
  %464 = vmatprep.subr.mxu0 0.0
  %465 = vmatpush1.msra.mxu0 0.0
  %466 = vmatprep.subr.mxu0 0.0
  %467 = vmatpush1.msra.mxu0 0.0
  %468 = vmatprep.subr.mxu0 0.0
  %469 = vmatpush1.msra.mxu0 0.0
  %470 = vmatprep.subr.mxu0 0.0
  %471 = vmatpush1.msra.mxu0 0.0
  %472 = vmatprep.mubr.f32.mxu0 0.0
  %473 = vmatmul.mubr.f32.gmra.mrb[0].mxu0 %v406
  %v474 = vpop.f32.mrb[0].mxu0
  %v475 = vadd.f32 %v403, %v474
  %v476 = vpop.f32.mrb[0].mxu0
  %477 = vdwg.mxu0
  %v478 = vmax.f32 %v475, 0.0
  %s479 = scalar_lea.vmem %s3, 128
  %v480 = vld [vmem:[%s479] sm:$0xff]
  %v481 = vld [vmem:[%s479 + $0x8] sm:$0xff]
  %v482 = vld [vmem:[%s479 + $0x10] sm:$0xff]
  %v483 = vld [vmem:[%s479 + $0x18] sm:$0xff]
  %v484 = vld [vmem:[%s479 + $0x20] sm:$0xff]
  %v485 = vld [vmem:[%s479 + $0x28] sm:$0xff]
  %v486 = vld [vmem:[%s479 + $0x30] sm:$0xff]
  %v487 = vld [vmem:[%s479 + $0x38] sm:$0xff]
  %s488 = scalar_lea.vmem %s4, 2
  %v489 = vld [vmem:[%s488] sm:$0x1]
  %v491 = vlaneseq
  %v492 = vshrl.u32 %v491, 7
  %v493 = vsub.s32 0, %v492
  %v494 = vrot.slane %v489, %v493
  %v497 = vsel %vm36, %v478, 0
  %499 = vmatprep.subr.mxu0 0.0
  %500 = vmatpush1.msra.mxu0 %v480
  %501 = vmatprep.subr.mxu0 0.0
  %502 = vmatpush1.msra.mxu0 %v481
  %503 = vmatprep.subr.mxu0 0.0
  %504 = vmatpush1.msra.mxu0 %v482
  %505 = vmatprep.subr.mxu0 0.0
  %506 = vmatpush1.msra.mxu0 %v483
  %507 = vmatprep.subr.mxu0 0.0
  %508 = vmatpush1.msra.mxu0 %v484
  %509 = vmatprep.subr.mxu0 0.0
  %510 = vmatpush1.msra.mxu0 %v485
  %511 = vmatprep.subr.mxu0 0.0
  %512 = vmatpush1.msra.mxu0 %v486
  %513 = vmatprep.subr.mxu0 0.0
  %514 = vmatpush1.msra.mxu0 %v487
  %515 = vmatprep.subr.mxu0 0.0
  %516 = vmatpush1.msra.mxu0 0.0
  %517 = vmatprep.subr.mxu0 0.0
  %518 = vmatpush1.msra.mxu0 0.0
  %519 = vmatprep.subr.mxu0 0.0
  %520 = vmatpush1.msra.mxu0 0.0
  %521 = vmatprep.subr.mxu0 0.0
  %522 = vmatpush1.msra.mxu0 0.0
  %523 = vmatprep.subr.mxu0 0.0
  %524 = vmatpush1.msra.mxu0 0.0
  %525 = vmatprep.subr.mxu0 0.0
  %526 = vmatpush1.msra.mxu0 0.0
  %527 = vmatprep.subr.mxu0 0.0
  %528 = vmatpush1.msra.mxu0 0.0
  %529 = vmatprep.subr.mxu0 0.0
  %530 = vmatpush1.msra.mxu0 0.0
  %531 = vmatprep.subr.mxu0 0.0
  %532 = vmatpush1.msra.mxu0 0.0
  %533 = vmatprep.subr.mxu0 0.0
  %534 = vmatpush1.msra.mxu0 0.0
  %535 = vmatprep.subr.mxu0 0.0
  %536 = vmatpush1.msra.mxu0 0.0
  %537 = vmatprep.subr.mxu0 0.0
  %538 = vmatpush1.msra.mxu0 0.0
  %539 = vmatprep.subr.mxu0 0.0
  %540 = vmatpush1.msra.mxu0 0.0
  %541 = vmatprep.subr.mxu0 0.0
  %542 = vmatpush1.msra.mxu0 0.0
  %543 = vmatprep.subr.mxu0 0.0
  %544 = vmatpush1.msra.mxu0 0.0
  %545 = vmatprep.subr.mxu0 0.0
  %546 = vmatpush1.msra.mxu0 0.0
  %547 = vmatprep.subr.mxu0 0.0
  %548 = vmatpush1.msra.mxu0 0.0
  %549 = vmatprep.subr.mxu0 0.0
  %550 = vmatpush1.msra.mxu0 0.0
  %551 = vmatprep.subr.mxu0 0.0
  %552 = vmatpush1.msra.mxu0 0.0
  %553 = vmatprep.subr.mxu0 0.0
  %554 = vmatpush1.msra.mxu0 0.0
  %555 = vmatprep.subr.mxu0 0.0
  %556 = vmatpush1.msra.mxu0 0.0
  %557 = vmatprep.subr.mxu0 0.0
  %558 = vmatpush1.msra.mxu0 0.0
  %559 = vmatprep.subr.mxu0 0.0
  %560 = vmatpush1.msra.mxu0 0.0
  %561 = vmatprep.subr.mxu0 0.0
  %562 = vmatpush1.msra.mxu0 0.0
  %563 = vmatprep.mubr.f32.mxu0 0.0
  %564 = vmatmul.mubr.f32.gmra.mrb[0].mxu0 %v497
  %v565 = vpop.f32.mrb[0].mxu0
  %v566 = vadd.f32 %v494, %v565
  %v567 = vpop.f32.mrb[0].mxu0
  %568 = vdwg.mxu0
  %s569 = scalar_lea.vmem %s5, 8
  %570 = vst.msk [vmem:[%s569] sm:$0xf] %vm199, %v566
  %s571 = scalar_lea.vmem %s0, 12
  %v572 = vld [vmem:[%s571] sm:$0xf]
  %s573 = scalar_lea.vmem %s1, 192
  %v574 = vld [vmem:[%s573] sm:$0xff]
  %v575 = vld [vmem:[%s573 + $0x8] sm:$0xff]
  %v576 = vld [vmem:[%s573 + $0x10] sm:$0xff]
  %v577 = vld [vmem:[%s573 + $0x18] sm:$0xff]
  %v578 = vld [vmem:[%s573 + $0x20] sm:$0xff]
  %v579 = vld [vmem:[%s573 + $0x28] sm:$0xff]
  %v580 = vld [vmem:[%s573 + $0x30] sm:$0xff]
  %v581 = vld [vmem:[%s573 + $0x38] sm:$0xff]
  %s582 = scalar_lea.vmem %s2, 3
  %v583 = vld [vmem:[%s582] sm:$0x1]
  %v585 = vlaneseq
  %v586 = vshrl.u32 %v585, 7
  %v587 = vsub.s32 0, %v586
  %v588 = vrot.slane %v583, %v587
  %v591 = vsel %vm36, %v572, 0
  %593 = vmatprep.subr.mxu0 0.0
  %594 = vmatpush1.msra.mxu0 %v574
  %595 = vmatprep.subr.mxu0 0.0
  %596 = vmatpush1.msra.mxu0 %v575
  %597 = vmatprep.subr.mxu0 0.0
  %598 = vmatpush1.msra.mxu0 %v576
  %599 = vmatprep.subr.mxu0 0.0
  %600 = vmatpush1.msra.mxu0 %v577
  %601 = vmatprep.subr.mxu0 0.0
  %602 = vmatpush1.msra.mxu0 %v578
  %603 = vmatprep.subr.mxu0 0.0
  %604 = vmatpush1.msra.mxu0 %v579
  %605 = vmatprep.subr.mxu0 0.0
  %606 = vmatpush1.msra.mxu0 %v580
  %607 = vmatprep.subr.mxu0 0.0
  %608 = vmatpush1.msra.mxu0 %v581
  %609 = vmatprep.subr.mxu0 0.0
  %610 = vmatpush1.msra.mxu0 0.0
  %611 = vmatprep.subr.mxu0 0.0
  %612 = vmatpush1.msra.mxu0 0.0
  %613 = vmatprep.subr.mxu0 0.0
  %614 = vmatpush1.msra.mxu0 0.0
  %615 = vmatprep.subr.mxu0 0.0
  %616 = vmatpush1.msra.mxu0 0.0
  %617 = vmatprep.subr.mxu0 0.0
  %618 = vmatpush1.msra.mxu0 0.0
  %619 = vmatprep.subr.mxu0 0.0
  %620 = vmatpush1.msra.mxu0 0.0
  %621 = vmatprep.subr.mxu0 0.0
  %622 = vmatpush1.msra.mxu0 0.0
  %623 = vmatprep.subr.mxu0 0.0
  %624 = vmatpush1.msra.mxu0 0.0
  %625 = vmatprep.subr.mxu0 0.0
  %626 = vmatpush1.msra.mxu0 0.0
  %627 = vmatprep.subr.mxu0 0.0
  %628 = vmatpush1.msra.mxu0 0.0
  %629 = vmatprep.subr.mxu0 0.0
  %630 = vmatpush1.msra.mxu0 0.0
  %631 = vmatprep.subr.mxu0 0.0
  %632 = vmatpush1.msra.mxu0 0.0
  %633 = vmatprep.subr.mxu0 0.0
  %634 = vmatpush1.msra.mxu0 0.0
  %635 = vmatprep.subr.mxu0 0.0
  %636 = vmatpush1.msra.mxu0 0.0
  %637 = vmatprep.subr.mxu0 0.0
  %638 = vmatpush1.msra.mxu0 0.0
  %639 = vmatprep.subr.mxu0 0.0
  %640 = vmatpush1.msra.mxu0 0.0
  %641 = vmatprep.subr.mxu0 0.0
  %642 = vmatpush1.msra.mxu0 0.0
  %643 = vmatprep.subr.mxu0 0.0
  %644 = vmatpush1.msra.mxu0 0.0
  %645 = vmatprep.subr.mxu0 0.0
  %646 = vmatpush1.msra.mxu0 0.0
  %647 = vmatprep.subr.mxu0 0.0
  %648 = vmatpush1.msra.mxu0 0.0
  %649 = vmatprep.subr.mxu0 0.0
  %650 = vmatpush1.msra.mxu0 0.0
  %651 = vmatprep.subr.mxu0 0.0
  %652 = vmatpush1.msra.mxu0 0.0
  %653 = vmatprep.subr.mxu0 0.0
  %654 = vmatpush1.msra.mxu0 0.0
  %655 = vmatprep.subr.mxu0 0.0
  %656 = vmatpush1.msra.mxu0 0.0
  %657 = vmatprep.mubr.f32.mxu0 0.0
  %658 = vmatmul.mubr.f32.gmra.mrb[0].mxu0 %v591
  %v659 = vpop.f32.mrb[0].mxu0
  %v660 = vadd.f32 %v588, %v659
  %v661 = vpop.f32.mrb[0].mxu0
  %662 = vdwg.mxu0
  %v663 = vmax.f32 %v660, 0.0
  %s664 = scalar_lea.vmem %s3, 192
  %v665 = vld [vmem:[%s664] sm:$0xff]
  %v666 = vld [vmem:[%s664 + $0x8] sm:$0xff]
  %v667 = vld [vmem:[%s664 + $0x10] sm:$0xff]
  %v668 = vld [vmem:[%s664 + $0x18] sm:$0xff]
  %v669 = vld [vmem:[%s664 + $0x20] sm:$0xff]
  %v670 = vld [vmem:[%s664 + $0x28] sm:$0xff]
  %v671 = vld [vmem:[%s664 + $0x30] sm:$0xff]
  %v672 = vld [vmem:[%s664 + $0x38] sm:$0xff]
  %s673 = scalar_lea.vmem %s4, 3
  %v674 = vld [vmem:[%s673] sm:$0x1]
  %v676 = vlaneseq
  %v677 = vshrl.u32 %v676, 7
  %v678 = vsub.s32 0, %v677
  %v679 = vrot.slane %v674, %v678
  %v682 = vsel %vm36, %v663, 0
  %684 = vmatprep.subr.mxu0 0.0
  %685 = vmatpush1.msra.mxu0 %v665
  %686 = vmatprep.subr.mxu0 0.0
  %687 = vmatpush1.msra.mxu0 %v666
  %688 = vmatprep.subr.mxu0 0.0
  %689 = vmatpush1.msra.mxu0 %v667
  %690 = vmatprep.subr.mxu0 0.0
  %691 = vmatpush1.msra.mxu0 %v668
  %692 = vmatprep.subr.mxu0 0.0
  %693 = vmatpush1.msra.mxu0 %v669
  %694 = vmatprep.subr.mxu0 0.0
  %695 = vmatpush1.msra.mxu0 %v670
  %696 = vmatprep.subr.mxu0 0.0
  %697 = vmatpush1.msra.mxu0 %v671
  %698 = vmatprep.subr.mxu0 0.0
  %699 = vmatpush1.msra.mxu0 %v672
  %700 = vmatprep.subr.mxu0 0.0
  %701 = vmatpush1.msra.mxu0 0.0
  %702 = vmatprep.subr.mxu0 0.0
  %703 = vmatpush1.msra.mxu0 0.0
  %704 = vmatprep.subr.mxu0 0.0
  %705 = vmatpush1.msra.mxu0 0.0
  %706 = vmatprep.subr.mxu0 0.0
  %707 = vmatpush1.msra.mxu0 0.0
  %708 = vmatprep.subr.mxu0 0.0
  %709 = vmatpush1.msra.mxu0 0.0
  %710 = vmatprep.subr.mxu0 0.0
  %711 = vmatpush1.msra.mxu0 0.0
  %712 = vmatprep.subr.mxu0 0.0
  %713 = vmatpush1.msra.mxu0 0.0
  %714 = vmatprep.subr.mxu0 0.0
  %715 = vmatpush1.msra.mxu0 0.0
  %716 = vmatprep.subr.mxu0 0.0
  %717 = vmatpush1.msra.mxu0 0.0
  %718 = vmatprep.subr.mxu0 0.0
  %719 = vmatpush1.msra.mxu0 0.0
  %720 = vmatprep.subr.mxu0 0.0
  %721 = vmatpush1.msra.mxu0 0.0
  %722 = vmatprep.subr.mxu0 0.0
  %723 = vmatpush1.msra.mxu0 0.0
  %724 = vmatprep.subr.mxu0 0.0
  %725 = vmatpush1.msra.mxu0 0.0
  %726 = vmatprep.subr.mxu0 0.0
  %727 = vmatpush1.msra.mxu0 0.0
  %728 = vmatprep.subr.mxu0 0.0
  %729 = vmatpush1.msra.mxu0 0.0
  %730 = vmatprep.subr.mxu0 0.0
  %731 = vmatpush1.msra.mxu0 0.0
  %732 = vmatprep.subr.mxu0 0.0
  %733 = vmatpush1.msra.mxu0 0.0
  %734 = vmatprep.subr.mxu0 0.0
  %735 = vmatpush1.msra.mxu0 0.0
  %736 = vmatprep.subr.mxu0 0.0
  %737 = vmatpush1.msra.mxu0 0.0
  %738 = vmatprep.subr.mxu0 0.0
  %739 = vmatpush1.msra.mxu0 0.0
  %740 = vmatprep.subr.mxu0 0.0
  %741 = vmatpush1.msra.mxu0 0.0
  %742 = vmatprep.subr.mxu0 0.0
  %743 = vmatpush1.msra.mxu0 0.0
  %744 = vmatprep.subr.mxu0 0.0
  %745 = vmatpush1.msra.mxu0 0.0
  %746 = vmatprep.subr.mxu0 0.0
  %747 = vmatpush1.msra.mxu0 0.0
  %748 = vmatprep.mubr.f32.mxu0 0.0
  %749 = vmatmul.mubr.f32.gmra.mrb[0].mxu0 %v682
  %v750 = vpop.f32.mrb[0].mxu0
  %v751 = vadd.f32 %v679, %v750
  %v752 = vpop.f32.mrb[0].mxu0
  %753 = vdwg.mxu0
  %s754 = scalar_lea.vmem %s5, 12
  %755 = vst.msk [vmem:[%s754] sm:$0xf] %vm199, %v751
  %s756 = scalar_lea.vmem %s0, 16
  %v757 = vld [vmem:[%s756] sm:$0xf]
  %s758 = scalar_lea.vmem %s1, 256
  %v759 = vld [vmem:[%s758] sm:$0xff]
  %v760 = vld [vmem:[%s758 + $0x8] sm:$0xff]
  %v761 = vld [vmem:[%s758 + $0x10] sm:$0xff]
  %v762 = vld [vmem:[%s758 + $0x18] sm:$0xff]
  %v763 = vld [vmem:[%s758 + $0x20] sm:$0xff]
  %v764 = vld [vmem:[%s758 + $0x28] sm:$0xff]
  %v765 = vld [vmem:[%s758 + $0x30] sm:$0xff]
  %v766 = vld [vmem:[%s758 + $0x38] sm:$0xff]
  %s767 = scalar_lea.vmem %s2, 4
  %v768 = vld [vmem:[%s767] sm:$0x1]
  %v770 = vlaneseq
  %v771 = vshrl.u32 %v770, 7
  %v772 = vsub.s32 0, %v771
  %v773 = vrot.slane %v768, %v772
  %v776 = vsel %vm36, %v757, 0
  %778 = vmatprep.subr.mxu0 0.0
  %779 = vmatpush1.msra.mxu0 %v759
  %780 = vmatprep.subr.mxu0 0.0
  %781 = vmatpush1.msra.mxu0 %v760
  %782 = vmatprep.subr.mxu0 0.0
  %783 = vmatpush1.msra.mxu0 %v761
  %784 = vmatprep.subr.mxu0 0.0
  %785 = vmatpush1.msra.mxu0 %v762
  %786 = vmatprep.subr.mxu0 0.0
  %787 = vmatpush1.msra.mxu0 %v763
  %788 = vmatprep.subr.mxu0 0.0
  %789 = vmatpush1.msra.mxu0 %v764
  %790 = vmatprep.subr.mxu0 0.0
  %791 = vmatpush1.msra.mxu0 %v765
  %792 = vmatprep.subr.mxu0 0.0
  %793 = vmatpush1.msra.mxu0 %v766
  %794 = vmatprep.subr.mxu0 0.0
  %795 = vmatpush1.msra.mxu0 0.0
  %796 = vmatprep.subr.mxu0 0.0
  %797 = vmatpush1.msra.mxu0 0.0
  %798 = vmatprep.subr.mxu0 0.0
  %799 = vmatpush1.msra.mxu0 0.0
  %800 = vmatprep.subr.mxu0 0.0
  %801 = vmatpush1.msra.mxu0 0.0
  %802 = vmatprep.subr.mxu0 0.0
  %803 = vmatpush1.msra.mxu0 0.0
  %804 = vmatprep.subr.mxu0 0.0
  %805 = vmatpush1.msra.mxu0 0.0
  %806 = vmatprep.subr.mxu0 0.0
  %807 = vmatpush1.msra.mxu0 0.0
  %808 = vmatprep.subr.mxu0 0.0
  %809 = vmatpush1.msra.mxu0 0.0
  %810 = vmatprep.subr.mxu0 0.0
  %811 = vmatpush1.msra.mxu0 0.0
  %812 = vmatprep.subr.mxu0 0.0
  %813 = vmatpush1.msra.mxu0 0.0
  %814 = vmatprep.subr.mxu0 0.0
  %815 = vmatpush1.msra.mxu0 0.0
  %816 = vmatprep.subr.mxu0 0.0
  %817 = vmatpush1.msra.mxu0 0.0
  %818 = vmatprep.subr.mxu0 0.0
  %819 = vmatpush1.msra.mxu0 0.0
  %820 = vmatprep.subr.mxu0 0.0
  %821 = vmatpush1.msra.mxu0 0.0
  %822 = vmatprep.subr.mxu0 0.0
  %823 = vmatpush1.msra.mxu0 0.0
  %824 = vmatprep.subr.mxu0 0.0
  %825 = vmatpush1.msra.mxu0 0.0
  %826 = vmatprep.subr.mxu0 0.0
  %827 = vmatpush1.msra.mxu0 0.0
  %828 = vmatprep.subr.mxu0 0.0
  %829 = vmatpush1.msra.mxu0 0.0
  %830 = vmatprep.subr.mxu0 0.0
  %831 = vmatpush1.msra.mxu0 0.0
  %832 = vmatprep.subr.mxu0 0.0
  %833 = vmatpush1.msra.mxu0 0.0
  %834 = vmatprep.subr.mxu0 0.0
  %835 = vmatpush1.msra.mxu0 0.0
  %836 = vmatprep.subr.mxu0 0.0
  %837 = vmatpush1.msra.mxu0 0.0
  %838 = vmatprep.subr.mxu0 0.0
  %839 = vmatpush1.msra.mxu0 0.0
  %840 = vmatprep.subr.mxu0 0.0
  %841 = vmatpush1.msra.mxu0 0.0
  %842 = vmatprep.mubr.f32.mxu0 0.0
  %843 = vmatmul.mubr.f32.gmra.mrb[0].mxu0 %v776
  %v844 = vpop.f32.mrb[0].mxu0
  %v845 = vadd.f32 %v773, %v844
  %v846 = vpop.f32.mrb[0].mxu0
  %847 = vdwg.mxu0
  %v848 = vmax.f32 %v845, 0.0
  %s849 = scalar_lea.vmem %s3, 256
  %v850 = vld [vmem:[%s849] sm:$0xff]
  %v851 = vld [vmem:[%s849 + $0x8] sm:$0xff]
  %v852 = vld [vmem:[%s849 + $0x10] sm:$0xff]
  %v853 = vld [vmem:[%s849 + $0x18] sm:$0xff]
  %v854 = vld [vmem:[%s849 + $0x20] sm:$0xff]
  %v855 = vld [vmem:[%s849 + $0x28] sm:$0xff]
  %v856 = vld [vmem:[%s849 + $0x30] sm:$0xff]
  %v857 = vld [vmem:[%s849 + $0x38] sm:$0xff]
  %s858 = scalar_lea.vmem %s4, 4
  %v859 = vld [vmem:[%s858] sm:$0x1]
  %v861 = vlaneseq
  %v862 = vshrl.u32 %v861, 7
  %v863 = vsub.s32 0, %v862
  %v864 = vrot.slane %v859, %v863
  %v867 = vsel %vm36, %v848, 0
  %869 = vmatprep.subr.mxu0 0.0
  %870 = vmatpush1.msra.mxu0 %v850
  %871 = vmatprep.subr.mxu0 0.0
  %872 = vmatpush1.msra.mxu0 %v851
  %873 = vmatprep.subr.mxu0 0.0
  %874 = vmatpush1.msra.mxu0 %v852
  %875 = vmatprep.subr.mxu0 0.0
  %876 = vmatpush1.msra.mxu0 %v853
  %877 = vmatprep.subr.mxu0 0.0
  %878 = vmatpush1.msra.mxu0 %v854
  %879 = vmatprep.subr.mxu0 0.0
  %880 = vmatpush1.msra.mxu0 %v855
  %881 = vmatprep.subr.mxu0 0.0
  %882 = vmatpush1.msra.mxu0 %v856
  %883 = vmatprep.subr.mxu0 0.0
  %884 = vmatpush1.msra.mxu0 %v857
  %885 = vmatprep.subr.mxu0 0.0
  %886 = vmatpush1.msra.mxu0 0.0
  %887 = vmatprep.subr.mxu0 0.0
  %888 = vmatpush1.msra.mxu0 0.0
  %889 = vmatprep.subr.mxu0 0.0
  %890 = vmatpush1.msra.mxu0 0.0
  %891 = vmatprep.subr.mxu0 0.0
  %892 = vmatpush1.msra.mxu0 0.0
  %893 = vmatprep.subr.mxu0 0.0
  %894 = vmatpush1.msra.mxu0 0.0
  %895 = vmatprep.subr.mxu0 0.0
  %896 = vmatpush1.msra.mxu0 0.0
  %897 = vmatprep.subr.mxu0 0.0
  %898 = vmatpush1.msra.mxu0 0.0
  %899 = vmatprep.subr.mxu0 0.0
  %900 = vmatpush1.msra.mxu0 0.0
  %901 = vmatprep.subr.mxu0 0.0
  %902 = vmatpush1.msra.mxu0 0.0
  %903 = vmatprep.subr.mxu0 0.0
  %904 = vmatpush1.msra.mxu0 0.0
  %905 = vmatprep.subr.mxu0 0.0
  %906 = vmatpush1.msra.mxu0 0.0
  %907 = vmatprep.subr.mxu0 0.0
  %908 = vmatpush1.msra.mxu0 0.0
  %909 = vmatprep.subr.mxu0 0.0
  %910 = vmatpush1.msra.mxu0 0.0
  %911 = vmatprep.subr.mxu0 0.0
  %912 = vmatpush1.msra.mxu0 0.0
  %913 = vmatprep.subr.mxu0 0.0
  %914 = vmatpush1.msra.mxu0 0.0
  %915 = vmatprep.subr.mxu0 0.0
  %916 = vmatpush1.msra.mxu0 0.0
  %917 = vmatprep.subr.mxu0 0.0
  %918 = vmatpush1.msra.mxu0 0.0
  %919 = vmatprep.subr.mxu0 0.0
  %920 = vmatpush1.msra.mxu0 0.0
  %921 = vmatprep.subr.mxu0 0.0
  %922 = vmatpush1.msra.mxu0 0.0
  %923 = vmatprep.subr.mxu0 0.0
  %924 = vmatpush1.msra.mxu0 0.0
  %925 = vmatprep.subr.mxu0 0.0
  %926 = vmatpush1.msra.mxu0 0.0
  %927 = vmatprep.subr.mxu0 0.0
  %928 = vmatpush1.msra.mxu0 0.0
  %929 = vmatprep.subr.mxu0 0.0
  %930 = vmatpush1.msra.mxu0 0.0
  %931 = vmatprep.subr.mxu0 0.0
  %932 = vmatpush1.msra.mxu0 0.0
  %933 = vmatprep.mubr.f32.mxu0 0.0
  %934 = vmatmul.mubr.f32.gmra.mrb[0].mxu0 %v867
  %v935 = vpop.f32.mrb[0].mxu0
  %v936 = vadd.f32 %v864, %v935
  %v937 = vpop.f32.mrb[0].mxu0
  %938 = vdwg.mxu0
  %s939 = scalar_lea.vmem %s5, 16
  %940 = vst.msk [vmem:[%s939] sm:$0xf] %vm199, %v936
  %s941 = scalar_lea.vmem %s0, 20
  %v942 = vld [vmem:[%s941] sm:$0xf]
  %s943 = scalar_lea.vmem %s1, 320
  %v944 = vld [vmem:[%s943] sm:$0xff]
  %v945 = vld [vmem:[%s943 + $0x8] sm:$0xff]
  %v946 = vld [vmem:[%s943 + $0x10] sm:$0xff]
  %v947 = vld [vmem:[%s943 + $0x18] sm:$0xff]
  %v948 = vld [vmem:[%s943 + $0x20] sm:$0xff]
  %v949 = vld [vmem:[%s943 + $0x28] sm:$0xff]
  %v950 = vld [vmem:[%s943 + $0x30] sm:$0xff]
  %v951 = vld [vmem:[%s943 + $0x38] sm:$0xff]
  %s952 = scalar_lea.vmem %s2, 5
  %v953 = vld [vmem:[%s952] sm:$0x1]
  %v955 = vlaneseq
  %v956 = vshrl.u32 %v955, 7
  %v957 = vsub.s32 0, %v956
  %v958 = vrot.slane %v953, %v957
  %v961 = vsel %vm36, %v942, 0
  %963 = vmatprep.subr.mxu0 0.0
  %964 = vmatpush1.msra.mxu0 %v944
  %965 = vmatprep.subr.mxu0 0.0
  %966 = vmatpush1.msra.mxu0 %v945
  %967 = vmatprep.subr.mxu0 0.0
  %968 = vmatpush1.msra.mxu0 %v946
  %969 = vmatprep.subr.mxu0 0.0
  %970 = vmatpush1.msra.mxu0 %v947
  %971 = vmatprep.subr.mxu0 0.0
  %972 = vmatpush1.msra.mxu0 %v948
  %973 = vmatprep.subr.mxu0 0.0
  %974 = vmatpush1.msra.mxu0 %v949
  %975 = vmatprep.subr.mxu0 0.0
  %976 = vmatpush1.msra.mxu0 %v950
  %977 = vmatprep.subr.mxu0 0.0
  %978 = vmatpush1.msra.mxu0 %v951
  %979 = vmatprep.subr.mxu0 0.0
  %980 = vmatpush1.msra.mxu0 0.0
  %981 = vmatprep.subr.mxu0 0.0
  %982 = vmatpush1.msra.mxu0 0.0
  %983 = vmatprep.subr.mxu0 0.0
  %984 = vmatpush1.msra.mxu0 0.0
  %985 = vmatprep.subr.mxu0 0.0
  %986 = vmatpush1.msra.mxu0 0.0
  %987 = vmatprep.subr.mxu0 0.0
  %988 = vmatpush1.msra.mxu0 0.0
  %989 = vmatprep.subr.mxu0 0.0
  %990 = vmatpush1.msra.mxu0 0.0
  %991 = vmatprep.subr.mxu0 0.0
  %992 = vmatpush1.msra.mxu0 0.0
  %993 = vmatprep.subr.mxu0 0.0
  %994 = vmatpush1.msra.mxu0 0.0
  %995 = vmatprep.subr.mxu0 0.0
  %996 = vmatpush1.msra.mxu0 0.0
  %997 = vmatprep.subr.mxu0 0.0
  %998 = vmatpush1.msra.mxu0 0.0
  %999 = vmatprep.subr.mxu0 0.0
  %1000 = vmatpush1.msra.mxu0 0.0
  %1001 = vmatprep.subr.mxu0 0.0
  %1002 = vmatpush1.msra.mxu0 0.0
  %1003 = vmatprep.subr.mxu0 0.0
  %1004 = vmatpush1.msra.mxu0 0.0
  %1005 = vmatprep.subr.mxu0 0.0
  %1006 = vmatpush1.msra.mxu0 0.0
  %1007 = vmatprep.subr.mxu0 0.0
  %1008 = vmatpush1.msra.mxu0 0.0
  %1009 = vmatprep.subr.mxu0 0.0
  %1010 = vmatpush1.msra.mxu0 0.0
  %1011 = vmatprep.subr.mxu0 0.0
  %1012 = vmatpush1.msra.mxu0 0.0
  %1013 = vmatprep.subr.mxu0 0.0
  %1014 = vmatpush1.msra.mxu0 0.0
  %1015 = vmatprep.subr.mxu0 0.0
  %1016 = vmatpush1.msra.mxu0 0.0
  %1017 = vmatprep.subr.mxu0 0.0
  %1018 = vmatpush1.msra.mxu0 0.0
  %1019 = vmatprep.subr.mxu0 0.0
  %1020 = vmatpush1.msra.mxu0 0.0
  %1021 = vmatprep.subr.mxu0 0.0
  %1022 = vmatpush1.msra.mxu0 0.0
  %1023 = vmatprep.subr.mxu0 0.0
  %1024 = vmatpush1.msra.mxu0 0.0
  %1025 = vmatprep.subr.mxu0 0.0
  %1026 = vmatpush1.msra.mxu0 0.0
  %1027 = vmatprep.mubr.f32.mxu0 0.0
  %1028 = vmatmul.mubr.f32.gmra.mrb[0].mxu0 %v961
  %v1029 = vpop.f32.mrb[0].mxu0
  %v1030 = vadd.f32 %v958, %v1029
  %v1031 = vpop.f32.mrb[0].mxu0
  %1032 = vdwg.mxu0
  %v1033 = vmax.f32 %v1030, 0.0
  %s1034 = scalar_lea.vmem %s3, 320
  %v1035 = vld [vmem:[%s1034] sm:$0xff]
  %v1036 = vld [vmem:[%s1034 + $0x8] sm:$0xff]
  %v1037 = vld [vmem:[%s1034 + $0x10] sm:$0xff]
  %v1038 = vld [vmem:[%s1034 + $0x18] sm:$0xff]
  %v1039 = vld [vmem:[%s1034 + $0x20] sm:$0xff]
  %v1040 = vld [vmem:[%s1034 + $0x28] sm:$0xff]
  %v1041 = vld [vmem:[%s1034 + $0x30] sm:$0xff]
  %v1042 = vld [vmem:[%s1034 + $0x38] sm:$0xff]
  %s1043 = scalar_lea.vmem %s4, 5
  %v1044 = vld [vmem:[%s1043] sm:$0x1]
  %v1046 = vlaneseq
  %v1047 = vshrl.u32 %v1046, 7
  %v1048 = vsub.s32 0, %v1047
  %v1049 = vrot.slane %v1044, %v1048
  %v1052 = vsel %vm36, %v1033, 0
  %1054 = vmatprep.subr.mxu0 0.0
  %1055 = vmatpush1.msra.mxu0 %v1035
  %1056 = vmatprep.subr.mxu0 0.0
  %1057 = vmatpush1.msra.mxu0 %v1036
  %1058 = vmatprep.subr.mxu0 0.0
  %1059 = vmatpush1.msra.mxu0 %v1037
  %1060 = vmatprep.subr.mxu0 0.0
  %1061 = vmatpush1.msra.mxu0 %v1038
  %1062 = vmatprep.subr.mxu0 0.0
  %1063 = vmatpush1.msra.mxu0 %v1039
  %1064 = vmatprep.subr.mxu0 0.0
  %1065 = vmatpush1.msra.mxu0 %v1040
  %1066 = vmatprep.subr.mxu0 0.0
  %1067 = vmatpush1.msra.mxu0 %v1041
  %1068 = vmatprep.subr.mxu0 0.0
  %1069 = vmatpush1.msra.mxu0 %v1042
  %1070 = vmatprep.subr.mxu0 0.0
  %1071 = vmatpush1.msra.mxu0 0.0
  %1072 = vmatprep.subr.mxu0 0.0
  %1073 = vmatpush1.msra.mxu0 0.0
  %1074 = vmatprep.subr.mxu0 0.0
  %1075 = vmatpush1.msra.mxu0 0.0
  %1076 = vmatprep.subr.mxu0 0.0
  %1077 = vmatpush1.msra.mxu0 0.0
  %1078 = vmatprep.subr.mxu0 0.0
  %1079 = vmatpush1.msra.mxu0 0.0
  %1080 = vmatprep.subr.mxu0 0.0
  %1081 = vmatpush1.msra.mxu0 0.0
  %1082 = vmatprep.subr.mxu0 0.0
  %1083 = vmatpush1.msra.mxu0 0.0
  %1084 = vmatprep.subr.mxu0 0.0
  %1085 = vmatpush1.msra.mxu0 0.0
  %1086 = vmatprep.subr.mxu0 0.0
  %1087 = vmatpush1.msra.mxu0 0.0
  %1088 = vmatprep.subr.mxu0 0.0
  %1089 = vmatpush1.msra.mxu0 0.0
  %1090 = vmatprep.subr.mxu0 0.0
  %1091 = vmatpush1.msra.mxu0 0.0
  %1092 = vmatprep.subr.mxu0 0.0
  %1093 = vmatpush1.msra.mxu0 0.0
  %1094 = vmatprep.subr.mxu0 0.0
  %1095 = vmatpush1.msra.mxu0 0.0
  %1096 = vmatprep.subr.mxu0 0.0
  %1097 = vmatpush1.msra.mxu0 0.0
  %1098 = vmatprep.subr.mxu0 0.0
  %1099 = vmatpush1.msra.mxu0 0.0
  %1100 = vmatprep.subr.mxu0 0.0
  %1101 = vmatpush1.msra.mxu0 0.0
  %1102 = vmatprep.subr.mxu0 0.0
  %1103 = vmatpush1.msra.mxu0 0.0
  %1104 = vmatprep.subr.mxu0 0.0
  %1105 = vmatpush1.msra.mxu0 0.0
  %1106 = vmatprep.subr.mxu0 0.0
  %1107 = vmatpush1.msra.mxu0 0.0
  %1108 = vmatprep.subr.mxu0 0.0
  %1109 = vmatpush1.msra.mxu0 0.0
  %1110 = vmatprep.subr.mxu0 0.0
  %1111 = vmatpush1.msra.mxu0 0.0
  %1112 = vmatprep.subr.mxu0 0.0
  %1113 = vmatpush1.msra.mxu0 0.0
  %1114 = vmatprep.subr.mxu0 0.0
  %1115 = vmatpush1.msra.mxu0 0.0
  %1116 = vmatprep.subr.mxu0 0.0
  %1117 = vmatpush1.msra.mxu0 0.0
  %1118 = vmatprep.mubr.f32.mxu0 0.0
  %1119 = vmatmul.mubr.f32.gmra.mrb[0].mxu0 %v1052
  %v1120 = vpop.f32.mrb[0].mxu0
  %v1121 = vadd.f32 %v1049, %v1120
  %v1122 = vpop.f32.mrb[0].mxu0
  %1123 = vdwg.mxu0
  %s1124 = scalar_lea.vmem %s5, 20
  %1125 = vst.msk [vmem:[%s1124] sm:$0xf] %vm199, %v1121
  %s1126 = scalar_lea.vmem %s0, 24
  %v1127 = vld [vmem:[%s1126] sm:$0xf]
  %s1128 = scalar_lea.vmem %s1, 384
  %v1129 = vld [vmem:[%s1128] sm:$0xff]
  %v1130 = vld [vmem:[%s1128 + $0x8] sm:$0xff]
  %v1131 = vld [vmem:[%s1128 + $0x10] sm:$0xff]
  %v1132 = vld [vmem:[%s1128 + $0x18] sm:$0xff]
  %v1133 = vld [vmem:[%s1128 + $0x20] sm:$0xff]
  %v1134 = vld [vmem:[%s1128 + $0x28] sm:$0xff]
  %v1135 = vld [vmem:[%s1128 + $0x30] sm:$0xff]
  %v1136 = vld [vmem:[%s1128 + $0x38] sm:$0xff]
  %s1137 = scalar_lea.vmem %s2, 6
  %v1138 = vld [vmem:[%s1137] sm:$0x1]
  %v1140 = vlaneseq
  %v1141 = vshrl.u32 %v1140, 7
  %v1142 = vsub.s32 0, %v1141
  %v1143 = vrot.slane %v1138, %v1142
  %v1146 = vsel %vm36, %v1127, 0
  %1148 = vmatprep.subr.mxu0 0.0
  %1149 = vmatpush1.msra.mxu0 %v1129
  %1150 = vmatprep.subr.mxu0 0.0
  %1151 = vmatpush1.msra.mxu0 %v1130
  %1152 = vmatprep.subr.mxu0 0.0
  %1153 = vmatpush1.msra.mxu0 %v1131
  %1154 = vmatprep.subr.mxu0 0.0
  %1155 = vmatpush1.msra.mxu0 %v1132
  %1156 = vmatprep.subr.mxu0 0.0
  %1157 = vmatpush1.msra.mxu0 %v1133
  %1158 = vmatprep.subr.mxu0 0.0
  %1159 = vmatpush1.msra.mxu0 %v1134
  %1160 = vmatprep.subr.mxu0 0.0
  %1161 = vmatpush1.msra.mxu0 %v1135
  %1162 = vmatprep.subr.mxu0 0.0
  %1163 = vmatpush1.msra.mxu0 %v1136
  %1164 = vmatprep.subr.mxu0 0.0
  %1165 = vmatpush1.msra.mxu0 0.0
  %1166 = vmatprep.subr.mxu0 0.0
  %1167 = vmatpush1.msra.mxu0 0.0
  %1168 = vmatprep.subr.mxu0 0.0
  %1169 = vmatpush1.msra.mxu0 0.0
  %1170 = vmatprep.subr.mxu0 0.0
  %1171 = vmatpush1.msra.mxu0 0.0
  %1172 = vmatprep.subr.mxu0 0.0
  %1173 = vmatpush1.msra.mxu0 0.0
  %1174 = vmatprep.subr.mxu0 0.0
  %1175 = vmatpush1.msra.mxu0 0.0
  %1176 = vmatprep.subr.mxu0 0.0
  %1177 = vmatpush1.msra.mxu0 0.0
  %1178 = vmatprep.subr.mxu0 0.0
  %1179 = vmatpush1.msra.mxu0 0.0
  %1180 = vmatprep.subr.mxu0 0.0
  %1181 = vmatpush1.msra.mxu0 0.0
  %1182 = vmatprep.subr.mxu0 0.0
  %1183 = vmatpush1.msra.mxu0 0.0
  %1184 = vmatprep.subr.mxu0 0.0
  %1185 = vmatpush1.msra.mxu0 0.0
  %1186 = vmatprep.subr.mxu0 0.0
  %1187 = vmatpush1.msra.mxu0 0.0
  %1188 = vmatprep.subr.mxu0 0.0
  %1189 = vmatpush1.msra.mxu0 0.0
  %1190 = vmatprep.subr.mxu0 0.0
  %1191 = vmatpush1.msra.mxu0 0.0
  %1192 = vmatprep.subr.mxu0 0.0
  %1193 = vmatpush1.msra.mxu0 0.0
  %1194 = vmatprep.subr.mxu0 0.0
  %1195 = vmatpush1.msra.mxu0 0.0
  %1196 = vmatprep.subr.mxu0 0.0
  %1197 = vmatpush1.msra.mxu0 0.0
  %1198 = vmatprep.subr.mxu0 0.0
  %1199 = vmatpush1.msra.mxu0 0.0
  %1200 = vmatprep.subr.mxu0 0.0
  %1201 = vmatpush1.msra.mxu0 0.0
  %1202 = vmatprep.subr.mxu0 0.0
  %1203 = vmatpush1.msra.mxu0 0.0
  %1204 = vmatprep.subr.mxu0 0.0
  %1205 = vmatpush1.msra.mxu0 0.0
  %1206 = vmatprep.subr.mxu0 0.0
  %1207 = vmatpush1.msra.mxu0 0.0
  %1208 = vmatprep.subr.mxu0 0.0
  %1209 = vmatpush1.msra.mxu0 0.0
  %1210 = vmatprep.subr.mxu0 0.0
  %1211 = vmatpush1.msra.mxu0 0.0
  %1212 = vmatprep.mubr.f32.mxu0 0.0
  %1213 = vmatmul.mubr.f32.gmra.mrb[0].mxu0 %v1146
  %v1214 = vpop.f32.mrb[0].mxu0
  %v1215 = vadd.f32 %v1143, %v1214
  %v1216 = vpop.f32.mrb[0].mxu0
  %1217 = vdwg.mxu0
  %v1218 = vmax.f32 %v1215, 0.0
  %s1219 = scalar_lea.vmem %s3, 384
  %v1220 = vld [vmem:[%s1219] sm:$0xff]
  %v1221 = vld [vmem:[%s1219 + $0x8] sm:$0xff]
  %v1222 = vld [vmem:[%s1219 + $0x10] sm:$0xff]
  %v1223 = vld [vmem:[%s1219 + $0x18] sm:$0xff]
  %v1224 = vld [vmem:[%s1219 + $0x20] sm:$0xff]
  %v1225 = vld [vmem:[%s1219 + $0x28] sm:$0xff]
  %v1226 = vld [vmem:[%s1219 + $0x30] sm:$0xff]
  %v1227 = vld [vmem:[%s1219 + $0x38] sm:$0xff]
  %s1228 = scalar_lea.vmem %s4, 6
  %v1229 = vld [vmem:[%s1228] sm:$0x1]
  %v1231 = vlaneseq
  %v1232 = vshrl.u32 %v1231, 7
  %v1233 = vsub.s32 0, %v1232
  %v1234 = vrot.slane %v1229, %v1233
  %v1237 = vsel %vm36, %v1218, 0
  %1239 = vmatprep.subr.mxu0 0.0
  %1240 = vmatpush1.msra.mxu0 %v1220
  %1241 = vmatprep.subr.mxu0 0.0
  %1242 = vmatpush1.msra.mxu0 %v1221
  %1243 = vmatprep.subr.mxu0 0.0
  %1244 = vmatpush1.msra.mxu0 %v1222
  %1245 = vmatprep.subr.mxu0 0.0
  %1246 = vmatpush1.msra.mxu0 %v1223
  %1247 = vmatprep.subr.mxu0 0.0
  %1248 = vmatpush1.msra.mxu0 %v1224
  %1249 = vmatprep.subr.mxu0 0.0
  %1250 = vmatpush1.msra.mxu0 %v1225
  %1251 = vmatprep.subr.mxu0 0.0
  %1252 = vmatpush1.msra.mxu0 %v1226
  %1253 = vmatprep.subr.mxu0 0.0
  %1254 = vmatpush1.msra.mxu0 %v1227
  %1255 = vmatprep.subr.mxu0 0.0
  %1256 = vmatpush1.msra.mxu0 0.0
  %1257 = vmatprep.subr.mxu0 0.0
  %1258 = vmatpush1.msra.mxu0 0.0
  %1259 = vmatprep.subr.mxu0 0.0
  %1260 = vmatpush1.msra.mxu0 0.0
  %1261 = vmatprep.subr.mxu0 0.0
  %1262 = vmatpush1.msra.mxu0 0.0
  %1263 = vmatprep.subr.mxu0 0.0
  %1264 = vmatpush1.msra.mxu0 0.0
  %1265 = vmatprep.subr.mxu0 0.0
  %1266 = vmatpush1.msra.mxu0 0.0
  %1267 = vmatprep.subr.mxu0 0.0
  %1268 = vmatpush1.msra.mxu0 0.0
  %1269 = vmatprep.subr.mxu0 0.0
  %1270 = vmatpush1.msra.mxu0 0.0
  %1271 = vmatprep.subr.mxu0 0.0
  %1272 = vmatpush1.msra.mxu0 0.0
  %1273 = vmatprep.subr.mxu0 0.0
  %1274 = vmatpush1.msra.mxu0 0.0
  %1275 = vmatprep.subr.mxu0 0.0
  %1276 = vmatpush1.msra.mxu0 0.0
  %1277 = vmatprep.subr.mxu0 0.0
  %1278 = vmatpush1.msra.mxu0 0.0
  %1279 = vmatprep.subr.mxu0 0.0
  %1280 = vmatpush1.msra.mxu0 0.0
  %1281 = vmatprep.subr.mxu0 0.0
  %1282 = vmatpush1.msra.mxu0 0.0
  %1283 = vmatprep.subr.mxu0 0.0
  %1284 = vmatpush1.msra.mxu0 0.0
  %1285 = vmatprep.subr.mxu0 0.0
  %1286 = vmatpush1.msra.mxu0 0.0
  %1287 = vmatprep.subr.mxu0 0.0
  %1288 = vmatpush1.msra.mxu0 0.0
  %1289 = vmatprep.subr.mxu0 0.0
  %1290 = vmatpush1.msra.mxu0 0.0
  %1291 = vmatprep.subr.mxu0 0.0
  %1292 = vmatpush1.msra.mxu0 0.0
  %1293 = vmatprep.subr.mxu0 0.0
  %1294 = vmatpush1.msra.mxu0 0.0
  %1295 = vmatprep.subr.mxu0 0.0
  %1296 = vmatpush1.msra.mxu0 0.0
  %1297 = vmatprep.subr.mxu0 0.0
  %1298 = vmatpush1.msra.mxu0 0.0
  %1299 = vmatprep.subr.mxu0 0.0
  %1300 = vmatpush1.msra.mxu0 0.0
  %1301 = vmatprep.subr.mxu0 0.0
  %1302 = vmatpush1.msra.mxu0 0.0
  %1303 = vmatprep.mubr.f32.mxu0 0.0
  %1304 = vmatmul.mubr.f32.gmra.mrb[0].mxu0 %v1237
  %v1305 = vpop.f32.mrb[0].mxu0
  %v1306 = vadd.f32 %v1234, %v1305
  %v1307 = vpop.f32.mrb[0].mxu0
  %1308 = vdwg.mxu0
  %s1309 = scalar_lea.vmem %s5, 24
  %1310 = vst.msk [vmem:[%s1309] sm:$0xf] %vm199, %v1306
  // Predicated region
  $region22: #{encoder_forward.11} parent=0 // pred_check
    _
  $region23: #{encoder_forward.11} parent=0 // pred_check_branch
    %1312 = sbr.rel (0) target = $region25
  $region24: #{encoder_forward.11} parent=0 // pred_region
    _
  $region25: #{encoder_forward.11} parent=0 // pred_fallthru
    _
  // Predicated region
  $region26: #{encoder_forward.11} parent=0 // pred_check
    _
  $region27: #{encoder_forward.11} parent=0 // pred_check_branch
    %1314 = sbr.rel (0) target = $region29
  $region28: #{encoder_forward.11} parent=0 // pred_region
    _
  $region29: #{encoder_forward.11} parent=0 // pred_fallthru
    _

</llo_original>
